<compile_context>
chip_gen: v7x
topology: tpu7x:2x2x1
jax: 0.10.0
libtpu: 0.0.40
codegen_flags: <defaults>
</compile_context>

<pallas_src>
import functools

import numpy as np
import jax
import jax.numpy as jnp
from jax.experimental import pallas as pl
from jax.experimental.pallas import tpu as pltpu


_OUT_LANES = 128


# ------------------------------ Pallas kernel ------------------------------ #

def _fused_kernel(*refs):
    """Full LearnLossActive forward for TB batch elements (one grid step).

    All spatial maps arrive in Morton (Z) order, batch-stacked along rows, so
    a stride-2 2x2 patch gather is a stride-4 sublane read from VMEM.
    """
    n_fc = (len(refs) - 20) // 2
    (x0_ref, s1_ref, s2_ref, s3_ref, s4_ref,
     w0_ref, b0_ref, w1_ref, b1_ref, w2_ref, b2_ref, w3_ref, b3_ref,
     w4_ref, b4_ref) = refs[:15]
    fc_refs = refs[15:15 + 2 * n_fc]
    o_ref = refs[15 + 2 * n_fc]
    a1_ref, a2_ref, a3_ref, a4_ref = refs[16 + 2 * n_fc:]

    f32 = jnp.float32
    tb = o_ref.shape[0]
    c = s1_ref.shape[1]                      # channel count
    fuse_k = (c % 128 == 0)                  # lane-aligned -> single K=4C matmul

    def finish_level(acc, b_ref, skip_ref, dst_ref):
        a = jnp.maximum(acc + b_ref[...], 0.0) + skip_ref[...].astype(f32)
        dst_ref[...] = a                     # f32 scratch, never leaves VMEM

    def gather_dot(src_ref, w_ref, n_out, n_k, stride):
        """sum_k (strided row-gather of src) @ (k-th C-row-block of w)."""
        if fuse_k:
            g = jnp.concatenate(
                [src_ref[pl.ds(k, n_out, stride=stride), :] for k in range(n_k)],
                axis=1).astype(w_ref.dtype)
            return jnp.dot(g, w_ref[...], preferred_element_type=f32)
        acc = jnp.zeros((n_out, w_ref.shape[1]), f32)
        for k in range(n_k):
            gk = src_ref[pl.ds(k, n_out, stride=stride), :].astype(w_ref.dtype)
            acc = acc + jnp.dot(gk, w_ref[pl.ds(k * c, c), :],
                                preferred_element_type=f32)
        return acc

    # level 0 (64x64 -> 32x32): patches pre-grouped by host (Morton reshape),
    # so this is a single (TB*1024, 4C) @ (4C, C) matmul.
    finish_level(jnp.dot(x0_ref[...], w0_ref[...], preferred_element_type=f32),
                 b0_ref, s1_ref, a1_ref)

    # levels 1..3: strided gather from f32 scratch + matmul
    finish_level(gather_dot(a1_ref, w1_ref, a2_ref.shape[0], 4, 4),
                 b1_ref, s2_ref, a2_ref)     # 32x32 -> 16x16
    finish_level(gather_dot(a2_ref, w2_ref, a3_ref.shape[0], 4, 4),
                 b2_ref, s3_ref, a3_ref)     # 16x16 ->  8x8
    finish_level(gather_dot(a3_ref, w3_ref, a4_ref.shape[0], 4, 4),
                 b3_ref, s4_ref, a4_ref)     #  8x8  ->  4x4

    # final 4x4 conv: full contraction over the 16 Morton positions, M=TB
    h = jnp.maximum(gather_dot(a4_ref, w4_ref, tb, 16, 16) + b4_ref[...], 0.0)

    # fused FC head: Linear+ReLU x5, final Linear (no ReLU), all at M=TB
    for i in range(n_fc):
        w_ref = fc_refs[2 * i]
        b_ref = fc_refs[2 * i + 1]
        h = jnp.dot(h.astype(w_ref.dtype), w_ref[...],
                    preferred_element_type=f32) + b_ref[...]
        if i < n_fc - 1:
            h = jnp.maximum(h, 0.0)

    # lane-dense store of the (TB, 1) result; glue keeps lane 0
    o_ref[...] = jnp.broadcast_to(h, o_ref.shape).astype(o_ref.dtype)


# ------------------------------- host glue ---------------------------------- #

def _morton_perm(size):
    """perm[m] = row-major index (i*size + j) of the m-th Morton-order cell."""
    n_bits = int(np.log2(size))
    assert (1 << n_bits) == size
    m = np.arange(size * size)
    i = np.zeros_like(m)
    j = np.zeros_like(m)
    for b in range(n_bits):
        j |= ((m >> (2 * b)) & 1) << b
        i |= ((m >> (2 * b + 1)) & 1) << b
    return i * size + j


def _conv2x2_to_mat(w, dtype):
    """(C_out, C_in, 2, 2) -> (4*C_in, C_out); row block k = 2*kh + kw."""
    c_out, c_in = w.shape[0], w.shape[1]
    return jnp.transpose(w, (2, 3, 1, 0)).reshape(4 * c_in, c_out).astype(dtype)


def learn_loss_active_forward(x, params, hg_feat_shape=(64, 32, 16, 8, 4),
                              tb=4, compute_dtype=jnp.bfloat16):
    """Fused-Pallas LearnLossActive.forward (original=False).

    tb: batch elements per grid step.
        v7x  (64 MiB VMEM / TC, 2 TCs): keep tb <= 4 and B//tb >= 2.
        v6e/v5e (128 MiB physical VMEM): tb = 8 is fine (raise the vmem limit
        if tb/C grow further).
    compute_dtype: bf16 recommended for v5e/v6e/v7x (MXU-native, halves the
        HBM bytes of the streamed input); f32 for bit-level checks.
    """
    B, C, _ = x.shape
    sizes = tuple(hg_feat_shape)
    assert len(sizes) == 5 and sizes[4] == 4
    assert all(sizes[i] == 2 * sizes[i + 1] for i in range(4))

    tb = max(1, min(int(tb), B))
    pad = (-B) % tb
    if pad:
        x = jnp.concatenate([x, jnp.zeros((pad,) + x.shape[1:], x.dtype)], axis=0)
    bp = B + pad
    g = bp // tb

    # single channels-last transpose + Morton row permutation, in compute dtype
    offs = np.cumsum([0] + [s * s for s in sizes])
    perm = np.concatenate([offs[i] + _morton_perm(sizes[i]) for i in range(5)])
    xt = jnp.transpose(x, (0, 2, 1)).astype(compute_dtype)        # (bp, S_tot, C)
    xp = jnp.take(xt, jnp.asarray(perm, np.int32), axis=1)

    # batch-stack tb elements along rows; level 0 as a (tb*1024, 4C) patch slab
    lvl0 = xp[:, :int(offs[1]), :].reshape(g, tb * sizes[1] ** 2, 4 * C)
    skips = [xp[:, int(offs[i]):int(offs[i + 1]), :]
             .reshape(g, tb * sizes[i] ** 2, C) for i in range(1, 5)]

    # conv weights -> matmul layouts; biases as f32 (1, N) rows
    (w0, b0), (w1, b1), (w2, b2), (w3, b3), (w4, b4) = params["hg_conv"]
    wm = [_conv2x2_to_mat(w, compute_dtype) for w in (w0, w1, w2, w3)]
    p4 = _morton_perm(4)                                          # 4x4 window order
    w4m = jnp.transpose(w4, (2, 3, 1, 0)).reshape(16, C, w4.shape[0])
    w4m = w4m[jnp.asarray(p4, np.int32)].reshape(16 * C, w4.shape[0])
    w4m = w4m.astype(compute_dtype)
    biases = [jnp.reshape(b, (1, -1)).astype(jnp.float32)
              for b in (b0, b1, b2, b3, b4)]

    args = [lvl0, skips[0], skips[1], skips[2], skips[3],
            wm[0], biases[0], wm[1], biases[1], wm[2], biases[2],
            wm[3], biases[3], w4m, biases[4]]
    for w, b in params["fc"]:
        args += [jnp.asarray(w).T.astype(compute_dtype),
                 jnp.reshape(jnp.asarray(b), (1, -1)).astype(jnp.float32)]

    def stream_spec(a):
        return pl.BlockSpec((None,) + tuple(a.shape[1:]), lambda i: (i, 0, 0))

    def const_spec(a):
        nd = a.ndim
        return pl.BlockSpec(tuple(a.shape), lambda i, _n=nd: (0,) * _n)

    in_specs = ([stream_spec(a) for a in args[:5]]
                + [const_spec(a) for a in args[5:]])

    # f32 VMEM scratch for the intermediate Morton-ordered feature maps
    scratch_shapes = [pltpu.VMEM((tb * sizes[i] ** 2, C), jnp.float32)
                      for i in range(1, 5)]

    # advisory cost estimate for XLA scheduling around the fused call
    itemsize = jnp.dtype(compute_dtype).itemsize
    flops = 0
    for s in sizes[1:5]:
        flops += 2 * (s * s) * (4 * C) * C          # 2x2 stride-2 conv levels
    flops += 2 * (16 * C) * C                       # final 4x4 conv
    d = C
    for w, _ in params["fc"]:
        flops += 2 * d * int(w.shape[0])
        d = int(w.shape[0])
    flops *= bp
    bytes_accessed = (bp * int(offs[-1]) * C * itemsize
                      + sum(int(np.prod(a.shape)) * a.dtype.itemsize
                            for a in args[5:])
                      + bp * _OUT_LANES * 4)

    out = pl.pallas_call(
        _fused_kernel,
        out_shape=jax.ShapeDtypeStruct((g, tb, _OUT_LANES), jnp.float32),
        grid=(g,),
        in_specs=in_specs,
        out_specs=pl.BlockSpec((None, tb, _OUT_LANES), lambda i: (i, 0, 0)),
        scratch_shapes=scratch_shapes,
        compiler_params=pltpu.CompilerParams(
            dimension_semantics=("parallel",),
            vmem_limit_bytes=48 * 1024 * 1024),
        cost_estimate=pl.CostEstimate(flops=int(flops), transcendentals=0,
                                      bytes_accessed=int(bytes_accessed)),
    )(*args)
    return out.reshape(bp, _OUT_LANES)[:B, :1]                    # (B, 1)


# --------------------------- pure-JAX reference ------------------------------ #

def ref_forward(x, params, hg_feat_shape=(64, 32, 16, 8, 4)):
    B, C, _ = x.shape
    conv_x, border = [], 0
    for size in hg_feat_shape:
        conv_x.append(x[:, :, border:border + size * size].reshape(B, C, size, size))
        border += size * size
    x_ = conv_x[0]
    for i in range(4):
        w, b = params["hg_conv"][i]
        y = jax.lax.conv_general_dilated(x_, w, (2, 2), "VALID",
                                         dimension_numbers=("NCHW", "OIHW", "NCHW"))
        x_ = conv_x[i + 1] + jnp.maximum(y + b[None, :, None, None], 0.0)
    w, b = params["hg_conv"][4]
    y = jax.lax.conv_general_dilated(x_, w, (1, 1), "VALID",
                                     dimension_numbers=("NCHW", "OIHW", "NCHW"))
    out = jnp.maximum(y.reshape(B, C) + b[None, :], 0.0)
    n_fc = len(params["fc"])
    for i, (w, b) in enumerate(params["fc"]):
        out = out @ w.T + b
        if i < n_fc - 1:
            out = jnp.maximum(out, 0.0)
    return out


# ----------------------------- parameter init -------------------------------- #

def init_params(key, hg_feat, num_feat=(128, 64, 32, 16, 8), out=1):
    """Deterministic PyTorch-style uniform(-1/sqrt(fan_in), +) init."""
    params = {"hg_conv": [], "fc": []}
    C = hg_feat
    for k in (2, 2, 2, 2, 4):                                # four 2x2 convs + one 4x4
        key, k1, k2 = jax.random.split(key, 3)
        bound = 1.0 / np.sqrt(C * k * k)
        params["hg_conv"].append((
            jax.random.uniform(k1, (C, C, k, k), jnp.float32, -bound, bound),
            jax.random.uniform(k2, (C,), jnp.float32, -bound, bound)))
    in_feat = C
    for out_feat in list(num_feat) + [out]:
        key, k1, k2 = jax.random.split(key, 3)
        bound = 1.0 / np.sqrt(in_feat)
        params["fc"].append((
            jax.random.uniform(k1, (out_feat, in_feat), jnp.float32, -bound, bound),
            jax.random.uniform(k2, (out_feat,), jnp.float32, -bound, bound)))
        in_feat = out_feat
    return params


# ----------------------------------- main ------------------------------------ #

if __name__ == "__main__":
    hg_feat_shape = (64, 32, 16, 8, 4)
    B, C = 4, 8                                              # small hg_feat demo
    S = sum(s * s for s in hg_feat_shape)                    # 5456

    key = jax.random.PRNGKey(0)
    kx, kp = jax.random.split(key)
    x = jax.random.normal(kx, (B, C, S), jnp.float32)
    params = init_params(kp, C)

    ref = np.asarray(ref_forward(x, params, hg_feat_shape))

    # 1) f32 compute path: bit-level fidelity check against the reference
    fwd_f32 = jax.jit(functools.partial(learn_loss_active_forward,
                                        hg_feat_shape=hg_feat_shape,
                                        tb=2, compute_dtype=jnp.float32))
    out_f32 = np.asarray(jax.block_until_ready(fwd_f32(x, params)))
    assert out_f32.shape == (B, 1), out_f32.shape
    assert np.allclose(out_f32, ref, rtol=1e-4, atol=1e-4), \
        float(np.max(np.abs(out_f32 - ref)))

    # 2) bf16 production path (recommended on v5e/v6e/v7x): relaxed tolerance
    #    per the review, since inputs/weights are rounded to bf16.
    fwd_bf16 = jax.jit(functools.partial(learn_loss_active_forward,
                                         hg_feat_shape=hg_feat_shape,
                                         tb=2, compute_dtype=jnp.bfloat16))
    out_bf16 = np.asarray(jax.block_until_ready(fwd_bf16(x, params)))
    assert out_bf16.shape == (B, 1), out_bf16.shape
    assert np.allclose(out_bf16, ref, rtol=5e-2, atol=1e-1), \
        float(np.max(np.abs(out_bf16 - ref)))

    print("KERNEL_OK")
</pallas_src>

<mosaic_0001>
module attributes {stable_mosaic.version = 11 : i64} {
  func.func private @main(%arg0: i32) attributes {dimension_semantics = [#tpu.dimension_semantics<core_parallel>], iteration_bounds = array<i64: 2>, tpu.core_type = #tpu.core_type<sc_scalar_subcore>, window_params = []} {
    return
  }
}

module attributes {stable_mosaic.version = 11 : i64} {
  func.func private @main(%arg0: i32) attributes {dimension_semantics = [#tpu.dimension_semantics<core_parallel>], iteration_bounds = array<i64: 2>, tpu.core_type = #tpu.core_type<sc_scalar_subcore>, window_params = []} {
    return
  }
}

module attributes {stable_mosaic.version = 11 : i64} {
  func.func @_fused_kernel(%arg0: i32, %arg1: memref<1x2048x32xf32, #tpu.memory_space<vmem>>, %arg2: memref<1x2048x8xf32, #tpu.memory_space<vmem>>, %arg3: memref<1x512x8xf32, #tpu.memory_space<vmem>>, %arg4: memref<1x128x8xf32, #tpu.memory_space<vmem>>, %arg5: memref<1x32x8xf32, #tpu.memory_space<vmem>>, %arg6: memref<32x8xf32, #tpu.memory_space<vmem>>, %arg7: memref<1x8xf32, #tpu.memory_space<vmem>>, %arg8: memref<32x8xf32, #tpu.memory_space<vmem>>, %arg9: memref<1x8xf32, #tpu.memory_space<vmem>>, %arg10: memref<32x8xf32, #tpu.memory_space<vmem>>, %arg11: memref<1x8xf32, #tpu.memory_space<vmem>>, %arg12: memref<32x8xf32, #tpu.memory_space<vmem>>, %arg13: memref<1x8xf32, #tpu.memory_space<vmem>>, %arg14: memref<128x8xf32, #tpu.memory_space<vmem>>, %arg15: memref<1x8xf32, #tpu.memory_space<vmem>>, %arg16: memref<8x128xf32, #tpu.memory_space<vmem>>, %arg17: memref<1x128xf32, #tpu.memory_space<vmem>>, %arg18: memref<128x64xf32, #tpu.memory_space<vmem>>, %arg19: memref<1x64xf32, #tpu.memory_space<vmem>>, %arg20: memref<64x32xf32, #tpu.memory_space<vmem>>, %arg21: memref<1x32xf32, #tpu.memory_space<vmem>>, %arg22: memref<32x16xf32, #tpu.memory_space<vmem>>, %arg23: memref<1x16xf32, #tpu.memory_space<vmem>>, %arg24: memref<16x8xf32, #tpu.memory_space<vmem>>, %arg25: memref<1x8xf32, #tpu.memory_space<vmem>>, %arg26: memref<8x1xf32, #tpu.memory_space<vmem>>, %arg27: memref<1x1xf32, #tpu.memory_space<vmem>>, %arg28: memref<1x2x128xf32, #tpu.memory_space<vmem>>, %arg29: memref<2048x8xf32, #tpu.memory_space<vmem>>, %arg30: memref<512x8xf32, #tpu.memory_space<vmem>>, %arg31: memref<128x8xf32, #tpu.memory_space<vmem>>, %arg32: memref<32x8xf32, #tpu.memory_space<vmem>>) attributes {dimension_semantics = [#tpu.dimension_semantics<parallel>], iteration_bounds = array<i64: 2>, scalar_prefetch = 0 : i64, scratch_operands = 4 : i64, tpu.core_type = #tpu.core_type<tc>, window_params = [{transform_indices = @transform_0, window_bounds = array<i64: 1, 2048, 32>}, {transform_indices = @transform_1, window_bounds = array<i64: 1, 2048, 8>}, {transform_indices = @transform_2, window_bounds = array<i64: 1, 512, 8>}, {transform_indices = @transform_3, window_bounds = array<i64: 1, 128, 8>}, {transform_indices = @transform_4, window_bounds = array<i64: 1, 32, 8>}, {pipeline_mode = #tpu.pipeline_mode<synchronous>, transform_indices = @transform_5, window_bounds = array<i64: 32, 8>}, {pipeline_mode = #tpu.pipeline_mode<synchronous>, transform_indices = @transform_6, window_bounds = array<i64: 1, 8>}, {pipeline_mode = #tpu.pipeline_mode<synchronous>, transform_indices = @transform_7, window_bounds = array<i64: 32, 8>}, {pipeline_mode = #tpu.pipeline_mode<synchronous>, transform_indices = @transform_8, window_bounds = array<i64: 1, 8>}, {pipeline_mode = #tpu.pipeline_mode<synchronous>, transform_indices = @transform_9, window_bounds = array<i64: 32, 8>}, {pipeline_mode = #tpu.pipeline_mode<synchronous>, transform_indices = @transform_10, window_bounds = array<i64: 1, 8>}, {pipeline_mode = #tpu.pipeline_mode<synchronous>, transform_indices = @transform_11, window_bounds = array<i64: 32, 8>}, {pipeline_mode = #tpu.pipeline_mode<synchronous>, transform_indices = @transform_12, window_bounds = array<i64: 1, 8>}, {pipeline_mode = #tpu.pipeline_mode<synchronous>, transform_indices = @transform_13, window_bounds = array<i64: 128, 8>}, {pipeline_mode = #tpu.pipeline_mode<synchronous>, transform_indices = @transform_14, window_bounds = array<i64: 1, 8>}, {pipeline_mode = #tpu.pipeline_mode<synchronous>, transform_indices = @transform_15, window_bounds = array<i64: 8, 128>}, {pipeline_mode = #tpu.pipeline_mode<synchronous>, transform_indices = @transform_16, window_bounds = array<i64: 1, 128>}, {pipeline_mode = #tpu.pipeline_mode<synchronous>, transform_indices = @transform_17, window_bounds = array<i64: 128, 64>}, {pipeline_mode = #tpu.pipeline_mode<synchronous>, transform_indices = @transform_18, window_bounds = array<i64: 1, 64>}, {pipeline_mode = #tpu.pipeline_mode<synchronous>, transform_indices = @transform_19, window_bounds = array<i64: 64, 32>}, {pipeline_mode = #tpu.pipeline_mode<synchronous>, transform_indices = @transform_20, window_bounds = array<i64: 1, 32>}, {pipeline_mode = #tpu.pipeline_mode<synchronous>, transform_indices = @transform_21, window_bounds = array<i64: 32, 16>}, {pipeline_mode = #tpu.pipeline_mode<synchronous>, transform_indices = @transform_22, window_bounds = array<i64: 1, 16>}, {pipeline_mode = #tpu.pipeline_mode<synchronous>, transform_indices = @transform_23, window_bounds = array<i64: 16, 8>}, {pipeline_mode = #tpu.pipeline_mode<synchronous>, transform_indices = @transform_24, window_bounds = array<i64: 1, 8>}, {pipeline_mode = #tpu.pipeline_mode<synchronous>, transform_indices = @transform_25, window_bounds = array<i64: 8, 1>}, {pipeline_mode = #tpu.pipeline_mode<synchronous>, transform_indices = @transform_26, window_bounds = array<i64: 1, 1>}, {transform_indices = @transform_27, window_bounds = array<i64: 1, 2, 128>}]} {
    %c0 = arith.constant 0 : index
    %c0_0 = arith.constant 0 : index
    %c0_1 = arith.constant 0 : index
    %0 = vector.load %arg1[%c0, %c0_0, %c0_1] : memref<1x2048x32xf32, #tpu.memory_space<vmem>>, vector<1x2048x32xf32>
    %1 = vector.shape_cast %0 : vector<1x2048x32xf32> to vector<2048x32xf32>
    %c0_2 = arith.constant 0 : index
    %c0_3 = arith.constant 0 : index
    %2 = vector.load %arg6[%c0_2, %c0_3] : memref<32x8xf32, #tpu.memory_space<vmem>>, vector<32x8xf32>
    %cst = arith.constant dense<0.000000e+00> : vector<2048x8xf32>
    %3 = tpu.matmul %1, %2, %cst {dimension_numbers = #tpu.dot_dimension_numbers<[1], [0], [0], [1], [0, 0, 1, 1], [], []>} : vector<2048x32xf32>, vector<32x8xf32>, vector<2048x8xf32> -> vector<2048x8xf32>
    %c0_4 = arith.constant 0 : index
    %c0_5 = arith.constant 0 : index
    %4 = vector.load %arg7[%c0_4, %c0_5] : memref<1x8xf32, #tpu.memory_space<vmem>>, vector<1x8xf32>
    %5 = vector.broadcast %4 : vector<1x8xf32> to vector<2048x8xf32>
    %6 = arith.addf %3, %5 : vector<2048x8xf32>
    %cst_6 = arith.constant 0.000000e+00 : f32
    %7 = vector.broadcast %cst_6 : f32 to vector<2048x8xf32>
    %8 = arith.maximumf %6, %7 : vector<2048x8xf32>
    %c0_7 = arith.constant 0 : index
    %c0_8 = arith.constant 0 : index
    %c0_9 = arith.constant 0 : index
    %9 = vector.load %arg2[%c0_7, %c0_8, %c0_9] : memref<1x2048x8xf32, #tpu.memory_space<vmem>>, vector<1x2048x8xf32>
    %10 = vector.shape_cast %9 : vector<1x2048x8xf32> to vector<2048x8xf32>
    %11 = arith.addf %8, %10 : vector<2048x8xf32>
    %c0_10 = arith.constant 0 : index
    %c0_11 = arith.constant 0 : index
    %12 = vector.load %arg29[%c0_10, %c0_11] : memref<2048x8xf32, #tpu.memory_space<vmem>>, vector<2048x8xf32>
    tpu.vector_store %arg29[%c0_10, %c0_11], %11 {strides = array<i32>} : memref<2048x8xf32, #tpu.memory_space<vmem>>, vector<2048x8xf32>,
    %cst_12 = arith.constant 0.000000e+00 : f32
    %13 = vector.broadcast %cst_12 : f32 to vector<512x8xf32>
    %c0_13 = arith.constant 0 : index
    %c0_14 = arith.constant 0 : index
    %14 = tpu.strided_load %arg29[%c0_13, %c0_14] {strides = array<i32: 4, 1>} : memref<2048x8xf32, #tpu.memory_space<vmem>>, vector<512x8xf32>
    %c0_15 = arith.constant 0 : index
    %c0_16 = arith.constant 0 : index
    %15 = vector.load %arg8[%c0_15, %c0_16] : memref<32x8xf32, #tpu.memory_space<vmem>>, vector<8x8xf32>
    %cst_17 = arith.constant dense<0.000000e+00> : vector<512x8xf32>
    %16 = tpu.matmul %14, %15, %cst_17 {dimension_numbers = #tpu.dot_dimension_numbers<[1], [0], [0], [1], [0, 0, 1, 1], [], []>} : vector<512x8xf32>, vector<8x8xf32>, vector<512x8xf32> -> vector<512x8xf32>
    %17 = arith.addf %13, %16 : vector<512x8xf32>
    %c1 = arith.constant 1 : index
    %c0_18 = arith.constant 0 : index
    %18 = tpu.strided_load %arg29[%c1, %c0_18] {strides = array<i32: 4, 1>} : memref<2048x8xf32, #tpu.memory_space<vmem>>, vector<512x8xf32>
    %c8 = arith.constant 8 : index
    %c0_19 = arith.constant 0 : index
    %19 = vector.load %arg8[%c8, %c0_19] : memref<32x8xf32, #tpu.memory_space<vmem>>, vector<8x8xf32>
    %cst_20 = arith.constant dense<0.000000e+00> : vector<512x8xf32>
    %20 = tpu.matmul %18, %19, %cst_20 {dimension_numbers = #tpu.dot_dimension_numbers<[1], [0], [0], [1], [0, 0, 1, 1], [], []>} : vector<512x8xf32>, vector<8x8xf32>, vector<512x8xf32> -> vector<512x8xf32>
    %21 = arith.addf %17, %20 : vector<512x8xf32>
    %c2 = arith.constant 2 : index
    %c0_21 = arith.constant 0 : index
    %22 = tpu.strided_load %arg29[%c2, %c0_21] {strides = array<i32: 4, 1>} : memref<2048x8xf32, #tpu.memory_space<vmem>>, vector<512x8xf32>
    %c16 = arith.constant 16 : index
    %c0_22 = arith.constant 0 : index
    %23 = vector.load %arg8[%c16, %c0_22] : memref<32x8xf32, #tpu.memory_space<vmem>>, vector<8x8xf32>
    %cst_23 = arith.constant dense<0.000000e+00> : vector<512x8xf32>
    %24 = tpu.matmul %22, %23, %cst_23 {dimension_numbers = #tpu.dot_dimension_numbers<[1], [0], [0], [1], [0, 0, 1, 1], [], []>} : vector<512x8xf32>, vector<8x8xf32>, vector<512x8xf32> -> vector<512x8xf32>
    %25 = arith.addf %21, %24 : vector<512x8xf32>
    %c3 = arith.constant 3 : index
    %c0_24 = arith.constant 0 : index
    %26 = tpu.strided_load %arg29[%c3, %c0_24] {strides = array<i32: 4, 1>} : memref<2048x8xf32, #tpu.memory_space<vmem>>, vector<512x8xf32>
    %c24 = arith.constant 24 : index
    %c0_25 = arith.constant 0 : index
    %27 = vector.load %arg8[%c24, %c0_25] : memref<32x8xf32, #tpu.memory_space<vmem>>, vector<8x8xf32>
    %cst_26 = arith.constant dense<0.000000e+00> : vector<512x8xf32>
    %28 = tpu.matmul %26, %27, %cst_26 {dimension_numbers = #tpu.dot_dimension_numbers<[1], [0], [0], [1], [0, 0, 1, 1], [], []>} : vector<512x8xf32>, vector<8x8xf32>, vector<512x8xf32> -> vector<512x8xf32>
    %29 = arith.addf %25, %28 : vector<512x8xf32>
    %c0_27 = arith.constant 0 : index
    %c0_28 = arith.constant 0 : index
    %30 = vector.load %arg9[%c0_27, %c0_28] : memref<1x8xf32, #tpu.memory_space<vmem>>, vector<1x8xf32>
    %31 = vector.broadcast %30 : vector<1x8xf32> to vector<512x8xf32>
    %32 = arith.addf %29, %31 : vector<512x8xf32>
    %cst_29 = arith.constant 0.000000e+00 : f32
    %33 = vector.broadcast %cst_29 : f32 to vector<512x8xf32>
    %34 = arith.maximumf %32, %33 : vector<512x8xf32>
    %c0_30 = arith.constant 0 : index
    %c0_31 = arith.constant 0 : index
    %c0_32 = arith.constant 0 : index
    %35 = vector.load %arg3[%c0_30, %c0_31, %c0_32] : memref<1x512x8xf32, #tpu.memory_space<vmem>>, vector<1x512x8xf32>
    %36 = vector.shape_cast %35 : vector<1x512x8xf32> to vector<512x8xf32>
    %37 = arith.addf %34, %36 : vector<512x8xf32>
    %c0_33 = arith.constant 0 : index
    %c0_34 = arith.constant 0 : index
    %38 = vector.load %arg30[%c0_33, %c0_34] : memref<512x8xf32, #tpu.memory_space<vmem>>, vector<512x8xf32>
    tpu.vector_store %arg30[%c0_33, %c0_34], %37 {strides = array<i32>} : memref<512x8xf32, #tpu.memory_space<vmem>>, vector<512x8xf32>,
    %cst_35 = arith.constant 0.000000e+00 : f32
    %39 = vector.broadcast %cst_35 : f32 to vector<128x8xf32>
    %c0_36 = arith.constant 0 : index
    %c0_37 = arith.constant 0 : index
    %40 = tpu.strided_load %arg30[%c0_36, %c0_37] {strides = array<i32: 4, 1>} : memref<512x8xf32, #tpu.memory_space<vmem>>, vector<128x8xf32>
    %c0_38 = arith.constant 0 : index
    %c0_39 = arith.constant 0 : index
    %41 = vector.load %arg10[%c0_38, %c0_39] : memref<32x8xf32, #tpu.memory_space<vmem>>, vector<8x8xf32>
    %cst_40 = arith.constant dense<0.000000e+00> : vector<128x8xf32>
    %42 = tpu.matmul %40, %41, %cst_40 {dimension_numbers = #tpu.dot_dimension_numbers<[1], [0], [0], [1], [0, 0, 1, 1], [], []>} : vector<128x8xf32>, vector<8x8xf32>, vector<128x8xf32> -> vector<128x8xf32>
    %43 = arith.addf %39, %42 : vector<128x8xf32>
    %c1_41 = arith.constant 1 : index
    %c0_42 = arith.constant 0 : index
    %44 = tpu.strided_load %arg30[%c1_41, %c0_42] {strides = array<i32: 4, 1>} : memref<512x8xf32, #tpu.memory_space<vmem>>, vector<128x8xf32>
    %c8_43 = arith.constant 8 : index
    %c0_44 = arith.constant 0 : index
    %45 = vector.load %arg10[%c8_43, %c0_44] : memref<32x8xf32, #tpu.memory_space<vmem>>, vector<8x8xf32>
    %cst_45 = arith.constant dense<0.000000e+00> : vector<128x8xf32>
    %46 = tpu.matmul %44, %45, %cst_45 {dimension_numbers = #tpu.dot_dimension_numbers<[1], [0], [0], [1], [0, 0, 1, 1], [], []>} : vector<128x8xf32>, vector<8x8xf32>, vector<128x8xf32> -> vector<128x8xf32>
    %47 = arith.addf %43, %46 : vector<128x8xf32>
    %c2_46 = arith.constant 2 : index
    %c0_47 = arith.constant 0 : index
    %48 = tpu.strided_load %arg30[%c2_46, %c0_47] {strides = array<i32: 4, 1>} : memref<512x8xf32, #tpu.memory_space<vmem>>, vector<128x8xf32>
    %c16_48 = arith.constant 16 : index
    %c0_49 = arith.constant 0 : index
    %49 = vector.load %arg10[%c16_48, %c0_49] : memref<32x8xf32, #tpu.memory_space<vmem>>, vector<8x8xf32>
    %cst_50 = arith.constant dense<0.000000e+00> : vector<128x8xf32>
    %50 = tpu.matmul %48, %49, %cst_50 {dimension_numbers = #tpu.dot_dimension_numbers<[1], [0], [0], [1], [0, 0, 1, 1], [], []>} : vector<128x8xf32>, vector<8x8xf32>, vector<128x8xf32> -> vector<128x8xf32>
    %51 = arith.addf %47, %50 : vector<128x8xf32>
    %c3_51 = arith.constant 3 : index
    %c0_52 = arith.constant 0 : index
    %52 = tpu.strided_load %arg30[%c3_51, %c0_52] {strides = array<i32: 4, 1>} : memref<512x8xf32, #tpu.memory_space<vmem>>, vector<128x8xf32>
    %c24_53 = arith.constant 24 : index
    %c0_54 = arith.constant 0 : index
    %53 = vector.load %arg10[%c24_53, %c0_54] : memref<32x8xf32, #tpu.memory_space<vmem>>, vector<8x8xf32>
    %cst_55 = arith.constant dense<0.000000e+00> : vector<128x8xf32>
    %54 = tpu.matmul %52, %53, %cst_55 {dimension_numbers = #tpu.dot_dimension_numbers<[1], [0], [0], [1], [0, 0, 1, 1], [], []>} : vector<128x8xf32>, vector<8x8xf32>, vector<128x8xf32> -> vector<128x8xf32>
    %55 = arith.addf %51, %54 : vector<128x8xf32>
    %c0_56 = arith.constant 0 : index
    %c0_57 = arith.constant 0 : index
    %56 = vector.load %arg11[%c0_56, %c0_57] : memref<1x8xf32, #tpu.memory_space<vmem>>, vector<1x8xf32>
    %57 = vector.broadcast %56 : vector<1x8xf32> to vector<128x8xf32>
    %58 = arith.addf %55, %57 : vector<128x8xf32>
    %cst_58 = arith.constant 0.000000e+00 : f32
    %59 = vector.broadcast %cst_58 : f32 to vector<128x8xf32>
    %60 = arith.maximumf %58, %59 : vector<128x8xf32>
    %c0_59 = arith.constant 0 : index
    %c0_60 = arith.constant 0 : index
    %c0_61 = arith.constant 0 : index
    %61 = vector.load %arg4[%c0_59, %c0_60, %c0_61] : memref<1x128x8xf32, #tpu.memory_space<vmem>>, vector<1x128x8xf32>
    %62 = vector.shape_cast %61 : vector<1x128x8xf32> to vector<128x8xf32>
    %63 = arith.addf %60, %62 : vector<128x8xf32>
    %c0_62 = arith.constant 0 : index
    %c0_63 = arith.constant 0 : index
    %64 = vector.load %arg31[%c0_62, %c0_63] : memref<128x8xf32, #tpu.memory_space<vmem>>, vector<128x8xf32>
    tpu.vector_store %arg31[%c0_62, %c0_63], %63 {strides = array<i32>} : memref<128x8xf32, #tpu.memory_space<vmem>>, vector<128x8xf32>,
    %cst_64 = arith.constant 0.000000e+00 : f32
    %65 = vector.broadcast %cst_64 : f32 to vector<32x8xf32>
    %c0_65 = arith.constant 0 : index
    %c0_66 = arith.constant 0 : index
    %66 = tpu.strided_load %arg31[%c0_65, %c0_66] {strides = array<i32: 4, 1>} : memref<128x8xf32, #tpu.memory_space<vmem>>, vector<32x8xf32>
    %c0_67 = arith.constant 0 : index
    %c0_68 = arith.constant 0 : index
    %67 = vector.load %arg12[%c0_67, %c0_68] : memref<32x8xf32, #tpu.memory_space<vmem>>, vector<8x8xf32>
    %cst_69 = arith.constant dense<0.000000e+00> : vector<32x8xf32>
    %68 = tpu.matmul %66, %67, %cst_69 {dimension_numbers = #tpu.dot_dimension_numbers<[1], [0], [0], [1], [0, 0, 1, 1], [], []>} : vector<32x8xf32>, vector<8x8xf32>, vector<32x8xf32> -> vector<32x8xf32>
    %69 = arith.addf %65, %68 : vector<32x8xf32>
    %c1_70 = arith.constant 1 : index
    %c0_71 = arith.constant 0 : index
    %70 = tpu.strided_load %arg31[%c1_70, %c0_71] {strides = array<i32: 4, 1>} : memref<128x8xf32, #tpu.memory_space<vmem>>, vector<32x8xf32>
    %c8_72 = arith.constant 8 : index
    %c0_73 = arith.constant 0 : index
    %71 = vector.load %arg12[%c8_72, %c0_73] : memref<32x8xf32, #tpu.memory_space<vmem>>, vector<8x8xf32>
    %cst_74 = arith.constant dense<0.000000e+00> : vector<32x8xf32>
    %72 = tpu.matmul %70, %71, %cst_74 {dimension_numbers = #tpu.dot_dimension_numbers<[1], [0], [0], [1], [0, 0, 1, 1], [], []>} : vector<32x8xf32>, vector<8x8xf32>, vector<32x8xf32> -> vector<32x8xf32>
    %73 = arith.addf %69, %72 : vector<32x8xf32>
    %c2_75 = arith.constant 2 : index
    %c0_76 = arith.constant 0 : index
    %74 = tpu.strided_load %arg31[%c2_75, %c0_76] {strides = array<i32: 4, 1>} : memref<128x8xf32, #tpu.memory_space<vmem>>, vector<32x8xf32>
    %c16_77 = arith.constant 16 : index
    %c0_78 = arith.constant 0 : index
    %75 = vector.load %arg12[%c16_77, %c0_78] : memref<32x8xf32, #tpu.memory_space<vmem>>, vector<8x8xf32>
    %cst_79 = arith.constant dense<0.000000e+00> : vector<32x8xf32>
    %76 = tpu.matmul %74, %75, %cst_79 {dimension_numbers = #tpu.dot_dimension_numbers<[1], [0], [0], [1], [0, 0, 1, 1], [], []>} : vector<32x8xf32>, vector<8x8xf32>, vector<32x8xf32> -> vector<32x8xf32>
    %77 = arith.addf %73, %76 : vector<32x8xf32>
    %c3_80 = arith.constant 3 : index
    %c0_81 = arith.constant 0 : index
    %78 = tpu.strided_load %arg31[%c3_80, %c0_81] {strides = array<i32: 4, 1>} : memref<128x8xf32, #tpu.memory_space<vmem>>, vector<32x8xf32>
    %c24_82 = arith.constant 24 : index
    %c0_83 = arith.constant 0 : index
    %79 = vector.load %arg12[%c24_82, %c0_83] : memref<32x8xf32, #tpu.memory_space<vmem>>, vector<8x8xf32>
    %cst_84 = arith.constant dense<0.000000e+00> : vector<32x8xf32>
    %80 = tpu.matmul %78, %79, %cst_84 {dimension_numbers = #tpu.dot_dimension_numbers<[1], [0], [0], [1], [0, 0, 1, 1], [], []>} : vector<32x8xf32>, vector<8x8xf32>, vector<32x8xf32> -> vector<32x8xf32>
    %81 = arith.addf %77, %80 : vector<32x8xf32>
    %c0_85 = arith.constant 0 : index
    %c0_86 = arith.constant 0 : index
    %82 = vector.load %arg13[%c0_85, %c0_86] : memref<1x8xf32, #tpu.memory_space<vmem>>, vector<1x8xf32>
    %83 = vector.broadcast %82 : vector<1x8xf32> to vector<32x8xf32>
    %84 = arith.addf %81, %83 : vector<32x8xf32>
    %cst_87 = arith.constant 0.000000e+00 : f32
    %85 = vector.broadcast %cst_87 : f32 to vector<32x8xf32>
    %86 = arith.maximumf %84, %85 : vector<32x8xf32>
    %c0_88 = arith.constant 0 : index
    %c0_89 = arith.constant 0 : index
    %c0_90 = arith.constant 0 : index
    %87 = vector.load %arg5[%c0_88, %c0_89, %c0_90] : memref<1x32x8xf32, #tpu.memory_space<vmem>>, vector<1x32x8xf32>
    %88 = vector.shape_cast %87 : vector<1x32x8xf32> to vector<32x8xf32>
    %89 = arith.addf %86, %88 : vector<32x8xf32>
    %c0_91 = arith.constant 0 : index
    %c0_92 = arith.constant 0 : index
    %90 = vector.load %arg32[%c0_91, %c0_92] : memref<32x8xf32, #tpu.memory_space<vmem>>, vector<32x8xf32>
    tpu.vector_store %arg32[%c0_91, %c0_92], %89 {strides = array<i32>} : memref<32x8xf32, #tpu.memory_space<vmem>>, vector<32x8xf32>,
    %cst_93 = arith.constant 0.000000e+00 : f32
    %91 = vector.broadcast %cst_93 : f32 to vector<2x8xf32>
    %c0_94 = arith.constant 0 : index
    %c0_95 = arith.constant 0 : index
    %92 = tpu.strided_load %arg32[%c0_94, %c0_95] {strides = array<i32: 16, 1>} : memref<32x8xf32, #tpu.memory_space<vmem>>, vector<2x8xf32>
    %c0_96 = arith.constant 0 : index
    %c0_97 = arith.constant 0 : index
    %93 = vector.load %arg14[%c0_96, %c0_97] : memref<128x8xf32, #tpu.memory_space<vmem>>, vector<8x8xf32>
    %cst_98 = arith.constant dense<0.000000e+00> : vector<2x8xf32>
    %94 = tpu.matmul %92, %93, %cst_98 {dimension_numbers = #tpu.dot_dimension_numbers<[1], [0], [0], [1], [0, 0, 1, 1], [], []>} : vector<2x8xf32>, vector<8x8xf32>, vector<2x8xf32> -> vector<2x8xf32>
    %95 = arith.addf %91, %94 : vector<2x8xf32>
    %c1_99 = arith.constant 1 : index
    %c0_100 = arith.constant 0 : index
    %96 = tpu.strided_load %arg32[%c1_99, %c0_100] {strides = array<i32: 16, 1>} : memref<32x8xf32, #tpu.memory_space<vmem>>, vector<2x8xf32>
    %c8_101 = arith.constant 8 : index
    %c0_102 = arith.constant 0 : index
    %97 = vector.load %arg14[%c8_101, %c0_102] : memref<128x8xf32, #tpu.memory_space<vmem>>, vector<8x8xf32>
    %cst_103 = arith.constant dense<0.000000e+00> : vector<2x8xf32>
    %98 = tpu.matmul %96, %97, %cst_103 {dimension_numbers = #tpu.dot_dimension_numbers<[1], [0], [0], [1], [0, 0, 1, 1], [], []>} : vector<2x8xf32>, vector<8x8xf32>, vector<2x8xf32> -> vector<2x8xf32>
    %99 = arith.addf %95, %98 : vector<2x8xf32>
    %c2_104 = arith.constant 2 : index
    %c0_105 = arith.constant 0 : index
    %100 = tpu.strided_load %arg32[%c2_104, %c0_105] {strides = array<i32: 16, 1>} : memref<32x8xf32, #tpu.memory_space<vmem>>, vector<2x8xf32>
    %c16_106 = arith.constant 16 : index
    %c0_107 = arith.constant 0 : index
    %101 = vector.load %arg14[%c16_106, %c0_107] : memref<128x8xf32, #tpu.memory_space<vmem>>, vector<8x8xf32>
    %cst_108 = arith.constant dense<0.000000e+00> : vector<2x8xf32>
    %102 = tpu.matmul %100, %101, %cst_108 {dimension_numbers = #tpu.dot_dimension_numbers<[1], [0], [0], [1], [0, 0, 1, 1], [], []>} : vector<2x8xf32>, vector<8x8xf32>, vector<2x8xf32> -> vector<2x8xf32>
    %103 = arith.addf %99, %102 : vector<2x8xf32>
    %c3_109 = arith.constant 3 : index
    %c0_110 = arith.constant 0 : index
    %104 = tpu.strided_load %arg32[%c3_109, %c0_110] {strides = array<i32: 16, 1>} : memref<32x8xf32, #tpu.memory_space<vmem>>, vector<2x8xf32>
    %c24_111 = arith.constant 24 : index
    %c0_112 = arith.constant 0 : index
    %105 = vector.load %arg14[%c24_111, %c0_112] : memref<128x8xf32, #tpu.memory_space<vmem>>, vector<8x8xf32>
    %cst_113 = arith.constant dense<0.000000e+00> : vector<2x8xf32>
    %106 = tpu.matmul %104, %105, %cst_113 {dimension_numbers = #tpu.dot_dimension_numbers<[1], [0], [0], [1], [0, 0, 1, 1], [], []>} : vector<2x8xf32>, vector<8x8xf32>, vector<2x8xf32> -> vector<2x8xf32>
    %107 = arith.addf %103, %106 : vector<2x8xf32>
    %c4 = arith.constant 4 : index
    %c0_114 = arith.constant 0 : index
    %108 = tpu.strided_load %arg32[%c4, %c0_114] {strides = array<i32: 16, 1>} : memref<32x8xf32, #tpu.memory_space<vmem>>, vector<2x8xf32>
    %c32 = arith.constant 32 : index
    %c0_115 = arith.constant 0 : index
    %109 = vector.load %arg14[%c32, %c0_115] : memref<128x8xf32, #tpu.memory_space<vmem>>, vector<8x8xf32>
    %cst_116 = arith.constant dense<0.000000e+00> : vector<2x8xf32>
    %110 = tpu.matmul %108, %109, %cst_116 {dimension_numbers = #tpu.dot_dimension_numbers<[1], [0], [0], [1], [0, 0, 1, 1], [], []>} : vector<2x8xf32>, vector<8x8xf32>, vector<2x8xf32> -> vector<2x8xf32>
    %111 = arith.addf %107, %110 : vector<2x8xf32>
    %c5 = arith.constant 5 : index
    %c0_117 = arith.constant 0 : index
    %112 = tpu.strided_load %arg32[%c5, %c0_117] {strides = array<i32: 16, 1>} : memref<32x8xf32, #tpu.memory_space<vmem>>, vector<2x8xf32>
    %c40 = arith.constant 40 : index
    %c0_118 = arith.constant 0 : index
    %113 = vector.load %arg14[%c40, %c0_118] : memref<128x8xf32, #tpu.memory_space<vmem>>, vector<8x8xf32>
    %cst_119 = arith.constant dense<0.000000e+00> : vector<2x8xf32>
    %114 = tpu.matmul %112, %113, %cst_119 {dimension_numbers = #tpu.dot_dimension_numbers<[1], [0], [0], [1], [0, 0, 1, 1], [], []>} : vector<2x8xf32>, vector<8x8xf32>, vector<2x8xf32> -> vector<2x8xf32>
    %115 = arith.addf %111, %114 : vector<2x8xf32>
    %c6 = arith.constant 6 : index
    %c0_120 = arith.constant 0 : index
    %116 = tpu.strided_load %arg32[%c6, %c0_120] {strides = array<i32: 16, 1>} : memref<32x8xf32, #tpu.memory_space<vmem>>, vector<2x8xf32>
    %c48 = arith.constant 48 : index
    %c0_121 = arith.constant 0 : index
    %117 = vector.load %arg14[%c48, %c0_121] : memref<128x8xf32, #tpu.memory_space<vmem>>, vector<8x8xf32>
    %cst_122 = arith.constant dense<0.000000e+00> : vector<2x8xf32>
    %118 = tpu.matmul %116, %117, %cst_122 {dimension_numbers = #tpu.dot_dimension_numbers<[1], [0], [0], [1], [0, 0, 1, 1], [], []>} : vector<2x8xf32>, vector<8x8xf32>, vector<2x8xf32> -> vector<2x8xf32>
    %119 = arith.addf %115, %118 : vector<2x8xf32>
    %c7 = arith.constant 7 : index
    %c0_123 = arith.constant 0 : index
    %120 = tpu.strided_load %arg32[%c7, %c0_123] {strides = array<i32: 16, 1>} : memref<32x8xf32, #tpu.memory_space<vmem>>, vector<2x8xf32>
    %c56 = arith.constant 56 : index
    %c0_124 = arith.constant 0 : index
    %121 = vector.load %arg14[%c56, %c0_124] : memref<128x8xf32, #tpu.memory_space<vmem>>, vector<8x8xf32>
    %cst_125 = arith.constant dense<0.000000e+00> : vector<2x8xf32>
    %122 = tpu.matmul %120, %121, %cst_125 {dimension_numbers = #tpu.dot_dimension_numbers<[1], [0], [0], [1], [0, 0, 1, 1], [], []>} : vector<2x8xf32>, vector<8x8xf32>, vector<2x8xf32> -> vector<2x8xf32>
    %123 = arith.addf %119, %122 : vector<2x8xf32>
    %c8_126 = arith.constant 8 : index
    %c0_127 = arith.constant 0 : index
    %124 = tpu.strided_load %arg32[%c8_126, %c0_127] {strides = array<i32: 16, 1>} : memref<32x8xf32, #tpu.memory_space<vmem>>, vector<2x8xf32>
    %c64 = arith.constant 64 : index
    %c0_128 = arith.constant 0 : index
    %125 = vector.load %arg14[%c64, %c0_128] : memref<128x8xf32, #tpu.memory_space<vmem>>, vector<8x8xf32>
    %cst_129 = arith.constant dense<0.000000e+00> : vector<2x8xf32>
    %126 = tpu.matmul %124, %125, %cst_129 {dimension_numbers = #tpu.dot_dimension_numbers<[1], [0], [0], [1], [0, 0, 1, 1], [], []>} : vector<2x8xf32>, vector<8x8xf32>, vector<2x8xf32> -> vector<2x8xf32>
    %127 = arith.addf %123, %126 : vector<2x8xf32>
    %c9 = arith.constant 9 : index
    %c0_130 = arith.constant 0 : index
    %128 = tpu.strided_load %arg32[%c9, %c0_130] {strides = array<i32: 16, 1>} : memref<32x8xf32, #tpu.memory_space<vmem>>, vector<2x8xf32>
    %c72 = arith.constant 72 : index
    %c0_131 = arith.constant 0 : index
    %129 = vector.load %arg14[%c72, %c0_131] : memref<128x8xf32, #tpu.memory_space<vmem>>, vector<8x8xf32>
    %cst_132 = arith.constant dense<0.000000e+00> : vector<2x8xf32>
    %130 = tpu.matmul %128, %129, %cst_132 {dimension_numbers = #tpu.dot_dimension_numbers<[1], [0], [0], [1], [0, 0, 1, 1], [], []>} : vector<2x8xf32>, vector<8x8xf32>, vector<2x8xf32> -> vector<2x8xf32>
    %131 = arith.addf %127, %130 : vector<2x8xf32>
    %c10 = arith.constant 10 : index
    %c0_133 = arith.constant 0 : index
    %132 = tpu.strided_load %arg32[%c10, %c0_133] {strides = array<i32: 16, 1>} : memref<32x8xf32, #tpu.memory_space<vmem>>, vector<2x8xf32>
    %c80 = arith.constant 80 : index
    %c0_134 = arith.constant 0 : index
    %133 = vector.load %arg14[%c80, %c0_134] : memref<128x8xf32, #tpu.memory_space<vmem>>, vector<8x8xf32>
    %cst_135 = arith.constant dense<0.000000e+00> : vector<2x8xf32>
    %134 = tpu.matmul %132, %133, %cst_135 {dimension_numbers = #tpu.dot_dimension_numbers<[1], [0], [0], [1], [0, 0, 1, 1], [], []>} : vector<2x8xf32>, vector<8x8xf32>, vector<2x8xf32> -> vector<2x8xf32>
    %135 = arith.addf %131, %134 : vector<2x8xf32>
    %c11 = arith.constant 11 : index
    %c0_136 = arith.constant 0 : index
    %136 = tpu.strided_load %arg32[%c11, %c0_136] {strides = array<i32: 16, 1>} : memref<32x8xf32, #tpu.memory_space<vmem>>, vector<2x8xf32>
    %c88 = arith.constant 88 : index
    %c0_137 = arith.constant 0 : index
    %137 = vector.load %arg14[%c88, %c0_137] : memref<128x8xf32, #tpu.memory_space<vmem>>, vector<8x8xf32>
    %cst_138 = arith.constant dense<0.000000e+00> : vector<2x8xf32>
    %138 = tpu.matmul %136, %137, %cst_138 {dimension_numbers = #tpu.dot_dimension_numbers<[1], [0], [0], [1], [0, 0, 1, 1], [], []>} : vector<2x8xf32>, vector<8x8xf32>, vector<2x8xf32> -> vector<2x8xf32>
    %139 = arith.addf %135, %138 : vector<2x8xf32>
    %c12 = arith.constant 12 : index
    %c0_139 = arith.constant 0 : index
    %140 = tpu.strided_load %arg32[%c12, %c0_139] {strides = array<i32: 16, 1>} : memref<32x8xf32, #tpu.memory_space<vmem>>, vector<2x8xf32>
    %c96 = arith.constant 96 : index
    %c0_140 = arith.constant 0 : index
    %141 = vector.load %arg14[%c96, %c0_140] : memref<128x8xf32, #tpu.memory_space<vmem>>, vector<8x8xf32>
    %cst_141 = arith.constant dense<0.000000e+00> : vector<2x8xf32>
    %142 = tpu.matmul %140, %141, %cst_141 {dimension_numbers = #tpu.dot_dimension_numbers<[1], [0], [0], [1], [0, 0, 1, 1], [], []>} : vector<2x8xf32>, vector<8x8xf32>, vector<2x8xf32> -> vector<2x8xf32>
    %143 = arith.addf %139, %142 : vector<2x8xf32>
    %c13 = arith.constant 13 : index
    %c0_142 = arith.constant 0 : index
    %144 = tpu.strided_load %arg32[%c13, %c0_142] {strides = array<i32: 16, 1>} : memref<32x8xf32, #tpu.memory_space<vmem>>, vector<2x8xf32>
    %c104 = arith.constant 104 : index
    %c0_143 = arith.constant 0 : index
    %145 = vector.load %arg14[%c104, %c0_143] : memref<128x8xf32, #tpu.memory_space<vmem>>, vector<8x8xf32>
    %cst_144 = arith.constant dense<0.000000e+00> : vector<2x8xf32>
    %146 = tpu.matmul %144, %145, %cst_144 {dimension_numbers = #tpu.dot_dimension_numbers<[1], [0], [0], [1], [0, 0, 1, 1], [], []>} : vector<2x8xf32>, vector<8x8xf32>, vector<2x8xf32> -> vector<2x8xf32>
    %147 = arith.addf %143, %146 : vector<2x8xf32>
    %c14 = arith.constant 14 : index
    %c0_145 = arith.constant 0 : index
    %148 = tpu.strided_load %arg32[%c14, %c0_145] {strides = array<i32: 16, 1>} : memref<32x8xf32, #tpu.memory_space<vmem>>, vector<2x8xf32>
    %c112 = arith.constant 112 : index
    %c0_146 = arith.constant 0 : index
    %149 = vector.load %arg14[%c112, %c0_146] : memref<128x8xf32, #tpu.memory_space<vmem>>, vector<8x8xf32>
    %cst_147 = arith.constant dense<0.000000e+00> : vector<2x8xf32>
    %150 = tpu.matmul %148, %149, %cst_147 {dimension_numbers = #tpu.dot_dimension_numbers<[1], [0], [0], [1], [0, 0, 1, 1], [], []>} : vector<2x8xf32>, vector<8x8xf32>, vector<2x8xf32> -> vector<2x8xf32>
    %151 = arith.addf %147, %150 : vector<2x8xf32>
    %c15 = arith.constant 15 : index
    %c0_148 = arith.constant 0 : index
    %152 = tpu.strided_load %arg32[%c15, %c0_148] {strides = array<i32: 16, 1>} : memref<32x8xf32, #tpu.memory_space<vmem>>, vector<2x8xf32>
    %c120 = arith.constant 120 : index
    %c0_149 = arith.constant 0 : index
    %153 = vector.load %arg14[%c120, %c0_149] : memref<128x8xf32, #tpu.memory_space<vmem>>, vector<8x8xf32>
    %cst_150 = arith.constant dense<0.000000e+00> : vector<2x8xf32>
    %154 = tpu.matmul %152, %153, %cst_150 {dimension_numbers = #tpu.dot_dimension_numbers<[1], [0], [0], [1], [0, 0, 1, 1], [], []>} : vector<2x8xf32>, vector<8x8xf32>, vector<2x8xf32> -> vector<2x8xf32>
    %155 = arith.addf %151, %154 : vector<2x8xf32>
    %c0_151 = arith.constant 0 : index
    %c0_152 = arith.constant 0 : index
    %156 = vector.load %arg15[%c0_151, %c0_152] : memref<1x8xf32, #tpu.memory_space<vmem>>, vector<1x8xf32>
    %157 = vector.broadcast %156 : vector<1x8xf32> to vector<2x8xf32>
    %158 = arith.addf %155, %157 : vector<2x8xf32>
    %cst_153 = arith.constant 0.000000e+00 : f32
    %159 = vector.broadcast %cst_153 : f32 to vector<2x8xf32>
    %160 = arith.maximumf %158, %159 : vector<2x8xf32>
    %c0_154 = arith.constant 0 : index
    %c0_155 = arith.constant 0 : index
    %161 = vector.load %arg16[%c0_154, %c0_155] : memref<8x128xf32, #tpu.memory_space<vmem>>, vector<8x128xf32>
    %cst_156 = arith.constant dense<0.000000e+00> : vector<2x128xf32>
    %162 = tpu.matmul %160, %161, %cst_156 {dimension_numbers = #tpu.dot_dimension_numbers<[1], [0], [0], [1], [0, 0, 1, 1], [], []>} : vector<2x8xf32>, vector<8x128xf32>, vector<2x128xf32> -> vector<2x128xf32>
    %c0_157 = arith.constant 0 : index
    %c0_158 = arith.constant 0 : index
    %163 = vector.load %arg17[%c0_157, %c0_158] : memref<1x128xf32, #tpu.memory_space<vmem>>, vector<1x128xf32>
    %164 = vector.broadcast %163 : vector<1x128xf32> to vector<2x128xf32>
    %165 = arith.addf %162, %164 : vector<2x128xf32>
    %cst_159 = arith.constant 0.000000e+00 : f32
    %166 = vector.broadcast %cst_159 : f32 to vector<2x128xf32>
    %167 = arith.maximumf %165, %166 : vector<2x128xf32>
    %c0_160 = arith.constant 0 : index
    %c0_161 = arith.constant 0 : index
    %168 = vector.load %arg18[%c0_160, %c0_161] : memref<128x64xf32, #tpu.memory_space<vmem>>, vector<128x64xf32>
    %cst_162 = arith.constant dense<0.000000e+00> : vector<2x64xf32>
    %169 = tpu.matmul %167, %168, %cst_162 {dimension_numbers = #tpu.dot_dimension_numbers<[1], [0], [0], [1], [0, 0, 1, 1], [], []>} : vector<2x128xf32>, vector<128x64xf32>, vector<2x64xf32> -> vector<2x64xf32>
    %c0_163 = arith.constant 0 : index
    %c0_164 = arith.constant 0 : index
    %170 = vector.load %arg19[%c0_163, %c0_164] : memref<1x64xf32, #tpu.memory_space<vmem>>, vector<1x64xf32>
    %171 = vector.broadcast %170 : vector<1x64xf32> to vector<2x64xf32>
    %172 = arith.addf %169, %171 : vector<2x64xf32>
    %cst_165 = arith.constant 0.000000e+00 : f32
    %173 = vector.broadcast %cst_165 : f32 to vector<2x64xf32>
    %174 = arith.maximumf %172, %173 : vector<2x64xf32>
    %c0_166 = arith.constant 0 : index
    %c0_167 = arith.constant 0 : index
    %175 = vector.load %arg20[%c0_166, %c0_167] : memref<64x32xf32, #tpu.memory_space<vmem>>, vector<64x32xf32>
    %cst_168 = arith.constant dense<0.000000e+00> : vector<2x32xf32>
    %176 = tpu.matmul %174, %175, %cst_168 {dimension_numbers = #tpu.dot_dimension_numbers<[1], [0], [0], [1], [0, 0, 1, 1], [], []>} : vector<2x64xf32>, vector<64x32xf32>, vector<2x32xf32> -> vector<2x32xf32>
    %c0_169 = arith.constant 0 : index
    %c0_170 = arith.constant 0 : index
    %177 = vector.load %arg21[%c0_169, %c0_170] : memref<1x32xf32, #tpu.memory_space<vmem>>, vector<1x32xf32>
    %178 = vector.broadcast %177 : vector<1x32xf32> to vector<2x32xf32>
    %179 = arith.addf %176, %178 : vector<2x32xf32>
    %cst_171 = arith.constant 0.000000e+00 : f32
    %180 = vector.broadcast %cst_171 : f32 to vector<2x32xf32>
    %181 = arith.maximumf %179, %180 : vector<2x32xf32>
    %c0_172 = arith.constant 0 : index
    %c0_173 = arith.constant 0 : index
    %182 = vector.load %arg22[%c0_172, %c0_173] : memref<32x16xf32, #tpu.memory_space<vmem>>, vector<32x16xf32>
    %cst_174 = arith.constant dense<0.000000e+00> : vector<2x16xf32>
    %183 = tpu.matmul %181, %182, %cst_174 {dimension_numbers = #tpu.dot_dimension_numbers<[1], [0], [0], [1], [0, 0, 1, 1], [], []>} : vector<2x32xf32>, vector<32x16xf32>, vector<2x16xf32> -> vector<2x16xf32>
    %c0_175 = arith.constant 0 : index
    %c0_176 = arith.constant 0 : index
    %184 = vector.load %arg23[%c0_175, %c0_176] : memref<1x16xf32, #tpu.memory_space<vmem>>, vector<1x16xf32>
    %185 = vector.broadcast %184 : vector<1x16xf32> to vector<2x16xf32>
    %186 = arith.addf %183, %185 : vector<2x16xf32>
    %cst_177 = arith.constant 0.000000e+00 : f32
    %187 = vector.broadcast %cst_177 : f32 to vector<2x16xf32>
    %188 = arith.maximumf %186, %187 : vector<2x16xf32>
    %c0_178 = arith.constant 0 : index
    %c0_179 = arith.constant 0 : index
    %189 = vector.load %arg24[%c0_178, %c0_179] : memref<16x8xf32, #tpu.memory_space<vmem>>, vector<16x8xf32>
    %cst_180 = arith.constant dense<0.000000e+00> : vector<2x8xf32>
    %190 = tpu.matmul %188, %189, %cst_180 {dimension_numbers = #tpu.dot_dimension_numbers<[1], [0], [0], [1], [0, 0, 1, 1], [], []>} : vector<2x16xf32>, vector<16x8xf32>, vector<2x8xf32> -> vector<2x8xf32>
    %c0_181 = arith.constant 0 : index
    %c0_182 = arith.constant 0 : index
    %191 = vector.load %arg25[%c0_181, %c0_182] : memref<1x8xf32, #tpu.memory_space<vmem>>, vector<1x8xf32>
    %192 = vector.broadcast %191 : vector<1x8xf32> to vector<2x8xf32>
    %193 = arith.addf %190, %192 : vector<2x8xf32>
    %cst_183 = arith.constant 0.000000e+00 : f32
    %194 = vector.broadcast %cst_183 : f32 to vector<2x8xf32>
    %195 = arith.maximumf %193, %194 : vector<2x8xf32>
    %c0_184 = arith.constant 0 : index
    %c0_185 = arith.constant 0 : index
    %196 = vector.load %arg26[%c0_184, %c0_185] : memref<8x1xf32, #tpu.memory_space<vmem>>, vector<8x1xf32>
    %cst_186 = arith.constant dense<0.000000e+00> : vector<2x1xf32>
    %197 = tpu.matmul %195, %196, %cst_186 {dimension_numbers = #tpu.dot_dimension_numbers<[1], [0], [0], [1], [0, 0, 1, 1], [], []>} : vector<2x8xf32>, vector<8x1xf32>, vector<2x1xf32> -> vector<2x1xf32>
    %c0_187 = arith.constant 0 : index
    %c0_188 = arith.constant 0 : index
    %198 = vector.load %arg27[%c0_187, %c0_188] : memref<1x1xf32, #tpu.memory_space<vmem>>, vector<1x1xf32>
    %199 = vector.broadcast %198 : vector<1x1xf32> to vector<2x1xf32>
    %200 = arith.addf %197, %199 : vector<2x1xf32>
    %201 = vector.shape_cast %200 : vector<2x1xf32> to vector<2x1xf32>
    %202 = vector.broadcast %201 : vector<2x1xf32> to vector<2x128xf32>
    %c0_189 = arith.constant 0 : index
    %c0_190 = arith.constant 0 : index
    %c0_191 = arith.constant 0 : index
    %203 = vector.load %arg28[%c0_189, %c0_190, %c0_191] : memref<1x2x128xf32, #tpu.memory_space<vmem>>, vector<1x2x128xf32>
    %204 = vector.shape_cast %203 : vector<1x2x128xf32> to vector<2x128xf32>
    %205 = vector.shape_cast %202 : vector<2x128xf32> to vector<1x2x128xf32>
    tpu.vector_store %arg28[%c0_189, %c0_190, %c0_191], %205 {strides = array<i32>} : memref<1x2x128xf32, #tpu.memory_space<vmem>>, vector<1x2x128xf32>,
    return
  }
  func.func @transform_0(%arg0: i32) -> (i32, i32, i32) {
    %c0_i32 = arith.constant 0 : i32
    %c0_i32_0 = arith.constant 0 : i32
    %c0_i32_1 = arith.constant 0 : i32
    return %arg0, %c0_i32, %c0_i32_0 : i32, i32, i32
  }
  func.func @transform_1(%arg0: i32) -> (i32, i32, i32) {
    %c0_i32 = arith.constant 0 : i32
    %c0_i32_0 = arith.constant 0 : i32
    %c0_i32_1 = arith.constant 0 : i32
    return %arg0, %c0_i32, %c0_i32_0 : i32, i32, i32
  }
  func.func @transform_2(%arg0: i32) -> (i32, i32, i32) {
    %c0_i32 = arith.constant 0 : i32
    %c0_i32_0 = arith.constant 0 : i32
    %c0_i32_1 = arith.constant 0 : i32
    return %arg0, %c0_i32, %c0_i32_0 : i32, i32, i32
  }
  func.func @transform_3(%arg0: i32) -> (i32, i32, i32) {
    %c0_i32 = arith.constant 0 : i32
    %c0_i32_0 = arith.constant 0 : i32
    %c0_i32_1 = arith.constant 0 : i32
    return %arg0, %c0_i32, %c0_i32_0 : i32, i32, i32
  }
  func.func @transform_4(%arg0: i32) -> (i32, i32, i32) {
    %c0_i32 = arith.constant 0 : i32
    %c0_i32_0 = arith.constant 0 : i32
    %c0_i32_1 = arith.constant 0 : i32
    return %arg0, %c0_i32, %c0_i32_0 : i32, i32, i32
  }
  func.func @transform_5(%arg0: i32) -> (i32, i32) {
    %c0_i32 = arith.constant 0 : i32
    %c0_i32_0 = arith.constant 0 : i32
    %c0_i32_1 = arith.constant 0 : i32
    return %c0_i32, %c0_i32_0 : i32, i32
  }
  func.func @transform_6(%arg0: i32) -> (i32, i32) {
    %c0_i32 = arith.constant 0 : i32
    %c0_i32_0 = arith.constant 0 : i32
    %c0_i32_1 = arith.constant 0 : i32
    return %c0_i32, %c0_i32_0 : i32, i32
  }
  func.func @transform_7(%arg0: i32) -> (i32, i32) {
    %c0_i32 = arith.constant 0 : i32
    %c0_i32_0 = arith.constant 0 : i32
    %c0_i32_1 = arith.constant 0 : i32
    return %c0_i32, %c0_i32_0 : i32, i32
  }
  func.func @transform_8(%arg0: i32) -> (i32, i32) {
    %c0_i32 = arith.constant 0 : i32
    %c0_i32_0 = arith.constant 0 : i32
    %c0_i32_1 = arith.constant 0 : i32
    return %c0_i32, %c0_i32_0 : i32, i32
  }
  func.func @transform_9(%arg0: i32) -> (i32, i32) {
    %c0_i32 = arith.constant 0 : i32
    %c0_i32_0 = arith.constant 0 : i32
    %c0_i32_1 = arith.constant 0 : i32
    return %c0_i32, %c0_i32_0 : i32, i32
  }
  func.func @transform_10(%arg0: i32) -> (i32, i32) {
    %c0_i32 = arith.constant 0 : i32
    %c0_i32_0 = arith.constant 0 : i32
    %c0_i32_1 = arith.constant 0 : i32
    return %c0_i32, %c0_i32_0 : i32, i32
  }
  func.func @transform_11(%arg0: i32) -> (i32, i32) {
    %c0_i32 = arith.constant 0 : i32
    %c0_i32_0 = arith.constant 0 : i32
    %c0_i32_1 = arith.constant 0 : i32
    return %c0_i32, %c0_i32_0 : i32, i32
  }
  func.func @transform_12(%arg0: i32) -> (i32, i32) {
    %c0_i32 = arith.constant 0 : i32
    %c0_i32_0 = arith.constant 0 : i32
    %c0_i32_1 = arith.constant 0 : i32
    return %c0_i32, %c0_i32_0 : i32, i32
  }
  func.func @transform_13(%arg0: i32) -> (i32, i32) {
    %c0_i32 = arith.constant 0 : i32
    %c0_i32_0 = arith.constant 0 : i32
    %c0_i32_1 = arith.constant 0 : i32
    return %c0_i32, %c0_i32_0 : i32, i32
  }
  func.func @transform_14(%arg0: i32) -> (i32, i32) {
    %c0_i32 = arith.constant 0 : i32
    %c0_i32_0 = arith.constant 0 : i32
    %c0_i32_1 = arith.constant 0 : i32
    return %c0_i32, %c0_i32_0 : i32, i32
  }
  func.func @transform_15(%arg0: i32) -> (i32, i32) {
    %c0_i32 = arith.constant 0 : i32
    %c0_i32_0 = arith.constant 0 : i32
    %c0_i32_1 = arith.constant 0 : i32
    return %c0_i32, %c0_i32_0 : i32, i32
  }
  func.func @transform_16(%arg0: i32) -> (i32, i32) {
    %c0_i32 = arith.constant 0 : i32
    %c0_i32_0 = arith.constant 0 : i32
    %c0_i32_1 = arith.constant 0 : i32
    return %c0_i32, %c0_i32_0 : i32, i32
  }
  func.func @transform_17(%arg0: i32) -> (i32, i32) {
    %c0_i32 = arith.constant 0 : i32
    %c0_i32_0 = arith.constant 0 : i32
    %c0_i32_1 = arith.constant 0 : i32
    return %c0_i32, %c0_i32_0 : i32, i32
  }
  func.func @transform_18(%arg0: i32) -> (i32, i32) {
    %c0_i32 = arith.constant 0 : i32
    %c0_i32_0 = arith.constant 0 : i32
    %c0_i32_1 = arith.constant 0 : i32
    return %c0_i32, %c0_i32_0 : i32, i32
  }
  func.func @transform_19(%arg0: i32) -> (i32, i32) {
    %c0_i32 = arith.constant 0 : i32
    %c0_i32_0 = arith.constant 0 : i32
    %c0_i32_1 = arith.constant 0 : i32
    return %c0_i32, %c0_i32_0 : i32, i32
  }
  func.func @transform_20(%arg0: i32) -> (i32, i32) {
    %c0_i32 = arith.constant 0 : i32
    %c0_i32_0 = arith.constant 0 : i32
    %c0_i32_1 = arith.constant 0 : i32
    return %c0_i32, %c0_i32_0 : i32, i32
  }
  func.func @transform_21(%arg0: i32) -> (i32, i32) {
    %c0_i32 = arith.constant 0 : i32
    %c0_i32_0 = arith.constant 0 : i32
    %c0_i32_1 = arith.constant 0 : i32
    return %c0_i32, %c0_i32_0 : i32, i32
  }
  func.func @transform_22(%arg0: i32) -> (i32, i32) {
    %c0_i32 = arith.constant 0 : i32
    %c0_i32_0 = arith.constant 0 : i32
    %c0_i32_1 = arith.constant 0 : i32
    return %c0_i32, %c0_i32_0 : i32, i32
  }
  func.func @transform_23(%arg0: i32) -> (i32, i32) {
    %c0_i32 = arith.constant 0 : i32
    %c0_i32_0 = arith.constant 0 : i32
    %c0_i32_1 = arith.constant 0 : i32
    return %c0_i32, %c0_i32_0 : i32, i32
  }
  func.func @transform_24(%arg0: i32) -> (i32, i32) {
    %c0_i32 = arith.constant 0 : i32
    %c0_i32_0 = arith.constant 0 : i32
    %c0_i32_1 = arith.constant 0 : i32
    return %c0_i32, %c0_i32_0 : i32, i32
  }
  func.func @transform_25(%arg0: i32) -> (i32, i32) {
    %c0_i32 = arith.constant 0 : i32
    %c0_i32_0 = arith.constant 0 : i32
    %c0_i32_1 = arith.constant 0 : i32
    return %c0_i32, %c0_i32_0 : i32, i32
  }
  func.func @transform_26(%arg0: i32) -> (i32, i32) {
    %c0_i32 = arith.constant 0 : i32
    %c0_i32_0 = arith.constant 0 : i32
    %c0_i32_1 = arith.constant 0 : i32
    return %c0_i32, %c0_i32_0 : i32, i32
  }
  func.func @transform_27(%arg0: i32) -> (i32, i32, i32) {
    %c0_i32 = arith.constant 0 : i32
    %c0_i32_0 = arith.constant 0 : i32
    %c0_i32_1 = arith.constant 0 : i32
    return %arg0, %c0_i32, %c0_i32_0 : i32, i32, i32
  }
}

</mosaic_0001>

<llo_original>
// kernel: learn_loss_active_forward.1
$region0: #{learn_loss_active_forward.1}
  #allocation0 [shape = 'u32[]', space=smem, size = 0x4, offset = 0x4, fixed_abs, tag = 'smem constant byte address 0x4 - core index']
  #allocation1 [shape = 'u32[144,128]{1,0:T(1,128)}', space=vmem, size = 0x12000, scoped, tag = 'internal scratch']
  #allocation2 [shape = 'f32[2048,8]{1,0:T(8,128)}', space=vmem, size = 0x100000, scoped, tag = 'scratch operand']
  #allocation3 [shape = 'f32[512,8]{1,0:T(8,128)}', space=vmem, size = 0x40000, scoped, tag = 'scratch operand']
  #allocation4 [shape = 'f32[128,8]{1,0:T(8,128)}', space=vmem, size = 0x10000, scoped, tag = 'scratch operand']
  #allocation5 [shape = 'f32[32,8]{1,0:T(8,128)}', space=vmem, size = 0x4000, scoped, tag = 'scratch operand']
  #allocation6 [shape = 'f32[1,1]{1,0:T(1,128)S(1)}', space=vmem, size = 0x200, scoped, tag = 'scoped memory for learn_loss_active_forward.1']
  %s0 = inlined_call_operand.vmem [shape: f32[2,2048,32], index: 0, kind: input, shape index: {}]
  %s1 = inlined_call_operand.vmem [shape: f32[2,2048,8], index: 1, kind: input, shape index: {}]
  %s2 = inlined_call_operand.vmem [shape: f32[2,512,8], index: 2, kind: input, shape index: {}]
  %s3 = inlined_call_operand.vmem [shape: f32[2,128,8], index: 3, kind: input, shape index: {}]
  %s4 = inlined_call_operand.vmem [shape: f32[2,32,8], index: 4, kind: input, shape index: {}]
  %s5 = inlined_call_operand.vmem [shape: f32[32,8], index: 5, kind: input, shape index: {}]
  %s6 = inlined_call_operand.vmem [shape: f32[1,8], index: 6, kind: input, shape index: {}]
  %s7 = inlined_call_operand.vmem [shape: f32[32,8], index: 7, kind: input, shape index: {}]
  %s8 = inlined_call_operand.vmem [shape: f32[1,8], index: 8, kind: input, shape index: {}]
  %s9 = inlined_call_operand.vmem [shape: f32[32,8], index: 9, kind: input, shape index: {}]
  %s10 = inlined_call_operand.vmem [shape: f32[1,8], index: 10, kind: input, shape index: {}]
  %s11 = inlined_call_operand.vmem [shape: f32[32,8], index: 11, kind: input, shape index: {}]
  %s12 = inlined_call_operand.vmem [shape: f32[1,8], index: 12, kind: input, shape index: {}]
  %s13 = inlined_call_operand.vmem [shape: f32[128,8], index: 13, kind: input, shape index: {}]
  %s14 = inlined_call_operand.vmem [shape: f32[1,8], index: 14, kind: input, shape index: {}]
  %s15 = inlined_call_operand.vmem [shape: f32[8,128], index: 15, kind: input, shape index: {}]
  %s16 = inlined_call_operand.vmem [shape: f32[1,128], index: 16, kind: input, shape index: {}]
  %s17 = inlined_call_operand.vmem [shape: f32[128,64], index: 17, kind: input, shape index: {}]
  %s18 = inlined_call_operand.vmem [shape: f32[1,64], index: 18, kind: input, shape index: {}]
  %s19 = inlined_call_operand.vmem [shape: f32[64,32], index: 19, kind: input, shape index: {}]
  %s20 = inlined_call_operand.vmem [shape: f32[1,32], index: 20, kind: input, shape index: {}]
  %s21 = inlined_call_operand.vmem [shape: f32[32,16], index: 21, kind: input, shape index: {}]
  %s22 = inlined_call_operand.vmem [shape: f32[1,16], index: 22, kind: input, shape index: {}]
  %s23 = inlined_call_operand.vmem [shape: f32[16,8], index: 23, kind: input, shape index: {}]
  %s24 = inlined_call_operand.vmem [shape: f32[1,8], index: 24, kind: input, shape index: {}]
  %s25 = inlined_call_operand.vmem [shape: f32[8,1], index: 25, kind: input, shape index: {}]
  %s26 = inlined_call_operand.<no memory space> [shape: f32[1,1], index: 26, kind: input, shape index: {}]
  %s27 = inlined_call_operand.vmem [shape: f32[2,2,128], index: 27, kind: output, shape index: {}]
  %s28 = sld [smem:[#allocation0]]
  $region141: #{learn_loss_active_forward.1} parent=0
    _
  %s30 = ssub.s32 1, %s28
  %s31 = scalar_select 0, %s30, %s28
  %v32 = vstv %s26
  %33 = vst [vmem:[#allocation6] sm:$0x1] %v32
  loop: start=0, step=1, limit=4
  $region2: #{learn_loss_active_forward.1} parent=0 // loop_pre_header
    _
  $region3: #{learn_loss_active_forward.1} parent=0 // loop_header
    %s35 = sphi 0, %s39
    %p36 = scmp.ge.s32.totalorder %s35, 4
    %s45 = sphi 0, %s47
    %s48 = sphi 0, %s45
    %s49 = sphi 0, %s48
    %s65 = sphi 0, %s49
    %s71 = sphi 0, %s73
    %s74 = sphi 0, %s71
    %s75 = sphi 0, %s74
    %s91 = sphi 0, %s75
    %s97 = sphi 0, %s99
    %s100 = sphi 0, %s97
    %s101 = sphi 0, %s100
    %s117 = sphi 0, %s101
    %s123 = sphi 0, %s125
    %s126 = sphi 0, %s123
    %s127 = sphi 0, %s126
    %s143 = sphi 0, %s127
    %s149 = sphi 0, %s151
    %s152 = sphi 0, %s149
    %s153 = sphi 0, %s152
    %s169 = sphi 0, %s153
    %s173 = sphi 0, %s173
    %s175 = sphi 0, %s173
    %s176 = sphi 0, %s175
    %s190 = sphi 0, %s176
    %s194 = sphi 0, %s194
    %s196 = sphi 0, %s194
    %s197 = sphi 0, %s196
    %s211 = sphi 0, %s197
    %s215 = sphi 0, %s215
    %s217 = sphi 0, %s215
    %s218 = sphi 0, %s217
    %s232 = sphi 0, %s218
    %s236 = sphi 0, %s236
    %s238 = sphi 0, %s236
    %s239 = sphi 0, %s238
    %s253 = sphi 0, %s239
    %s257 = sphi 0, %s257
    %s259 = sphi 0, %s257
    %s260 = sphi 0, %s259
    %s274 = sphi 0, %s260
    %s278 = sphi 0, %s278
    %s280 = sphi 0, %s278
    %s281 = sphi 0, %s280
    %s295 = sphi 0, %s281
    %s299 = sphi 0, %s299
    %s301 = sphi 0, %s299
    %s302 = sphi 0, %s301
    %s316 = sphi 0, %s302
    %s320 = sphi 0, %s320
    %s322 = sphi 0, %s320
    %s323 = sphi 0, %s322
    %s337 = sphi 0, %s323
    %s341 = sphi 0, %s341
    %s343 = sphi 0, %s341
    %s344 = sphi 0, %s343
    %s358 = sphi 0, %s344
    %s362 = sphi 0, %s362
    %s364 = sphi 0, %s362
    %s365 = sphi 0, %s364
    %s379 = sphi 0, %s365
    %s383 = sphi 0, %s383
    %s385 = sphi 0, %s383
    %s386 = sphi 0, %s385
    %s400 = sphi 0, %s386
    %s404 = sphi 0, %s404
    %s406 = sphi 0, %s404
    %s407 = sphi 0, %s406
    %s421 = sphi 0, %s407
    %s425 = sphi 0, %s425
    %s427 = sphi 0, %s425
    %s428 = sphi 0, %s427
    %s442 = sphi 0, %s428
    %s446 = sphi 0, %s446
    %s448 = sphi 0, %s446
    %s449 = sphi 0, %s448
    %s463 = sphi 0, %s449
    %s467 = sphi 0, %s467
    %s469 = sphi 0, %s467
    %s470 = sphi 0, %s469
    %s484 = sphi 0, %s470
    %s488 = sphi 0, %s488
    %s490 = sphi 0, %s488
    %s491 = sphi 0, %s490
    %s505 = sphi 0, %s491
    %s509 = sphi 0, %s509
    %s511 = sphi 0, %s509
    %s512 = sphi 0, %s511
    %s526 = sphi 0, %s512
    %s530 = sphi 0, %s530
    %s532 = sphi 0, %s530
    %s533 = sphi 0, %s532
    %s547 = sphi 0, %s533
    %s551 = sphi 0, %s551
    %s553 = sphi 0, %s551
    %s554 = sphi 0, %s553
    %s568 = sphi 0, %s554
    %s572 = sphi 0, %s572
    %s574 = sphi 0, %s572
    %s575 = sphi 0, %s574
    %s589 = sphi 0, %s575
    %s593 = sphi 0, %s593
    %s595 = sphi 0, %s593
    %s596 = sphi 0, %s595
    %s610 = sphi 0, %s596
    %s614 = sphi 0, %s614
    %s616 = sphi 0, %s614
    %s617 = sphi 0, %s616
    %s631 = sphi 0, %s617
    %s637 = sphi 0, %s639
    %s640 = sphi 0, %s637
    %s641 = sphi 0, %s640
    %s657 = sphi 0, %s641
  $region4: #{learn_loss_active_forward.1} parent=0 // loop_header_branch
    %38 = sbr.rel (%p36) target = $region8
  $region5: #{learn_loss_active_forward.1} parent=0 // loop_body
    %s40 = ssub.s32 %s35, 1
    %s41 = ssub.s32 %s35, 2
    %s42 = sadd.s32 %s35, 1
    %s43 = ssub.s32 %s35, %s42
    %p44 = scmp.eq.s32.totalorder %s43, 0
    %s46 = sadd.s32 %s45, 1
    %s47 = scalar_select %p44, %s45, %s46
    %p50 = pneg %p44
    %p51 = scmp.eq.s32.totalorder %s35, 1
    %p52 = por %p50, %p51
    %p53 = scmp.ne.s32.totalorder %s45, %s48
    %p54 = scmp.eq.s32.totalorder %s35, 0
    %p55 = por %p53, %p54
    %p56 = scmp.ne.s32.totalorder %s45, %s48
    %p57 = scmp.eq.s32.totalorder %s40, 1
    %p58 = por %p56, %p57
    %p59 = scmp.ne.s32.totalorder %s48, %s49
    %p60 = scmp.eq.s32.totalorder %s40, 0
    %p61 = por %p59, %p60
    %p62 = scmp.ne.s32.totalorder %s48, %s49
    %p63 = scmp.eq.s32.totalorder %s41, 1
    %p64 = por %p62, %p63
    %p66 = scmp.ne.s32.totalorder %s49, %s65
    %p67 = scmp.eq.s32.totalorder %s41, 0
    %p68 = por %p66, %p67
    %s69 = ssub.s32 %s35, %s42
    %p70 = scmp.eq.s32.totalorder %s69, 0
    %s72 = sadd.s32 %s71, 1
    %s73 = scalar_select %p70, %s71, %s72
    %p76 = pneg %p70
    %p77 = scmp.eq.s32.totalorder %s35, 1
    %p78 = por %p76, %p77
    %p79 = scmp.ne.s32.totalorder %s71, %s74
    %p80 = scmp.eq.s32.totalorder %s35, 0
    %p81 = por %p79, %p80
    %p82 = scmp.ne.s32.totalorder %s71, %s74
    %p83 = scmp.eq.s32.totalorder %s40, 1
    %p84 = por %p82, %p83
    %p85 = scmp.ne.s32.totalorder %s74, %s75
    %p86 = scmp.eq.s32.totalorder %s40, 0
    %p87 = por %p85, %p86
    %p88 = scmp.ne.s32.totalorder %s74, %s75
    %p89 = scmp.eq.s32.totalorder %s41, 1
    %p90 = por %p88, %p89
    %p92 = scmp.ne.s32.totalorder %s75, %s91
    %p93 = scmp.eq.s32.totalorder %s41, 0
    %p94 = por %p92, %p93
    %s95 = ssub.s32 %s35, %s42
    %p96 = scmp.eq.s32.totalorder %s95, 0
    %s98 = sadd.s32 %s97, 1
    %s99 = scalar_select %p96, %s97, %s98
    %p102 = pneg %p96
    %p103 = scmp.eq.s32.totalorder %s35, 1
    %p104 = por %p102, %p103
    %p105 = scmp.ne.s32.totalorder %s97, %s100
    %p106 = scmp.eq.s32.totalorder %s35, 0
    %p107 = por %p105, %p106
    %p108 = scmp.ne.s32.totalorder %s97, %s100
    %p109 = scmp.eq.s32.totalorder %s40, 1
    %p110 = por %p108, %p109
    %p111 = scmp.ne.s32.totalorder %s100, %s101
    %p112 = scmp.eq.s32.totalorder %s40, 0
    %p113 = por %p111, %p112
    %p114 = scmp.ne.s32.totalorder %s100, %s101
    %p115 = scmp.eq.s32.totalorder %s41, 1
    %p116 = por %p114, %p115
    %p118 = scmp.ne.s32.totalorder %s101, %s117
    %p119 = scmp.eq.s32.totalorder %s41, 0
    %p120 = por %p118, %p119
    %s121 = ssub.s32 %s35, %s42
    %p122 = scmp.eq.s32.totalorder %s121, 0
    %s124 = sadd.s32 %s123, 1
    %s125 = scalar_select %p122, %s123, %s124
    %p128 = pneg %p122
    %p129 = scmp.eq.s32.totalorder %s35, 1
    %p130 = por %p128, %p129
    %p131 = scmp.ne.s32.totalorder %s123, %s126
    %p132 = scmp.eq.s32.totalorder %s35, 0
    %p133 = por %p131, %p132
    %p134 = scmp.ne.s32.totalorder %s123, %s126
    %p135 = scmp.eq.s32.totalorder %s40, 1
    %p136 = por %p134, %p135
    %p137 = scmp.ne.s32.totalorder %s126, %s127
    %p138 = scmp.eq.s32.totalorder %s40, 0
    %p139 = por %p137, %p138
    %p140 = scmp.ne.s32.totalorder %s126, %s127
    %p141 = scmp.eq.s32.totalorder %s41, 1
    %p142 = por %p140, %p141
    %p144 = scmp.ne.s32.totalorder %s127, %s143
    %p145 = scmp.eq.s32.totalorder %s41, 0
    %p146 = por %p144, %p145
    %s147 = ssub.s32 %s35, %s42
    %p148 = scmp.eq.s32.totalorder %s147, 0
    %s150 = sadd.s32 %s149, 1
    %s151 = scalar_select %p148, %s149, %s150
    %p154 = pneg %p148
    %p155 = scmp.eq.s32.totalorder %s35, 1
    %p156 = por %p154, %p155
    %p157 = scmp.ne.s32.totalorder %s149, %s152
    %p158 = scmp.eq.s32.totalorder %s35, 0
    %p159 = por %p157, %p158
    %p160 = scmp.ne.s32.totalorder %s149, %s152
    %p161 = scmp.eq.s32.totalorder %s40, 1
    %p162 = por %p160, %p161
    %p163 = scmp.ne.s32.totalorder %s152, %s153
    %p164 = scmp.eq.s32.totalorder %s40, 0
    %p165 = por %p163, %p164
    %p166 = scmp.ne.s32.totalorder %s152, %s153
    %p167 = scmp.eq.s32.totalorder %s41, 1
    %p168 = por %p166, %p167
    %p170 = scmp.ne.s32.totalorder %s153, %s169
    %p171 = scmp.eq.s32.totalorder %s41, 0
    %p172 = por %p170, %p171
    %s174 = sadd.s32 %s173, 1
    %p177 = scmp.eq.s32.totalorder %s35, 1
    %p178 = scmp.ne.s32.totalorder %s173, %s175
    %p179 = scmp.eq.s32.totalorder %s35, 0
    %p180 = por %p178, %p179
    %p181 = scmp.ne.s32.totalorder %s173, %s175
    %p182 = scmp.eq.s32.totalorder %s40, 1
    %p183 = por %p181, %p182
    %p184 = scmp.ne.s32.totalorder %s175, %s176
    %p185 = scmp.eq.s32.totalorder %s40, 0
    %p186 = por %p184, %p185
    %p187 = scmp.ne.s32.totalorder %s175, %s176
    %p188 = scmp.eq.s32.totalorder %s41, 1
    %p189 = por %p187, %p188
    %p191 = scmp.ne.s32.totalorder %s176, %s190
    %p192 = scmp.eq.s32.totalorder %s41, 0
    %p193 = por %p191, %p192
    %s195 = sadd.s32 %s194, 1
    %p198 = scmp.eq.s32.totalorder %s35, 1
    %p199 = scmp.ne.s32.totalorder %s194, %s196
    %p200 = scmp.eq.s32.totalorder %s35, 0
    %p201 = por %p199, %p200
    %p202 = scmp.ne.s32.totalorder %s194, %s196
    %p203 = scmp.eq.s32.totalorder %s40, 1
    %p204 = por %p202, %p203
    %p205 = scmp.ne.s32.totalorder %s196, %s197
    %p206 = scmp.eq.s32.totalorder %s40, 0
    %p207 = por %p205, %p206
    %p208 = scmp.ne.s32.totalorder %s196, %s197
    %p209 = scmp.eq.s32.totalorder %s41, 1
    %p210 = por %p208, %p209
    %p212 = scmp.ne.s32.totalorder %s197, %s211
    %p213 = scmp.eq.s32.totalorder %s41, 0
    %p214 = por %p212, %p213
    %s216 = sadd.s32 %s215, 1
    %p219 = scmp.eq.s32.totalorder %s35, 1
    %p220 = scmp.ne.s32.totalorder %s215, %s217
    %p221 = scmp.eq.s32.totalorder %s35, 0
    %p222 = por %p220, %p221
    %p223 = scmp.ne.s32.totalorder %s215, %s217
    %p224 = scmp.eq.s32.totalorder %s40, 1
    %p225 = por %p223, %p224
    %p226 = scmp.ne.s32.totalorder %s217, %s218
    %p227 = scmp.eq.s32.totalorder %s40, 0
    %p228 = por %p226, %p227
    %p229 = scmp.ne.s32.totalorder %s217, %s218
    %p230 = scmp.eq.s32.totalorder %s41, 1
    %p231 = por %p229, %p230
    %p233 = scmp.ne.s32.totalorder %s218, %s232
    %p234 = scmp.eq.s32.totalorder %s41, 0
    %p235 = por %p233, %p234
    %s237 = sadd.s32 %s236, 1
    %p240 = scmp.eq.s32.totalorder %s35, 1
    %p241 = scmp.ne.s32.totalorder %s236, %s238
    %p242 = scmp.eq.s32.totalorder %s35, 0
    %p243 = por %p241, %p242
    %p244 = scmp.ne.s32.totalorder %s236, %s238
    %p245 = scmp.eq.s32.totalorder %s40, 1
    %p246 = por %p244, %p245
    %p247 = scmp.ne.s32.totalorder %s238, %s239
    %p248 = scmp.eq.s32.totalorder %s40, 0
    %p249 = por %p247, %p248
    %p250 = scmp.ne.s32.totalorder %s238, %s239
    %p251 = scmp.eq.s32.totalorder %s41, 1
    %p252 = por %p250, %p251
    %p254 = scmp.ne.s32.totalorder %s239, %s253
    %p255 = scmp.eq.s32.totalorder %s41, 0
    %p256 = por %p254, %p255
    %s258 = sadd.s32 %s257, 1
    %p261 = scmp.eq.s32.totalorder %s35, 1
    %p262 = scmp.ne.s32.totalorder %s257, %s259
    %p263 = scmp.eq.s32.totalorder %s35, 0
    %p264 = por %p262, %p263
    %p265 = scmp.ne.s32.totalorder %s257, %s259
    %p266 = scmp.eq.s32.totalorder %s40, 1
    %p267 = por %p265, %p266
    %p268 = scmp.ne.s32.totalorder %s259, %s260
    %p269 = scmp.eq.s32.totalorder %s40, 0
    %p270 = por %p268, %p269
    %p271 = scmp.ne.s32.totalorder %s259, %s260
    %p272 = scmp.eq.s32.totalorder %s41, 1
    %p273 = por %p271, %p272
    %p275 = scmp.ne.s32.totalorder %s260, %s274
    %p276 = scmp.eq.s32.totalorder %s41, 0
    %p277 = por %p275, %p276
    %s279 = sadd.s32 %s278, 1
    %p282 = scmp.eq.s32.totalorder %s35, 1
    %p283 = scmp.ne.s32.totalorder %s278, %s280
    %p284 = scmp.eq.s32.totalorder %s35, 0
    %p285 = por %p283, %p284
    %p286 = scmp.ne.s32.totalorder %s278, %s280
    %p287 = scmp.eq.s32.totalorder %s40, 1
    %p288 = por %p286, %p287
    %p289 = scmp.ne.s32.totalorder %s280, %s281
    %p290 = scmp.eq.s32.totalorder %s40, 0
    %p291 = por %p289, %p290
    %p292 = scmp.ne.s32.totalorder %s280, %s281
    %p293 = scmp.eq.s32.totalorder %s41, 1
    %p294 = por %p292, %p293
    %p296 = scmp.ne.s32.totalorder %s281, %s295
    %p297 = scmp.eq.s32.totalorder %s41, 0
    %p298 = por %p296, %p297
    %s300 = sadd.s32 %s299, 1
    %p303 = scmp.eq.s32.totalorder %s35, 1
    %p304 = scmp.ne.s32.totalorder %s299, %s301
    %p305 = scmp.eq.s32.totalorder %s35, 0
    %p306 = por %p304, %p305
    %p307 = scmp.ne.s32.totalorder %s299, %s301
    %p308 = scmp.eq.s32.totalorder %s40, 1
    %p309 = por %p307, %p308
    %p310 = scmp.ne.s32.totalorder %s301, %s302
    %p311 = scmp.eq.s32.totalorder %s40, 0
    %p312 = por %p310, %p311
    %p313 = scmp.ne.s32.totalorder %s301, %s302
    %p314 = scmp.eq.s32.totalorder %s41, 1
    %p315 = por %p313, %p314
    %p317 = scmp.ne.s32.totalorder %s302, %s316
    %p318 = scmp.eq.s32.totalorder %s41, 0
    %p319 = por %p317, %p318
    %s321 = sadd.s32 %s320, 1
    %p324 = scmp.eq.s32.totalorder %s35, 1
    %p325 = scmp.ne.s32.totalorder %s320, %s322
    %p326 = scmp.eq.s32.totalorder %s35, 0
    %p327 = por %p325, %p326
    %p328 = scmp.ne.s32.totalorder %s320, %s322
    %p329 = scmp.eq.s32.totalorder %s40, 1
    %p330 = por %p328, %p329
    %p331 = scmp.ne.s32.totalorder %s322, %s323
    %p332 = scmp.eq.s32.totalorder %s40, 0
    %p333 = por %p331, %p332
    %p334 = scmp.ne.s32.totalorder %s322, %s323
    %p335 = scmp.eq.s32.totalorder %s41, 1
    %p336 = por %p334, %p335
    %p338 = scmp.ne.s32.totalorder %s323, %s337
    %p339 = scmp.eq.s32.totalorder %s41, 0
    %p340 = por %p338, %p339
    %s342 = sadd.s32 %s341, 1
    %p345 = scmp.eq.s32.totalorder %s35, 1
    %p346 = scmp.ne.s32.totalorder %s341, %s343
    %p347 = scmp.eq.s32.totalorder %s35, 0
    %p348 = por %p346, %p347
    %p349 = scmp.ne.s32.totalorder %s341, %s343
    %p350 = scmp.eq.s32.totalorder %s40, 1
    %p351 = por %p349, %p350
    %p352 = scmp.ne.s32.totalorder %s343, %s344
    %p353 = scmp.eq.s32.totalorder %s40, 0
    %p354 = por %p352, %p353
    %p355 = scmp.ne.s32.totalorder %s343, %s344
    %p356 = scmp.eq.s32.totalorder %s41, 1
    %p357 = por %p355, %p356
    %p359 = scmp.ne.s32.totalorder %s344, %s358
    %p360 = scmp.eq.s32.totalorder %s41, 0
    %p361 = por %p359, %p360
    %s363 = sadd.s32 %s362, 1
    %p366 = scmp.eq.s32.totalorder %s35, 1
    %p367 = scmp.ne.s32.totalorder %s362, %s364
    %p368 = scmp.eq.s32.totalorder %s35, 0
    %p369 = por %p367, %p368
    %p370 = scmp.ne.s32.totalorder %s362, %s364
    %p371 = scmp.eq.s32.totalorder %s40, 1
    %p372 = por %p370, %p371
    %p373 = scmp.ne.s32.totalorder %s364, %s365
    %p374 = scmp.eq.s32.totalorder %s40, 0
    %p375 = por %p373, %p374
    %p376 = scmp.ne.s32.totalorder %s364, %s365
    %p377 = scmp.eq.s32.totalorder %s41, 1
    %p378 = por %p376, %p377
    %p380 = scmp.ne.s32.totalorder %s365, %s379
    %p381 = scmp.eq.s32.totalorder %s41, 0
    %p382 = por %p380, %p381
    %s384 = sadd.s32 %s383, 1
    %p387 = scmp.eq.s32.totalorder %s35, 1
    %p388 = scmp.ne.s32.totalorder %s383, %s385
    %p389 = scmp.eq.s32.totalorder %s35, 0
    %p390 = por %p388, %p389
    %p391 = scmp.ne.s32.totalorder %s383, %s385
    %p392 = scmp.eq.s32.totalorder %s40, 1
    %p393 = por %p391, %p392
    %p394 = scmp.ne.s32.totalorder %s385, %s386
    %p395 = scmp.eq.s32.totalorder %s40, 0
    %p396 = por %p394, %p395
    %p397 = scmp.ne.s32.totalorder %s385, %s386
    %p398 = scmp.eq.s32.totalorder %s41, 1
    %p399 = por %p397, %p398
    %p401 = scmp.ne.s32.totalorder %s386, %s400
    %p402 = scmp.eq.s32.totalorder %s41, 0
    %p403 = por %p401, %p402
    %s405 = sadd.s32 %s404, 1
    %p408 = scmp.eq.s32.totalorder %s35, 1
    %p409 = scmp.ne.s32.totalorder %s404, %s406
    %p410 = scmp.eq.s32.totalorder %s35, 0
    %p411 = por %p409, %p410
    %p412 = scmp.ne.s32.totalorder %s404, %s406
    %p413 = scmp.eq.s32.totalorder %s40, 1
    %p414 = por %p412, %p413
    %p415 = scmp.ne.s32.totalorder %s406, %s407
    %p416 = scmp.eq.s32.totalorder %s40, 0
    %p417 = por %p415, %p416
    %p418 = scmp.ne.s32.totalorder %s406, %s407
    %p419 = scmp.eq.s32.totalorder %s41, 1
    %p420 = por %p418, %p419
    %p422 = scmp.ne.s32.totalorder %s407, %s421
    %p423 = scmp.eq.s32.totalorder %s41, 0
    %p424 = por %p422, %p423
    %s426 = sadd.s32 %s425, 1
    %p429 = scmp.eq.s32.totalorder %s35, 1
    %p430 = scmp.ne.s32.totalorder %s425, %s427
    %p431 = scmp.eq.s32.totalorder %s35, 0
    %p432 = por %p430, %p431
    %p433 = scmp.ne.s32.totalorder %s425, %s427
    %p434 = scmp.eq.s32.totalorder %s40, 1
    %p435 = por %p433, %p434
    %p436 = scmp.ne.s32.totalorder %s427, %s428
    %p437 = scmp.eq.s32.totalorder %s40, 0
    %p438 = por %p436, %p437
    %p439 = scmp.ne.s32.totalorder %s427, %s428
    %p440 = scmp.eq.s32.totalorder %s41, 1
    %p441 = por %p439, %p440
    %p443 = scmp.ne.s32.totalorder %s428, %s442
    %p444 = scmp.eq.s32.totalorder %s41, 0
    %p445 = por %p443, %p444
    %s447 = sadd.s32 %s446, 1
    %p450 = scmp.eq.s32.totalorder %s35, 1
    %p451 = scmp.ne.s32.totalorder %s446, %s448
    %p452 = scmp.eq.s32.totalorder %s35, 0
    %p453 = por %p451, %p452
    %p454 = scmp.ne.s32.totalorder %s446, %s448
    %p455 = scmp.eq.s32.totalorder %s40, 1
    %p456 = por %p454, %p455
    %p457 = scmp.ne.s32.totalorder %s448, %s449
    %p458 = scmp.eq.s32.totalorder %s40, 0
    %p459 = por %p457, %p458
    %p460 = scmp.ne.s32.totalorder %s448, %s449
    %p461 = scmp.eq.s32.totalorder %s41, 1
    %p462 = por %p460, %p461
    %p464 = scmp.ne.s32.totalorder %s449, %s463
    %p465 = scmp.eq.s32.totalorder %s41, 0
    %p466 = por %p464, %p465
    %s468 = sadd.s32 %s467, 1
    %p471 = scmp.eq.s32.totalorder %s35, 1
    %p472 = scmp.ne.s32.totalorder %s467, %s469
    %p473 = scmp.eq.s32.totalorder %s35, 0
    %p474 = por %p472, %p473
    %p475 = scmp.ne.s32.totalorder %s467, %s469
    %p476 = scmp.eq.s32.totalorder %s40, 1
    %p477 = por %p475, %p476
    %p478 = scmp.ne.s32.totalorder %s469, %s470
    %p479 = scmp.eq.s32.totalorder %s40, 0
    %p480 = por %p478, %p479
    %p481 = scmp.ne.s32.totalorder %s469, %s470
    %p482 = scmp.eq.s32.totalorder %s41, 1
    %p483 = por %p481, %p482
    %p485 = scmp.ne.s32.totalorder %s470, %s484
    %p486 = scmp.eq.s32.totalorder %s41, 0
    %p487 = por %p485, %p486
    %s489 = sadd.s32 %s488, 1
    %p492 = scmp.eq.s32.totalorder %s35, 1
    %p493 = scmp.ne.s32.totalorder %s488, %s490
    %p494 = scmp.eq.s32.totalorder %s35, 0
    %p495 = por %p493, %p494
    %p496 = scmp.ne.s32.totalorder %s488, %s490
    %p497 = scmp.eq.s32.totalorder %s40, 1
    %p498 = por %p496, %p497
    %p499 = scmp.ne.s32.totalorder %s490, %s491
    %p500 = scmp.eq.s32.totalorder %s40, 0
    %p501 = por %p499, %p500
    %p502 = scmp.ne.s32.totalorder %s490, %s491
    %p503 = scmp.eq.s32.totalorder %s41, 1
    %p504 = por %p502, %p503
    %p506 = scmp.ne.s32.totalorder %s491, %s505
    %p507 = scmp.eq.s32.totalorder %s41, 0
    %p508 = por %p506, %p507
    %s510 = sadd.s32 %s509, 1
    %p513 = scmp.eq.s32.totalorder %s35, 1
    %p514 = scmp.ne.s32.totalorder %s509, %s511
    %p515 = scmp.eq.s32.totalorder %s35, 0
    %p516 = por %p514, %p515
    %p517 = scmp.ne.s32.totalorder %s509, %s511
    %p518 = scmp.eq.s32.totalorder %s40, 1
    %p519 = por %p517, %p518
    %p520 = scmp.ne.s32.totalorder %s511, %s512
    %p521 = scmp.eq.s32.totalorder %s40, 0
    %p522 = por %p520, %p521
    %p523 = scmp.ne.s32.totalorder %s511, %s512
    %p524 = scmp.eq.s32.totalorder %s41, 1
    %p525 = por %p523, %p524
    %p527 = scmp.ne.s32.totalorder %s512, %s526
    %p528 = scmp.eq.s32.totalorder %s41, 0
    %p529 = por %p527, %p528
    %s531 = sadd.s32 %s530, 1
    %p534 = scmp.eq.s32.totalorder %s35, 1
    %p535 = scmp.ne.s32.totalorder %s530, %s532
    %p536 = scmp.eq.s32.totalorder %s35, 0
    %p537 = por %p535, %p536
    %p538 = scmp.ne.s32.totalorder %s530, %s532
    %p539 = scmp.eq.s32.totalorder %s40, 1
    %p540 = por %p538, %p539
    %p541 = scmp.ne.s32.totalorder %s532, %s533
    %p542 = scmp.eq.s32.totalorder %s40, 0
    %p543 = por %p541, %p542
    %p544 = scmp.ne.s32.totalorder %s532, %s533
    %p545 = scmp.eq.s32.totalorder %s41, 1
    %p546 = por %p544, %p545
    %p548 = scmp.ne.s32.totalorder %s533, %s547
    %p549 = scmp.eq.s32.totalorder %s41, 0
    %p550 = por %p548, %p549
    %s552 = sadd.s32 %s551, 1
    %p555 = scmp.eq.s32.totalorder %s35, 1
    %p556 = scmp.ne.s32.totalorder %s551, %s553
    %p557 = scmp.eq.s32.totalorder %s35, 0
    %p558 = por %p556, %p557
    %p559 = scmp.ne.s32.totalorder %s551, %s553
    %p560 = scmp.eq.s32.totalorder %s40, 1
    %p561 = por %p559, %p560
    %p562 = scmp.ne.s32.totalorder %s553, %s554
    %p563 = scmp.eq.s32.totalorder %s40, 0
    %p564 = por %p562, %p563
    %p565 = scmp.ne.s32.totalorder %s553, %s554
    %p566 = scmp.eq.s32.totalorder %s41, 1
    %p567 = por %p565, %p566
    %p569 = scmp.ne.s32.totalorder %s554, %s568
    %p570 = scmp.eq.s32.totalorder %s41, 0
    %p571 = por %p569, %p570
    %s573 = sadd.s32 %s572, 1
    %p576 = scmp.eq.s32.totalorder %s35, 1
    %p577 = scmp.ne.s32.totalorder %s572, %s574
    %p578 = scmp.eq.s32.totalorder %s35, 0
    %p579 = por %p577, %p578
    %p580 = scmp.ne.s32.totalorder %s572, %s574
    %p581 = scmp.eq.s32.totalorder %s40, 1
    %p582 = por %p580, %p581
    %p583 = scmp.ne.s32.totalorder %s574, %s575
    %p584 = scmp.eq.s32.totalorder %s40, 0
    %p585 = por %p583, %p584
    %p586 = scmp.ne.s32.totalorder %s574, %s575
    %p587 = scmp.eq.s32.totalorder %s41, 1
    %p588 = por %p586, %p587
    %p590 = scmp.ne.s32.totalorder %s575, %s589
    %p591 = scmp.eq.s32.totalorder %s41, 0
    %p592 = por %p590, %p591
    %s594 = sadd.s32 %s593, 1
    %p597 = scmp.eq.s32.totalorder %s35, 1
    %p598 = scmp.ne.s32.totalorder %s593, %s595
    %p599 = scmp.eq.s32.totalorder %s35, 0
    %p600 = por %p598, %p599
    %p601 = scmp.ne.s32.totalorder %s593, %s595
    %p602 = scmp.eq.s32.totalorder %s40, 1
    %p603 = por %p601, %p602
    %p604 = scmp.ne.s32.totalorder %s595, %s596
    %p605 = scmp.eq.s32.totalorder %s40, 0
    %p606 = por %p604, %p605
    %p607 = scmp.ne.s32.totalorder %s595, %s596
    %p608 = scmp.eq.s32.totalorder %s41, 1
    %p609 = por %p607, %p608
    %p611 = scmp.ne.s32.totalorder %s596, %s610
    %p612 = scmp.eq.s32.totalorder %s41, 0
    %p613 = por %p611, %p612
    %s615 = sadd.s32 %s614, 1
    %p618 = scmp.eq.s32.totalorder %s35, 1
    %p619 = scmp.ne.s32.totalorder %s614, %s616
    %p620 = scmp.eq.s32.totalorder %s35, 0
    %p621 = por %p619, %p620
    %p622 = scmp.ne.s32.totalorder %s614, %s616
    %p623 = scmp.eq.s32.totalorder %s40, 1
    %p624 = por %p622, %p623
    %p625 = scmp.ne.s32.totalorder %s616, %s617
    %p626 = scmp.eq.s32.totalorder %s40, 0
    %p627 = por %p625, %p626
    %p628 = scmp.ne.s32.totalorder %s616, %s617
    %p629 = scmp.eq.s32.totalorder %s41, 1
    %p630 = por %p628, %p629
    %p632 = scmp.ne.s32.totalorder %s617, %s631
    %p633 = scmp.eq.s32.totalorder %s41, 0
    %p634 = por %p632, %p633
    %s635 = ssub.s32 %s35, %s42
    %p636 = scmp.eq.s32.totalorder %s635, 0
    %s638 = sadd.s32 %s637, 1
    %s639 = scalar_select %p636, %s637, %s638
    %p642 = pneg %p636
    %p643 = scmp.eq.s32.totalorder %s35, 1
    %p644 = por %p642, %p643
    %p645 = scmp.ne.s32.totalorder %s637, %s640
    %p646 = scmp.eq.s32.totalorder %s35, 0
    %p647 = por %p645, %p646
    %p648 = scmp.ne.s32.totalorder %s637, %s640
    %p649 = scmp.eq.s32.totalorder %s40, 1
    %p650 = por %p648, %p649
    %p651 = scmp.ne.s32.totalorder %s640, %s641
    %p652 = scmp.eq.s32.totalorder %s40, 0
    %p653 = por %p651, %p652
    %p654 = scmp.ne.s32.totalorder %s640, %s641
    %p655 = scmp.eq.s32.totalorder %s41, 1
    %p656 = por %p654, %p655
    %p658 = scmp.ne.s32.totalorder %s641, %s657
    %p659 = scmp.eq.s32.totalorder %s41, 0
    %p660 = por %p658, %p659
    %p661 = scmp.le.s32.totalorder 1, %s35
    %p662 = scmp.lt.s32.totalorder %s35, 3
    %p663 = pnand %p661, %p662
    %p664 = pneg %p663
    // Predicated region
    $region9: #{learn_loss_active_forward.1} parent=5 // pred_check
      _
    $region10: #{learn_loss_active_forward.1} parent=5 // pred_check_branch
      %666 = sbr.rel (%p663) target = $region12
    $region11: #{learn_loss_active_forward.1} parent=5 // pred_region
      %s667 = ssub.s32 %s35, 1
      // Predicated region
      $region13: #{learn_loss_active_forward.1} parent=11 // pred_check
        %p668 = pneg %p186
      $region14: #{learn_loss_active_forward.1} parent=11 // pred_check_branch
        %670 = sbr.rel (%p668) target = $region16
      $region15: #{learn_loss_active_forward.1} parent=11 // pred_region
        _
      $region16: #{learn_loss_active_forward.1} parent=11 // pred_fallthru
        _
      // Predicated region
      $region17: #{learn_loss_active_forward.1} parent=11 // pred_check
        %p671 = pneg %p207
      $region18: #{learn_loss_active_forward.1} parent=11 // pred_check_branch
        %673 = sbr.rel (%p671) target = $region20
      $region19: #{learn_loss_active_forward.1} parent=11 // pred_region
        _
      $region20: #{learn_loss_active_forward.1} parent=11 // pred_fallthru
        _
      // Predicated region
      $region21: #{learn_loss_active_forward.1} parent=11 // pred_check
        %p674 = pneg %p228
      $region22: #{learn_loss_active_forward.1} parent=11 // pred_check_branch
        %676 = sbr.rel (%p674) target = $region24
      $region23: #{learn_loss_active_forward.1} parent=11 // pred_region
        _
      $region24: #{learn_loss_active_forward.1} parent=11 // pred_fallthru
        _
      // Predicated region
      $region25: #{learn_loss_active_forward.1} parent=11 // pred_check
        %p677 = pneg %p249
      $region26: #{learn_loss_active_forward.1} parent=11 // pred_check_branch
        %679 = sbr.rel (%p677) target = $region28
      $region27: #{learn_loss_active_forward.1} parent=11 // pred_region
        _
      $region28: #{learn_loss_active_forward.1} parent=11 // pred_fallthru
        _
      // Predicated region
      $region29: #{learn_loss_active_forward.1} parent=11 // pred_check
        %p680 = pneg %p270
      $region30: #{learn_loss_active_forward.1} parent=11 // pred_check_branch
        %682 = sbr.rel (%p680) target = $region32
      $region31: #{learn_loss_active_forward.1} parent=11 // pred_region
        _
      $region32: #{learn_loss_active_forward.1} parent=11 // pred_fallthru
        _
      // Predicated region
      $region33: #{learn_loss_active_forward.1} parent=11 // pred_check
        %p683 = pneg %p291
      $region34: #{learn_loss_active_forward.1} parent=11 // pred_check_branch
        %685 = sbr.rel (%p683) target = $region36
      $region35: #{learn_loss_active_forward.1} parent=11 // pred_region
        _
      $region36: #{learn_loss_active_forward.1} parent=11 // pred_fallthru
        _
      // Predicated region
      $region37: #{learn_loss_active_forward.1} parent=11 // pred_check
        %p686 = pneg %p312
      $region38: #{learn_loss_active_forward.1} parent=11 // pred_check_branch
        %688 = sbr.rel (%p686) target = $region40
      $region39: #{learn_loss_active_forward.1} parent=11 // pred_region
        _
      $region40: #{learn_loss_active_forward.1} parent=11 // pred_fallthru
        _
      // Predicated region
      $region41: #{learn_loss_active_forward.1} parent=11 // pred_check
        %p689 = pneg %p333
      $region42: #{learn_loss_active_forward.1} parent=11 // pred_check_branch
        %691 = sbr.rel (%p689) target = $region44
      $region43: #{learn_loss_active_forward.1} parent=11 // pred_region
        _
      $region44: #{learn_loss_active_forward.1} parent=11 // pred_fallthru
        _
      // Predicated region
      $region45: #{learn_loss_active_forward.1} parent=11 // pred_check
        %p692 = pneg %p354
      $region46: #{learn_loss_active_forward.1} parent=11 // pred_check_branch
        %694 = sbr.rel (%p692) target = $region48
      $region47: #{learn_loss_active_forward.1} parent=11 // pred_region
        _
      $region48: #{learn_loss_active_forward.1} parent=11 // pred_fallthru
        _
      // Predicated region
      $region49: #{learn_loss_active_forward.1} parent=11 // pred_check
        %p695 = pneg %p375
      $region50: #{learn_loss_active_forward.1} parent=11 // pred_check_branch
        %697 = sbr.rel (%p695) target = $region52
      $region51: #{learn_loss_active_forward.1} parent=11 // pred_region
        _
      $region52: #{learn_loss_active_forward.1} parent=11 // pred_fallthru
        _
      // Predicated region
      $region53: #{learn_loss_active_forward.1} parent=11 // pred_check
        %p698 = pneg %p396
      $region54: #{learn_loss_active_forward.1} parent=11 // pred_check_branch
        %700 = sbr.rel (%p698) target = $region56
      $region55: #{learn_loss_active_forward.1} parent=11 // pred_region
        _
      $region56: #{learn_loss_active_forward.1} parent=11 // pred_fallthru
        _
      // Predicated region
      $region57: #{learn_loss_active_forward.1} parent=11 // pred_check
        %p701 = pneg %p417
      $region58: #{learn_loss_active_forward.1} parent=11 // pred_check_branch
        %703 = sbr.rel (%p701) target = $region60
      $region59: #{learn_loss_active_forward.1} parent=11 // pred_region
        _
      $region60: #{learn_loss_active_forward.1} parent=11 // pred_fallthru
        _
      // Predicated region
      $region61: #{learn_loss_active_forward.1} parent=11 // pred_check
        %p704 = pneg %p438
      $region62: #{learn_loss_active_forward.1} parent=11 // pred_check_branch
        %706 = sbr.rel (%p704) target = $region64
      $region63: #{learn_loss_active_forward.1} parent=11 // pred_region
        _
      $region64: #{learn_loss_active_forward.1} parent=11 // pred_fallthru
        _
      // Predicated region
      $region65: #{learn_loss_active_forward.1} parent=11 // pred_check
        %p707 = pneg %p459
      $region66: #{learn_loss_active_forward.1} parent=11 // pred_check_branch
        %709 = sbr.rel (%p707) target = $region68
      $region67: #{learn_loss_active_forward.1} parent=11 // pred_region
        _
      $region68: #{learn_loss_active_forward.1} parent=11 // pred_fallthru
        _
      // Predicated region
      $region69: #{learn_loss_active_forward.1} parent=11 // pred_check
        %p710 = pneg %p480
      $region70: #{learn_loss_active_forward.1} parent=11 // pred_check_branch
        %712 = sbr.rel (%p710) target = $region72
      $region71: #{learn_loss_active_forward.1} parent=11 // pred_region
        _
      $region72: #{learn_loss_active_forward.1} parent=11 // pred_fallthru
        _
      // Predicated region
      $region73: #{learn_loss_active_forward.1} parent=11 // pred_check
        %p713 = pneg %p501
      $region74: #{learn_loss_active_forward.1} parent=11 // pred_check_branch
        %715 = sbr.rel (%p713) target = $region76
      $region75: #{learn_loss_active_forward.1} parent=11 // pred_region
        _
      $region76: #{learn_loss_active_forward.1} parent=11 // pred_fallthru
        _
      // Predicated region
      $region77: #{learn_loss_active_forward.1} parent=11 // pred_check
        %p716 = pneg %p522
      $region78: #{learn_loss_active_forward.1} parent=11 // pred_check_branch
        %718 = sbr.rel (%p716) target = $region80
      $region79: #{learn_loss_active_forward.1} parent=11 // pred_region
        _
      $region80: #{learn_loss_active_forward.1} parent=11 // pred_fallthru
        _
      // Predicated region
      $region81: #{learn_loss_active_forward.1} parent=11 // pred_check
        %p719 = pneg %p543
      $region82: #{learn_loss_active_forward.1} parent=11 // pred_check_branch
        %721 = sbr.rel (%p719) target = $region84
      $region83: #{learn_loss_active_forward.1} parent=11 // pred_region
        _
      $region84: #{learn_loss_active_forward.1} parent=11 // pred_fallthru
        _
      // Predicated region
      $region85: #{learn_loss_active_forward.1} parent=11 // pred_check
        %p722 = pneg %p564
      $region86: #{learn_loss_active_forward.1} parent=11 // pred_check_branch
        %724 = sbr.rel (%p722) target = $region88
      $region87: #{learn_loss_active_forward.1} parent=11 // pred_region
        _
      $region88: #{learn_loss_active_forward.1} parent=11 // pred_fallthru
        _
      // Predicated region
      $region89: #{learn_loss_active_forward.1} parent=11 // pred_check
        %p725 = pneg %p585
      $region90: #{learn_loss_active_forward.1} parent=11 // pred_check_branch
        %727 = sbr.rel (%p725) target = $region92
      $region91: #{learn_loss_active_forward.1} parent=11 // pred_region
        _
      $region92: #{learn_loss_active_forward.1} parent=11 // pred_fallthru
        _
      // Predicated region
      $region93: #{learn_loss_active_forward.1} parent=11 // pred_check
        %p728 = pneg %p606
      $region94: #{learn_loss_active_forward.1} parent=11 // pred_check_branch
        %730 = sbr.rel (%p728) target = $region96
      $region95: #{learn_loss_active_forward.1} parent=11 // pred_region
        _
      $region96: #{learn_loss_active_forward.1} parent=11 // pred_fallthru
        _
      // Predicated region
      $region97: #{learn_loss_active_forward.1} parent=11 // pred_check
        %p731 = pneg %p627
      $region98: #{learn_loss_active_forward.1} parent=11 // pred_check_branch
        %733 = sbr.rel (%p731) target = $region100
      $region99: #{learn_loss_active_forward.1} parent=11 // pred_region
        _
      $region100: #{learn_loss_active_forward.1} parent=11 // pred_fallthru
        _
    $region12: #{learn_loss_active_forward.1} parent=5 // pred_fallthru
      _
    %p734 = scmp.lt.s32.totalorder %s35, 2
    // Predicated region
    $region101: #{learn_loss_active_forward.1} parent=5 // pred_check
      %p735 = pneg %p734
    $region102: #{learn_loss_active_forward.1} parent=5 // pred_check_branch
      %737 = sbr.rel (%p735) target = $region104
    $region103: #{learn_loss_active_forward.1} parent=5 // pred_region
      // Predicated region
      $region105: #{learn_loss_active_forward.1} parent=103 // pred_check
        %p738 = pneg %p55
      $region106: #{learn_loss_active_forward.1} parent=103 // pred_check_branch
        %740 = sbr.rel (%p738) target = $region108
      $region107: #{learn_loss_active_forward.1} parent=103 // pred_region
        %p741 = scmp.lt.s32.totalorder %s35, 1
        %s742 = scalar_select %p741, %s35, 1
        %s743 = smul.addr %s742, 256
        %s744 = smul.addr %s743, 8
        %s745 = scalar_lea.vmem %s0, %s744
      $region108: #{learn_loss_active_forward.1} parent=103 // pred_fallthru
        _
      // Predicated region
      $region109: #{learn_loss_active_forward.1} parent=103 // pred_check
        %p746 = pneg %p81
      $region110: #{learn_loss_active_forward.1} parent=103 // pred_check_branch
        %748 = sbr.rel (%p746) target = $region112
      $region111: #{learn_loss_active_forward.1} parent=103 // pred_region
        %p749 = scmp.lt.s32.totalorder %s35, 1
        %s750 = scalar_select %p749, %s35, 1
        %s751 = smul.addr %s750, 256
        %s752 = smul.addr %s751, 8
        %s753 = scalar_lea.vmem %s1, %s752
      $region112: #{learn_loss_active_forward.1} parent=103 // pred_fallthru
        _
      // Predicated region
      $region113: #{learn_loss_active_forward.1} parent=103 // pred_check
        %p754 = pneg %p107
      $region114: #{learn_loss_active_forward.1} parent=103 // pred_check_branch
        %756 = sbr.rel (%p754) target = $region116
      $region115: #{learn_loss_active_forward.1} parent=103 // pred_region
        %p757 = scmp.lt.s32.totalorder %s35, 1
        %s758 = scalar_select %p757, %s35, 1
        %s759 = smul.addr %s758, 64
        %s760 = smul.addr %s759, 8
        %s761 = scalar_lea.vmem %s2, %s760
      $region116: #{learn_loss_active_forward.1} parent=103 // pred_fallthru
        _
      // Predicated region
      $region117: #{learn_loss_active_forward.1} parent=103 // pred_check
        %p762 = pneg %p133
      $region118: #{learn_loss_active_forward.1} parent=103 // pred_check_branch
        %764 = sbr.rel (%p762) target = $region120
      $region119: #{learn_loss_active_forward.1} parent=103 // pred_region
        %p765 = scmp.lt.s32.totalorder %s35, 1
        %s766 = scalar_select %p765, %s35, 1
        %s767 = smul.addr %s766, 16
        %s768 = smul.addr %s767, 8
        %s769 = scalar_lea.vmem %s3, %s768
      $region120: #{learn_loss_active_forward.1} parent=103 // pred_fallthru
        _
      // Predicated region
      $region121: #{learn_loss_active_forward.1} parent=103 // pred_check
        %p770 = pneg %p159
      $region122: #{learn_loss_active_forward.1} parent=103 // pred_check_branch
        %772 = sbr.rel (%p770) target = $region124
      $region123: #{learn_loss_active_forward.1} parent=103 // pred_region
        %p773 = scmp.lt.s32.totalorder %s35, 1
        %s774 = scalar_select %p773, %s35, 1
        %s775 = smul.addr %s774, 4
        %s776 = smul.addr %s775, 8
        %s777 = scalar_lea.vmem %s4, %s776
      $region124: #{learn_loss_active_forward.1} parent=103 // pred_fallthru
        _
    $region104: #{learn_loss_active_forward.1} parent=5 // pred_fallthru
      _
    %p778 = scmp.le.s32.totalorder 1, %s35
    %p779 = scmp.lt.s32.totalorder %s35, 3
    %p780 = pnand %p778, %p779
    %p781 = pneg %p780
    // Predicated region
    $region125: #{learn_loss_active_forward.1} parent=5 // pred_check
      _
    $region126: #{learn_loss_active_forward.1} parent=5 // pred_check_branch
      %783 = sbr.rel (%p780) target = $region128
    $region127: #{learn_loss_active_forward.1} parent=5 // pred_region
      %s784 = ssub.s32 %s35, 1
      %p785 = scmp.lt.s32.totalorder %s40, 1
      %s786 = scalar_select %p785, %s40, 1
      %s787 = smul.addr %s786, 256
      %s788 = smul.addr %s787, 8
      %s789 = scalar_lea.vmem %s0, %s788
      %p790 = pneg %p61
      %p791 = pneg %p58
      %p792 = scmp.lt.s32.totalorder %s40, 1
      %s793 = scalar_select %p792, %s40, 1
      %s794 = smul.addr %s793, 256
      %s795 = smul.addr %s794, 8
      %s796 = scalar_lea.vmem %s1, %s795
      %p797 = pneg %p87
      %p798 = pneg %p84
      %p799 = scmp.lt.s32.totalorder %s40, 1
      %s800 = scalar_select %p799, %s40, 1
      %s801 = smul.addr %s800, 64
      %s802 = smul.addr %s801, 8
      %s803 = scalar_lea.vmem %s2, %s802
      %p804 = pneg %p113
      %p805 = pneg %p110
      %p806 = scmp.lt.s32.totalorder %s40, 1
      %s807 = scalar_select %p806, %s40, 1
      %s808 = smul.addr %s807, 16
      %s809 = smul.addr %s808, 8
      %s810 = scalar_lea.vmem %s3, %s809
      %p811 = pneg %p139
      %p812 = pneg %p136
      %p813 = scmp.lt.s32.totalorder %s40, 1
      %s814 = scalar_select %p813, %s40, 1
      %s815 = smul.addr %s814, 4
      %s816 = smul.addr %s815, 8
      %s817 = scalar_lea.vmem %s4, %s816
      %p818 = pneg %p165
      %p819 = pneg %p162
      %p820 = pneg %p186
      %p821 = pneg %p183
      %p822 = pneg %p207
      %p823 = pneg %p204
      %p824 = pneg %p228
      %p825 = pneg %p225
      %p826 = pneg %p249
      %p827 = pneg %p246
      %p828 = pneg %p270
      %p829 = pneg %p267
      %p830 = pneg %p291
      %p831 = pneg %p288
      %p832 = pneg %p312
      %p833 = pneg %p309
      %p834 = pneg %p333
      %p835 = pneg %p330
      %p836 = pneg %p354
      %p837 = pneg %p351
      %p838 = pneg %p375
      %p839 = pneg %p372
      %p840 = pneg %p396
      %p841 = pneg %p393
      %p842 = pneg %p417
      %p843 = pneg %p414
      %p844 = pneg %p438
      %p845 = pneg %p435
      %p846 = pneg %p459
      %p847 = pneg %p456
      %p848 = pneg %p480
      %p849 = pneg %p477
      %p850 = pneg %p501
      %p851 = pneg %p498
      %p852 = pneg %p522
      %p853 = pneg %p519
      %p854 = pneg %p543
      %p855 = pneg %p540
      %p856 = pneg %p564
      %p857 = pneg %p561
      %p858 = pneg %p585
      %p859 = pneg %p582
      %p860 = pneg %p606
      %p861 = pneg %p603
      %p862 = pneg %p627
      %p863 = pneg %p624
      %p864 = pneg %p653
      %p865 = pneg %p650
      %p866 = scmp.lt.s32.totalorder %s40, 1
      %s867 = scalar_select %p866, %s40, 1
      %s868 = smul.addr %s867, 2
      %s869 = scalar_lea.vmem %s27, %s868
      %p870 = scmp.lt.s32.totalorder %s40, 1
      %s871 = scalar_select %p870, %s40, 1
      %s872 = smul.addr %s871, 256
      %s873 = smul.addr %s872, 8
      %s874 = scalar_lea.vmem %s0, %s873
      %p875 = scmp.lt.s32.totalorder %s40, 1
      %s876 = scalar_select %p875, %s40, 1
      %s877 = smul.addr %s876, 256
      %s878 = smul.addr %s877, 8
      %s879 = scalar_lea.vmem %s1, %s878
      %p880 = scmp.lt.s32.totalorder %s40, 1
      %s881 = scalar_select %p880, %s40, 1
      %s882 = smul.addr %s881, 64
      %s883 = smul.addr %s882, 8
      %s884 = scalar_lea.vmem %s2, %s883
      %p885 = scmp.lt.s32.totalorder %s40, 1
      %s886 = scalar_select %p885, %s40, 1
      %s887 = smul.addr %s886, 16
      %s888 = smul.addr %s887, 8
      %s889 = scalar_lea.vmem %s3, %s888
      %p890 = scmp.lt.s32.totalorder %s40, 1
      %s891 = scalar_select %p890, %s40, 1
      %s892 = smul.addr %s891, 4
      %s893 = smul.addr %s892, 8
      %s894 = scalar_lea.vmem %s4, %s893
      %p895 = scmp.lt.s32.totalorder %s40, 1
      %s896 = scalar_select %p895, %s40, 1
      %s897 = smul.addr %s896, 2
      %s898 = scalar_lea.vmem %s27, %s897
      %v899 = vld [vmem:[%s874] sm:$0xff]
      %v900 = vld [vmem:[%s874 + $0x8] sm:$0xff]
      %v901 = vld [vmem:[%s874 + $0x10] sm:$0xff]
      %v902 = vld [vmem:[%s874 + $0x18] sm:$0xff]
      %v903 = vld [vmem:[%s874 + $0x20] sm:$0xff]
      %v904 = vld [vmem:[%s874 + $0x28] sm:$0xff]
      %v905 = vld [vmem:[%s874 + $0x30] sm:$0xff]
      %v906 = vld [vmem:[%s874 + $0x38] sm:$0xff]
      %v907 = vld [vmem:[%s874 + $0x40] sm:$0xff]
      %v908 = vld [vmem:[%s874 + $0x48] sm:$0xff]
      %v909 = vld [vmem:[%s874 + $0x50] sm:$0xff]
      %v910 = vld [vmem:[%s874 + $0x58] sm:$0xff]
      %v911 = vld [vmem:[%s874 + $0x60] sm:$0xff]
      %v912 = vld [vmem:[%s874 + $0x68] sm:$0xff]
      %v913 = vld [vmem:[%s874 + $0x70] sm:$0xff]
      %v914 = vld [vmem:[%s874 + $0x78] sm:$0xff]
      %v915 = vld [vmem:[%s874 + $0x80] sm:$0xff]
      %v916 = vld [vmem:[%s874 + $0x88] sm:$0xff]
      %v917 = vld [vmem:[%s874 + $0x90] sm:$0xff]
      %v918 = vld [vmem:[%s874 + $0x98] sm:$0xff]
      %v919 = vld [vmem:[%s874 + $0xa0] sm:$0xff]
      %v920 = vld [vmem:[%s874 + $0xa8] sm:$0xff]
      %v921 = vld [vmem:[%s874 + $0xb0] sm:$0xff]
      %v922 = vld [vmem:[%s874 + $0xb8] sm:$0xff]
      %v923 = vld [vmem:[%s874 + $0xc0] sm:$0xff]
      %v924 = vld [vmem:[%s874 + $0xc8] sm:$0xff]
      %v925 = vld [vmem:[%s874 + $0xd0] sm:$0xff]
      %v926 = vld [vmem:[%s874 + $0xd8] sm:$0xff]
      %v927 = vld [vmem:[%s874 + $0xe0] sm:$0xff]
      %v928 = vld [vmem:[%s874 + $0xe8] sm:$0xff]
      %v929 = vld [vmem:[%s874 + $0xf0] sm:$0xff]
      %v930 = vld [vmem:[%s874 + $0xf8] sm:$0xff]
      %v931 = vld [vmem:[%s874 + $0x100] sm:$0xff]
      %v932 = vld [vmem:[%s874 + $0x108] sm:$0xff]
      %v933 = vld [vmem:[%s874 + $0x110] sm:$0xff]
      %v934 = vld [vmem:[%s874 + $0x118] sm:$0xff]
      %v935 = vld [vmem:[%s874 + $0x120] sm:$0xff]
      %v936 = vld [vmem:[%s874 + $0x128] sm:$0xff]
      %v937 = vld [vmem:[%s874 + $0x130] sm:$0xff]
      %v938 = vld [vmem:[%s874 + $0x138] sm:$0xff]
      %v939 = vld [vmem:[%s874 + $0x140] sm:$0xff]
      %v940 = vld [vmem:[%s874 + $0x148] sm:$0xff]
      %v941 = vld [vmem:[%s874 + $0x150] sm:$0xff]
      %v942 = vld [vmem:[%s874 + $0x158] sm:$0xff]
      %v943 = vld [vmem:[%s874 + $0x160] sm:$0xff]
      %v944 = vld [vmem:[%s874 + $0x168] sm:$0xff]
      %v945 = vld [vmem:[%s874 + $0x170] sm:$0xff]
      %v946 = vld [vmem:[%s874 + $0x178] sm:$0xff]
      %v947 = vld [vmem:[%s874 + $0x180] sm:$0xff]
      %v948 = vld [vmem:[%s874 + $0x188] sm:$0xff]
      %v949 = vld [vmem:[%s874 + $0x190] sm:$0xff]
      %v950 = vld [vmem:[%s874 + $0x198] sm:$0xff]
      %v951 = vld [vmem:[%s874 + $0x1a0] sm:$0xff]
      %v952 = vld [vmem:[%s874 + $0x1a8] sm:$0xff]
      %v953 = vld [vmem:[%s874 + $0x1b0] sm:$0xff]
      %v954 = vld [vmem:[%s874 + $0x1b8] sm:$0xff]
      %v955 = vld [vmem:[%s874 + $0x1c0] sm:$0xff]
      %v956 = vld [vmem:[%s874 + $0x1c8] sm:$0xff]
      %v957 = vld [vmem:[%s874 + $0x1d0] sm:$0xff]
      %v958 = vld [vmem:[%s874 + $0x1d8] sm:$0xff]
      %v959 = vld [vmem:[%s874 + $0x1e0] sm:$0xff]
      %v960 = vld [vmem:[%s874 + $0x1e8] sm:$0xff]
      %v961 = vld [vmem:[%s874 + $0x1f0] sm:$0xff]
      %v962 = vld [vmem:[%s874 + $0x1f8] sm:$0xff]
      %v963 = vld [vmem:[%s874 + $0x200] sm:$0xff]
      %v964 = vld [vmem:[%s874 + $0x208] sm:$0xff]
      %v965 = vld [vmem:[%s874 + $0x210] sm:$0xff]
      %v966 = vld [vmem:[%s874 + $0x218] sm:$0xff]
      %v967 = vld [vmem:[%s874 + $0x220] sm:$0xff]
      %v968 = vld [vmem:[%s874 + $0x228] sm:$0xff]
      %v969 = vld [vmem:[%s874 + $0x230] sm:$0xff]
      %v970 = vld [vmem:[%s874 + $0x238] sm:$0xff]
      %v971 = vld [vmem:[%s874 + $0x240] sm:$0xff]
      %v972 = vld [vmem:[%s874 + $0x248] sm:$0xff]
      %v973 = vld [vmem:[%s874 + $0x250] sm:$0xff]
      %v974 = vld [vmem:[%s874 + $0x258] sm:$0xff]
      %v975 = vld [vmem:[%s874 + $0x260] sm:$0xff]
      %v976 = vld [vmem:[%s874 + $0x268] sm:$0xff]
      %v977 = vld [vmem:[%s874 + $0x270] sm:$0xff]
      %v978 = vld [vmem:[%s874 + $0x278] sm:$0xff]
      %v979 = vld [vmem:[%s874 + $0x280] sm:$0xff]
      %v980 = vld [vmem:[%s874 + $0x288] sm:$0xff]
      %v981 = vld [vmem:[%s874 + $0x290] sm:$0xff]
      %v982 = vld [vmem:[%s874 + $0x298] sm:$0xff]
      %v983 = vld [vmem:[%s874 + $0x2a0] sm:$0xff]
      %v984 = vld [vmem:[%s874 + $0x2a8] sm:$0xff]
      %v985 = vld [vmem:[%s874 + $0x2b0] sm:$0xff]
      %v986 = vld [vmem:[%s874 + $0x2b8] sm:$0xff]
      %v987 = vld [vmem:[%s874 + $0x2c0] sm:$0xff]
      %v988 = vld [vmem:[%s874 + $0x2c8] sm:$0xff]
      %v989 = vld [vmem:[%s874 + $0x2d0] sm:$0xff]
      %v990 = vld [vmem:[%s874 + $0x2d8] sm:$0xff]
      %v991 = vld [vmem:[%s874 + $0x2e0] sm:$0xff]
      %v992 = vld [vmem:[%s874 + $0x2e8] sm:$0xff]
      %v993 = vld [vmem:[%s874 + $0x2f0] sm:$0xff]
      %v994 = vld [vmem:[%s874 + $0x2f8] sm:$0xff]
      %v995 = vld [vmem:[%s874 + $0x300] sm:$0xff]
      %v996 = vld [vmem:[%s874 + $0x308] sm:$0xff]
      %v997 = vld [vmem:[%s874 + $0x310] sm:$0xff]
      %v998 = vld [vmem:[%s874 + $0x318] sm:$0xff]
      %v999 = vld [vmem:[%s874 + $0x320] sm:$0xff]
      %v1000 = vld [vmem:[%s874 + $0x328] sm:$0xff]
      %v1001 = vld [vmem:[%s874 + $0x330] sm:$0xff]
      %v1002 = vld [vmem:[%s874 + $0x338] sm:$0xff]
      %v1003 = vld [vmem:[%s874 + $0x340] sm:$0xff]
      %v1004 = vld [vmem:[%s874 + $0x348] sm:$0xff]
      %v1005 = vld [vmem:[%s874 + $0x350] sm:$0xff]
      %v1006 = vld [vmem:[%s874 + $0x358] sm:$0xff]
      %v1007 = vld [vmem:[%s874 + $0x360] sm:$0xff]
      %v1008 = vld [vmem:[%s874 + $0x368] sm:$0xff]
      %v1009 = vld [vmem:[%s874 + $0x370] sm:$0xff]
      %v1010 = vld [vmem:[%s874 + $0x378] sm:$0xff]
      %v1011 = vld [vmem:[%s874 + $0x380] sm:$0xff]
      %v1012 = vld [vmem:[%s874 + $0x388] sm:$0xff]
      %v1013 = vld [vmem:[%s874 + $0x390] sm:$0xff]
      %v1014 = vld [vmem:[%s874 + $0x398] sm:$0xff]
      %v1015 = vld [vmem:[%s874 + $0x3a0] sm:$0xff]
      %v1016 = vld [vmem:[%s874 + $0x3a8] sm:$0xff]
      %v1017 = vld [vmem:[%s874 + $0x3b0] sm:$0xff]
      %v1018 = vld [vmem:[%s874 + $0x3b8] sm:$0xff]
      %v1019 = vld [vmem:[%s874 + $0x3c0] sm:$0xff]
      %v1020 = vld [vmem:[%s874 + $0x3c8] sm:$0xff]
      %v1021 = vld [vmem:[%s874 + $0x3d0] sm:$0xff]
      %v1022 = vld [vmem:[%s874 + $0x3d8] sm:$0xff]
      %v1023 = vld [vmem:[%s874 + $0x3e0] sm:$0xff]
      %v1024 = vld [vmem:[%s874 + $0x3e8] sm:$0xff]
      %v1025 = vld [vmem:[%s874 + $0x3f0] sm:$0xff]
      %v1026 = vld [vmem:[%s874 + $0x3f8] sm:$0xff]
      %v1027 = vld [vmem:[%s874 + $0x400] sm:$0xff]
      %v1028 = vld [vmem:[%s874 + $0x408] sm:$0xff]
      %v1029 = vld [vmem:[%s874 + $0x410] sm:$0xff]
      %v1030 = vld [vmem:[%s874 + $0x418] sm:$0xff]
      %v1031 = vld [vmem:[%s874 + $0x420] sm:$0xff]
      %v1032 = vld [vmem:[%s874 + $0x428] sm:$0xff]
      %v1033 = vld [vmem:[%s874 + $0x430] sm:$0xff]
      %v1034 = vld [vmem:[%s874 + $0x438] sm:$0xff]
      %v1035 = vld [vmem:[%s874 + $0x440] sm:$0xff]
      %v1036 = vld [vmem:[%s874 + $0x448] sm:$0xff]
      %v1037 = vld [vmem:[%s874 + $0x450] sm:$0xff]
      %v1038 = vld [vmem:[%s874 + $0x458] sm:$0xff]
      %v1039 = vld [vmem:[%s874 + $0x460] sm:$0xff]
      %v1040 = vld [vmem:[%s874 + $0x468] sm:$0xff]
      %v1041 = vld [vmem:[%s874 + $0x470] sm:$0xff]
      %v1042 = vld [vmem:[%s874 + $0x478] sm:$0xff]
      %v1043 = vld [vmem:[%s874 + $0x480] sm:$0xff]
      %v1044 = vld [vmem:[%s874 + $0x488] sm:$0xff]
      %v1045 = vld [vmem:[%s874 + $0x490] sm:$0xff]
      %v1046 = vld [vmem:[%s874 + $0x498] sm:$0xff]
      %v1047 = vld [vmem:[%s874 + $0x4a0] sm:$0xff]
      %v1048 = vld [vmem:[%s874 + $0x4a8] sm:$0xff]
      %v1049 = vld [vmem:[%s874 + $0x4b0] sm:$0xff]
      %v1050 = vld [vmem:[%s874 + $0x4b8] sm:$0xff]
      %v1051 = vld [vmem:[%s874 + $0x4c0] sm:$0xff]
      %v1052 = vld [vmem:[%s874 + $0x4c8] sm:$0xff]
      %v1053 = vld [vmem:[%s874 + $0x4d0] sm:$0xff]
      %v1054 = vld [vmem:[%s874 + $0x4d8] sm:$0xff]
      %v1055 = vld [vmem:[%s874 + $0x4e0] sm:$0xff]
      %v1056 = vld [vmem:[%s874 + $0x4e8] sm:$0xff]
      %v1057 = vld [vmem:[%s874 + $0x4f0] sm:$0xff]
      %v1058 = vld [vmem:[%s874 + $0x4f8] sm:$0xff]
      %v1059 = vld [vmem:[%s874 + $0x500] sm:$0xff]
      %v1060 = vld [vmem:[%s874 + $0x508] sm:$0xff]
      %v1061 = vld [vmem:[%s874 + $0x510] sm:$0xff]
      %v1062 = vld [vmem:[%s874 + $0x518] sm:$0xff]
      %v1063 = vld [vmem:[%s874 + $0x520] sm:$0xff]
      %v1064 = vld [vmem:[%s874 + $0x528] sm:$0xff]
      %v1065 = vld [vmem:[%s874 + $0x530] sm:$0xff]
      %v1066 = vld [vmem:[%s874 + $0x538] sm:$0xff]
      %v1067 = vld [vmem:[%s874 + $0x540] sm:$0xff]
      %v1068 = vld [vmem:[%s874 + $0x548] sm:$0xff]
      %v1069 = vld [vmem:[%s874 + $0x550] sm:$0xff]
      %v1070 = vld [vmem:[%s874 + $0x558] sm:$0xff]
      %v1071 = vld [vmem:[%s874 + $0x560] sm:$0xff]
      %v1072 = vld [vmem:[%s874 + $0x568] sm:$0xff]
      %v1073 = vld [vmem:[%s874 + $0x570] sm:$0xff]
      %v1074 = vld [vmem:[%s874 + $0x578] sm:$0xff]
      %v1075 = vld [vmem:[%s874 + $0x580] sm:$0xff]
      %v1076 = vld [vmem:[%s874 + $0x588] sm:$0xff]
      %v1077 = vld [vmem:[%s874 + $0x590] sm:$0xff]
      %v1078 = vld [vmem:[%s874 + $0x598] sm:$0xff]
      %v1079 = vld [vmem:[%s874 + $0x5a0] sm:$0xff]
      %v1080 = vld [vmem:[%s874 + $0x5a8] sm:$0xff]
      %v1081 = vld [vmem:[%s874 + $0x5b0] sm:$0xff]
      %v1082 = vld [vmem:[%s874 + $0x5b8] sm:$0xff]
      %v1083 = vld [vmem:[%s874 + $0x5c0] sm:$0xff]
      %v1084 = vld [vmem:[%s874 + $0x5c8] sm:$0xff]
      %v1085 = vld [vmem:[%s874 + $0x5d0] sm:$0xff]
      %v1086 = vld [vmem:[%s874 + $0x5d8] sm:$0xff]
      %v1087 = vld [vmem:[%s874 + $0x5e0] sm:$0xff]
      %v1088 = vld [vmem:[%s874 + $0x5e8] sm:$0xff]
      %v1089 = vld [vmem:[%s874 + $0x5f0] sm:$0xff]
      %v1090 = vld [vmem:[%s874 + $0x5f8] sm:$0xff]
      %v1091 = vld [vmem:[%s874 + $0x600] sm:$0xff]
      %v1092 = vld [vmem:[%s874 + $0x608] sm:$0xff]
      %v1093 = vld [vmem:[%s874 + $0x610] sm:$0xff]
      %v1094 = vld [vmem:[%s874 + $0x618] sm:$0xff]
      %v1095 = vld [vmem:[%s874 + $0x620] sm:$0xff]
      %v1096 = vld [vmem:[%s874 + $0x628] sm:$0xff]
      %v1097 = vld [vmem:[%s874 + $0x630] sm:$0xff]
      %v1098 = vld [vmem:[%s874 + $0x638] sm:$0xff]
      %v1099 = vld [vmem:[%s874 + $0x640] sm:$0xff]
      %v1100 = vld [vmem:[%s874 + $0x648] sm:$0xff]
      %v1101 = vld [vmem:[%s874 + $0x650] sm:$0xff]
      %v1102 = vld [vmem:[%s874 + $0x658] sm:$0xff]
      %v1103 = vld [vmem:[%s874 + $0x660] sm:$0xff]
      %v1104 = vld [vmem:[%s874 + $0x668] sm:$0xff]
      %v1105 = vld [vmem:[%s874 + $0x670] sm:$0xff]
      %v1106 = vld [vmem:[%s874 + $0x678] sm:$0xff]
      %v1107 = vld [vmem:[%s874 + $0x680] sm:$0xff]
      %v1108 = vld [vmem:[%s874 + $0x688] sm:$0xff]
      %v1109 = vld [vmem:[%s874 + $0x690] sm:$0xff]
      %v1110 = vld [vmem:[%s874 + $0x698] sm:$0xff]
      %v1111 = vld [vmem:[%s874 + $0x6a0] sm:$0xff]
      %v1112 = vld [vmem:[%s874 + $0x6a8] sm:$0xff]
      %v1113 = vld [vmem:[%s874 + $0x6b0] sm:$0xff]
      %v1114 = vld [vmem:[%s874 + $0x6b8] sm:$0xff]
      %v1115 = vld [vmem:[%s874 + $0x6c0] sm:$0xff]
      %v1116 = vld [vmem:[%s874 + $0x6c8] sm:$0xff]
      %v1117 = vld [vmem:[%s874 + $0x6d0] sm:$0xff]
      %v1118 = vld [vmem:[%s874 + $0x6d8] sm:$0xff]
      %v1119 = vld [vmem:[%s874 + $0x6e0] sm:$0xff]
      %v1120 = vld [vmem:[%s874 + $0x6e8] sm:$0xff]
      %v1121 = vld [vmem:[%s874 + $0x6f0] sm:$0xff]
      %v1122 = vld [vmem:[%s874 + $0x6f8] sm:$0xff]
      %v1123 = vld [vmem:[%s874 + $0x700] sm:$0xff]
      %v1124 = vld [vmem:[%s874 + $0x708] sm:$0xff]
      %v1125 = vld [vmem:[%s874 + $0x710] sm:$0xff]
      %v1126 = vld [vmem:[%s874 + $0x718] sm:$0xff]
      %v1127 = vld [vmem:[%s874 + $0x720] sm:$0xff]
      %v1128 = vld [vmem:[%s874 + $0x728] sm:$0xff]
      %v1129 = vld [vmem:[%s874 + $0x730] sm:$0xff]
      %v1130 = vld [vmem:[%s874 + $0x738] sm:$0xff]
      %v1131 = vld [vmem:[%s874 + $0x740] sm:$0xff]
      %v1132 = vld [vmem:[%s874 + $0x748] sm:$0xff]
      %v1133 = vld [vmem:[%s874 + $0x750] sm:$0xff]
      %v1134 = vld [vmem:[%s874 + $0x758] sm:$0xff]
      %v1135 = vld [vmem:[%s874 + $0x760] sm:$0xff]
      %v1136 = vld [vmem:[%s874 + $0x768] sm:$0xff]
      %v1137 = vld [vmem:[%s874 + $0x770] sm:$0xff]
      %v1138 = vld [vmem:[%s874 + $0x778] sm:$0xff]
      %v1139 = vld [vmem:[%s874 + $0x780] sm:$0xff]
      %v1140 = vld [vmem:[%s874 + $0x788] sm:$0xff]
      %v1141 = vld [vmem:[%s874 + $0x790] sm:$0xff]
      %v1142 = vld [vmem:[%s874 + $0x798] sm:$0xff]
      %v1143 = vld [vmem:[%s874 + $0x7a0] sm:$0xff]
      %v1144 = vld [vmem:[%s874 + $0x7a8] sm:$0xff]
      %v1145 = vld [vmem:[%s874 + $0x7b0] sm:$0xff]
      %v1146 = vld [vmem:[%s874 + $0x7b8] sm:$0xff]
      %v1147 = vld [vmem:[%s874 + $0x7c0] sm:$0xff]
      %v1148 = vld [vmem:[%s874 + $0x7c8] sm:$0xff]
      %v1149 = vld [vmem:[%s874 + $0x7d0] sm:$0xff]
      %v1150 = vld [vmem:[%s874 + $0x7d8] sm:$0xff]
      %v1151 = vld [vmem:[%s874 + $0x7e0] sm:$0xff]
      %v1152 = vld [vmem:[%s874 + $0x7e8] sm:$0xff]
      %v1153 = vld [vmem:[%s874 + $0x7f0] sm:$0xff]
      %v1154 = vld [vmem:[%s874 + $0x7f8] sm:$0xff]
      %v1155 = vld [vmem:[%s5] sm:$0xff]
      %v1156 = vld [vmem:[%s5 + $0x8] sm:$0xff]
      %v1157 = vld [vmem:[%s5 + $0x10] sm:$0xff]
      %v1158 = vld [vmem:[%s5 + $0x18] sm:$0xff]
      %v1159 = vld [vmem:[%s6] sm:$0x1]
      %v1161 = vlaneseq
      %v1162 = vshrl.u32 %v1161, 7
      %v1163 = vsub.s32 0, %v1162
      %v1164 = vrot.slane %v1159, %v1163
      %vm1166 = vcmask 261120
      %v1168 = vsel %vm1166, %v899, 0
      %v1171 = vsel %vm1166, %v900, 0
      %v1174 = vsel %vm1166, %v901, 0
      %v1177 = vsel %vm1166, %v902, 0
      %v1180 = vsel %vm1166, %v903, 0
      %v1183 = vsel %vm1166, %v904, 0
      %v1186 = vsel %vm1166, %v905, 0
      %v1189 = vsel %vm1166, %v906, 0
      %v1192 = vsel %vm1166, %v907, 0
      %v1195 = vsel %vm1166, %v908, 0
      %v1198 = vsel %vm1166, %v909, 0
      %v1201 = vsel %vm1166, %v910, 0
      %v1204 = vsel %vm1166, %v911, 0
      %v1207 = vsel %vm1166, %v912, 0
      %v1210 = vsel %vm1166, %v913, 0
      %v1213 = vsel %vm1166, %v914, 0
      %v1216 = vsel %vm1166, %v915, 0
      %v1219 = vsel %vm1166, %v916, 0
      %v1222 = vsel %vm1166, %v917, 0
      %v1225 = vsel %vm1166, %v918, 0
      %v1228 = vsel %vm1166, %v919, 0
      %v1231 = vsel %vm1166, %v920, 0
      %v1234 = vsel %vm1166, %v921, 0
      %v1237 = vsel %vm1166, %v922, 0
      %v1240 = vsel %vm1166, %v923, 0
      %v1243 = vsel %vm1166, %v924, 0
      %v1246 = vsel %vm1166, %v925, 0
      %v1249 = vsel %vm1166, %v926, 0
      %v1252 = vsel %vm1166, %v927, 0
      %v1255 = vsel %vm1166, %v928, 0
      %v1258 = vsel %vm1166, %v929, 0
      %v1261 = vsel %vm1166, %v930, 0
      %v1264 = vsel %vm1166, %v931, 0
      %v1267 = vsel %vm1166, %v932, 0
      %v1270 = vsel %vm1166, %v933, 0
      %v1273 = vsel %vm1166, %v934, 0
      %v1276 = vsel %vm1166, %v935, 0
      %v1279 = vsel %vm1166, %v936, 0
      %v1282 = vsel %vm1166, %v937, 0
      %v1285 = vsel %vm1166, %v938, 0
      %v1288 = vsel %vm1166, %v939, 0
      %v1291 = vsel %vm1166, %v940, 0
      %v1294 = vsel %vm1166, %v941, 0
      %v1297 = vsel %vm1166, %v942, 0
      %v1300 = vsel %vm1166, %v943, 0
      %v1303 = vsel %vm1166, %v944, 0
      %v1306 = vsel %vm1166, %v945, 0
      %v1309 = vsel %vm1166, %v946, 0
      %v1312 = vsel %vm1166, %v947, 0
      %v1315 = vsel %vm1166, %v948, 0
      %v1318 = vsel %vm1166, %v949, 0
      %v1321 = vsel %vm1166, %v950, 0
      %v1324 = vsel %vm1166, %v951, 0
      %v1327 = vsel %vm1166, %v952, 0
      %v1330 = vsel %vm1166, %v953, 0
      %v1333 = vsel %vm1166, %v954, 0
      %v1336 = vsel %vm1166, %v955, 0
      %v1339 = vsel %vm1166, %v956, 0
      %v1342 = vsel %vm1166, %v957, 0
      %v1345 = vsel %vm1166, %v958, 0
      %v1348 = vsel %vm1166, %v959, 0
      %v1351 = vsel %vm1166, %v960, 0
      %v1354 = vsel %vm1166, %v961, 0
      %v1357 = vsel %vm1166, %v962, 0
      %v1360 = vsel %vm1166, %v963, 0
      %v1363 = vsel %vm1166, %v964, 0
      %v1366 = vsel %vm1166, %v965, 0
      %v1369 = vsel %vm1166, %v966, 0
      %v1372 = vsel %vm1166, %v967, 0
      %v1375 = vsel %vm1166, %v968, 0
      %v1378 = vsel %vm1166, %v969, 0
      %v1381 = vsel %vm1166, %v970, 0
      %v1384 = vsel %vm1166, %v971, 0
      %v1387 = vsel %vm1166, %v972, 0
      %v1390 = vsel %vm1166, %v973, 0
      %v1393 = vsel %vm1166, %v974, 0
      %v1396 = vsel %vm1166, %v975, 0
      %v1399 = vsel %vm1166, %v976, 0
      %v1402 = vsel %vm1166, %v977, 0
      %v1405 = vsel %vm1166, %v978, 0
      %v1408 = vsel %vm1166, %v979, 0
      %v1411 = vsel %vm1166, %v980, 0
      %v1414 = vsel %vm1166, %v981, 0
      %v1417 = vsel %vm1166, %v982, 0
      %v1420 = vsel %vm1166, %v983, 0
      %v1423 = vsel %vm1166, %v984, 0
      %v1426 = vsel %vm1166, %v985, 0
      %v1429 = vsel %vm1166, %v986, 0
      %v1432 = vsel %vm1166, %v987, 0
      %v1435 = vsel %vm1166, %v988, 0
      %v1438 = vsel %vm1166, %v989, 0
      %v1441 = vsel %vm1166, %v990, 0
      %v1444 = vsel %vm1166, %v991, 0
      %v1447 = vsel %vm1166, %v992, 0
      %v1450 = vsel %vm1166, %v993, 0
      %v1453 = vsel %vm1166, %v994, 0
      %v1456 = vsel %vm1166, %v995, 0
      %v1459 = vsel %vm1166, %v996, 0
      %v1462 = vsel %vm1166, %v997, 0
      %v1465 = vsel %vm1166, %v998, 0
      %v1468 = vsel %vm1166, %v999, 0
      %v1471 = vsel %vm1166, %v1000, 0
      %v1474 = vsel %vm1166, %v1001, 0
      %v1477 = vsel %vm1166, %v1002, 0
      %v1480 = vsel %vm1166, %v1003, 0
      %v1483 = vsel %vm1166, %v1004, 0
      %v1486 = vsel %vm1166, %v1005, 0
      %v1489 = vsel %vm1166, %v1006, 0
      %v1492 = vsel %vm1166, %v1007, 0
      %v1495 = vsel %vm1166, %v1008, 0
      %v1498 = vsel %vm1166, %v1009, 0
      %v1501 = vsel %vm1166, %v1010, 0
      %v1504 = vsel %vm1166, %v1011, 0
      %v1507 = vsel %vm1166, %v1012, 0
      %v1510 = vsel %vm1166, %v1013, 0
      %v1513 = vsel %vm1166, %v1014, 0
      %v1516 = vsel %vm1166, %v1015, 0
      %v1519 = vsel %vm1166, %v1016, 0
      %v1522 = vsel %vm1166, %v1017, 0
      %v1525 = vsel %vm1166, %v1018, 0
      %v1528 = vsel %vm1166, %v1019, 0
      %v1531 = vsel %vm1166, %v1020, 0
      %v1534 = vsel %vm1166, %v1021, 0
      %v1537 = vsel %vm1166, %v1022, 0
      %v1540 = vsel %vm1166, %v1023, 0
      %v1543 = vsel %vm1166, %v1024, 0
      %v1546 = vsel %vm1166, %v1025, 0
      %v1549 = vsel %vm1166, %v1026, 0
      %v1552 = vsel %vm1166, %v1027, 0
      %v1555 = vsel %vm1166, %v1028, 0
      %v1558 = vsel %vm1166, %v1029, 0
      %v1561 = vsel %vm1166, %v1030, 0
      %v1564 = vsel %vm1166, %v1031, 0
      %v1567 = vsel %vm1166, %v1032, 0
      %v1570 = vsel %vm1166, %v1033, 0
      %v1573 = vsel %vm1166, %v1034, 0
      %v1576 = vsel %vm1166, %v1035, 0
      %v1579 = vsel %vm1166, %v1036, 0
      %v1582 = vsel %vm1166, %v1037, 0
      %v1585 = vsel %vm1166, %v1038, 0
      %v1588 = vsel %vm1166, %v1039, 0
      %v1591 = vsel %vm1166, %v1040, 0
      %v1594 = vsel %vm1166, %v1041, 0
      %v1597 = vsel %vm1166, %v1042, 0
      %v1600 = vsel %vm1166, %v1043, 0
      %v1603 = vsel %vm1166, %v1044, 0
      %v1606 = vsel %vm1166, %v1045, 0
      %v1609 = vsel %vm1166, %v1046, 0
      %v1612 = vsel %vm1166, %v1047, 0
      %v1615 = vsel %vm1166, %v1048, 0
      %v1618 = vsel %vm1166, %v1049, 0
      %v1621 = vsel %vm1166, %v1050, 0
      %v1624 = vsel %vm1166, %v1051, 0
      %v1627 = vsel %vm1166, %v1052, 0
      %v1630 = vsel %vm1166, %v1053, 0
      %v1633 = vsel %vm1166, %v1054, 0
      %v1636 = vsel %vm1166, %v1055, 0
      %v1639 = vsel %vm1166, %v1056, 0
      %v1642 = vsel %vm1166, %v1057, 0
      %v1645 = vsel %vm1166, %v1058, 0
      %v1648 = vsel %vm1166, %v1059, 0
      %v1651 = vsel %vm1166, %v1060, 0
      %v1654 = vsel %vm1166, %v1061, 0
      %v1657 = vsel %vm1166, %v1062, 0
      %v1660 = vsel %vm1166, %v1063, 0
      %v1663 = vsel %vm1166, %v1064, 0
      %v1666 = vsel %vm1166, %v1065, 0
      %v1669 = vsel %vm1166, %v1066, 0
      %v1672 = vsel %vm1166, %v1067, 0
      %v1675 = vsel %vm1166, %v1068, 0
      %v1678 = vsel %vm1166, %v1069, 0
      %v1681 = vsel %vm1166, %v1070, 0
      %v1684 = vsel %vm1166, %v1071, 0
      %v1687 = vsel %vm1166, %v1072, 0
      %v1690 = vsel %vm1166, %v1073, 0
      %v1693 = vsel %vm1166, %v1074, 0
      %v1696 = vsel %vm1166, %v1075, 0
      %v1699 = vsel %vm1166, %v1076, 0
      %v1702 = vsel %vm1166, %v1077, 0
      %v1705 = vsel %vm1166, %v1078, 0
      %v1708 = vsel %vm1166, %v1079, 0
      %v1711 = vsel %vm1166, %v1080, 0
      %v1714 = vsel %vm1166, %v1081, 0
      %v1717 = vsel %vm1166, %v1082, 0
      %v1720 = vsel %vm1166, %v1083, 0
      %v1723 = vsel %vm1166, %v1084, 0
      %v1726 = vsel %vm1166, %v1085, 0
      %v1729 = vsel %vm1166, %v1086, 0
      %v1732 = vsel %vm1166, %v1087, 0
      %v1735 = vsel %vm1166, %v1088, 0
      %v1738 = vsel %vm1166, %v1089, 0
      %v1741 = vsel %vm1166, %v1090, 0
      %v1744 = vsel %vm1166, %v1091, 0
      %v1747 = vsel %vm1166, %v1092, 0
      %v1750 = vsel %vm1166, %v1093, 0
      %v1753 = vsel %vm1166, %v1094, 0
      %v1756 = vsel %vm1166, %v1095, 0
      %v1759 = vsel %vm1166, %v1096, 0
      %v1762 = vsel %vm1166, %v1097, 0
      %v1765 = vsel %vm1166, %v1098, 0
      %v1768 = vsel %vm1166, %v1099, 0
      %v1771 = vsel %vm1166, %v1100, 0
      %v1774 = vsel %vm1166, %v1101, 0
      %v1777 = vsel %vm1166, %v1102, 0
      %v1780 = vsel %vm1166, %v1103, 0
      %v1783 = vsel %vm1166, %v1104, 0
      %v1786 = vsel %vm1166, %v1105, 0
      %v1789 = vsel %vm1166, %v1106, 0
      %v1792 = vsel %vm1166, %v1107, 0
      %v1795 = vsel %vm1166, %v1108, 0
      %v1798 = vsel %vm1166, %v1109, 0
      %v1801 = vsel %vm1166, %v1110, 0
      %v1804 = vsel %vm1166, %v1111, 0
      %v1807 = vsel %vm1166, %v1112, 0
      %v1810 = vsel %vm1166, %v1113, 0
      %v1813 = vsel %vm1166, %v1114, 0
      %v1816 = vsel %vm1166, %v1115, 0
      %v1819 = vsel %vm1166, %v1116, 0
      %v1822 = vsel %vm1166, %v1117, 0
      %v1825 = vsel %vm1166, %v1118, 0
      %v1828 = vsel %vm1166, %v1119, 0
      %v1831 = vsel %vm1166, %v1120, 0
      %v1834 = vsel %vm1166, %v1121, 0
      %v1837 = vsel %vm1166, %v1122, 0
      %v1840 = vsel %vm1166, %v1123, 0
      %v1843 = vsel %vm1166, %v1124, 0
      %v1846 = vsel %vm1166, %v1125, 0
      %v1849 = vsel %vm1166, %v1126, 0
      %v1852 = vsel %vm1166, %v1127, 0
      %v1855 = vsel %vm1166, %v1128, 0
      %v1858 = vsel %vm1166, %v1129, 0
      %v1861 = vsel %vm1166, %v1130, 0
      %v1864 = vsel %vm1166, %v1131, 0
      %v1867 = vsel %vm1166, %v1132, 0
      %v1870 = vsel %vm1166, %v1133, 0
      %v1873 = vsel %vm1166, %v1134, 0
      %v1876 = vsel %vm1166, %v1135, 0
      %v1879 = vsel %vm1166, %v1136, 0
      %v1882 = vsel %vm1166, %v1137, 0
      %v1885 = vsel %vm1166, %v1138, 0
      %v1888 = vsel %vm1166, %v1139, 0
      %v1891 = vsel %vm1166, %v1140, 0
      %v1894 = vsel %vm1166, %v1141, 0
      %v1897 = vsel %vm1166, %v1142, 0
      %v1900 = vsel %vm1166, %v1143, 0
      %v1903 = vsel %vm1166, %v1144, 0
      %v1906 = vsel %vm1166, %v1145, 0
      %v1909 = vsel %vm1166, %v1146, 0
      %v1912 = vsel %vm1166, %v1147, 0
      %v1915 = vsel %vm1166, %v1148, 0
      %v1918 = vsel %vm1166, %v1149, 0
      %v1921 = vsel %vm1166, %v1150, 0
      %v1924 = vsel %vm1166, %v1151, 0
      %v1927 = vsel %vm1166, %v1152, 0
      %v1930 = vsel %vm1166, %v1153, 0
      %v1933 = vsel %vm1166, %v1154, 0
      %1935 = vmatprep.subr.mxu0 0.0
      %1936 = vmatpush1.msra.mxu0 %v1155
      %1937 = vmatprep.subr.mxu0 0.0
      %1938 = vmatpush1.msra.mxu0 %v1156
      %1939 = vmatprep.subr.mxu0 0.0
      %1940 = vmatpush1.msra.mxu0 %v1157
      %1941 = vmatprep.subr.mxu0 0.0
      %1942 = vmatpush1.msra.mxu0 %v1158
      %1943 = vmatprep.subr.mxu0 0.0
      %1944 = vmatpush1.msra.mxu0 0.0
      %1945 = vmatprep.subr.mxu0 0.0
      %1946 = vmatpush1.msra.mxu0 0.0
      %1947 = vmatprep.subr.mxu0 0.0
      %1948 = vmatpush1.msra.mxu0 0.0
      %1949 = vmatprep.subr.mxu0 0.0
      %1950 = vmatpush1.msra.mxu0 0.0
      %1951 = vmatprep.subr.mxu0 0.0
      %1952 = vmatpush1.msra.mxu0 0.0
      %1953 = vmatprep.subr.mxu0 0.0
      %1954 = vmatpush1.msra.mxu0 0.0
      %1955 = vmatprep.subr.mxu0 0.0
      %1956 = vmatpush1.msra.mxu0 0.0
      %1957 = vmatprep.subr.mxu0 0.0
      %1958 = vmatpush1.msra.mxu0 0.0
      %1959 = vmatprep.subr.mxu0 0.0
      %1960 = vmatpush1.msra.mxu0 0.0
      %1961 = vmatprep.subr.mxu0 0.0
      %1962 = vmatpush1.msra.mxu0 0.0
      %1963 = vmatprep.subr.mxu0 0.0
      %1964 = vmatpush1.msra.mxu0 0.0
      %1965 = vmatprep.subr.mxu0 0.0
      %1966 = vmatpush1.msra.mxu0 0.0
      %1967 = vmatprep.subr.mxu0 0.0
      %1968 = vmatpush1.msra.mxu0 0.0
      %1969 = vmatprep.subr.mxu0 0.0
      %1970 = vmatpush1.msra.mxu0 0.0
      %1971 = vmatprep.subr.mxu0 0.0
      %1972 = vmatpush1.msra.mxu0 0.0
      %1973 = vmatprep.subr.mxu0 0.0
      %1974 = vmatpush1.msra.mxu0 0.0
      %1975 = vmatprep.subr.mxu0 0.0
      %1976 = vmatpush1.msra.mxu0 0.0
      %1977 = vmatprep.subr.mxu0 0.0
      %1978 = vmatpush1.msra.mxu0 0.0
      %1979 = vmatprep.subr.mxu0 0.0
      %1980 = vmatpush1.msra.mxu0 0.0
      %1981 = vmatprep.subr.mxu0 0.0
      %1982 = vmatpush1.msra.mxu0 0.0
      %1983 = vmatprep.subr.mxu0 0.0
      %1984 = vmatpush1.msra.mxu0 0.0
      %1985 = vmatprep.subr.mxu0 0.0
      %1986 = vmatpush1.msra.mxu0 0.0
      %1987 = vmatprep.subr.mxu0 0.0
      %1988 = vmatpush1.msra.mxu0 0.0
      %1989 = vmatprep.subr.mxu0 0.0
      %1990 = vmatpush1.msra.mxu0 0.0
      %1991 = vmatprep.subr.mxu0 0.0
      %1992 = vmatpush1.msra.mxu0 0.0
      %1993 = vmatprep.subr.mxu0 0.0
      %1994 = vmatpush1.msra.mxu0 0.0
      %1995 = vmatprep.subr.mxu0 0.0
      %1996 = vmatpush1.msra.mxu0 0.0
      %1997 = vmatprep.subr.mxu0 0.0
      %1998 = vmatpush1.msra.mxu0 0.0
      %1999 = vmatprep.mubr.f32.mxu0 0.0
      %2000 = vmatmul.mubr.f32.gmra.mrb[0].mxu0 %v1168
      %v2001 = vpop.f32.mrb[0].mxu0
      %v2002 = vadd.f32 %v1164, %v2001
      %v2003 = vpop.f32.mrb[0].mxu0
      %2004 = vmatprep.mubr.f32.mxu0 0.0
      %2005 = vmatmul.mubr.f32.gmra.mrb[0].mxu0 %v1171
      %v2006 = vpop.f32.mrb[0].mxu0
      %v2007 = vadd.f32 %v1164, %v2006
      %v2008 = vpop.f32.mrb[0].mxu0
      %2009 = vmatprep.mubr.f32.mxu0 0.0
      %2010 = vmatmul.mubr.f32.gmra.mrb[0].mxu0 %v1174
      %v2011 = vpop.f32.mrb[0].mxu0
      %v2012 = vadd.f32 %v1164, %v2011
      %v2013 = vpop.f32.mrb[0].mxu0
      %2014 = vmatprep.mubr.f32.mxu0 0.0
      %2015 = vmatmul.mubr.f32.gmra.mrb[0].mxu0 %v1177
      %v2016 = vpop.f32.mrb[0].mxu0
      %v2017 = vadd.f32 %v1164, %v2016
      %v2018 = vpop.f32.mrb[0].mxu0
      %2019 = vmatprep.mubr.f32.mxu0 0.0
      %2020 = vmatmul.mubr.f32.gmra.mrb[0].mxu0 %v1180
      %v2021 = vpop.f32.mrb[0].mxu0
      %v2022 = vadd.f32 %v1164, %v2021
      %v2023 = vpop.f32.mrb[0].mxu0
      %2024 = vmatprep.mubr.f32.mxu0 0.0
      %2025 = vmatmul.mubr.f32.gmra.mrb[0].mxu0 %v1183
      %v2026 = vpop.f32.mrb[0].mxu0
      %v2027 = vadd.f32 %v1164, %v2026
      %v2028 = vpop.f32.mrb[0].mxu0
      %2029 = vmatprep.mubr.f32.mxu0 0.0
      %2030 = vmatmul.mubr.f32.gmra.mrb[0].mxu0 %v1186
      %v2031 = vpop.f32.mrb[0].mxu0
      %v2032 = vadd.f32 %v1164, %v2031
      %v2033 = vpop.f32.mrb[0].mxu0
      %2034 = vmatprep.mubr.f32.mxu0 0.0
      %2035 = vmatmul.mubr.f32.gmra.mrb[0].mxu0 %v1189
      %v2036 = vpop.f32.mrb[0].mxu0
      %v2037 = vadd.f32 %v1164, %v2036
      %v2038 = vpop.f32.mrb[0].mxu0
      %2039 = vmatprep.mubr.f32.mxu0 0.0
      %2040 = vmatmul.mubr.f32.gmra.mrb[0].mxu0 %v1192
      %v2041 = vpop.f32.mrb[0].mxu0
      %v2042 = vadd.f32 %v1164, %v2041
      %v2043 = vpop.f32.mrb[0].mxu0
      %2044 = vmatprep.mubr.f32.mxu0 0.0
      %2045 = vmatmul.mubr.f32.gmra.mrb[0].mxu0 %v1195
      %v2046 = vpop.f32.mrb[0].mxu0
      %v2047 = vadd.f32 %v1164, %v2046
      %v2048 = vpop.f32.mrb[0].mxu0
      %2049 = vmatprep.mubr.f32.mxu0 0.0
      %2050 = vmatmul.mubr.f32.gmra.mrb[0].mxu0 %v1198
      %v2051 = vpop.f32.mrb[0].mxu0
      %v2052 = vadd.f32 %v1164, %v2051
      %v2053 = vpop.f32.mrb[0].mxu0
      %2054 = vmatprep.mubr.f32.mxu0 0.0
      %2055 = vmatmul.mubr.f32.gmra.mrb[0].mxu0 %v1201
      %v2056 = vpop.f32.mrb[0].mxu0
      %v2057 = vadd.f32 %v1164, %v2056
      %v2058 = vpop.f32.mrb[0].mxu0
      %2059 = vmatprep.mubr.f32.mxu0 0.0
      %2060 = vmatmul.mubr.f32.gmra.mrb[0].mxu0 %v1204
      %v2061 = vpop.f32.mrb[0].mxu0
      %v2062 = vadd.f32 %v1164, %v2061
      %v2063 = vpop.f32.mrb[0].mxu0
      %2064 = vmatprep.mubr.f32.mxu0 0.0
      %2065 = vmatmul.mubr.f32.gmra.mrb[0].mxu0 %v1207
      %v2066 = vpop.f32.mrb[0].mxu0
      %v2067 = vadd.f32 %v1164, %v2066
      %v2068 = vpop.f32.mrb[0].mxu0
      %2069 = vmatprep.mubr.f32.mxu0 0.0
      %2070 = vmatmul.mubr.f32.gmra.mrb[0].mxu0 %v1210
      %v2071 = vpop.f32.mrb[0].mxu0
      %v2072 = vadd.f32 %v1164, %v2071
      %v2073 = vpop.f32.mrb[0].mxu0
      %2074 = vmatprep.mubr.f32.mxu0 0.0
      %2075 = vmatmul.mubr.f32.gmra.mrb[0].mxu0 %v1213
      %v2076 = vpop.f32.mrb[0].mxu0
      %v2077 = vadd.f32 %v1164, %v2076
      %v2078 = vpop.f32.mrb[0].mxu0
      %2079 = vmatprep.mubr.f32.mxu0 0.0
      %2080 = vmatmul.mubr.f32.gmra.mrb[0].mxu0 %v1216
      %v2081 = vpop.f32.mrb[0].mxu0
      %v2082 = vadd.f32 %v1164, %v2081
      %v2083 = vpop.f32.mrb[0].mxu0
      %2084 = vmatprep.mubr.f32.mxu0 0.0
      %2085 = vmatmul.mubr.f32.gmra.mrb[0].mxu0 %v1219
      %v2086 = vpop.f32.mrb[0].mxu0
      %v2087 = vadd.f32 %v1164, %v2086
      %v2088 = vpop.f32.mrb[0].mxu0
      %2089 = vmatprep.mubr.f32.mxu0 0.0
      %2090 = vmatmul.mubr.f32.gmra.mrb[0].mxu0 %v1222
      %v2091 = vpop.f32.mrb[0].mxu0
      %v2092 = vadd.f32 %v1164, %v2091
      %v2093 = vpop.f32.mrb[0].mxu0
      %2094 = vmatprep.mubr.f32.mxu0 0.0
      %2095 = vmatmul.mubr.f32.gmra.mrb[0].mxu0 %v1225
      %v2096 = vpop.f32.mrb[0].mxu0
      %v2097 = vadd.f32 %v1164, %v2096
      %v2098 = vpop.f32.mrb[0].mxu0
      %2099 = vmatprep.mubr.f32.mxu0 0.0
      %2100 = vmatmul.mubr.f32.gmra.mrb[0].mxu0 %v1228
      %v2101 = vpop.f32.mrb[0].mxu0
      %v2102 = vadd.f32 %v1164, %v2101
      %v2103 = vpop.f32.mrb[0].mxu0
      %2104 = vmatprep.mubr.f32.mxu0 0.0
      %2105 = vmatmul.mubr.f32.gmra.mrb[0].mxu0 %v1231
      %v2106 = vpop.f32.mrb[0].mxu0
      %v2107 = vadd.f32 %v1164, %v2106
      %v2108 = vpop.f32.mrb[0].mxu0
      %2109 = vmatprep.mubr.f32.mxu0 0.0
      %2110 = vmatmul.mubr.f32.gmra.mrb[0].mxu0 %v1234
      %v2111 = vpop.f32.mrb[0].mxu0
      %v2112 = vadd.f32 %v1164, %v2111
      %v2113 = vpop.f32.mrb[0].mxu0
      %2114 = vmatprep.mubr.f32.mxu0 0.0
      %2115 = vmatmul.mubr.f32.gmra.mrb[0].mxu0 %v1237
      %v2116 = vpop.f32.mrb[0].mxu0
      %v2117 = vadd.f32 %v1164, %v2116
      %v2118 = vpop.f32.mrb[0].mxu0
      %2119 = vmatprep.mubr.f32.mxu0 0.0
      %2120 = vmatmul.mubr.f32.gmra.mrb[0].mxu0 %v1240
      %v2121 = vpop.f32.mrb[0].mxu0
      %v2122 = vadd.f32 %v1164, %v2121
      %v2123 = vpop.f32.mrb[0].mxu0
      %2124 = vmatprep.mubr.f32.mxu0 0.0
      %2125 = vmatmul.mubr.f32.gmra.mrb[0].mxu0 %v1243
      %v2126 = vpop.f32.mrb[0].mxu0
      %v2127 = vadd.f32 %v1164, %v2126
      %v2128 = vpop.f32.mrb[0].mxu0
      %2129 = vmatprep.mubr.f32.mxu0 0.0
      %2130 = vmatmul.mubr.f32.gmra.mrb[0].mxu0 %v1246
      %v2131 = vpop.f32.mrb[0].mxu0
      %v2132 = vadd.f32 %v1164, %v2131
      %v2133 = vpop.f32.mrb[0].mxu0
      %2134 = vmatprep.mubr.f32.mxu0 0.0
      %2135 = vmatmul.mubr.f32.gmra.mrb[0].mxu0 %v1249
      %v2136 = vpop.f32.mrb[0].mxu0
      %v2137 = vadd.f32 %v1164, %v2136
      %v2138 = vpop.f32.mrb[0].mxu0
      %2139 = vmatprep.mubr.f32.mxu0 0.0
      %2140 = vmatmul.mubr.f32.gmra.mrb[0].mxu0 %v1252
      %v2141 = vpop.f32.mrb[0].mxu0
      %v2142 = vadd.f32 %v1164, %v2141
      %v2143 = vpop.f32.mrb[0].mxu0
      %2144 = vmatprep.mubr.f32.mxu0 0.0
      %2145 = vmatmul.mubr.f32.gmra.mrb[0].mxu0 %v1255
      %v2146 = vpop.f32.mrb[0].mxu0
      %v2147 = vadd.f32 %v1164, %v2146
      %v2148 = vpop.f32.mrb[0].mxu0
      %2149 = vmatprep.mubr.f32.mxu0 0.0
      %2150 = vmatmul.mubr.f32.gmra.mrb[0].mxu0 %v1258
      %v2151 = vpop.f32.mrb[0].mxu0
      %v2152 = vadd.f32 %v1164, %v2151
      %v2153 = vpop.f32.mrb[0].mxu0
      %2154 = vmatprep.mubr.f32.mxu0 0.0
      %2155 = vmatmul.mubr.f32.gmra.mrb[0].mxu0 %v1261
      %v2156 = vpop.f32.mrb[0].mxu0
      %v2157 = vadd.f32 %v1164, %v2156
      %v2158 = vpop.f32.mrb[0].mxu0
      %2159 = vmatprep.mubr.f32.mxu0 0.0
      %2160 = vmatmul.mubr.f32.gmra.mrb[0].mxu0 %v1264
      %v2161 = vpop.f32.mrb[0].mxu0
      %v2162 = vadd.f32 %v1164, %v2161
      %v2163 = vpop.f32.mrb[0].mxu0
      %2164 = vmatprep.mubr.f32.mxu0 0.0
      %2165 = vmatmul.mubr.f32.gmra.mrb[0].mxu0 %v1267
      %v2166 = vpop.f32.mrb[0].mxu0
      %v2167 = vadd.f32 %v1164, %v2166
      %v2168 = vpop.f32.mrb[0].mxu0
      %2169 = vmatprep.mubr.f32.mxu0 0.0
      %2170 = vmatmul.mubr.f32.gmra.mrb[0].mxu0 %v1270
      %v2171 = vpop.f32.mrb[0].mxu0
      %v2172 = vadd.f32 %v1164, %v2171
      %v2173 = vpop.f32.mrb[0].mxu0
      %2174 = vmatprep.mubr.f32.mxu0 0.0
      %2175 = vmatmul.mubr.f32.gmra.mrb[0].mxu0 %v1273
      %v2176 = vpop.f32.mrb[0].mxu0
      %v2177 = vadd.f32 %v1164, %v2176
      %v2178 = vpop.f32.mrb[0].mxu0
      %2179 = vmatprep.mubr.f32.mxu0 0.0
      %2180 = vmatmul.mubr.f32.gmra.mrb[0].mxu0 %v1276
      %v2181 = vpop.f32.mrb[0].mxu0
      %v2182 = vadd.f32 %v1164, %v2181
      %v2183 = vpop.f32.mrb[0].mxu0
      %2184 = vmatprep.mubr.f32.mxu0 0.0
      %2185 = vmatmul.mubr.f32.gmra.mrb[0].mxu0 %v1279
      %v2186 = vpop.f32.mrb[0].mxu0
      %v2187 = vadd.f32 %v1164, %v2186
      %v2188 = vpop.f32.mrb[0].mxu0
      %2189 = vmatprep.mubr.f32.mxu0 0.0
      %2190 = vmatmul.mubr.f32.gmra.mrb[0].mxu0 %v1282
      %v2191 = vpop.f32.mrb[0].mxu0
      %v2192 = vadd.f32 %v1164, %v2191
      %v2193 = vpop.f32.mrb[0].mxu0
      %2194 = vmatprep.mubr.f32.mxu0 0.0
      %2195 = vmatmul.mubr.f32.gmra.mrb[0].mxu0 %v1285
      %v2196 = vpop.f32.mrb[0].mxu0
      %v2197 = vadd.f32 %v1164, %v2196
      %v2198 = vpop.f32.mrb[0].mxu0
      %2199 = vmatprep.mubr.f32.mxu0 0.0
      %2200 = vmatmul.mubr.f32.gmra.mrb[0].mxu0 %v1288
      %v2201 = vpop.f32.mrb[0].mxu0
      %v2202 = vadd.f32 %v1164, %v2201
      %v2203 = vpop.f32.mrb[0].mxu0
      %2204 = vmatprep.mubr.f32.mxu0 0.0
      %2205 = vmatmul.mubr.f32.gmra.mrb[0].mxu0 %v1291
      %v2206 = vpop.f32.mrb[0].mxu0
      %v2207 = vadd.f32 %v1164, %v2206
      %v2208 = vpop.f32.mrb[0].mxu0
      %2209 = vmatprep.mubr.f32.mxu0 0.0
      %2210 = vmatmul.mubr.f32.gmra.mrb[0].mxu0 %v1294
      %v2211 = vpop.f32.mrb[0].mxu0
      %v2212 = vadd.f32 %v1164, %v2211
      %v2213 = vpop.f32.mrb[0].mxu0
      %2214 = vmatprep.mubr.f32.mxu0 0.0
      %2215 = vmatmul.mubr.f32.gmra.mrb[0].mxu0 %v1297
      %v2216 = vpop.f32.mrb[0].mxu0
      %v2217 = vadd.f32 %v1164, %v2216
      %v2218 = vpop.f32.mrb[0].mxu0
      %2219 = vmatprep.mubr.f32.mxu0 0.0
      %2220 = vmatmul.mubr.f32.gmra.mrb[0].mxu0 %v1300
      %v2221 = vpop.f32.mrb[0].mxu0
      %v2222 = vadd.f32 %v1164, %v2221
      %v2223 = vpop.f32.mrb[0].mxu0
      %2224 = vmatprep.mubr.f32.mxu0 0.0
      %2225 = vmatmul.mubr.f32.gmra.mrb[0].mxu0 %v1303
      %v2226 = vpop.f32.mrb[0].mxu0
      %v2227 = vadd.f32 %v1164, %v2226
      %v2228 = vpop.f32.mrb[0].mxu0
      %2229 = vmatprep.mubr.f32.mxu0 0.0
      %2230 = vmatmul.mubr.f32.gmra.mrb[0].mxu0 %v1306
      %v2231 = vpop.f32.mrb[0].mxu0
      %v2232 = vadd.f32 %v1164, %v2231
      %v2233 = vpop.f32.mrb[0].mxu0
      %2234 = vmatprep.mubr.f32.mxu0 0.0
      %2235 = vmatmul.mubr.f32.gmra.mrb[0].mxu0 %v1309
      %v2236 = vpop.f32.mrb[0].mxu0
      %v2237 = vadd.f32 %v1164, %v2236
      %v2238 = vpop.f32.mrb[0].mxu0
      %2239 = vmatprep.mubr.f32.mxu0 0.0
      %2240 = vmatmul.mubr.f32.gmra.mrb[0].mxu0 %v1312
      %v2241 = vpop.f32.mrb[0].mxu0
      %v2242 = vadd.f32 %v1164, %v2241
      %v2243 = vpop.f32.mrb[0].mxu0
      %2244 = vmatprep.mubr.f32.mxu0 0.0
      %2245 = vmatmul.mubr.f32.gmra.mrb[0].mxu0 %v1315
      %v2246 = vpop.f32.mrb[0].mxu0
      %v2247 = vadd.f32 %v1164, %v2246
      %v2248 = vpop.f32.mrb[0].mxu0
      %2249 = vmatprep.mubr.f32.mxu0 0.0
      %2250 = vmatmul.mubr.f32.gmra.mrb[0].mxu0 %v1318
      %v2251 = vpop.f32.mrb[0].mxu0
      %v2252 = vadd.f32 %v1164, %v2251
      %v2253 = vpop.f32.mrb[0].mxu0
      %2254 = vmatprep.mubr.f32.mxu0 0.0
      %2255 = vmatmul.mubr.f32.gmra.mrb[0].mxu0 %v1321
      %v2256 = vpop.f32.mrb[0].mxu0
      %v2257 = vadd.f32 %v1164, %v2256
      %v2258 = vpop.f32.mrb[0].mxu0
      %2259 = vmatprep.mubr.f32.mxu0 0.0
      %2260 = vmatmul.mubr.f32.gmra.mrb[0].mxu0 %v1324
      %v2261 = vpop.f32.mrb[0].mxu0
      %v2262 = vadd.f32 %v1164, %v2261
      %v2263 = vpop.f32.mrb[0].mxu0
      %2264 = vmatprep.mubr.f32.mxu0 0.0
      %2265 = vmatmul.mubr.f32.gmra.mrb[0].mxu0 %v1327
      %v2266 = vpop.f32.mrb[0].mxu0
      %v2267 = vadd.f32 %v1164, %v2266
      %v2268 = vpop.f32.mrb[0].mxu0
      %2269 = vmatprep.mubr.f32.mxu0 0.0
      %2270 = vmatmul.mubr.f32.gmra.mrb[0].mxu0 %v1330
      %v2271 = vpop.f32.mrb[0].mxu0
      %v2272 = vadd.f32 %v1164, %v2271
      %v2273 = vpop.f32.mrb[0].mxu0
      %2274 = vmatprep.mubr.f32.mxu0 0.0
      %2275 = vmatmul.mubr.f32.gmra.mrb[0].mxu0 %v1333
      %v2276 = vpop.f32.mrb[0].mxu0
      %v2277 = vadd.f32 %v1164, %v2276
      %v2278 = vpop.f32.mrb[0].mxu0
      %2279 = vmatprep.mubr.f32.mxu0 0.0
      %2280 = vmatmul.mubr.f32.gmra.mrb[0].mxu0 %v1336
      %v2281 = vpop.f32.mrb[0].mxu0
      %v2282 = vadd.f32 %v1164, %v2281
      %v2283 = vpop.f32.mrb[0].mxu0
      %2284 = vmatprep.mubr.f32.mxu0 0.0
      %2285 = vmatmul.mubr.f32.gmra.mrb[0].mxu0 %v1339
      %v2286 = vpop.f32.mrb[0].mxu0
      %v2287 = vadd.f32 %v1164, %v2286
      %v2288 = vpop.f32.mrb[0].mxu0
      %2289 = vmatprep.mubr.f32.mxu0 0.0
      %2290 = vmatmul.mubr.f32.gmra.mrb[0].mxu0 %v1342
      %v2291 = vpop.f32.mrb[0].mxu0
      %v2292 = vadd.f32 %v1164, %v2291
      %v2293 = vpop.f32.mrb[0].mxu0
      %2294 = vmatprep.mubr.f32.mxu0 0.0
      %2295 = vmatmul.mubr.f32.gmra.mrb[0].mxu0 %v1345
      %v2296 = vpop.f32.mrb[0].mxu0
      %v2297 = vadd.f32 %v1164, %v2296
      %v2298 = vpop.f32.mrb[0].mxu0
      %2299 = vmatprep.mubr.f32.mxu0 0.0
      %2300 = vmatmul.mubr.f32.gmra.mrb[0].mxu0 %v1348
      %v2301 = vpop.f32.mrb[0].mxu0
      %v2302 = vadd.f32 %v1164, %v2301
      %v2303 = vpop.f32.mrb[0].mxu0
      %2304 = vmatprep.mubr.f32.mxu0 0.0
      %2305 = vmatmul.mubr.f32.gmra.mrb[0].mxu0 %v1351
      %v2306 = vpop.f32.mrb[0].mxu0
      %v2307 = vadd.f32 %v1164, %v2306
      %v2308 = vpop.f32.mrb[0].mxu0
      %2309 = vmatprep.mubr.f32.mxu0 0.0
      %2310 = vmatmul.mubr.f32.gmra.mrb[0].mxu0 %v1354
      %v2311 = vpop.f32.mrb[0].mxu0
      %v2312 = vadd.f32 %v1164, %v2311
      %v2313 = vpop.f32.mrb[0].mxu0
      %2314 = vmatprep.mubr.f32.mxu0 0.0
      %2315 = vmatmul.mubr.f32.gmra.mrb[0].mxu0 %v1357
      %v2316 = vpop.f32.mrb[0].mxu0
      %v2317 = vadd.f32 %v1164, %v2316
      %v2318 = vpop.f32.mrb[0].mxu0
      %2319 = vmatprep.mubr.f32.mxu0 0.0
      %2320 = vmatmul.mubr.f32.gmra.mrb[0].mxu0 %v1360
      %v2321 = vpop.f32.mrb[0].mxu0
      %v2322 = vadd.f32 %v1164, %v2321
      %v2323 = vpop.f32.mrb[0].mxu0
      %2324 = vmatprep.mubr.f32.mxu0 0.0
      %2325 = vmatmul.mubr.f32.gmra.mrb[0].mxu0 %v1363
      %v2326 = vpop.f32.mrb[0].mxu0
      %v2327 = vadd.f32 %v1164, %v2326
      %v2328 = vpop.f32.mrb[0].mxu0
      %2329 = vmatprep.mubr.f32.mxu0 0.0
      %2330 = vmatmul.mubr.f32.gmra.mrb[0].mxu0 %v1366
      %v2331 = vpop.f32.mrb[0].mxu0
      %v2332 = vadd.f32 %v1164, %v2331
      %v2333 = vpop.f32.mrb[0].mxu0
      %2334 = vmatprep.mubr.f32.mxu0 0.0
      %2335 = vmatmul.mubr.f32.gmra.mrb[0].mxu0 %v1369
      %v2336 = vpop.f32.mrb[0].mxu0
      %v2337 = vadd.f32 %v1164, %v2336
      %v2338 = vpop.f32.mrb[0].mxu0
      %2339 = vmatprep.mubr.f32.mxu0 0.0
      %2340 = vmatmul.mubr.f32.gmra.mrb[0].mxu0 %v1372
      %v2341 = vpop.f32.mrb[0].mxu0
      %v2342 = vadd.f32 %v1164, %v2341
      %v2343 = vpop.f32.mrb[0].mxu0
      %2344 = vmatprep.mubr.f32.mxu0 0.0
      %2345 = vmatmul.mubr.f32.gmra.mrb[0].mxu0 %v1375
      %v2346 = vpop.f32.mrb[0].mxu0
      %v2347 = vadd.f32 %v1164, %v2346
      %v2348 = vpop.f32.mrb[0].mxu0
      %2349 = vmatprep.mubr.f32.mxu0 0.0
      %2350 = vmatmul.mubr.f32.gmra.mrb[0].mxu0 %v1378
      %v2351 = vpop.f32.mrb[0].mxu0
      %v2352 = vadd.f32 %v1164, %v2351
      %v2353 = vpop.f32.mrb[0].mxu0
      %2354 = vmatprep.mubr.f32.mxu0 0.0
      %2355 = vmatmul.mubr.f32.gmra.mrb[0].mxu0 %v1381
      %v2356 = vpop.f32.mrb[0].mxu0
      %v2357 = vadd.f32 %v1164, %v2356
      %v2358 = vpop.f32.mrb[0].mxu0
      %2359 = vmatprep.mubr.f32.mxu0 0.0
      %2360 = vmatmul.mubr.f32.gmra.mrb[0].mxu0 %v1384
      %v2361 = vpop.f32.mrb[0].mxu0
      %v2362 = vadd.f32 %v1164, %v2361
      %v2363 = vpop.f32.mrb[0].mxu0
      %2364 = vmatprep.mubr.f32.mxu0 0.0
      %2365 = vmatmul.mubr.f32.gmra.mrb[0].mxu0 %v1387
      %v2366 = vpop.f32.mrb[0].mxu0
      %v2367 = vadd.f32 %v1164, %v2366
      %v2368 = vpop.f32.mrb[0].mxu0
      %2369 = vmatprep.mubr.f32.mxu0 0.0
      %2370 = vmatmul.mubr.f32.gmra.mrb[0].mxu0 %v1390
      %v2371 = vpop.f32.mrb[0].mxu0
      %v2372 = vadd.f32 %v1164, %v2371
      %v2373 = vpop.f32.mrb[0].mxu0
      %2374 = vmatprep.mubr.f32.mxu0 0.0
      %2375 = vmatmul.mubr.f32.gmra.mrb[0].mxu0 %v1393
      %v2376 = vpop.f32.mrb[0].mxu0
      %v2377 = vadd.f32 %v1164, %v2376
      %v2378 = vpop.f32.mrb[0].mxu0
      %2379 = vmatprep.mubr.f32.mxu0 0.0
      %2380 = vmatmul.mubr.f32.gmra.mrb[0].mxu0 %v1396
      %v2381 = vpop.f32.mrb[0].mxu0
      %v2382 = vadd.f32 %v1164, %v2381
      %v2383 = vpop.f32.mrb[0].mxu0
      %2384 = vmatprep.mubr.f32.mxu0 0.0
      %2385 = vmatmul.mubr.f32.gmra.mrb[0].mxu0 %v1399
      %v2386 = vpop.f32.mrb[0].mxu0
      %v2387 = vadd.f32 %v1164, %v2386
      %v2388 = vpop.f32.mrb[0].mxu0
      %2389 = vmatprep.mubr.f32.mxu0 0.0
      %2390 = vmatmul.mubr.f32.gmra.mrb[0].mxu0 %v1402
      %v2391 = vpop.f32.mrb[0].mxu0
      %v2392 = vadd.f32 %v1164, %v2391
      %v2393 = vpop.f32.mrb[0].mxu0
      %2394 = vmatprep.mubr.f32.mxu0 0.0
      %2395 = vmatmul.mubr.f32.gmra.mrb[0].mxu0 %v1405
      %v2396 = vpop.f32.mrb[0].mxu0
      %v2397 = vadd.f32 %v1164, %v2396
      %v2398 = vpop.f32.mrb[0].mxu0
      %2399 = vmatprep.mubr.f32.mxu0 0.0
      %2400 = vmatmul.mubr.f32.gmra.mrb[0].mxu0 %v1408
      %v2401 = vpop.f32.mrb[0].mxu0
      %v2402 = vadd.f32 %v1164, %v2401
      %v2403 = vpop.f32.mrb[0].mxu0
      %2404 = vmatprep.mubr.f32.mxu0 0.0
      %2405 = vmatmul.mubr.f32.gmra.mrb[0].mxu0 %v1411
      %v2406 = vpop.f32.mrb[0].mxu0
      %v2407 = vadd.f32 %v1164, %v2406
      %v2408 = vpop.f32.mrb[0].mxu0
      %2409 = vmatprep.mubr.f32.mxu0 0.0
      %2410 = vmatmul.mubr.f32.gmra.mrb[0].mxu0 %v1414
      %v2411 = vpop.f32.mrb[0].mxu0
      %v2412 = vadd.f32 %v1164, %v2411
      %v2413 = vpop.f32.mrb[0].mxu0
      %2414 = vmatprep.mubr.f32.mxu0 0.0
      %2415 = vmatmul.mubr.f32.gmra.mrb[0].mxu0 %v1417
      %v2416 = vpop.f32.mrb[0].mxu0
      %v2417 = vadd.f32 %v1164, %v2416
      %v2418 = vpop.f32.mrb[0].mxu0
      %2419 = vmatprep.mubr.f32.mxu0 0.0
      %2420 = vmatmul.mubr.f32.gmra.mrb[0].mxu0 %v1420
      %v2421 = vpop.f32.mrb[0].mxu0
      %v2422 = vadd.f32 %v1164, %v2421
      %v2423 = vpop.f32.mrb[0].mxu0
      %2424 = vmatprep.mubr.f32.mxu0 0.0
      %2425 = vmatmul.mubr.f32.gmra.mrb[0].mxu0 %v1423
      %v2426 = vpop.f32.mrb[0].mxu0
      %v2427 = vadd.f32 %v1164, %v2426
      %v2428 = vpop.f32.mrb[0].mxu0
      %2429 = vmatprep.mubr.f32.mxu0 0.0
      %2430 = vmatmul.mubr.f32.gmra.mrb[0].mxu0 %v1426
      %v2431 = vpop.f32.mrb[0].mxu0
      %v2432 = vadd.f32 %v1164, %v2431
      %v2433 = vpop.f32.mrb[0].mxu0
      %2434 = vmatprep.mubr.f32.mxu0 0.0
      %2435 = vmatmul.mubr.f32.gmra.mrb[0].mxu0 %v1429
      %v2436 = vpop.f32.mrb[0].mxu0
      %v2437 = vadd.f32 %v1164, %v2436
      %v2438 = vpop.f32.mrb[0].mxu0
      %2439 = vmatprep.mubr.f32.mxu0 0.0
      %2440 = vmatmul.mubr.f32.gmra.mrb[0].mxu0 %v1432
      %v2441 = vpop.f32.mrb[0].mxu0
      %v2442 = vadd.f32 %v1164, %v2441
      %v2443 = vpop.f32.mrb[0].mxu0
      %2444 = vmatprep.mubr.f32.mxu0 0.0
      %2445 = vmatmul.mubr.f32.gmra.mrb[0].mxu0 %v1435
      %v2446 = vpop.f32.mrb[0].mxu0
      %v2447 = vadd.f32 %v1164, %v2446
      %v2448 = vpop.f32.mrb[0].mxu0
      %2449 = vmatprep.mubr.f32.mxu0 0.0
      %2450 = vmatmul.mubr.f32.gmra.mrb[0].mxu0 %v1438
      %v2451 = vpop.f32.mrb[0].mxu0
      %v2452 = vadd.f32 %v1164, %v2451
      %v2453 = vpop.f32.mrb[0].mxu0
      %2454 = vmatprep.mubr.f32.mxu0 0.0
      %2455 = vmatmul.mubr.f32.gmra.mrb[0].mxu0 %v1441
      %v2456 = vpop.f32.mrb[0].mxu0
      %v2457 = vadd.f32 %v1164, %v2456
      %v2458 = vpop.f32.mrb[0].mxu0
      %2459 = vmatprep.mubr.f32.mxu0 0.0
      %2460 = vmatmul.mubr.f32.gmra.mrb[0].mxu0 %v1444
      %v2461 = vpop.f32.mrb[0].mxu0
      %v2462 = vadd.f32 %v1164, %v2461
      %v2463 = vpop.f32.mrb[0].mxu0
      %2464 = vmatprep.mubr.f32.mxu0 0.0
      %2465 = vmatmul.mubr.f32.gmra.mrb[0].mxu0 %v1447
      %v2466 = vpop.f32.mrb[0].mxu0
      %v2467 = vadd.f32 %v1164, %v2466
      %v2468 = vpop.f32.mrb[0].mxu0
      %2469 = vmatprep.mubr.f32.mxu0 0.0
      %2470 = vmatmul.mubr.f32.gmra.mrb[0].mxu0 %v1450
      %v2471 = vpop.f32.mrb[0].mxu0
      %v2472 = vadd.f32 %v1164, %v2471
      %v2473 = vpop.f32.mrb[0].mxu0
      %2474 = vmatprep.mubr.f32.mxu0 0.0
      %2475 = vmatmul.mubr.f32.gmra.mrb[0].mxu0 %v1453
      %v2476 = vpop.f32.mrb[0].mxu0
      %v2477 = vadd.f32 %v1164, %v2476
      %v2478 = vpop.f32.mrb[0].mxu0
      %2479 = vmatprep.mubr.f32.mxu0 0.0
      %2480 = vmatmul.mubr.f32.gmra.mrb[0].mxu0 %v1456
      %v2481 = vpop.f32.mrb[0].mxu0
      %v2482 = vadd.f32 %v1164, %v2481
      %v2483 = vpop.f32.mrb[0].mxu0
      %2484 = vmatprep.mubr.f32.mxu0 0.0
      %2485 = vmatmul.mubr.f32.gmra.mrb[0].mxu0 %v1459
      %v2486 = vpop.f32.mrb[0].mxu0
      %v2487 = vadd.f32 %v1164, %v2486
      %v2488 = vpop.f32.mrb[0].mxu0
      %2489 = vmatprep.mubr.f32.mxu0 0.0
      %2490 = vmatmul.mubr.f32.gmra.mrb[0].mxu0 %v1462
      %v2491 = vpop.f32.mrb[0].mxu0
      %v2492 = vadd.f32 %v1164, %v2491
      %v2493 = vpop.f32.mrb[0].mxu0
      %2494 = vmatprep.mubr.f32.mxu0 0.0
      %2495 = vmatmul.mubr.f32.gmra.mrb[0].mxu0 %v1465
      %v2496 = vpop.f32.mrb[0].mxu0
      %v2497 = vadd.f32 %v1164, %v2496
      %v2498 = vpop.f32.mrb[0].mxu0
      %2499 = vmatprep.mubr.f32.mxu0 0.0
      %2500 = vmatmul.mubr.f32.gmra.mrb[0].mxu0 %v1468
      %v2501 = vpop.f32.mrb[0].mxu0
      %v2502 = vadd.f32 %v1164, %v2501
      %v2503 = vpop.f32.mrb[0].mxu0
      %2504 = vmatprep.mubr.f32.mxu0 0.0
      %2505 = vmatmul.mubr.f32.gmra.mrb[0].mxu0 %v1471
      %v2506 = vpop.f32.mrb[0].mxu0
      %v2507 = vadd.f32 %v1164, %v2506
      %v2508 = vpop.f32.mrb[0].mxu0
      %2509 = vmatprep.mubr.f32.mxu0 0.0
      %2510 = vmatmul.mubr.f32.gmra.mrb[0].mxu0 %v1474
      %v2511 = vpop.f32.mrb[0].mxu0
      %v2512 = vadd.f32 %v1164, %v2511
      %v2513 = vpop.f32.mrb[0].mxu0
      %2514 = vmatprep.mubr.f32.mxu0 0.0
      %2515 = vmatmul.mubr.f32.gmra.mrb[0].mxu0 %v1477
      %v2516 = vpop.f32.mrb[0].mxu0
      %v2517 = vadd.f32 %v1164, %v2516
      %v2518 = vpop.f32.mrb[0].mxu0
      %2519 = vmatprep.mubr.f32.mxu0 0.0
      %2520 = vmatmul.mubr.f32.gmra.mrb[0].mxu0 %v1480
      %v2521 = vpop.f32.mrb[0].mxu0
      %v2522 = vadd.f32 %v1164, %v2521
      %v2523 = vpop.f32.mrb[0].mxu0
      %2524 = vmatprep.mubr.f32.mxu0 0.0
      %2525 = vmatmul.mubr.f32.gmra.mrb[0].mxu0 %v1483
      %v2526 = vpop.f32.mrb[0].mxu0
      %v2527 = vadd.f32 %v1164, %v2526
      %v2528 = vpop.f32.mrb[0].mxu0
      %2529 = vmatprep.mubr.f32.mxu0 0.0
      %2530 = vmatmul.mubr.f32.gmra.mrb[0].mxu0 %v1486
      %v2531 = vpop.f32.mrb[0].mxu0
      %v2532 = vadd.f32 %v1164, %v2531
      %v2533 = vpop.f32.mrb[0].mxu0
      %2534 = vmatprep.mubr.f32.mxu0 0.0
      %2535 = vmatmul.mubr.f32.gmra.mrb[0].mxu0 %v1489
      %v2536 = vpop.f32.mrb[0].mxu0
      %v2537 = vadd.f32 %v1164, %v2536
      %v2538 = vpop.f32.mrb[0].mxu0
      %2539 = vmatprep.mubr.f32.mxu0 0.0
      %2540 = vmatmul.mubr.f32.gmra.mrb[0].mxu0 %v1492
      %v2541 = vpop.f32.mrb[0].mxu0
      %v2542 = vadd.f32 %v1164, %v2541
      %v2543 = vpop.f32.mrb[0].mxu0
      %2544 = vmatprep.mubr.f32.mxu0 0.0
      %2545 = vmatmul.mubr.f32.gmra.mrb[0].mxu0 %v1495
      %v2546 = vpop.f32.mrb[0].mxu0
      %v2547 = vadd.f32 %v1164, %v2546
      %v2548 = vpop.f32.mrb[0].mxu0
      %2549 = vmatprep.mubr.f32.mxu0 0.0
      %2550 = vmatmul.mubr.f32.gmra.mrb[0].mxu0 %v1498
      %v2551 = vpop.f32.mrb[0].mxu0
      %v2552 = vadd.f32 %v1164, %v2551
      %v2553 = vpop.f32.mrb[0].mxu0
      %2554 = vmatprep.mubr.f32.mxu0 0.0
      %2555 = vmatmul.mubr.f32.gmra.mrb[0].mxu0 %v1501
      %v2556 = vpop.f32.mrb[0].mxu0
      %v2557 = vadd.f32 %v1164, %v2556
      %v2558 = vpop.f32.mrb[0].mxu0
      %2559 = vmatprep.mubr.f32.mxu0 0.0
      %2560 = vmatmul.mubr.f32.gmra.mrb[0].mxu0 %v1504
      %v2561 = vpop.f32.mrb[0].mxu0
      %v2562 = vadd.f32 %v1164, %v2561
      %v2563 = vpop.f32.mrb[0].mxu0
      %2564 = vmatprep.mubr.f32.mxu0 0.0
      %2565 = vmatmul.mubr.f32.gmra.mrb[0].mxu0 %v1507
      %v2566 = vpop.f32.mrb[0].mxu0
      %v2567 = vadd.f32 %v1164, %v2566
      %v2568 = vpop.f32.mrb[0].mxu0
      %2569 = vmatprep.mubr.f32.mxu0 0.0
      %2570 = vmatmul.mubr.f32.gmra.mrb[0].mxu0 %v1510
      %v2571 = vpop.f32.mrb[0].mxu0
      %v2572 = vadd.f32 %v1164, %v2571
      %v2573 = vpop.f32.mrb[0].mxu0
      %2574 = vmatprep.mubr.f32.mxu0 0.0
      %2575 = vmatmul.mubr.f32.gmra.mrb[0].mxu0 %v1513
      %v2576 = vpop.f32.mrb[0].mxu0
      %v2577 = vadd.f32 %v1164, %v2576
      %v2578 = vpop.f32.mrb[0].mxu0
      %2579 = vmatprep.mubr.f32.mxu0 0.0
      %2580 = vmatmul.mubr.f32.gmra.mrb[0].mxu0 %v1516
      %v2581 = vpop.f32.mrb[0].mxu0
      %v2582 = vadd.f32 %v1164, %v2581
      %v2583 = vpop.f32.mrb[0].mxu0
      %2584 = vmatprep.mubr.f32.mxu0 0.0
      %2585 = vmatmul.mubr.f32.gmra.mrb[0].mxu0 %v1519
      %v2586 = vpop.f32.mrb[0].mxu0
      %v2587 = vadd.f32 %v1164, %v2586
      %v2588 = vpop.f32.mrb[0].mxu0
      %2589 = vmatprep.mubr.f32.mxu0 0.0
      %2590 = vmatmul.mubr.f32.gmra.mrb[0].mxu0 %v1522
      %v2591 = vpop.f32.mrb[0].mxu0
      %v2592 = vadd.f32 %v1164, %v2591
      %v2593 = vpop.f32.mrb[0].mxu0
      %2594 = vmatprep.mubr.f32.mxu0 0.0
      %2595 = vmatmul.mubr.f32.gmra.mrb[0].mxu0 %v1525
      %v2596 = vpop.f32.mrb[0].mxu0
      %v2597 = vadd.f32 %v1164, %v2596
      %v2598 = vpop.f32.mrb[0].mxu0
      %2599 = vmatprep.mubr.f32.mxu0 0.0
      %2600 = vmatmul.mubr.f32.gmra.mrb[0].mxu0 %v1528
      %v2601 = vpop.f32.mrb[0].mxu0
      %v2602 = vadd.f32 %v1164, %v2601
      %v2603 = vpop.f32.mrb[0].mxu0
      %2604 = vmatprep.mubr.f32.mxu0 0.0
      %2605 = vmatmul.mubr.f32.gmra.mrb[0].mxu0 %v1531
      %v2606 = vpop.f32.mrb[0].mxu0
      %v2607 = vadd.f32 %v1164, %v2606
      %v2608 = vpop.f32.mrb[0].mxu0
      %2609 = vmatprep.mubr.f32.mxu0 0.0
      %2610 = vmatmul.mubr.f32.gmra.mrb[0].mxu0 %v1534
      %v2611 = vpop.f32.mrb[0].mxu0
      %v2612 = vadd.f32 %v1164, %v2611
      %v2613 = vpop.f32.mrb[0].mxu0
      %2614 = vmatprep.mubr.f32.mxu0 0.0
      %2615 = vmatmul.mubr.f32.gmra.mrb[0].mxu0 %v1537
      %v2616 = vpop.f32.mrb[0].mxu0
      %v2617 = vadd.f32 %v1164, %v2616
      %v2618 = vpop.f32.mrb[0].mxu0
      %2619 = vmatprep.mubr.f32.mxu0 0.0
      %2620 = vmatmul.mubr.f32.gmra.mrb[0].mxu0 %v1540
      %v2621 = vpop.f32.mrb[0].mxu0
      %v2622 = vadd.f32 %v1164, %v2621
      %v2623 = vpop.f32.mrb[0].mxu0
      %2624 = vmatprep.mubr.f32.mxu0 0.0
      %2625 = vmatmul.mubr.f32.gmra.mrb[0].mxu0 %v1543
      %v2626 = vpop.f32.mrb[0].mxu0
      %v2627 = vadd.f32 %v1164, %v2626
      %v2628 = vpop.f32.mrb[0].mxu0
      %2629 = vmatprep.mubr.f32.mxu0 0.0
      %2630 = vmatmul.mubr.f32.gmra.mrb[0].mxu0 %v1546
      %v2631 = vpop.f32.mrb[0].mxu0
      %v2632 = vadd.f32 %v1164, %v2631
      %v2633 = vpop.f32.mrb[0].mxu0
      %2634 = vmatprep.mubr.f32.mxu0 0.0
      %2635 = vmatmul.mubr.f32.gmra.mrb[0].mxu0 %v1549
      %v2636 = vpop.f32.mrb[0].mxu0
      %v2637 = vadd.f32 %v1164, %v2636
      %v2638 = vpop.f32.mrb[0].mxu0
      %2639 = vmatprep.mubr.f32.mxu0 0.0
      %2640 = vmatmul.mubr.f32.gmra.mrb[0].mxu0 %v1552
      %v2641 = vpop.f32.mrb[0].mxu0
      %v2642 = vadd.f32 %v1164, %v2641
      %v2643 = vpop.f32.mrb[0].mxu0
      %2644 = vmatprep.mubr.f32.mxu0 0.0
      %2645 = vmatmul.mubr.f32.gmra.mrb[0].mxu0 %v1555
      %v2646 = vpop.f32.mrb[0].mxu0
      %v2647 = vadd.f32 %v1164, %v2646
      %v2648 = vpop.f32.mrb[0].mxu0
      %2649 = vmatprep.mubr.f32.mxu0 0.0
      %2650 = vmatmul.mubr.f32.gmra.mrb[0].mxu0 %v1558
      %v2651 = vpop.f32.mrb[0].mxu0
      %v2652 = vadd.f32 %v1164, %v2651
      %v2653 = vpop.f32.mrb[0].mxu0
      %2654 = vmatprep.mubr.f32.mxu0 0.0
      %2655 = vmatmul.mubr.f32.gmra.mrb[0].mxu0 %v1561
      %v2656 = vpop.f32.mrb[0].mxu0
      %v2657 = vadd.f32 %v1164, %v2656
      %v2658 = vpop.f32.mrb[0].mxu0
      %2659 = vmatprep.mubr.f32.mxu0 0.0
      %2660 = vmatmul.mubr.f32.gmra.mrb[0].mxu0 %v1564
      %v2661 = vpop.f32.mrb[0].mxu0
      %v2662 = vadd.f32 %v1164, %v2661
      %v2663 = vpop.f32.mrb[0].mxu0
      %2664 = vmatprep.mubr.f32.mxu0 0.0
      %2665 = vmatmul.mubr.f32.gmra.mrb[0].mxu0 %v1567
      %v2666 = vpop.f32.mrb[0].mxu0
      %v2667 = vadd.f32 %v1164, %v2666
      %v2668 = vpop.f32.mrb[0].mxu0
      %2669 = vmatprep.mubr.f32.mxu0 0.0
      %2670 = vmatmul.mubr.f32.gmra.mrb[0].mxu0 %v1570
      %v2671 = vpop.f32.mrb[0].mxu0
      %v2672 = vadd.f32 %v1164, %v2671
      %v2673 = vpop.f32.mrb[0].mxu0
      %2674 = vmatprep.mubr.f32.mxu0 0.0
      %2675 = vmatmul.mubr.f32.gmra.mrb[0].mxu0 %v1573
      %v2676 = vpop.f32.mrb[0].mxu0
      %v2677 = vadd.f32 %v1164, %v2676
      %v2678 = vpop.f32.mrb[0].mxu0
      %2679 = vmatprep.mubr.f32.mxu0 0.0
      %2680 = vmatmul.mubr.f32.gmra.mrb[0].mxu0 %v1576
      %v2681 = vpop.f32.mrb[0].mxu0
      %v2682 = vadd.f32 %v1164, %v2681
      %v2683 = vpop.f32.mrb[0].mxu0
      %2684 = vmatprep.mubr.f32.mxu0 0.0
      %2685 = vmatmul.mubr.f32.gmra.mrb[0].mxu0 %v1579
      %v2686 = vpop.f32.mrb[0].mxu0
      %v2687 = vadd.f32 %v1164, %v2686
      %v2688 = vpop.f32.mrb[0].mxu0
      %2689 = vmatprep.mubr.f32.mxu0 0.0
      %2690 = vmatmul.mubr.f32.gmra.mrb[0].mxu0 %v1582
      %v2691 = vpop.f32.mrb[0].mxu0
      %v2692 = vadd.f32 %v1164, %v2691
      %v2693 = vpop.f32.mrb[0].mxu0
      %2694 = vmatprep.mubr.f32.mxu0 0.0
      %2695 = vmatmul.mubr.f32.gmra.mrb[0].mxu0 %v1585
      %v2696 = vpop.f32.mrb[0].mxu0
      %v2697 = vadd.f32 %v1164, %v2696
      %v2698 = vpop.f32.mrb[0].mxu0
      %2699 = vmatprep.mubr.f32.mxu0 0.0
      %2700 = vmatmul.mubr.f32.gmra.mrb[0].mxu0 %v1588
      %v2701 = vpop.f32.mrb[0].mxu0
      %v2702 = vadd.f32 %v1164, %v2701
      %v2703 = vpop.f32.mrb[0].mxu0
      %2704 = vmatprep.mubr.f32.mxu0 0.0
      %2705 = vmatmul.mubr.f32.gmra.mrb[0].mxu0 %v1591
      %v2706 = vpop.f32.mrb[0].mxu0
      %v2707 = vadd.f32 %v1164, %v2706
      %v2708 = vpop.f32.mrb[0].mxu0
      %2709 = vmatprep.mubr.f32.mxu0 0.0
      %2710 = vmatmul.mubr.f32.gmra.mrb[0].mxu0 %v1594
      %v2711 = vpop.f32.mrb[0].mxu0
      %v2712 = vadd.f32 %v1164, %v2711
      %v2713 = vpop.f32.mrb[0].mxu0
      %2714 = vmatprep.mubr.f32.mxu0 0.0
      %2715 = vmatmul.mubr.f32.gmra.mrb[0].mxu0 %v1597
      %v2716 = vpop.f32.mrb[0].mxu0
      %v2717 = vadd.f32 %v1164, %v2716
      %v2718 = vpop.f32.mrb[0].mxu0
      %2719 = vmatprep.mubr.f32.mxu0 0.0
      %2720 = vmatmul.mubr.f32.gmra.mrb[0].mxu0 %v1600
      %v2721 = vpop.f32.mrb[0].mxu0
      %v2722 = vadd.f32 %v1164, %v2721
      %v2723 = vpop.f32.mrb[0].mxu0
      %2724 = vmatprep.mubr.f32.mxu0 0.0
      %2725 = vmatmul.mubr.f32.gmra.mrb[0].mxu0 %v1603
      %v2726 = vpop.f32.mrb[0].mxu0
      %v2727 = vadd.f32 %v1164, %v2726
      %v2728 = vpop.f32.mrb[0].mxu0
      %2729 = vmatprep.mubr.f32.mxu0 0.0
      %2730 = vmatmul.mubr.f32.gmra.mrb[0].mxu0 %v1606
      %v2731 = vpop.f32.mrb[0].mxu0
      %v2732 = vadd.f32 %v1164, %v2731
      %v2733 = vpop.f32.mrb[0].mxu0
      %2734 = vmatprep.mubr.f32.mxu0 0.0
      %2735 = vmatmul.mubr.f32.gmra.mrb[0].mxu0 %v1609
      %v2736 = vpop.f32.mrb[0].mxu0
      %v2737 = vadd.f32 %v1164, %v2736
      %v2738 = vpop.f32.mrb[0].mxu0
      %2739 = vmatprep.mubr.f32.mxu0 0.0
      %2740 = vmatmul.mubr.f32.gmra.mrb[0].mxu0 %v1612
      %v2741 = vpop.f32.mrb[0].mxu0
      %v2742 = vadd.f32 %v1164, %v2741
      %v2743 = vpop.f32.mrb[0].mxu0
      %2744 = vmatprep.mubr.f32.mxu0 0.0
      %2745 = vmatmul.mubr.f32.gmra.mrb[0].mxu0 %v1615
      %v2746 = vpop.f32.mrb[0].mxu0
      %v2747 = vadd.f32 %v1164, %v2746
      %v2748 = vpop.f32.mrb[0].mxu0
      %2749 = vmatprep.mubr.f32.mxu0 0.0
      %2750 = vmatmul.mubr.f32.gmra.mrb[0].mxu0 %v1618
      %v2751 = vpop.f32.mrb[0].mxu0
      %v2752 = vadd.f32 %v1164, %v2751
      %v2753 = vpop.f32.mrb[0].mxu0
      %2754 = vmatprep.mubr.f32.mxu0 0.0
      %2755 = vmatmul.mubr.f32.gmra.mrb[0].mxu0 %v1621
      %v2756 = vpop.f32.mrb[0].mxu0
      %v2757 = vadd.f32 %v1164, %v2756
      %v2758 = vpop.f32.mrb[0].mxu0
      %2759 = vmatprep.mubr.f32.mxu0 0.0
      %2760 = vmatmul.mubr.f32.gmra.mrb[0].mxu0 %v1624
      %v2761 = vpop.f32.mrb[0].mxu0
      %v2762 = vadd.f32 %v1164, %v2761
      %v2763 = vpop.f32.mrb[0].mxu0
      %2764 = vmatprep.mubr.f32.mxu0 0.0
      %2765 = vmatmul.mubr.f32.gmra.mrb[0].mxu0 %v1627
      %v2766 = vpop.f32.mrb[0].mxu0
      %v2767 = vadd.f32 %v1164, %v2766
      %v2768 = vpop.f32.mrb[0].mxu0
      %2769 = vmatprep.mubr.f32.mxu0 0.0
      %2770 = vmatmul.mubr.f32.gmra.mrb[0].mxu0 %v1630
      %v2771 = vpop.f32.mrb[0].mxu0
      %v2772 = vadd.f32 %v1164, %v2771
      %v2773 = vpop.f32.mrb[0].mxu0
      %2774 = vmatprep.mubr.f32.mxu0 0.0
      %2775 = vmatmul.mubr.f32.gmra.mrb[0].mxu0 %v1633
      %v2776 = vpop.f32.mrb[0].mxu0
      %v2777 = vadd.f32 %v1164, %v2776
      %v2778 = vpop.f32.mrb[0].mxu0
      %2779 = vmatprep.mubr.f32.mxu0 0.0
      %2780 = vmatmul.mubr.f32.gmra.mrb[0].mxu0 %v1636
      %v2781 = vpop.f32.mrb[0].mxu0
      %v2782 = vadd.f32 %v1164, %v2781
      %v2783 = vpop.f32.mrb[0].mxu0
      %2784 = vmatprep.mubr.f32.mxu0 0.0
      %2785 = vmatmul.mubr.f32.gmra.mrb[0].mxu0 %v1639
      %v2786 = vpop.f32.mrb[0].mxu0
      %v2787 = vadd.f32 %v1164, %v2786
      %v2788 = vpop.f32.mrb[0].mxu0
      %2789 = vmatprep.mubr.f32.mxu0 0.0
      %2790 = vmatmul.mubr.f32.gmra.mrb[0].mxu0 %v1642
      %v2791 = vpop.f32.mrb[0].mxu0
      %v2792 = vadd.f32 %v1164, %v2791
      %v2793 = vpop.f32.mrb[0].mxu0
      %2794 = vmatprep.mubr.f32.mxu0 0.0
      %2795 = vmatmul.mubr.f32.gmra.mrb[0].mxu0 %v1645
      %v2796 = vpop.f32.mrb[0].mxu0
      %v2797 = vadd.f32 %v1164, %v2796
      %v2798 = vpop.f32.mrb[0].mxu0
      %2799 = vmatprep.mubr.f32.mxu0 0.0
      %2800 = vmatmul.mubr.f32.gmra.mrb[0].mxu0 %v1648
      %v2801 = vpop.f32.mrb[0].mxu0
      %v2802 = vadd.f32 %v1164, %v2801
      %v2803 = vpop.f32.mrb[0].mxu0
      %2804 = vmatprep.mubr.f32.mxu0 0.0
      %2805 = vmatmul.mubr.f32.gmra.mrb[0].mxu0 %v1651
      %v2806 = vpop.f32.mrb[0].mxu0
      %v2807 = vadd.f32 %v1164, %v2806
      %v2808 = vpop.f32.mrb[0].mxu0
      %2809 = vmatprep.mubr.f32.mxu0 0.0
      %2810 = vmatmul.mubr.f32.gmra.mrb[0].mxu0 %v1654
      %v2811 = vpop.f32.mrb[0].mxu0
      %v2812 = vadd.f32 %v1164, %v2811
      %v2813 = vpop.f32.mrb[0].mxu0
      %2814 = vmatprep.mubr.f32.mxu0 0.0
      %2815 = vmatmul.mubr.f32.gmra.mrb[0].mxu0 %v1657
      %v2816 = vpop.f32.mrb[0].mxu0
      %v2817 = vadd.f32 %v1164, %v2816
      %v2818 = vpop.f32.mrb[0].mxu0
      %2819 = vmatprep.mubr.f32.mxu0 0.0
      %2820 = vmatmul.mubr.f32.gmra.mrb[0].mxu0 %v1660
      %v2821 = vpop.f32.mrb[0].mxu0
      %v2822 = vadd.f32 %v1164, %v2821
      %v2823 = vpop.f32.mrb[0].mxu0
      %2824 = vmatprep.mubr.f32.mxu0 0.0
      %2825 = vmatmul.mubr.f32.gmra.mrb[0].mxu0 %v1663
      %v2826 = vpop.f32.mrb[0].mxu0
      %v2827 = vadd.f32 %v1164, %v2826
      %v2828 = vpop.f32.mrb[0].mxu0
      %2829 = vmatprep.mubr.f32.mxu0 0.0
      %2830 = vmatmul.mubr.f32.gmra.mrb[0].mxu0 %v1666
      %v2831 = vpop.f32.mrb[0].mxu0
      %v2832 = vadd.f32 %v1164, %v2831
      %v2833 = vpop.f32.mrb[0].mxu0
      %2834 = vmatprep.mubr.f32.mxu0 0.0
      %2835 = vmatmul.mubr.f32.gmra.mrb[0].mxu0 %v1669
      %v2836 = vpop.f32.mrb[0].mxu0
      %v2837 = vadd.f32 %v1164, %v2836
      %v2838 = vpop.f32.mrb[0].mxu0
      %2839 = vmatprep.mubr.f32.mxu0 0.0
      %2840 = vmatmul.mubr.f32.gmra.mrb[0].mxu0 %v1672
      %v2841 = vpop.f32.mrb[0].mxu0
      %v2842 = vadd.f32 %v1164, %v2841
      %v2843 = vpop.f32.mrb[0].mxu0
      %2844 = vmatprep.mubr.f32.mxu0 0.0
      %2845 = vmatmul.mubr.f32.gmra.mrb[0].mxu0 %v1675
      %v2846 = vpop.f32.mrb[0].mxu0
      %v2847 = vadd.f32 %v1164, %v2846
      %v2848 = vpop.f32.mrb[0].mxu0
      %2849 = vmatprep.mubr.f32.mxu0 0.0
      %2850 = vmatmul.mubr.f32.gmra.mrb[0].mxu0 %v1678
      %v2851 = vpop.f32.mrb[0].mxu0
      %v2852 = vadd.f32 %v1164, %v2851
      %v2853 = vpop.f32.mrb[0].mxu0
      %2854 = vmatprep.mubr.f32.mxu0 0.0
      %2855 = vmatmul.mubr.f32.gmra.mrb[0].mxu0 %v1681
      %v2856 = vpop.f32.mrb[0].mxu0
      %v2857 = vadd.f32 %v1164, %v2856
      %v2858 = vpop.f32.mrb[0].mxu0
      %2859 = vmatprep.mubr.f32.mxu0 0.0
      %2860 = vmatmul.mubr.f32.gmra.mrb[0].mxu0 %v1684
      %v2861 = vpop.f32.mrb[0].mxu0
      %v2862 = vadd.f32 %v1164, %v2861
      %v2863 = vpop.f32.mrb[0].mxu0
      %2864 = vmatprep.mubr.f32.mxu0 0.0
      %2865 = vmatmul.mubr.f32.gmra.mrb[0].mxu0 %v1687
      %v2866 = vpop.f32.mrb[0].mxu0
      %v2867 = vadd.f32 %v1164, %v2866
      %v2868 = vpop.f32.mrb[0].mxu0
      %2869 = vmatprep.mubr.f32.mxu0 0.0
      %2870 = vmatmul.mubr.f32.gmra.mrb[0].mxu0 %v1690
      %v2871 = vpop.f32.mrb[0].mxu0
      %v2872 = vadd.f32 %v1164, %v2871
      %v2873 = vpop.f32.mrb[0].mxu0
      %2874 = vmatprep.mubr.f32.mxu0 0.0
      %2875 = vmatmul.mubr.f32.gmra.mrb[0].mxu0 %v1693
      %v2876 = vpop.f32.mrb[0].mxu0
      %v2877 = vadd.f32 %v1164, %v2876
      %v2878 = vpop.f32.mrb[0].mxu0
      %2879 = vmatprep.mubr.f32.mxu0 0.0
      %2880 = vmatmul.mubr.f32.gmra.mrb[0].mxu0 %v1696
      %v2881 = vpop.f32.mrb[0].mxu0
      %v2882 = vadd.f32 %v1164, %v2881
      %v2883 = vpop.f32.mrb[0].mxu0
      %2884 = vmatprep.mubr.f32.mxu0 0.0
      %2885 = vmatmul.mubr.f32.gmra.mrb[0].mxu0 %v1699
      %v2886 = vpop.f32.mrb[0].mxu0
      %v2887 = vadd.f32 %v1164, %v2886
      %v2888 = vpop.f32.mrb[0].mxu0
      %2889 = vmatprep.mubr.f32.mxu0 0.0
      %2890 = vmatmul.mubr.f32.gmra.mrb[0].mxu0 %v1702
      %v2891 = vpop.f32.mrb[0].mxu0
      %v2892 = vadd.f32 %v1164, %v2891
      %v2893 = vpop.f32.mrb[0].mxu0
      %2894 = vmatprep.mubr.f32.mxu0 0.0
      %2895 = vmatmul.mubr.f32.gmra.mrb[0].mxu0 %v1705
      %v2896 = vpop.f32.mrb[0].mxu0
      %v2897 = vadd.f32 %v1164, %v2896
      %v2898 = vpop.f32.mrb[0].mxu0
      %2899 = vmatprep.mubr.f32.mxu0 0.0
      %2900 = vmatmul.mubr.f32.gmra.mrb[0].mxu0 %v1708
      %v2901 = vpop.f32.mrb[0].mxu0
      %v2902 = vadd.f32 %v1164, %v2901
      %v2903 = vpop.f32.mrb[0].mxu0
      %2904 = vmatprep.mubr.f32.mxu0 0.0
      %2905 = vmatmul.mubr.f32.gmra.mrb[0].mxu0 %v1711
      %v2906 = vpop.f32.mrb[0].mxu0
      %v2907 = vadd.f32 %v1164, %v2906
      %v2908 = vpop.f32.mrb[0].mxu0
      %2909 = vmatprep.mubr.f32.mxu0 0.0
      %2910 = vmatmul.mubr.f32.gmra.mrb[0].mxu0 %v1714
      %v2911 = vpop.f32.mrb[0].mxu0
      %v2912 = vadd.f32 %v1164, %v2911
      %v2913 = vpop.f32.mrb[0].mxu0
      %2914 = vmatprep.mubr.f32.mxu0 0.0
      %2915 = vmatmul.mubr.f32.gmra.mrb[0].mxu0 %v1717
      %v2916 = vpop.f32.mrb[0].mxu0
      %v2917 = vadd.f32 %v1164, %v2916
      %v2918 = vpop.f32.mrb[0].mxu0
      %2919 = vmatprep.mubr.f32.mxu0 0.0
      %2920 = vmatmul.mubr.f32.gmra.mrb[0].mxu0 %v1720
      %v2921 = vpop.f32.mrb[0].mxu0
      %v2922 = vadd.f32 %v1164, %v2921
      %v2923 = vpop.f32.mrb[0].mxu0
      %2924 = vmatprep.mubr.f32.mxu0 0.0
      %2925 = vmatmul.mubr.f32.gmra.mrb[0].mxu0 %v1723
      %v2926 = vpop.f32.mrb[0].mxu0
      %v2927 = vadd.f32 %v1164, %v2926
      %v2928 = vpop.f32.mrb[0].mxu0
      %2929 = vmatprep.mubr.f32.mxu0 0.0
      %2930 = vmatmul.mubr.f32.gmra.mrb[0].mxu0 %v1726
      %v2931 = vpop.f32.mrb[0].mxu0
      %v2932 = vadd.f32 %v1164, %v2931
      %v2933 = vpop.f32.mrb[0].mxu0
      %2934 = vmatprep.mubr.f32.mxu0 0.0
      %2935 = vmatmul.mubr.f32.gmra.mrb[0].mxu0 %v1729
      %v2936 = vpop.f32.mrb[0].mxu0
      %v2937 = vadd.f32 %v1164, %v2936
      %v2938 = vpop.f32.mrb[0].mxu0
      %2939 = vmatprep.mubr.f32.mxu0 0.0
      %2940 = vmatmul.mubr.f32.gmra.mrb[0].mxu0 %v1732
      %v2941 = vpop.f32.mrb[0].mxu0
      %v2942 = vadd.f32 %v1164, %v2941
      %v2943 = vpop.f32.mrb[0].mxu0
      %2944 = vmatprep.mubr.f32.mxu0 0.0
      %2945 = vmatmul.mubr.f32.gmra.mrb[0].mxu0 %v1735
      %v2946 = vpop.f32.mrb[0].mxu0
      %v2947 = vadd.f32 %v1164, %v2946
      %v2948 = vpop.f32.mrb[0].mxu0
      %2949 = vmatprep.mubr.f32.mxu0 0.0
      %2950 = vmatmul.mubr.f32.gmra.mrb[0].mxu0 %v1738
      %v2951 = vpop.f32.mrb[0].mxu0
      %v2952 = vadd.f32 %v1164, %v2951
      %v2953 = vpop.f32.mrb[0].mxu0
      %2954 = vmatprep.mubr.f32.mxu0 0.0
      %2955 = vmatmul.mubr.f32.gmra.mrb[0].mxu0 %v1741
      %v2956 = vpop.f32.mrb[0].mxu0
      %v2957 = vadd.f32 %v1164, %v2956
      %v2958 = vpop.f32.mrb[0].mxu0
      %2959 = vmatprep.mubr.f32.mxu0 0.0
      %2960 = vmatmul.mubr.f32.gmra.mrb[0].mxu0 %v1744
      %v2961 = vpop.f32.mrb[0].mxu0
      %v2962 = vadd.f32 %v1164, %v2961
      %v2963 = vpop.f32.mrb[0].mxu0
      %2964 = vmatprep.mubr.f32.mxu0 0.0
      %2965 = vmatmul.mubr.f32.gmra.mrb[0].mxu0 %v1747
      %v2966 = vpop.f32.mrb[0].mxu0
      %v2967 = vadd.f32 %v1164, %v2966
      %v2968 = vpop.f32.mrb[0].mxu0
      %2969 = vmatprep.mubr.f32.mxu0 0.0
      %2970 = vmatmul.mubr.f32.gmra.mrb[0].mxu0 %v1750
      %v2971 = vpop.f32.mrb[0].mxu0
      %v2972 = vadd.f32 %v1164, %v2971
      %v2973 = vpop.f32.mrb[0].mxu0
      %2974 = vmatprep.mubr.f32.mxu0 0.0
      %2975 = vmatmul.mubr.f32.gmra.mrb[0].mxu0 %v1753
      %v2976 = vpop.f32.mrb[0].mxu0
      %v2977 = vadd.f32 %v1164, %v2976
      %v2978 = vpop.f32.mrb[0].mxu0
      %2979 = vmatprep.mubr.f32.mxu0 0.0
      %2980 = vmatmul.mubr.f32.gmra.mrb[0].mxu0 %v1756
      %v2981 = vpop.f32.mrb[0].mxu0
      %v2982 = vadd.f32 %v1164, %v2981
      %v2983 = vpop.f32.mrb[0].mxu0
      %2984 = vmatprep.mubr.f32.mxu0 0.0
      %2985 = vmatmul.mubr.f32.gmra.mrb[0].mxu0 %v1759
      %v2986 = vpop.f32.mrb[0].mxu0
      %v2987 = vadd.f32 %v1164, %v2986
      %v2988 = vpop.f32.mrb[0].mxu0
      %2989 = vmatprep.mubr.f32.mxu0 0.0
      %2990 = vmatmul.mubr.f32.gmra.mrb[0].mxu0 %v1762
      %v2991 = vpop.f32.mrb[0].mxu0
      %v2992 = vadd.f32 %v1164, %v2991
      %v2993 = vpop.f32.mrb[0].mxu0
      %2994 = vmatprep.mubr.f32.mxu0 0.0
      %2995 = vmatmul.mubr.f32.gmra.mrb[0].mxu0 %v1765
      %v2996 = vpop.f32.mrb[0].mxu0
      %v2997 = vadd.f32 %v1164, %v2996
      %v2998 = vpop.f32.mrb[0].mxu0
      %2999 = vmatprep.mubr.f32.mxu0 0.0
      %3000 = vmatmul.mubr.f32.gmra.mrb[0].mxu0 %v1768
      %v3001 = vpop.f32.mrb[0].mxu0
      %v3002 = vadd.f32 %v1164, %v3001
      %v3003 = vpop.f32.mrb[0].mxu0
      %3004 = vmatprep.mubr.f32.mxu0 0.0
      %3005 = vmatmul.mubr.f32.gmra.mrb[0].mxu0 %v1771
      %v3006 = vpop.f32.mrb[0].mxu0
      %v3007 = vadd.f32 %v1164, %v3006
      %v3008 = vpop.f32.mrb[0].mxu0
      %3009 = vmatprep.mubr.f32.mxu0 0.0
      %3010 = vmatmul.mubr.f32.gmra.mrb[0].mxu0 %v1774
      %v3011 = vpop.f32.mrb[0].mxu0
      %v3012 = vadd.f32 %v1164, %v3011
      %v3013 = vpop.f32.mrb[0].mxu0
      %3014 = vmatprep.mubr.f32.mxu0 0.0
      %3015 = vmatmul.mubr.f32.gmra.mrb[0].mxu0 %v1777
      %v3016 = vpop.f32.mrb[0].mxu0
      %v3017 = vadd.f32 %v1164, %v3016
      %v3018 = vpop.f32.mrb[0].mxu0
      %3019 = vmatprep.mubr.f32.mxu0 0.0
      %3020 = vmatmul.mubr.f32.gmra.mrb[0].mxu0 %v1780
      %v3021 = vpop.f32.mrb[0].mxu0
      %v3022 = vadd.f32 %v1164, %v3021
      %v3023 = vpop.f32.mrb[0].mxu0
      %3024 = vmatprep.mubr.f32.mxu0 0.0
      %3025 = vmatmul.mubr.f32.gmra.mrb[0].mxu0 %v1783
      %v3026 = vpop.f32.mrb[0].mxu0
      %v3027 = vadd.f32 %v1164, %v3026
      %v3028 = vpop.f32.mrb[0].mxu0
      %3029 = vmatprep.mubr.f32.mxu0 0.0
      %3030 = vmatmul.mubr.f32.gmra.mrb[0].mxu0 %v1786
      %v3031 = vpop.f32.mrb[0].mxu0
      %v3032 = vadd.f32 %v1164, %v3031
      %v3033 = vpop.f32.mrb[0].mxu0
      %3034 = vmatprep.mubr.f32.mxu0 0.0
      %3035 = vmatmul.mubr.f32.gmra.mrb[0].mxu0 %v1789
      %v3036 = vpop.f32.mrb[0].mxu0
      %v3037 = vadd.f32 %v1164, %v3036
      %v3038 = vpop.f32.mrb[0].mxu0
      %3039 = vmatprep.mubr.f32.mxu0 0.0
      %3040 = vmatmul.mubr.f32.gmra.mrb[0].mxu0 %v1792
      %v3041 = vpop.f32.mrb[0].mxu0
      %v3042 = vadd.f32 %v1164, %v3041
      %v3043 = vpop.f32.mrb[0].mxu0
      %3044 = vmatprep.mubr.f32.mxu0 0.0
      %3045 = vmatmul.mubr.f32.gmra.mrb[0].mxu0 %v1795
      %v3046 = vpop.f32.mrb[0].mxu0
      %v3047 = vadd.f32 %v1164, %v3046
      %v3048 = vpop.f32.mrb[0].mxu0
      %3049 = vmatprep.mubr.f32.mxu0 0.0
      %3050 = vmatmul.mubr.f32.gmra.mrb[0].mxu0 %v1798
      %v3051 = vpop.f32.mrb[0].mxu0
      %v3052 = vadd.f32 %v1164, %v3051
      %v3053 = vpop.f32.mrb[0].mxu0
      %3054 = vmatprep.mubr.f32.mxu0 0.0
      %3055 = vmatmul.mubr.f32.gmra.mrb[0].mxu0 %v1801
      %v3056 = vpop.f32.mrb[0].mxu0
      %v3057 = vadd.f32 %v1164, %v3056
      %v3058 = vpop.f32.mrb[0].mxu0
      %3059 = vmatprep.mubr.f32.mxu0 0.0
      %3060 = vmatmul.mubr.f32.gmra.mrb[0].mxu0 %v1804
      %v3061 = vpop.f32.mrb[0].mxu0
      %v3062 = vadd.f32 %v1164, %v3061
      %v3063 = vpop.f32.mrb[0].mxu0
      %3064 = vmatprep.mubr.f32.mxu0 0.0
      %3065 = vmatmul.mubr.f32.gmra.mrb[0].mxu0 %v1807
      %v3066 = vpop.f32.mrb[0].mxu0
      %v3067 = vadd.f32 %v1164, %v3066
      %v3068 = vpop.f32.mrb[0].mxu0
      %3069 = vmatprep.mubr.f32.mxu0 0.0
      %3070 = vmatmul.mubr.f32.gmra.mrb[0].mxu0 %v1810
      %v3071 = vpop.f32.mrb[0].mxu0
      %v3072 = vadd.f32 %v1164, %v3071
      %v3073 = vpop.f32.mrb[0].mxu0
      %3074 = vmatprep.mubr.f32.mxu0 0.0
      %3075 = vmatmul.mubr.f32.gmra.mrb[0].mxu0 %v1813
      %v3076 = vpop.f32.mrb[0].mxu0
      %v3077 = vadd.f32 %v1164, %v3076
      %v3078 = vpop.f32.mrb[0].mxu0
      %3079 = vmatprep.mubr.f32.mxu0 0.0
      %3080 = vmatmul.mubr.f32.gmra.mrb[0].mxu0 %v1816
      %v3081 = vpop.f32.mrb[0].mxu0
      %v3082 = vadd.f32 %v1164, %v3081
      %v3083 = vpop.f32.mrb[0].mxu0
      %3084 = vmatprep.mubr.f32.mxu0 0.0
      %3085 = vmatmul.mubr.f32.gmra.mrb[0].mxu0 %v1819
      %v3086 = vpop.f32.mrb[0].mxu0
      %v3087 = vadd.f32 %v1164, %v3086
      %v3088 = vpop.f32.mrb[0].mxu0
      %3089 = vmatprep.mubr.f32.mxu0 0.0
      %3090 = vmatmul.mubr.f32.gmra.mrb[0].mxu0 %v1822
      %v3091 = vpop.f32.mrb[0].mxu0
      %v3092 = vadd.f32 %v1164, %v3091
      %v3093 = vpop.f32.mrb[0].mxu0
      %3094 = vmatprep.mubr.f32.mxu0 0.0
      %3095 = vmatmul.mubr.f32.gmra.mrb[0].mxu0 %v1825
      %v3096 = vpop.f32.mrb[0].mxu0
      %v3097 = vadd.f32 %v1164, %v3096
      %v3098 = vpop.f32.mrb[0].mxu0
      %3099 = vmatprep.mubr.f32.mxu0 0.0
      %3100 = vmatmul.mubr.f32.gmra.mrb[0].mxu0 %v1828
      %v3101 = vpop.f32.mrb[0].mxu0
      %v3102 = vadd.f32 %v1164, %v3101
      %v3103 = vpop.f32.mrb[0].mxu0
      %3104 = vmatprep.mubr.f32.mxu0 0.0
      %3105 = vmatmul.mubr.f32.gmra.mrb[0].mxu0 %v1831
      %v3106 = vpop.f32.mrb[0].mxu0
      %v3107 = vadd.f32 %v1164, %v3106
      %v3108 = vpop.f32.mrb[0].mxu0
      %3109 = vmatprep.mubr.f32.mxu0 0.0
      %3110 = vmatmul.mubr.f32.gmra.mrb[0].mxu0 %v1834
      %v3111 = vpop.f32.mrb[0].mxu0
      %v3112 = vadd.f32 %v1164, %v3111
      %v3113 = vpop.f32.mrb[0].mxu0
      %3114 = vmatprep.mubr.f32.mxu0 0.0
      %3115 = vmatmul.mubr.f32.gmra.mrb[0].mxu0 %v1837
      %v3116 = vpop.f32.mrb[0].mxu0
      %v3117 = vadd.f32 %v1164, %v3116
      %v3118 = vpop.f32.mrb[0].mxu0
      %3119 = vmatprep.mubr.f32.mxu0 0.0
      %3120 = vmatmul.mubr.f32.gmra.mrb[0].mxu0 %v1840
      %v3121 = vpop.f32.mrb[0].mxu0
      %v3122 = vadd.f32 %v1164, %v3121
      %v3123 = vpop.f32.mrb[0].mxu0
      %3124 = vmatprep.mubr.f32.mxu0 0.0
      %3125 = vmatmul.mubr.f32.gmra.mrb[0].mxu0 %v1843
      %v3126 = vpop.f32.mrb[0].mxu0
      %v3127 = vadd.f32 %v1164, %v3126
      %v3128 = vpop.f32.mrb[0].mxu0
      %3129 = vmatprep.mubr.f32.mxu0 0.0
      %3130 = vmatmul.mubr.f32.gmra.mrb[0].mxu0 %v1846
      %v3131 = vpop.f32.mrb[0].mxu0
      %v3132 = vadd.f32 %v1164, %v3131
      %v3133 = vpop.f32.mrb[0].mxu0
      %3134 = vmatprep.mubr.f32.mxu0 0.0
      %3135 = vmatmul.mubr.f32.gmra.mrb[0].mxu0 %v1849
      %v3136 = vpop.f32.mrb[0].mxu0
      %v3137 = vadd.f32 %v1164, %v3136
      %v3138 = vpop.f32.mrb[0].mxu0
      %3139 = vmatprep.mubr.f32.mxu0 0.0
      %3140 = vmatmul.mubr.f32.gmra.mrb[0].mxu0 %v1852
      %v3141 = vpop.f32.mrb[0].mxu0
      %v3142 = vadd.f32 %v1164, %v3141
      %v3143 = vpop.f32.mrb[0].mxu0
      %3144 = vmatprep.mubr.f32.mxu0 0.0
      %3145 = vmatmul.mubr.f32.gmra.mrb[0].mxu0 %v1855
      %v3146 = vpop.f32.mrb[0].mxu0
      %v3147 = vadd.f32 %v1164, %v3146
      %v3148 = vpop.f32.mrb[0].mxu0
      %3149 = vmatprep.mubr.f32.mxu0 0.0
      %3150 = vmatmul.mubr.f32.gmra.mrb[0].mxu0 %v1858
      %v3151 = vpop.f32.mrb[0].mxu0
      %v3152 = vadd.f32 %v1164, %v3151
      %v3153 = vpop.f32.mrb[0].mxu0
      %3154 = vmatprep.mubr.f32.mxu0 0.0
      %3155 = vmatmul.mubr.f32.gmra.mrb[0].mxu0 %v1861
      %v3156 = vpop.f32.mrb[0].mxu0
      %v3157 = vadd.f32 %v1164, %v3156
      %v3158 = vpop.f32.mrb[0].mxu0
      %3159 = vmatprep.mubr.f32.mxu0 0.0
      %3160 = vmatmul.mubr.f32.gmra.mrb[0].mxu0 %v1864
      %v3161 = vpop.f32.mrb[0].mxu0
      %v3162 = vadd.f32 %v1164, %v3161
      %v3163 = vpop.f32.mrb[0].mxu0
      %3164 = vmatprep.mubr.f32.mxu0 0.0
      %3165 = vmatmul.mubr.f32.gmra.mrb[0].mxu0 %v1867
      %v3166 = vpop.f32.mrb[0].mxu0
      %v3167 = vadd.f32 %v1164, %v3166
      %v3168 = vpop.f32.mrb[0].mxu0
      %3169 = vmatprep.mubr.f32.mxu0 0.0
      %3170 = vmatmul.mubr.f32.gmra.mrb[0].mxu0 %v1870
      %v3171 = vpop.f32.mrb[0].mxu0
      %v3172 = vadd.f32 %v1164, %v3171
      %v3173 = vpop.f32.mrb[0].mxu0
      %3174 = vmatprep.mubr.f32.mxu0 0.0
      %3175 = vmatmul.mubr.f32.gmra.mrb[0].mxu0 %v1873
      %v3176 = vpop.f32.mrb[0].mxu0
      %v3177 = vadd.f32 %v1164, %v3176
      %v3178 = vpop.f32.mrb[0].mxu0
      %3179 = vmatprep.mubr.f32.mxu0 0.0
      %3180 = vmatmul.mubr.f32.gmra.mrb[0].mxu0 %v1876
      %v3181 = vpop.f32.mrb[0].mxu0
      %v3182 = vadd.f32 %v1164, %v3181
      %v3183 = vpop.f32.mrb[0].mxu0
      %3184 = vmatprep.mubr.f32.mxu0 0.0
      %3185 = vmatmul.mubr.f32.gmra.mrb[0].mxu0 %v1879
      %v3186 = vpop.f32.mrb[0].mxu0
      %v3187 = vadd.f32 %v1164, %v3186
      %v3188 = vpop.f32.mrb[0].mxu0
      %3189 = vmatprep.mubr.f32.mxu0 0.0
      %3190 = vmatmul.mubr.f32.gmra.mrb[0].mxu0 %v1882
      %v3191 = vpop.f32.mrb[0].mxu0
      %v3192 = vadd.f32 %v1164, %v3191
      %v3193 = vpop.f32.mrb[0].mxu0
      %3194 = vmatprep.mubr.f32.mxu0 0.0
      %3195 = vmatmul.mubr.f32.gmra.mrb[0].mxu0 %v1885
      %v3196 = vpop.f32.mrb[0].mxu0
      %v3197 = vadd.f32 %v1164, %v3196
      %v3198 = vpop.f32.mrb[0].mxu0
      %3199 = vmatprep.mubr.f32.mxu0 0.0
      %3200 = vmatmul.mubr.f32.gmra.mrb[0].mxu0 %v1888
      %v3201 = vpop.f32.mrb[0].mxu0
      %v3202 = vadd.f32 %v1164, %v3201
      %v3203 = vpop.f32.mrb[0].mxu0
      %3204 = vmatprep.mubr.f32.mxu0 0.0
      %3205 = vmatmul.mubr.f32.gmra.mrb[0].mxu0 %v1891
      %v3206 = vpop.f32.mrb[0].mxu0
      %v3207 = vadd.f32 %v1164, %v3206
      %v3208 = vpop.f32.mrb[0].mxu0
      %3209 = vmatprep.mubr.f32.mxu0 0.0
      %3210 = vmatmul.mubr.f32.gmra.mrb[0].mxu0 %v1894
      %v3211 = vpop.f32.mrb[0].mxu0
      %v3212 = vadd.f32 %v1164, %v3211
      %v3213 = vpop.f32.mrb[0].mxu0
      %3214 = vmatprep.mubr.f32.mxu0 0.0
      %3215 = vmatmul.mubr.f32.gmra.mrb[0].mxu0 %v1897
      %v3216 = vpop.f32.mrb[0].mxu0
      %v3217 = vadd.f32 %v1164, %v3216
      %v3218 = vpop.f32.mrb[0].mxu0
      %3219 = vmatprep.mubr.f32.mxu0 0.0
      %3220 = vmatmul.mubr.f32.gmra.mrb[0].mxu0 %v1900
      %v3221 = vpop.f32.mrb[0].mxu0
      %v3222 = vadd.f32 %v1164, %v3221
      %v3223 = vpop.f32.mrb[0].mxu0
      %3224 = vmatprep.mubr.f32.mxu0 0.0
      %3225 = vmatmul.mubr.f32.gmra.mrb[0].mxu0 %v1903
      %v3226 = vpop.f32.mrb[0].mxu0
      %v3227 = vadd.f32 %v1164, %v3226
      %v3228 = vpop.f32.mrb[0].mxu0
      %3229 = vmatprep.mubr.f32.mxu0 0.0
      %3230 = vmatmul.mubr.f32.gmra.mrb[0].mxu0 %v1906
      %v3231 = vpop.f32.mrb[0].mxu0
      %v3232 = vadd.f32 %v1164, %v3231
      %v3233 = vpop.f32.mrb[0].mxu0
      %3234 = vmatprep.mubr.f32.mxu0 0.0
      %3235 = vmatmul.mubr.f32.gmra.mrb[0].mxu0 %v1909
      %v3236 = vpop.f32.mrb[0].mxu0
      %v3237 = vadd.f32 %v1164, %v3236
      %v3238 = vpop.f32.mrb[0].mxu0
      %3239 = vmatprep.mubr.f32.mxu0 0.0
      %3240 = vmatmul.mubr.f32.gmra.mrb[0].mxu0 %v1912
      %v3241 = vpop.f32.mrb[0].mxu0
      %v3242 = vadd.f32 %v1164, %v3241
      %v3243 = vpop.f32.mrb[0].mxu0
      %3244 = vmatprep.mubr.f32.mxu0 0.0
      %3245 = vmatmul.mubr.f32.gmra.mrb[0].mxu0 %v1915
      %v3246 = vpop.f32.mrb[0].mxu0
      %v3247 = vadd.f32 %v1164, %v3246
      %v3248 = vpop.f32.mrb[0].mxu0
      %3249 = vmatprep.mubr.f32.mxu0 0.0
      %3250 = vmatmul.mubr.f32.gmra.mrb[0].mxu0 %v1918
      %v3251 = vpop.f32.mrb[0].mxu0
      %v3252 = vadd.f32 %v1164, %v3251
      %v3253 = vpop.f32.mrb[0].mxu0
      %3254 = vmatprep.mubr.f32.mxu0 0.0
      %3255 = vmatmul.mubr.f32.gmra.mrb[0].mxu0 %v1921
      %v3256 = vpop.f32.mrb[0].mxu0
      %v3257 = vadd.f32 %v1164, %v3256
      %v3258 = vpop.f32.mrb[0].mxu0
      %3259 = vmatprep.mubr.f32.mxu0 0.0
      %3260 = vmatmul.mubr.f32.gmra.mrb[0].mxu0 %v1924
      %v3261 = vpop.f32.mrb[0].mxu0
      %v3262 = vadd.f32 %v1164, %v3261
      %v3263 = vpop.f32.mrb[0].mxu0
      %3264 = vmatprep.mubr.f32.mxu0 0.0
      %3265 = vmatmul.mubr.f32.gmra.mrb[0].mxu0 %v1927
      %v3266 = vpop.f32.mrb[0].mxu0
      %v3267 = vadd.f32 %v1164, %v3266
      %v3268 = vpop.f32.mrb[0].mxu0
      %3269 = vmatprep.mubr.f32.mxu0 0.0
      %3270 = vmatmul.mubr.f32.gmra.mrb[0].mxu0 %v1930
      %v3271 = vpop.f32.mrb[0].mxu0
      %v3272 = vadd.f32 %v1164, %v3271
      %v3273 = vpop.f32.mrb[0].mxu0
      %3274 = vmatprep.mubr.f32.mxu0 0.0
      %3275 = vmatmul.mubr.f32.gmra.mrb[0].mxu0 %v1933
      %v3276 = vpop.f32.mrb[0].mxu0
      %v3277 = vadd.f32 %v1164, %v3276
      %v3278 = vpop.f32.mrb[0].mxu0
      %3279 = vdwg.mxu0
      %v3280 = vmax.f32 %v2002, 0.0
      %v3281 = vmax.f32 %v2007, 0.0
      %v3282 = vmax.f32 %v2012, 0.0
      %v3283 = vmax.f32 %v2017, 0.0
      %v3284 = vmax.f32 %v2022, 0.0
      %v3285 = vmax.f32 %v2027, 0.0
      %v3286 = vmax.f32 %v2032, 0.0
      %v3287 = vmax.f32 %v2037, 0.0
      %v3288 = vmax.f32 %v2042, 0.0
      %v3289 = vmax.f32 %v2047, 0.0
      %v3290 = vmax.f32 %v2052, 0.0
      %v3291 = vmax.f32 %v2057, 0.0
      %v3292 = vmax.f32 %v2062, 0.0
      %v3293 = vmax.f32 %v2067, 0.0
      %v3294 = vmax.f32 %v2072, 0.0
      %v3295 = vmax.f32 %v2077, 0.0
      %v3296 = vmax.f32 %v2082, 0.0
      %v3297 = vmax.f32 %v2087, 0.0
      %v3298 = vmax.f32 %v2092, 0.0
      %v3299 = vmax.f32 %v2097, 0.0
      %v3300 = vmax.f32 %v2102, 0.0
      %v3301 = vmax.f32 %v2107, 0.0
      %v3302 = vmax.f32 %v2112, 0.0
      %v3303 = vmax.f32 %v2117, 0.0
      %v3304 = vmax.f32 %v2122, 0.0
      %v3305 = vmax.f32 %v2127, 0.0
      %v3306 = vmax.f32 %v2132, 0.0
      %v3307 = vmax.f32 %v2137, 0.0
      %v3308 = vmax.f32 %v2142, 0.0
      %v3309 = vmax.f32 %v2147, 0.0
      %v3310 = vmax.f32 %v2152, 0.0
      %v3311 = vmax.f32 %v2157, 0.0
      %v3312 = vmax.f32 %v2162, 0.0
      %v3313 = vmax.f32 %v2167, 0.0
      %v3314 = vmax.f32 %v2172, 0.0
      %v3315 = vmax.f32 %v2177, 0.0
      %v3316 = vmax.f32 %v2182, 0.0
      %v3317 = vmax.f32 %v2187, 0.0
      %v3318 = vmax.f32 %v2192, 0.0
      %v3319 = vmax.f32 %v2197, 0.0
      %v3320 = vmax.f32 %v2202, 0.0
      %v3321 = vmax.f32 %v2207, 0.0
      %v3322 = vmax.f32 %v2212, 0.0
      %v3323 = vmax.f32 %v2217, 0.0
      %v3324 = vmax.f32 %v2222, 0.0
      %v3325 = vmax.f32 %v2227, 0.0
      %v3326 = vmax.f32 %v2232, 0.0
      %v3327 = vmax.f32 %v2237, 0.0
      %v3328 = vmax.f32 %v2242, 0.0
      %v3329 = vmax.f32 %v2247, 0.0
      %v3330 = vmax.f32 %v2252, 0.0
      %v3331 = vmax.f32 %v2257, 0.0
      %v3332 = vmax.f32 %v2262, 0.0
      %v3333 = vmax.f32 %v2267, 0.0
      %v3334 = vmax.f32 %v2272, 0.0
      %v3335 = vmax.f32 %v2277, 0.0
      %v3336 = vmax.f32 %v2282, 0.0
      %v3337 = vmax.f32 %v2287, 0.0
      %v3338 = vmax.f32 %v2292, 0.0
      %v3339 = vmax.f32 %v2297, 0.0
      %v3340 = vmax.f32 %v2302, 0.0
      %v3341 = vmax.f32 %v2307, 0.0
      %v3342 = vmax.f32 %v2312, 0.0
      %v3343 = vmax.f32 %v2317, 0.0
      %v3344 = vmax.f32 %v2322, 0.0
      %v3345 = vmax.f32 %v2327, 0.0
      %v3346 = vmax.f32 %v2332, 0.0
      %v3347 = vmax.f32 %v2337, 0.0
      %v3348 = vmax.f32 %v2342, 0.0
      %v3349 = vmax.f32 %v2347, 0.0
      %v3350 = vmax.f32 %v2352, 0.0
      %v3351 = vmax.f32 %v2357, 0.0
      %v3352 = vmax.f32 %v2362, 0.0
      %v3353 = vmax.f32 %v2367, 0.0
      %v3354 = vmax.f32 %v2372, 0.0
      %v3355 = vmax.f32 %v2377, 0.0
      %v3356 = vmax.f32 %v2382, 0.0
      %v3357 = vmax.f32 %v2387, 0.0
      %v3358 = vmax.f32 %v2392, 0.0
      %v3359 = vmax.f32 %v2397, 0.0
      %v3360 = vmax.f32 %v2402, 0.0
      %v3361 = vmax.f32 %v2407, 0.0
      %v3362 = vmax.f32 %v2412, 0.0
      %v3363 = vmax.f32 %v2417, 0.0
      %v3364 = vmax.f32 %v2422, 0.0
      %v3365 = vmax.f32 %v2427, 0.0
      %v3366 = vmax.f32 %v2432, 0.0
      %v3367 = vmax.f32 %v2437, 0.0
      %v3368 = vmax.f32 %v2442, 0.0
      %v3369 = vmax.f32 %v2447, 0.0
      %v3370 = vmax.f32 %v2452, 0.0
      %v3371 = vmax.f32 %v2457, 0.0
      %v3372 = vmax.f32 %v2462, 0.0
      %v3373 = vmax.f32 %v2467, 0.0
      %v3374 = vmax.f32 %v2472, 0.0
      %v3375 = vmax.f32 %v2477, 0.0
      %v3376 = vmax.f32 %v2482, 0.0
      %v3377 = vmax.f32 %v2487, 0.0
      %v3378 = vmax.f32 %v2492, 0.0
      %v3379 = vmax.f32 %v2497, 0.0
      %v3380 = vmax.f32 %v2502, 0.0
      %v3381 = vmax.f32 %v2507, 0.0
      %v3382 = vmax.f32 %v2512, 0.0
      %v3383 = vmax.f32 %v2517, 0.0
      %v3384 = vmax.f32 %v2522, 0.0
      %v3385 = vmax.f32 %v2527, 0.0
      %v3386 = vmax.f32 %v2532, 0.0
      %v3387 = vmax.f32 %v2537, 0.0
      %v3388 = vmax.f32 %v2542, 0.0
      %v3389 = vmax.f32 %v2547, 0.0
      %v3390 = vmax.f32 %v2552, 0.0
      %v3391 = vmax.f32 %v2557, 0.0
      %v3392 = vmax.f32 %v2562, 0.0
      %v3393 = vmax.f32 %v2567, 0.0
      %v3394 = vmax.f32 %v2572, 0.0
      %v3395 = vmax.f32 %v2577, 0.0
      %v3396 = vmax.f32 %v2582, 0.0
      %v3397 = vmax.f32 %v2587, 0.0
      %v3398 = vmax.f32 %v2592, 0.0
      %v3399 = vmax.f32 %v2597, 0.0
      %v3400 = vmax.f32 %v2602, 0.0
      %v3401 = vmax.f32 %v2607, 0.0
      %v3402 = vmax.f32 %v2612, 0.0
      %v3403 = vmax.f32 %v2617, 0.0
      %v3404 = vmax.f32 %v2622, 0.0
      %v3405 = vmax.f32 %v2627, 0.0
      %v3406 = vmax.f32 %v2632, 0.0
      %v3407 = vmax.f32 %v2637, 0.0
      %v3408 = vmax.f32 %v2642, 0.0
      %v3409 = vmax.f32 %v2647, 0.0
      %v3410 = vmax.f32 %v2652, 0.0
      %v3411 = vmax.f32 %v2657, 0.0
      %v3412 = vmax.f32 %v2662, 0.0
      %v3413 = vmax.f32 %v2667, 0.0
      %v3414 = vmax.f32 %v2672, 0.0
      %v3415 = vmax.f32 %v2677, 0.0
      %v3416 = vmax.f32 %v2682, 0.0
      %v3417 = vmax.f32 %v2687, 0.0
      %v3418 = vmax.f32 %v2692, 0.0
      %v3419 = vmax.f32 %v2697, 0.0
      %v3420 = vmax.f32 %v2702, 0.0
      %v3421 = vmax.f32 %v2707, 0.0
      %v3422 = vmax.f32 %v2712, 0.0
      %v3423 = vmax.f32 %v2717, 0.0
      %v3424 = vmax.f32 %v2722, 0.0
      %v3425 = vmax.f32 %v2727, 0.0
      %v3426 = vmax.f32 %v2732, 0.0
      %v3427 = vmax.f32 %v2737, 0.0
      %v3428 = vmax.f32 %v2742, 0.0
      %v3429 = vmax.f32 %v2747, 0.0
      %v3430 = vmax.f32 %v2752, 0.0
      %v3431 = vmax.f32 %v2757, 0.0
      %v3432 = vmax.f32 %v2762, 0.0
      %v3433 = vmax.f32 %v2767, 0.0
      %v3434 = vmax.f32 %v2772, 0.0
      %v3435 = vmax.f32 %v2777, 0.0
      %v3436 = vmax.f32 %v2782, 0.0
      %v3437 = vmax.f32 %v2787, 0.0
      %v3438 = vmax.f32 %v2792, 0.0
      %v3439 = vmax.f32 %v2797, 0.0
      %v3440 = vmax.f32 %v2802, 0.0
      %v3441 = vmax.f32 %v2807, 0.0
      %v3442 = vmax.f32 %v2812, 0.0
      %v3443 = vmax.f32 %v2817, 0.0
      %v3444 = vmax.f32 %v2822, 0.0
      %v3445 = vmax.f32 %v2827, 0.0
      %v3446 = vmax.f32 %v2832, 0.0
      %v3447 = vmax.f32 %v2837, 0.0
      %v3448 = vmax.f32 %v2842, 0.0
      %v3449 = vmax.f32 %v2847, 0.0
      %v3450 = vmax.f32 %v2852, 0.0
      %v3451 = vmax.f32 %v2857, 0.0
      %v3452 = vmax.f32 %v2862, 0.0
      %v3453 = vmax.f32 %v2867, 0.0
      %v3454 = vmax.f32 %v2872, 0.0
      %v3455 = vmax.f32 %v2877, 0.0
      %v3456 = vmax.f32 %v2882, 0.0
      %v3457 = vmax.f32 %v2887, 0.0
      %v3458 = vmax.f32 %v2892, 0.0
      %v3459 = vmax.f32 %v2897, 0.0
      %v3460 = vmax.f32 %v2902, 0.0
      %v3461 = vmax.f32 %v2907, 0.0
      %v3462 = vmax.f32 %v2912, 0.0
      %v3463 = vmax.f32 %v2917, 0.0
      %v3464 = vmax.f32 %v2922, 0.0
      %v3465 = vmax.f32 %v2927, 0.0
      %v3466 = vmax.f32 %v2932, 0.0
      %v3467 = vmax.f32 %v2937, 0.0
      %v3468 = vmax.f32 %v2942, 0.0
      %v3469 = vmax.f32 %v2947, 0.0
      %v3470 = vmax.f32 %v2952, 0.0
      %v3471 = vmax.f32 %v2957, 0.0
      %v3472 = vmax.f32 %v2962, 0.0
      %v3473 = vmax.f32 %v2967, 0.0
      %v3474 = vmax.f32 %v2972, 0.0
      %v3475 = vmax.f32 %v2977, 0.0
      %v3476 = vmax.f32 %v2982, 0.0
      %v3477 = vmax.f32 %v2987, 0.0
      %v3478 = vmax.f32 %v2992, 0.0
      %v3479 = vmax.f32 %v2997, 0.0
      %v3480 = vmax.f32 %v3002, 0.0
      %v3481 = vmax.f32 %v3007, 0.0
      %v3482 = vmax.f32 %v3012, 0.0
      %v3483 = vmax.f32 %v3017, 0.0
      %v3484 = vmax.f32 %v3022, 0.0
      %v3485 = vmax.f32 %v3027, 0.0
      %v3486 = vmax.f32 %v3032, 0.0
      %v3487 = vmax.f32 %v3037, 0.0
      %v3488 = vmax.f32 %v3042, 0.0
      %v3489 = vmax.f32 %v3047, 0.0
      %v3490 = vmax.f32 %v3052, 0.0
      %v3491 = vmax.f32 %v3057, 0.0
      %v3492 = vmax.f32 %v3062, 0.0
      %v3493 = vmax.f32 %v3067, 0.0
      %v3494 = vmax.f32 %v3072, 0.0
      %v3495 = vmax.f32 %v3077, 0.0
      %v3496 = vmax.f32 %v3082, 0.0
      %v3497 = vmax.f32 %v3087, 0.0
      %v3498 = vmax.f32 %v3092, 0.0
      %v3499 = vmax.f32 %v3097, 0.0
      %v3500 = vmax.f32 %v3102, 0.0
      %v3501 = vmax.f32 %v3107, 0.0
      %v3502 = vmax.f32 %v3112, 0.0
      %v3503 = vmax.f32 %v3117, 0.0
      %v3504 = vmax.f32 %v3122, 0.0
      %v3505 = vmax.f32 %v3127, 0.0
      %v3506 = vmax.f32 %v3132, 0.0
      %v3507 = vmax.f32 %v3137, 0.0
      %v3508 = vmax.f32 %v3142, 0.0
      %v3509 = vmax.f32 %v3147, 0.0
      %v3510 = vmax.f32 %v3152, 0.0
      %v3511 = vmax.f32 %v3157, 0.0
      %v3512 = vmax.f32 %v3162, 0.0
      %v3513 = vmax.f32 %v3167, 0.0
      %v3514 = vmax.f32 %v3172, 0.0
      %v3515 = vmax.f32 %v3177, 0.0
      %v3516 = vmax.f32 %v3182, 0.0
      %v3517 = vmax.f32 %v3187, 0.0
      %v3518 = vmax.f32 %v3192, 0.0
      %v3519 = vmax.f32 %v3197, 0.0
      %v3520 = vmax.f32 %v3202, 0.0
      %v3521 = vmax.f32 %v3207, 0.0
      %v3522 = vmax.f32 %v3212, 0.0
      %v3523 = vmax.f32 %v3217, 0.0
      %v3524 = vmax.f32 %v3222, 0.0
      %v3525 = vmax.f32 %v3227, 0.0
      %v3526 = vmax.f32 %v3232, 0.0
      %v3527 = vmax.f32 %v3237, 0.0
      %v3528 = vmax.f32 %v3242, 0.0
      %v3529 = vmax.f32 %v3247, 0.0
      %v3530 = vmax.f32 %v3252, 0.0
      %v3531 = vmax.f32 %v3257, 0.0
      %v3532 = vmax.f32 %v3262, 0.0
      %v3533 = vmax.f32 %v3267, 0.0
      %v3534 = vmax.f32 %v3272, 0.0
      %v3535 = vmax.f32 %v3277, 0.0
      %v3536 = vld [vmem:[%s879] sm:$0xff]
      %v3537 = vld [vmem:[%s879 + $0x8] sm:$0xff]
      %v3538 = vld [vmem:[%s879 + $0x10] sm:$0xff]
      %v3539 = vld [vmem:[%s879 + $0x18] sm:$0xff]
      %v3540 = vld [vmem:[%s879 + $0x20] sm:$0xff]
      %v3541 = vld [vmem:[%s879 + $0x28] sm:$0xff]
      %v3542 = vld [vmem:[%s879 + $0x30] sm:$0xff]
      %v3543 = vld [vmem:[%s879 + $0x38] sm:$0xff]
      %v3544 = vld [vmem:[%s879 + $0x40] sm:$0xff]
      %v3545 = vld [vmem:[%s879 + $0x48] sm:$0xff]
      %v3546 = vld [vmem:[%s879 + $0x50] sm:$0xff]
      %v3547 = vld [vmem:[%s879 + $0x58] sm:$0xff]
      %v3548 = vld [vmem:[%s879 + $0x60] sm:$0xff]
      %v3549 = vld [vmem:[%s879 + $0x68] sm:$0xff]
      %v3550 = vld [vmem:[%s879 + $0x70] sm:$0xff]
      %v3551 = vld [vmem:[%s879 + $0x78] sm:$0xff]
      %v3552 = vld [vmem:[%s879 + $0x80] sm:$0xff]
      %v3553 = vld [vmem:[%s879 + $0x88] sm:$0xff]
      %v3554 = vld [vmem:[%s879 + $0x90] sm:$0xff]
      %v3555 = vld [vmem:[%s879 + $0x98] sm:$0xff]
      %v3556 = vld [vmem:[%s879 + $0xa0] sm:$0xff]
      %v3557 = vld [vmem:[%s879 + $0xa8] sm:$0xff]
      %v3558 = vld [vmem:[%s879 + $0xb0] sm:$0xff]
      %v3559 = vld [vmem:[%s879 + $0xb8] sm:$0xff]
      %v3560 = vld [vmem:[%s879 + $0xc0] sm:$0xff]
      %v3561 = vld [vmem:[%s879 + $0xc8] sm:$0xff]
      %v3562 = vld [vmem:[%s879 + $0xd0] sm:$0xff]
      %v3563 = vld [vmem:[%s879 + $0xd8] sm:$0xff]
      %v3564 = vld [vmem:[%s879 + $0xe0] sm:$0xff]
      %v3565 = vld [vmem:[%s879 + $0xe8] sm:$0xff]
      %v3566 = vld [vmem:[%s879 + $0xf0] sm:$0xff]
      %v3567 = vld [vmem:[%s879 + $0xf8] sm:$0xff]
      %v3568 = vld [vmem:[%s879 + $0x100] sm:$0xff]
      %v3569 = vld [vmem:[%s879 + $0x108] sm:$0xff]
      %v3570 = vld [vmem:[%s879 + $0x110] sm:$0xff]
      %v3571 = vld [vmem:[%s879 + $0x118] sm:$0xff]
      %v3572 = vld [vmem:[%s879 + $0x120] sm:$0xff]
      %v3573 = vld [vmem:[%s879 + $0x128] sm:$0xff]
      %v3574 = vld [vmem:[%s879 + $0x130] sm:$0xff]
      %v3575 = vld [vmem:[%s879 + $0x138] sm:$0xff]
      %v3576 = vld [vmem:[%s879 + $0x140] sm:$0xff]
      %v3577 = vld [vmem:[%s879 + $0x148] sm:$0xff]
      %v3578 = vld [vmem:[%s879 + $0x150] sm:$0xff]
      %v3579 = vld [vmem:[%s879 + $0x158] sm:$0xff]
      %v3580 = vld [vmem:[%s879 + $0x160] sm:$0xff]
      %v3581 = vld [vmem:[%s879 + $0x168] sm:$0xff]
      %v3582 = vld [vmem:[%s879 + $0x170] sm:$0xff]
      %v3583 = vld [vmem:[%s879 + $0x178] sm:$0xff]
      %v3584 = vld [vmem:[%s879 + $0x180] sm:$0xff]
      %v3585 = vld [vmem:[%s879 + $0x188] sm:$0xff]
      %v3586 = vld [vmem:[%s879 + $0x190] sm:$0xff]
      %v3587 = vld [vmem:[%s879 + $0x198] sm:$0xff]
      %v3588 = vld [vmem:[%s879 + $0x1a0] sm:$0xff]
      %v3589 = vld [vmem:[%s879 + $0x1a8] sm:$0xff]
      %v3590 = vld [vmem:[%s879 + $0x1b0] sm:$0xff]
      %v3591 = vld [vmem:[%s879 + $0x1b8] sm:$0xff]
      %v3592 = vld [vmem:[%s879 + $0x1c0] sm:$0xff]
      %v3593 = vld [vmem:[%s879 + $0x1c8] sm:$0xff]
      %v3594 = vld [vmem:[%s879 + $0x1d0] sm:$0xff]
      %v3595 = vld [vmem:[%s879 + $0x1d8] sm:$0xff]
      %v3596 = vld [vmem:[%s879 + $0x1e0] sm:$0xff]
      %v3597 = vld [vmem:[%s879 + $0x1e8] sm:$0xff]
      %v3598 = vld [vmem:[%s879 + $0x1f0] sm:$0xff]
      %v3599 = vld [vmem:[%s879 + $0x1f8] sm:$0xff]
      %v3600 = vld [vmem:[%s879 + $0x200] sm:$0xff]
      %v3601 = vld [vmem:[%s879 + $0x208] sm:$0xff]
      %v3602 = vld [vmem:[%s879 + $0x210] sm:$0xff]
      %v3603 = vld [vmem:[%s879 + $0x218] sm:$0xff]
      %v3604 = vld [vmem:[%s879 + $0x220] sm:$0xff]
      %v3605 = vld [vmem:[%s879 + $0x228] sm:$0xff]
      %v3606 = vld [vmem:[%s879 + $0x230] sm:$0xff]
      %v3607 = vld [vmem:[%s879 + $0x238] sm:$0xff]
      %v3608 = vld [vmem:[%s879 + $0x240] sm:$0xff]
      %v3609 = vld [vmem:[%s879 + $0x248] sm:$0xff]
      %v3610 = vld [vmem:[%s879 + $0x250] sm:$0xff]
      %v3611 = vld [vmem:[%s879 + $0x258] sm:$0xff]
      %v3612 = vld [vmem:[%s879 + $0x260] sm:$0xff]
      %v3613 = vld [vmem:[%s879 + $0x268] sm:$0xff]
      %v3614 = vld [vmem:[%s879 + $0x270] sm:$0xff]
      %v3615 = vld [vmem:[%s879 + $0x278] sm:$0xff]
      %v3616 = vld [vmem:[%s879 + $0x280] sm:$0xff]
      %v3617 = vld [vmem:[%s879 + $0x288] sm:$0xff]
      %v3618 = vld [vmem:[%s879 + $0x290] sm:$0xff]
      %v3619 = vld [vmem:[%s879 + $0x298] sm:$0xff]
      %v3620 = vld [vmem:[%s879 + $0x2a0] sm:$0xff]
      %v3621 = vld [vmem:[%s879 + $0x2a8] sm:$0xff]
      %v3622 = vld [vmem:[%s879 + $0x2b0] sm:$0xff]
      %v3623 = vld [vmem:[%s879 + $0x2b8] sm:$0xff]
      %v3624 = vld [vmem:[%s879 + $0x2c0] sm:$0xff]
      %v3625 = vld [vmem:[%s879 + $0x2c8] sm:$0xff]
      %v3626 = vld [vmem:[%s879 + $0x2d0] sm:$0xff]
      %v3627 = vld [vmem:[%s879 + $0x2d8] sm:$0xff]
      %v3628 = vld [vmem:[%s879 + $0x2e0] sm:$0xff]
      %v3629 = vld [vmem:[%s879 + $0x2e8] sm:$0xff]
      %v3630 = vld [vmem:[%s879 + $0x2f0] sm:$0xff]
      %v3631 = vld [vmem:[%s879 + $0x2f8] sm:$0xff]
      %v3632 = vld [vmem:[%s879 + $0x300] sm:$0xff]
      %v3633 = vld [vmem:[%s879 + $0x308] sm:$0xff]
      %v3634 = vld [vmem:[%s879 + $0x310] sm:$0xff]
      %v3635 = vld [vmem:[%s879 + $0x318] sm:$0xff]
      %v3636 = vld [vmem:[%s879 + $0x320] sm:$0xff]
      %v3637 = vld [vmem:[%s879 + $0x328] sm:$0xff]
      %v3638 = vld [vmem:[%s879 + $0x330] sm:$0xff]
      %v3639 = vld [vmem:[%s879 + $0x338] sm:$0xff]
      %v3640 = vld [vmem:[%s879 + $0x340] sm:$0xff]
      %v3641 = vld [vmem:[%s879 + $0x348] sm:$0xff]
      %v3642 = vld [vmem:[%s879 + $0x350] sm:$0xff]
      %v3643 = vld [vmem:[%s879 + $0x358] sm:$0xff]
      %v3644 = vld [vmem:[%s879 + $0x360] sm:$0xff]
      %v3645 = vld [vmem:[%s879 + $0x368] sm:$0xff]
      %v3646 = vld [vmem:[%s879 + $0x370] sm:$0xff]
      %v3647 = vld [vmem:[%s879 + $0x378] sm:$0xff]
      %v3648 = vld [vmem:[%s879 + $0x380] sm:$0xff]
      %v3649 = vld [vmem:[%s879 + $0x388] sm:$0xff]
      %v3650 = vld [vmem:[%s879 + $0x390] sm:$0xff]
      %v3651 = vld [vmem:[%s879 + $0x398] sm:$0xff]
      %v3652 = vld [vmem:[%s879 + $0x3a0] sm:$0xff]
      %v3653 = vld [vmem:[%s879 + $0x3a8] sm:$0xff]
      %v3654 = vld [vmem:[%s879 + $0x3b0] sm:$0xff]
      %v3655 = vld [vmem:[%s879 + $0x3b8] sm:$0xff]
      %v3656 = vld [vmem:[%s879 + $0x3c0] sm:$0xff]
      %v3657 = vld [vmem:[%s879 + $0x3c8] sm:$0xff]
      %v3658 = vld [vmem:[%s879 + $0x3d0] sm:$0xff]
      %v3659 = vld [vmem:[%s879 + $0x3d8] sm:$0xff]
      %v3660 = vld [vmem:[%s879 + $0x3e0] sm:$0xff]
      %v3661 = vld [vmem:[%s879 + $0x3e8] sm:$0xff]
      %v3662 = vld [vmem:[%s879 + $0x3f0] sm:$0xff]
      %v3663 = vld [vmem:[%s879 + $0x3f8] sm:$0xff]
      %v3664 = vld [vmem:[%s879 + $0x400] sm:$0xff]
      %v3665 = vld [vmem:[%s879 + $0x408] sm:$0xff]
      %v3666 = vld [vmem:[%s879 + $0x410] sm:$0xff]
      %v3667 = vld [vmem:[%s879 + $0x418] sm:$0xff]
      %v3668 = vld [vmem:[%s879 + $0x420] sm:$0xff]
      %v3669 = vld [vmem:[%s879 + $0x428] sm:$0xff]
      %v3670 = vld [vmem:[%s879 + $0x430] sm:$0xff]
      %v3671 = vld [vmem:[%s879 + $0x438] sm:$0xff]
      %v3672 = vld [vmem:[%s879 + $0x440] sm:$0xff]
      %v3673 = vld [vmem:[%s879 + $0x448] sm:$0xff]
      %v3674 = vld [vmem:[%s879 + $0x450] sm:$0xff]
      %v3675 = vld [vmem:[%s879 + $0x458] sm:$0xff]
      %v3676 = vld [vmem:[%s879 + $0x460] sm:$0xff]
      %v3677 = vld [vmem:[%s879 + $0x468] sm:$0xff]
      %v3678 = vld [vmem:[%s879 + $0x470] sm:$0xff]
      %v3679 = vld [vmem:[%s879 + $0x478] sm:$0xff]
      %v3680 = vld [vmem:[%s879 + $0x480] sm:$0xff]
      %v3681 = vld [vmem:[%s879 + $0x488] sm:$0xff]
      %v3682 = vld [vmem:[%s879 + $0x490] sm:$0xff]
      %v3683 = vld [vmem:[%s879 + $0x498] sm:$0xff]
      %v3684 = vld [vmem:[%s879 + $0x4a0] sm:$0xff]
      %v3685 = vld [vmem:[%s879 + $0x4a8] sm:$0xff]
      %v3686 = vld [vmem:[%s879 + $0x4b0] sm:$0xff]
      %v3687 = vld [vmem:[%s879 + $0x4b8] sm:$0xff]
      %v3688 = vld [vmem:[%s879 + $0x4c0] sm:$0xff]
      %v3689 = vld [vmem:[%s879 + $0x4c8] sm:$0xff]
      %v3690 = vld [vmem:[%s879 + $0x4d0] sm:$0xff]
      %v3691 = vld [vmem:[%s879 + $0x4d8] sm:$0xff]
      %v3692 = vld [vmem:[%s879 + $0x4e0] sm:$0xff]
      %v3693 = vld [vmem:[%s879 + $0x4e8] sm:$0xff]
      %v3694 = vld [vmem:[%s879 + $0x4f0] sm:$0xff]
      %v3695 = vld [vmem:[%s879 + $0x4f8] sm:$0xff]
      %v3696 = vld [vmem:[%s879 + $0x500] sm:$0xff]
      %v3697 = vld [vmem:[%s879 + $0x508] sm:$0xff]
      %v3698 = vld [vmem:[%s879 + $0x510] sm:$0xff]
      %v3699 = vld [vmem:[%s879 + $0x518] sm:$0xff]
      %v3700 = vld [vmem:[%s879 + $0x520] sm:$0xff]
      %v3701 = vld [vmem:[%s879 + $0x528] sm:$0xff]
      %v3702 = vld [vmem:[%s879 + $0x530] sm:$0xff]
      %v3703 = vld [vmem:[%s879 + $0x538] sm:$0xff]
      %v3704 = vld [vmem:[%s879 + $0x540] sm:$0xff]
      %v3705 = vld [vmem:[%s879 + $0x548] sm:$0xff]
      %v3706 = vld [vmem:[%s879 + $0x550] sm:$0xff]
      %v3707 = vld [vmem:[%s879 + $0x558] sm:$0xff]
      %v3708 = vld [vmem:[%s879 + $0x560] sm:$0xff]
      %v3709 = vld [vmem:[%s879 + $0x568] sm:$0xff]
      %v3710 = vld [vmem:[%s879 + $0x570] sm:$0xff]
      %v3711 = vld [vmem:[%s879 + $0x578] sm:$0xff]
      %v3712 = vld [vmem:[%s879 + $0x580] sm:$0xff]
      %v3713 = vld [vmem:[%s879 + $0x588] sm:$0xff]
      %v3714 = vld [vmem:[%s879 + $0x590] sm:$0xff]
      %v3715 = vld [vmem:[%s879 + $0x598] sm:$0xff]
      %v3716 = vld [vmem:[%s879 + $0x5a0] sm:$0xff]
      %v3717 = vld [vmem:[%s879 + $0x5a8] sm:$0xff]
      %v3718 = vld [vmem:[%s879 + $0x5b0] sm:$0xff]
      %v3719 = vld [vmem:[%s879 + $0x5b8] sm:$0xff]
      %v3720 = vld [vmem:[%s879 + $0x5c0] sm:$0xff]
      %v3721 = vld [vmem:[%s879 + $0x5c8] sm:$0xff]
      %v3722 = vld [vmem:[%s879 + $0x5d0] sm:$0xff]
      %v3723 = vld [vmem:[%s879 + $0x5d8] sm:$0xff]
      %v3724 = vld [vmem:[%s879 + $0x5e0] sm:$0xff]
      %v3725 = vld [vmem:[%s879 + $0x5e8] sm:$0xff]
      %v3726 = vld [vmem:[%s879 + $0x5f0] sm:$0xff]
      %v3727 = vld [vmem:[%s879 + $0x5f8] sm:$0xff]
      %v3728 = vld [vmem:[%s879 + $0x600] sm:$0xff]
      %v3729 = vld [vmem:[%s879 + $0x608] sm:$0xff]
      %v3730 = vld [vmem:[%s879 + $0x610] sm:$0xff]
      %v3731 = vld [vmem:[%s879 + $0x618] sm:$0xff]
      %v3732 = vld [vmem:[%s879 + $0x620] sm:$0xff]
      %v3733 = vld [vmem:[%s879 + $0x628] sm:$0xff]
      %v3734 = vld [vmem:[%s879 + $0x630] sm:$0xff]
      %v3735 = vld [vmem:[%s879 + $0x638] sm:$0xff]
      %v3736 = vld [vmem:[%s879 + $0x640] sm:$0xff]
      %v3737 = vld [vmem:[%s879 + $0x648] sm:$0xff]
      %v3738 = vld [vmem:[%s879 + $0x650] sm:$0xff]
      %v3739 = vld [vmem:[%s879 + $0x658] sm:$0xff]
      %v3740 = vld [vmem:[%s879 + $0x660] sm:$0xff]
      %v3741 = vld [vmem:[%s879 + $0x668] sm:$0xff]
      %v3742 = vld [vmem:[%s879 + $0x670] sm:$0xff]
      %v3743 = vld [vmem:[%s879 + $0x678] sm:$0xff]
      %v3744 = vld [vmem:[%s879 + $0x680] sm:$0xff]
      %v3745 = vld [vmem:[%s879 + $0x688] sm:$0xff]
      %v3746 = vld [vmem:[%s879 + $0x690] sm:$0xff]
      %v3747 = vld [vmem:[%s879 + $0x698] sm:$0xff]
      %v3748 = vld [vmem:[%s879 + $0x6a0] sm:$0xff]
      %v3749 = vld [vmem:[%s879 + $0x6a8] sm:$0xff]
      %v3750 = vld [vmem:[%s879 + $0x6b0] sm:$0xff]
      %v3751 = vld [vmem:[%s879 + $0x6b8] sm:$0xff]
      %v3752 = vld [vmem:[%s879 + $0x6c0] sm:$0xff]
      %v3753 = vld [vmem:[%s879 + $0x6c8] sm:$0xff]
      %v3754 = vld [vmem:[%s879 + $0x6d0] sm:$0xff]
      %v3755 = vld [vmem:[%s879 + $0x6d8] sm:$0xff]
      %v3756 = vld [vmem:[%s879 + $0x6e0] sm:$0xff]
      %v3757 = vld [vmem:[%s879 + $0x6e8] sm:$0xff]
      %v3758 = vld [vmem:[%s879 + $0x6f0] sm:$0xff]
      %v3759 = vld [vmem:[%s879 + $0x6f8] sm:$0xff]
      %v3760 = vld [vmem:[%s879 + $0x700] sm:$0xff]
      %v3761 = vld [vmem:[%s879 + $0x708] sm:$0xff]
      %v3762 = vld [vmem:[%s879 + $0x710] sm:$0xff]
      %v3763 = vld [vmem:[%s879 + $0x718] sm:$0xff]
      %v3764 = vld [vmem:[%s879 + $0x720] sm:$0xff]
      %v3765 = vld [vmem:[%s879 + $0x728] sm:$0xff]
      %v3766 = vld [vmem:[%s879 + $0x730] sm:$0xff]
      %v3767 = vld [vmem:[%s879 + $0x738] sm:$0xff]
      %v3768 = vld [vmem:[%s879 + $0x740] sm:$0xff]
      %v3769 = vld [vmem:[%s879 + $0x748] sm:$0xff]
      %v3770 = vld [vmem:[%s879 + $0x750] sm:$0xff]
      %v3771 = vld [vmem:[%s879 + $0x758] sm:$0xff]
      %v3772 = vld [vmem:[%s879 + $0x760] sm:$0xff]
      %v3773 = vld [vmem:[%s879 + $0x768] sm:$0xff]
      %v3774 = vld [vmem:[%s879 + $0x770] sm:$0xff]
      %v3775 = vld [vmem:[%s879 + $0x778] sm:$0xff]
      %v3776 = vld [vmem:[%s879 + $0x780] sm:$0xff]
      %v3777 = vld [vmem:[%s879 + $0x788] sm:$0xff]
      %v3778 = vld [vmem:[%s879 + $0x790] sm:$0xff]
      %v3779 = vld [vmem:[%s879 + $0x798] sm:$0xff]
      %v3780 = vld [vmem:[%s879 + $0x7a0] sm:$0xff]
      %v3781 = vld [vmem:[%s879 + $0x7a8] sm:$0xff]
      %v3782 = vld [vmem:[%s879 + $0x7b0] sm:$0xff]
      %v3783 = vld [vmem:[%s879 + $0x7b8] sm:$0xff]
      %v3784 = vld [vmem:[%s879 + $0x7c0] sm:$0xff]
      %v3785 = vld [vmem:[%s879 + $0x7c8] sm:$0xff]
      %v3786 = vld [vmem:[%s879 + $0x7d0] sm:$0xff]
      %v3787 = vld [vmem:[%s879 + $0x7d8] sm:$0xff]
      %v3788 = vld [vmem:[%s879 + $0x7e0] sm:$0xff]
      %v3789 = vld [vmem:[%s879 + $0x7e8] sm:$0xff]
      %v3790 = vld [vmem:[%s879 + $0x7f0] sm:$0xff]
      %v3791 = vld [vmem:[%s879 + $0x7f8] sm:$0xff]
      %v3792 = vadd.f32 %v3280, %v3536
      %v3793 = vadd.f32 %v3281, %v3537
      %v3794 = vadd.f32 %v3282, %v3538
      %v3795 = vadd.f32 %v3283, %v3539
      %v3796 = vadd.f32 %v3284, %v3540
      %v3797 = vadd.f32 %v3285, %v3541
      %v3798 = vadd.f32 %v3286, %v3542
      %v3799 = vadd.f32 %v3287, %v3543
      %v3800 = vadd.f32 %v3288, %v3544
      %v3801 = vadd.f32 %v3289, %v3545
      %v3802 = vadd.f32 %v3290, %v3546
      %v3803 = vadd.f32 %v3291, %v3547
      %v3804 = vadd.f32 %v3292, %v3548
      %v3805 = vadd.f32 %v3293, %v3549
      %v3806 = vadd.f32 %v3294, %v3550
      %v3807 = vadd.f32 %v3295, %v3551
      %v3808 = vadd.f32 %v3296, %v3552
      %v3809 = vadd.f32 %v3297, %v3553
      %v3810 = vadd.f32 %v3298, %v3554
      %v3811 = vadd.f32 %v3299, %v3555
      %v3812 = vadd.f32 %v3300, %v3556
      %v3813 = vadd.f32 %v3301, %v3557
      %v3814 = vadd.f32 %v3302, %v3558
      %v3815 = vadd.f32 %v3303, %v3559
      %v3816 = vadd.f32 %v3304, %v3560
      %v3817 = vadd.f32 %v3305, %v3561
      %v3818 = vadd.f32 %v3306, %v3562
      %v3819 = vadd.f32 %v3307, %v3563
      %v3820 = vadd.f32 %v3308, %v3564
      %v3821 = vadd.f32 %v3309, %v3565
      %v3822 = vadd.f32 %v3310, %v3566
      %v3823 = vadd.f32 %v3311, %v3567
      %v3824 = vadd.f32 %v3312, %v3568
      %v3825 = vadd.f32 %v3313, %v3569
      %v3826 = vadd.f32 %v3314, %v3570
      %v3827 = vadd.f32 %v3315, %v3571
      %v3828 = vadd.f32 %v3316, %v3572
      %v3829 = vadd.f32 %v3317, %v3573
      %v3830 = vadd.f32 %v3318, %v3574
      %v3831 = vadd.f32 %v3319, %v3575
      %v3832 = vadd.f32 %v3320, %v3576
      %v3833 = vadd.f32 %v3321, %v3577
      %v3834 = vadd.f32 %v3322, %v3578
      %v3835 = vadd.f32 %v3323, %v3579
      %v3836 = vadd.f32 %v3324, %v3580
      %v3837 = vadd.f32 %v3325, %v3581
      %v3838 = vadd.f32 %v3326, %v3582
      %v3839 = vadd.f32 %v3327, %v3583
      %v3840 = vadd.f32 %v3328, %v3584
      %v3841 = vadd.f32 %v3329, %v3585
      %v3842 = vadd.f32 %v3330, %v3586
      %v3843 = vadd.f32 %v3331, %v3587
      %v3844 = vadd.f32 %v3332, %v3588
      %v3845 = vadd.f32 %v3333, %v3589
      %v3846 = vadd.f32 %v3334, %v3590
      %v3847 = vadd.f32 %v3335, %v3591
      %v3848 = vadd.f32 %v3336, %v3592
      %v3849 = vadd.f32 %v3337, %v3593
      %v3850 = vadd.f32 %v3338, %v3594
      %v3851 = vadd.f32 %v3339, %v3595
      %v3852 = vadd.f32 %v3340, %v3596
      %v3853 = vadd.f32 %v3341, %v3597
      %v3854 = vadd.f32 %v3342, %v3598
      %v3855 = vadd.f32 %v3343, %v3599
      %v3856 = vadd.f32 %v3344, %v3600
      %v3857 = vadd.f32 %v3345, %v3601
      %v3858 = vadd.f32 %v3346, %v3602
      %v3859 = vadd.f32 %v3347, %v3603
      %v3860 = vadd.f32 %v3348, %v3604
      %v3861 = vadd.f32 %v3349, %v3605
      %v3862 = vadd.f32 %v3350, %v3606
      %v3863 = vadd.f32 %v3351, %v3607
      %v3864 = vadd.f32 %v3352, %v3608
      %v3865 = vadd.f32 %v3353, %v3609
      %v3866 = vadd.f32 %v3354, %v3610
      %v3867 = vadd.f32 %v3355, %v3611
      %v3868 = vadd.f32 %v3356, %v3612
      %v3869 = vadd.f32 %v3357, %v3613
      %v3870 = vadd.f32 %v3358, %v3614
      %v3871 = vadd.f32 %v3359, %v3615
      %v3872 = vadd.f32 %v3360, %v3616
      %v3873 = vadd.f32 %v3361, %v3617
      %v3874 = vadd.f32 %v3362, %v3618
      %v3875 = vadd.f32 %v3363, %v3619
      %v3876 = vadd.f32 %v3364, %v3620
      %v3877 = vadd.f32 %v3365, %v3621
      %v3878 = vadd.f32 %v3366, %v3622
      %v3879 = vadd.f32 %v3367, %v3623
      %v3880 = vadd.f32 %v3368, %v3624
      %v3881 = vadd.f32 %v3369, %v3625
      %v3882 = vadd.f32 %v3370, %v3626
      %v3883 = vadd.f32 %v3371, %v3627
      %v3884 = vadd.f32 %v3372, %v3628
      %v3885 = vadd.f32 %v3373, %v3629
      %v3886 = vadd.f32 %v3374, %v3630
      %v3887 = vadd.f32 %v3375, %v3631
      %v3888 = vadd.f32 %v3376, %v3632
      %v3889 = vadd.f32 %v3377, %v3633
      %v3890 = vadd.f32 %v3378, %v3634
      %v3891 = vadd.f32 %v3379, %v3635
      %v3892 = vadd.f32 %v3380, %v3636
      %v3893 = vadd.f32 %v3381, %v3637
      %v3894 = vadd.f32 %v3382, %v3638
      %v3895 = vadd.f32 %v3383, %v3639
      %v3896 = vadd.f32 %v3384, %v3640
      %v3897 = vadd.f32 %v3385, %v3641
      %v3898 = vadd.f32 %v3386, %v3642
      %v3899 = vadd.f32 %v3387, %v3643
      %v3900 = vadd.f32 %v3388, %v3644
      %v3901 = vadd.f32 %v3389, %v3645
      %v3902 = vadd.f32 %v3390, %v3646
      %v3903 = vadd.f32 %v3391, %v3647
      %v3904 = vadd.f32 %v3392, %v3648
      %v3905 = vadd.f32 %v3393, %v3649
      %v3906 = vadd.f32 %v3394, %v3650
      %v3907 = vadd.f32 %v3395, %v3651
      %v3908 = vadd.f32 %v3396, %v3652
      %v3909 = vadd.f32 %v3397, %v3653
      %v3910 = vadd.f32 %v3398, %v3654
      %v3911 = vadd.f32 %v3399, %v3655
      %v3912 = vadd.f32 %v3400, %v3656
      %v3913 = vadd.f32 %v3401, %v3657
      %v3914 = vadd.f32 %v3402, %v3658
      %v3915 = vadd.f32 %v3403, %v3659
      %v3916 = vadd.f32 %v3404, %v3660
      %v3917 = vadd.f32 %v3405, %v3661
      %v3918 = vadd.f32 %v3406, %v3662
      %v3919 = vadd.f32 %v3407, %v3663
      %v3920 = vadd.f32 %v3408, %v3664
      %v3921 = vadd.f32 %v3409, %v3665
      %v3922 = vadd.f32 %v3410, %v3666
      %v3923 = vadd.f32 %v3411, %v3667
      %v3924 = vadd.f32 %v3412, %v3668
      %v3925 = vadd.f32 %v3413, %v3669
      %v3926 = vadd.f32 %v3414, %v3670
      %v3927 = vadd.f32 %v3415, %v3671
      %v3928 = vadd.f32 %v3416, %v3672
      %v3929 = vadd.f32 %v3417, %v3673
      %v3930 = vadd.f32 %v3418, %v3674
      %v3931 = vadd.f32 %v3419, %v3675
      %v3932 = vadd.f32 %v3420, %v3676
      %v3933 = vadd.f32 %v3421, %v3677
      %v3934 = vadd.f32 %v3422, %v3678
      %v3935 = vadd.f32 %v3423, %v3679
      %v3936 = vadd.f32 %v3424, %v3680
      %v3937 = vadd.f32 %v3425, %v3681
      %v3938 = vadd.f32 %v3426, %v3682
      %v3939 = vadd.f32 %v3427, %v3683
      %v3940 = vadd.f32 %v3428, %v3684
      %v3941 = vadd.f32 %v3429, %v3685
      %v3942 = vadd.f32 %v3430, %v3686
      %v3943 = vadd.f32 %v3431, %v3687
      %v3944 = vadd.f32 %v3432, %v3688
      %v3945 = vadd.f32 %v3433, %v3689
      %v3946 = vadd.f32 %v3434, %v3690
      %v3947 = vadd.f32 %v3435, %v3691
      %v3948 = vadd.f32 %v3436, %v3692
      %v3949 = vadd.f32 %v3437, %v3693
      %v3950 = vadd.f32 %v3438, %v3694
      %v3951 = vadd.f32 %v3439, %v3695
      %v3952 = vadd.f32 %v3440, %v3696
      %v3953 = vadd.f32 %v3441, %v3697
      %v3954 = vadd.f32 %v3442, %v3698
      %v3955 = vadd.f32 %v3443, %v3699
      %v3956 = vadd.f32 %v3444, %v3700
      %v3957 = vadd.f32 %v3445, %v3701
      %v3958 = vadd.f32 %v3446, %v3702
      %v3959 = vadd.f32 %v3447, %v3703
      %v3960 = vadd.f32 %v3448, %v3704
      %v3961 = vadd.f32 %v3449, %v3705
      %v3962 = vadd.f32 %v3450, %v3706
      %v3963 = vadd.f32 %v3451, %v3707
      %v3964 = vadd.f32 %v3452, %v3708
      %v3965 = vadd.f32 %v3453, %v3709
      %v3966 = vadd.f32 %v3454, %v3710
      %v3967 = vadd.f32 %v3455, %v3711
      %v3968 = vadd.f32 %v3456, %v3712
      %v3969 = vadd.f32 %v3457, %v3713
      %v3970 = vadd.f32 %v3458, %v3714
      %v3971 = vadd.f32 %v3459, %v3715
      %v3972 = vadd.f32 %v3460, %v3716
      %v3973 = vadd.f32 %v3461, %v3717
      %v3974 = vadd.f32 %v3462, %v3718
      %v3975 = vadd.f32 %v3463, %v3719
      %v3976 = vadd.f32 %v3464, %v3720
      %v3977 = vadd.f32 %v3465, %v3721
      %v3978 = vadd.f32 %v3466, %v3722
      %v3979 = vadd.f32 %v3467, %v3723
      %v3980 = vadd.f32 %v3468, %v3724
      %v3981 = vadd.f32 %v3469, %v3725
      %v3982 = vadd.f32 %v3470, %v3726
      %v3983 = vadd.f32 %v3471, %v3727
      %v3984 = vadd.f32 %v3472, %v3728
      %v3985 = vadd.f32 %v3473, %v3729
      %v3986 = vadd.f32 %v3474, %v3730
      %v3987 = vadd.f32 %v3475, %v3731
      %v3988 = vadd.f32 %v3476, %v3732
      %v3989 = vadd.f32 %v3477, %v3733
      %v3990 = vadd.f32 %v3478, %v3734
      %v3991 = vadd.f32 %v3479, %v3735
      %v3992 = vadd.f32 %v3480, %v3736
      %v3993 = vadd.f32 %v3481, %v3737
      %v3994 = vadd.f32 %v3482, %v3738
      %v3995 = vadd.f32 %v3483, %v3739
      %v3996 = vadd.f32 %v3484, %v3740
      %v3997 = vadd.f32 %v3485, %v3741
      %v3998 = vadd.f32 %v3486, %v3742
      %v3999 = vadd.f32 %v3487, %v3743
      %v4000 = vadd.f32 %v3488, %v3744
      %v4001 = vadd.f32 %v3489, %v3745
      %v4002 = vadd.f32 %v3490, %v3746
      %v4003 = vadd.f32 %v3491, %v3747
      %v4004 = vadd.f32 %v3492, %v3748
      %v4005 = vadd.f32 %v3493, %v3749
      %v4006 = vadd.f32 %v3494, %v3750
      %v4007 = vadd.f32 %v3495, %v3751
      %v4008 = vadd.f32 %v3496, %v3752
      %v4009 = vadd.f32 %v3497, %v3753
      %v4010 = vadd.f32 %v3498, %v3754
      %v4011 = vadd.f32 %v3499, %v3755
      %v4012 = vadd.f32 %v3500, %v3756
      %v4013 = vadd.f32 %v3501, %v3757
      %v4014 = vadd.f32 %v3502, %v3758
      %v4015 = vadd.f32 %v3503, %v3759
      %v4016 = vadd.f32 %v3504, %v3760
      %v4017 = vadd.f32 %v3505, %v3761
      %v4018 = vadd.f32 %v3506, %v3762
      %v4019 = vadd.f32 %v3507, %v3763
      %v4020 = vadd.f32 %v3508, %v3764
      %v4021 = vadd.f32 %v3509, %v3765
      %v4022 = vadd.f32 %v3510, %v3766
      %v4023 = vadd.f32 %v3511, %v3767
      %v4024 = vadd.f32 %v3512, %v3768
      %v4025 = vadd.f32 %v3513, %v3769
      %v4026 = vadd.f32 %v3514, %v3770
      %v4027 = vadd.f32 %v3515, %v3771
      %v4028 = vadd.f32 %v3516, %v3772
      %v4029 = vadd.f32 %v3517, %v3773
      %v4030 = vadd.f32 %v3518, %v3774
      %v4031 = vadd.f32 %v3519, %v3775
      %v4032 = vadd.f32 %v3520, %v3776
      %v4033 = vadd.f32 %v3521, %v3777
      %v4034 = vadd.f32 %v3522, %v3778
      %v4035 = vadd.f32 %v3523, %v3779
      %v4036 = vadd.f32 %v3524, %v3780
      %v4037 = vadd.f32 %v3525, %v3781
      %v4038 = vadd.f32 %v3526, %v3782
      %v4039 = vadd.f32 %v3527, %v3783
      %v4040 = vadd.f32 %v3528, %v3784
      %v4041 = vadd.f32 %v3529, %v3785
      %v4042 = vadd.f32 %v3530, %v3786
      %v4043 = vadd.f32 %v3531, %v3787
      %v4044 = vadd.f32 %v3532, %v3788
      %v4045 = vadd.f32 %v3533, %v3789
      %v4046 = vadd.f32 %v3534, %v3790
      %v4047 = vadd.f32 %v3535, %v3791
      %vm4048 = vcmask 64512
      %4049 = vst.msk [vmem:[#allocation2] sm:$0xff] %vm4048, %v3792
      %4050 = vst.msk [vmem:[#allocation2 + $0x8] sm:$0xff] %vm4048, %v3793
      %4051 = vst.msk [vmem:[#allocation2 + $0x10] sm:$0xff] %vm4048, %v3794
      %4052 = vst.msk [vmem:[#allocation2 + $0x18] sm:$0xff] %vm4048, %v3795
      %4053 = vst.msk [vmem:[#allocation2 + $0x20] sm:$0xff] %vm4048, %v3796
      %4054 = vst.msk [vmem:[#allocation2 + $0x28] sm:$0xff] %vm4048, %v3797
      %4055 = vst.msk [vmem:[#allocation2 + $0x30] sm:$0xff] %vm4048, %v3798
      %4056 = vst.msk [vmem:[#allocation2 + $0x38] sm:$0xff] %vm4048, %v3799
      %4057 = vst.msk [vmem:[#allocation2 + $0x40] sm:$0xff] %vm4048, %v3800
      %4058 = vst.msk [vmem:[#allocation2 + $0x48] sm:$0xff] %vm4048, %v3801
      %4059 = vst.msk [vmem:[#allocation2 + $0x50] sm:$0xff] %vm4048, %v3802
      %4060 = vst.msk [vmem:[#allocation2 + $0x58] sm:$0xff] %vm4048, %v3803
      %4061 = vst.msk [vmem:[#allocation2 + $0x60] sm:$0xff] %vm4048, %v3804
      %4062 = vst.msk [vmem:[#allocation2 + $0x68] sm:$0xff] %vm4048, %v3805
      %4063 = vst.msk [vmem:[#allocation2 + $0x70] sm:$0xff] %vm4048, %v3806
      %4064 = vst.msk [vmem:[#allocation2 + $0x78] sm:$0xff] %vm4048, %v3807
      %4065 = vst.msk [vmem:[#allocation2 + $0x80] sm:$0xff] %vm4048, %v3808
      %4066 = vst.msk [vmem:[#allocation2 + $0x88] sm:$0xff] %vm4048, %v3809
      %4067 = vst.msk [vmem:[#allocation2 + $0x90] sm:$0xff] %vm4048, %v3810
      %4068 = vst.msk [vmem:[#allocation2 + $0x98] sm:$0xff] %vm4048, %v3811
      %4069 = vst.msk [vmem:[#allocation2 + $0xa0] sm:$0xff] %vm4048, %v3812
      %4070 = vst.msk [vmem:[#allocation2 + $0xa8] sm:$0xff] %vm4048, %v3813
      %4071 = vst.msk [vmem:[#allocation2 + $0xb0] sm:$0xff] %vm4048, %v3814
      %4072 = vst.msk [vmem:[#allocation2 + $0xb8] sm:$0xff] %vm4048, %v3815
      %4073 = vst.msk [vmem:[#allocation2 + $0xc0] sm:$0xff] %vm4048, %v3816
      %4074 = vst.msk [vmem:[#allocation2 + $0xc8] sm:$0xff] %vm4048, %v3817
      %4075 = vst.msk [vmem:[#allocation2 + $0xd0] sm:$0xff] %vm4048, %v3818
      %4076 = vst.msk [vmem:[#allocation2 + $0xd8] sm:$0xff] %vm4048, %v3819
      %4077 = vst.msk [vmem:[#allocation2 + $0xe0] sm:$0xff] %vm4048, %v3820
      %4078 = vst.msk [vmem:[#allocation2 + $0xe8] sm:$0xff] %vm4048, %v3821
      %4079 = vst.msk [vmem:[#allocation2 + $0xf0] sm:$0xff] %vm4048, %v3822
      %4080 = vst.msk [vmem:[#allocation2 + $0xf8] sm:$0xff] %vm4048, %v3823
      %4081 = vst.msk [vmem:[#allocation2 + $0x100] sm:$0xff] %vm4048, %v3824
      %4082 = vst.msk [vmem:[#allocation2 + $0x108] sm:$0xff] %vm4048, %v3825
      %4083 = vst.msk [vmem:[#allocation2 + $0x110] sm:$0xff] %vm4048, %v3826
      %4084 = vst.msk [vmem:[#allocation2 + $0x118] sm:$0xff] %vm4048, %v3827
      %4085 = vst.msk [vmem:[#allocation2 + $0x120] sm:$0xff] %vm4048, %v3828
      %4086 = vst.msk [vmem:[#allocation2 + $0x128] sm:$0xff] %vm4048, %v3829
      %4087 = vst.msk [vmem:[#allocation2 + $0x130] sm:$0xff] %vm4048, %v3830
      %4088 = vst.msk [vmem:[#allocation2 + $0x138] sm:$0xff] %vm4048, %v3831
      %4089 = vst.msk [vmem:[#allocation2 + $0x140] sm:$0xff] %vm4048, %v3832
      %4090 = vst.msk [vmem:[#allocation2 + $0x148] sm:$0xff] %vm4048, %v3833
      %4091 = vst.msk [vmem:[#allocation2 + $0x150] sm:$0xff] %vm4048, %v3834
      %4092 = vst.msk [vmem:[#allocation2 + $0x158] sm:$0xff] %vm4048, %v3835
      %4093 = vst.msk [vmem:[#allocation2 + $0x160] sm:$0xff] %vm4048, %v3836
      %4094 = vst.msk [vmem:[#allocation2 + $0x168] sm:$0xff] %vm4048, %v3837
      %4095 = vst.msk [vmem:[#allocation2 + $0x170] sm:$0xff] %vm4048, %v3838
      %4096 = vst.msk [vmem:[#allocation2 + $0x178] sm:$0xff] %vm4048, %v3839
      %4097 = vst.msk [vmem:[#allocation2 + $0x180] sm:$0xff] %vm4048, %v3840
      %4098 = vst.msk [vmem:[#allocation2 + $0x188] sm:$0xff] %vm4048, %v3841
      %4099 = vst.msk [vmem:[#allocation2 + $0x190] sm:$0xff] %vm4048, %v3842
      %4100 = vst.msk [vmem:[#allocation2 + $0x198] sm:$0xff] %vm4048, %v3843
      %4101 = vst.msk [vmem:[#allocation2 + $0x1a0] sm:$0xff] %vm4048, %v3844
      %4102 = vst.msk [vmem:[#allocation2 + $0x1a8] sm:$0xff] %vm4048, %v3845
      %4103 = vst.msk [vmem:[#allocation2 + $0x1b0] sm:$0xff] %vm4048, %v3846
      %4104 = vst.msk [vmem:[#allocation2 + $0x1b8] sm:$0xff] %vm4048, %v3847
      %4105 = vst.msk [vmem:[#allocation2 + $0x1c0] sm:$0xff] %vm4048, %v3848
      %4106 = vst.msk [vmem:[#allocation2 + $0x1c8] sm:$0xff] %vm4048, %v3849
      %4107 = vst.msk [vmem:[#allocation2 + $0x1d0] sm:$0xff] %vm4048, %v3850
      %4108 = vst.msk [vmem:[#allocation2 + $0x1d8] sm:$0xff] %vm4048, %v3851
      %4109 = vst.msk [vmem:[#allocation2 + $0x1e0] sm:$0xff] %vm4048, %v3852
      %4110 = vst.msk [vmem:[#allocation2 + $0x1e8] sm:$0xff] %vm4048, %v3853
      %4111 = vst.msk [vmem:[#allocation2 + $0x1f0] sm:$0xff] %vm4048, %v3854
      %4112 = vst.msk [vmem:[#allocation2 + $0x1f8] sm:$0xff] %vm4048, %v3855
      %4113 = vst.msk [vmem:[#allocation2 + $0x200] sm:$0xff] %vm4048, %v3856
      %4114 = vst.msk [vmem:[#allocation2 + $0x208] sm:$0xff] %vm4048, %v3857
      %4115 = vst.msk [vmem:[#allocation2 + $0x210] sm:$0xff] %vm4048, %v3858
      %4116 = vst.msk [vmem:[#allocation2 + $0x218] sm:$0xff] %vm4048, %v3859
      %4117 = vst.msk [vmem:[#allocation2 + $0x220] sm:$0xff] %vm4048, %v3860
      %4118 = vst.msk [vmem:[#allocation2 + $0x228] sm:$0xff] %vm4048, %v3861
      %4119 = vst.msk [vmem:[#allocation2 + $0x230] sm:$0xff] %vm4048, %v3862
      %4120 = vst.msk [vmem:[#allocation2 + $0x238] sm:$0xff] %vm4048, %v3863
      %4121 = vst.msk [vmem:[#allocation2 + $0x240] sm:$0xff] %vm4048, %v3864
      %4122 = vst.msk [vmem:[#allocation2 + $0x248] sm:$0xff] %vm4048, %v3865
      %4123 = vst.msk [vmem:[#allocation2 + $0x250] sm:$0xff] %vm4048, %v3866
      %4124 = vst.msk [vmem:[#allocation2 + $0x258] sm:$0xff] %vm4048, %v3867
      %4125 = vst.msk [vmem:[#allocation2 + $0x260] sm:$0xff] %vm4048, %v3868
      %4126 = vst.msk [vmem:[#allocation2 + $0x268] sm:$0xff] %vm4048, %v3869
      %4127 = vst.msk [vmem:[#allocation2 + $0x270] sm:$0xff] %vm4048, %v3870
      %4128 = vst.msk [vmem:[#allocation2 + $0x278] sm:$0xff] %vm4048, %v3871
      %4129 = vst.msk [vmem:[#allocation2 + $0x280] sm:$0xff] %vm4048, %v3872
      %4130 = vst.msk [vmem:[#allocation2 + $0x288] sm:$0xff] %vm4048, %v3873
      %4131 = vst.msk [vmem:[#allocation2 + $0x290] sm:$0xff] %vm4048, %v3874
      %4132 = vst.msk [vmem:[#allocation2 + $0x298] sm:$0xff] %vm4048, %v3875
      %4133 = vst.msk [vmem:[#allocation2 + $0x2a0] sm:$0xff] %vm4048, %v3876
      %4134 = vst.msk [vmem:[#allocation2 + $0x2a8] sm:$0xff] %vm4048, %v3877
      %4135 = vst.msk [vmem:[#allocation2 + $0x2b0] sm:$0xff] %vm4048, %v3878
      %4136 = vst.msk [vmem:[#allocation2 + $0x2b8] sm:$0xff] %vm4048, %v3879
      %4137 = vst.msk [vmem:[#allocation2 + $0x2c0] sm:$0xff] %vm4048, %v3880
      %4138 = vst.msk [vmem:[#allocation2 + $0x2c8] sm:$0xff] %vm4048, %v3881
      %4139 = vst.msk [vmem:[#allocation2 + $0x2d0] sm:$0xff] %vm4048, %v3882
      %4140 = vst.msk [vmem:[#allocation2 + $0x2d8] sm:$0xff] %vm4048, %v3883
      %4141 = vst.msk [vmem:[#allocation2 + $0x2e0] sm:$0xff] %vm4048, %v3884
      %4142 = vst.msk [vmem:[#allocation2 + $0x2e8] sm:$0xff] %vm4048, %v3885
      %4143 = vst.msk [vmem:[#allocation2 + $0x2f0] sm:$0xff] %vm4048, %v3886
      %4144 = vst.msk [vmem:[#allocation2 + $0x2f8] sm:$0xff] %vm4048, %v3887
      %4145 = vst.msk [vmem:[#allocation2 + $0x300] sm:$0xff] %vm4048, %v3888
      %4146 = vst.msk [vmem:[#allocation2 + $0x308] sm:$0xff] %vm4048, %v3889
      %4147 = vst.msk [vmem:[#allocation2 + $0x310] sm:$0xff] %vm4048, %v3890
      %4148 = vst.msk [vmem:[#allocation2 + $0x318] sm:$0xff] %vm4048, %v3891
      %4149 = vst.msk [vmem:[#allocation2 + $0x320] sm:$0xff] %vm4048, %v3892
      %4150 = vst.msk [vmem:[#allocation2 + $0x328] sm:$0xff] %vm4048, %v3893
      %4151 = vst.msk [vmem:[#allocation2 + $0x330] sm:$0xff] %vm4048, %v3894
      %4152 = vst.msk [vmem:[#allocation2 + $0x338] sm:$0xff] %vm4048, %v3895
      %4153 = vst.msk [vmem:[#allocation2 + $0x340] sm:$0xff] %vm4048, %v3896
      %4154 = vst.msk [vmem:[#allocation2 + $0x348] sm:$0xff] %vm4048, %v3897
      %4155 = vst.msk [vmem:[#allocation2 + $0x350] sm:$0xff] %vm4048, %v3898
      %4156 = vst.msk [vmem:[#allocation2 + $0x358] sm:$0xff] %vm4048, %v3899
      %4157 = vst.msk [vmem:[#allocation2 + $0x360] sm:$0xff] %vm4048, %v3900
      %4158 = vst.msk [vmem:[#allocation2 + $0x368] sm:$0xff] %vm4048, %v3901
      %4159 = vst.msk [vmem:[#allocation2 + $0x370] sm:$0xff] %vm4048, %v3902
      %4160 = vst.msk [vmem:[#allocation2 + $0x378] sm:$0xff] %vm4048, %v3903
      %4161 = vst.msk [vmem:[#allocation2 + $0x380] sm:$0xff] %vm4048, %v3904
      %4162 = vst.msk [vmem:[#allocation2 + $0x388] sm:$0xff] %vm4048, %v3905
      %4163 = vst.msk [vmem:[#allocation2 + $0x390] sm:$0xff] %vm4048, %v3906
      %4164 = vst.msk [vmem:[#allocation2 + $0x398] sm:$0xff] %vm4048, %v3907
      %4165 = vst.msk [vmem:[#allocation2 + $0x3a0] sm:$0xff] %vm4048, %v3908
      %4166 = vst.msk [vmem:[#allocation2 + $0x3a8] sm:$0xff] %vm4048, %v3909
      %4167 = vst.msk [vmem:[#allocation2 + $0x3b0] sm:$0xff] %vm4048, %v3910
      %4168 = vst.msk [vmem:[#allocation2 + $0x3b8] sm:$0xff] %vm4048, %v3911
      %4169 = vst.msk [vmem:[#allocation2 + $0x3c0] sm:$0xff] %vm4048, %v3912
      %4170 = vst.msk [vmem:[#allocation2 + $0x3c8] sm:$0xff] %vm4048, %v3913
      %4171 = vst.msk [vmem:[#allocation2 + $0x3d0] sm:$0xff] %vm4048, %v3914
      %4172 = vst.msk [vmem:[#allocation2 + $0x3d8] sm:$0xff] %vm4048, %v3915
      %4173 = vst.msk [vmem:[#allocation2 + $0x3e0] sm:$0xff] %vm4048, %v3916
      %4174 = vst.msk [vmem:[#allocation2 + $0x3e8] sm:$0xff] %vm4048, %v3917
      %4175 = vst.msk [vmem:[#allocation2 + $0x3f0] sm:$0xff] %vm4048, %v3918
      %4176 = vst.msk [vmem:[#allocation2 + $0x3f8] sm:$0xff] %vm4048, %v3919
      %4177 = vst.msk [vmem:[#allocation2 + $0x400] sm:$0xff] %vm4048, %v3920
      %4178 = vst.msk [vmem:[#allocation2 + $0x408] sm:$0xff] %vm4048, %v3921
      %4179 = vst.msk [vmem:[#allocation2 + $0x410] sm:$0xff] %vm4048, %v3922
      %4180 = vst.msk [vmem:[#allocation2 + $0x418] sm:$0xff] %vm4048, %v3923
      %4181 = vst.msk [vmem:[#allocation2 + $0x420] sm:$0xff] %vm4048, %v3924
      %4182 = vst.msk [vmem:[#allocation2 + $0x428] sm:$0xff] %vm4048, %v3925
      %4183 = vst.msk [vmem:[#allocation2 + $0x430] sm:$0xff] %vm4048, %v3926
      %4184 = vst.msk [vmem:[#allocation2 + $0x438] sm:$0xff] %vm4048, %v3927
      %4185 = vst.msk [vmem:[#allocation2 + $0x440] sm:$0xff] %vm4048, %v3928
      %4186 = vst.msk [vmem:[#allocation2 + $0x448] sm:$0xff] %vm4048, %v3929
      %4187 = vst.msk [vmem:[#allocation2 + $0x450] sm:$0xff] %vm4048, %v3930
      %4188 = vst.msk [vmem:[#allocation2 + $0x458] sm:$0xff] %vm4048, %v3931
      %4189 = vst.msk [vmem:[#allocation2 + $0x460] sm:$0xff] %vm4048, %v3932
      %4190 = vst.msk [vmem:[#allocation2 + $0x468] sm:$0xff] %vm4048, %v3933
      %4191 = vst.msk [vmem:[#allocation2 + $0x470] sm:$0xff] %vm4048, %v3934
      %4192 = vst.msk [vmem:[#allocation2 + $0x478] sm:$0xff] %vm4048, %v3935
      %4193 = vst.msk [vmem:[#allocation2 + $0x480] sm:$0xff] %vm4048, %v3936
      %4194 = vst.msk [vmem:[#allocation2 + $0x488] sm:$0xff] %vm4048, %v3937
      %4195 = vst.msk [vmem:[#allocation2 + $0x490] sm:$0xff] %vm4048, %v3938
      %4196 = vst.msk [vmem:[#allocation2 + $0x498] sm:$0xff] %vm4048, %v3939
      %4197 = vst.msk [vmem:[#allocation2 + $0x4a0] sm:$0xff] %vm4048, %v3940
      %4198 = vst.msk [vmem:[#allocation2 + $0x4a8] sm:$0xff] %vm4048, %v3941
      %4199 = vst.msk [vmem:[#allocation2 + $0x4b0] sm:$0xff] %vm4048, %v3942
      %4200 = vst.msk [vmem:[#allocation2 + $0x4b8] sm:$0xff] %vm4048, %v3943
      %4201 = vst.msk [vmem:[#allocation2 + $0x4c0] sm:$0xff] %vm4048, %v3944
      %4202 = vst.msk [vmem:[#allocation2 + $0x4c8] sm:$0xff] %vm4048, %v3945
      %4203 = vst.msk [vmem:[#allocation2 + $0x4d0] sm:$0xff] %vm4048, %v3946
      %4204 = vst.msk [vmem:[#allocation2 + $0x4d8] sm:$0xff] %vm4048, %v3947
      %4205 = vst.msk [vmem:[#allocation2 + $0x4e0] sm:$0xff] %vm4048, %v3948
      %4206 = vst.msk [vmem:[#allocation2 + $0x4e8] sm:$0xff] %vm4048, %v3949
      %4207 = vst.msk [vmem:[#allocation2 + $0x4f0] sm:$0xff] %vm4048, %v3950
      %4208 = vst.msk [vmem:[#allocation2 + $0x4f8] sm:$0xff] %vm4048, %v3951
      %4209 = vst.msk [vmem:[#allocation2 + $0x500] sm:$0xff] %vm4048, %v3952
      %4210 = vst.msk [vmem:[#allocation2 + $0x508] sm:$0xff] %vm4048, %v3953
      %4211 = vst.msk [vmem:[#allocation2 + $0x510] sm:$0xff] %vm4048, %v3954
      %4212 = vst.msk [vmem:[#allocation2 + $0x518] sm:$0xff] %vm4048, %v3955
      %4213 = vst.msk [vmem:[#allocation2 + $0x520] sm:$0xff] %vm4048, %v3956
      %4214 = vst.msk [vmem:[#allocation2 + $0x528] sm:$0xff] %vm4048, %v3957
      %4215 = vst.msk [vmem:[#allocation2 + $0x530] sm:$0xff] %vm4048, %v3958
      %4216 = vst.msk [vmem:[#allocation2 + $0x538] sm:$0xff] %vm4048, %v3959
      %4217 = vst.msk [vmem:[#allocation2 + $0x540] sm:$0xff] %vm4048, %v3960
      %4218 = vst.msk [vmem:[#allocation2 + $0x548] sm:$0xff] %vm4048, %v3961
      %4219 = vst.msk [vmem:[#allocation2 + $0x550] sm:$0xff] %vm4048, %v3962
      %4220 = vst.msk [vmem:[#allocation2 + $0x558] sm:$0xff] %vm4048, %v3963
      %4221 = vst.msk [vmem:[#allocation2 + $0x560] sm:$0xff] %vm4048, %v3964
      %4222 = vst.msk [vmem:[#allocation2 + $0x568] sm:$0xff] %vm4048, %v3965
      %4223 = vst.msk [vmem:[#allocation2 + $0x570] sm:$0xff] %vm4048, %v3966
      %4224 = vst.msk [vmem:[#allocation2 + $0x578] sm:$0xff] %vm4048, %v3967
      %4225 = vst.msk [vmem:[#allocation2 + $0x580] sm:$0xff] %vm4048, %v3968
      %4226 = vst.msk [vmem:[#allocation2 + $0x588] sm:$0xff] %vm4048, %v3969
      %4227 = vst.msk [vmem:[#allocation2 + $0x590] sm:$0xff] %vm4048, %v3970
      %4228 = vst.msk [vmem:[#allocation2 + $0x598] sm:$0xff] %vm4048, %v3971
      %4229 = vst.msk [vmem:[#allocation2 + $0x5a0] sm:$0xff] %vm4048, %v3972
      %4230 = vst.msk [vmem:[#allocation2 + $0x5a8] sm:$0xff] %vm4048, %v3973
      %4231 = vst.msk [vmem:[#allocation2 + $0x5b0] sm:$0xff] %vm4048, %v3974
      %4232 = vst.msk [vmem:[#allocation2 + $0x5b8] sm:$0xff] %vm4048, %v3975
      %4233 = vst.msk [vmem:[#allocation2 + $0x5c0] sm:$0xff] %vm4048, %v3976
      %4234 = vst.msk [vmem:[#allocation2 + $0x5c8] sm:$0xff] %vm4048, %v3977
      %4235 = vst.msk [vmem:[#allocation2 + $0x5d0] sm:$0xff] %vm4048, %v3978
      %4236 = vst.msk [vmem:[#allocation2 + $0x5d8] sm:$0xff] %vm4048, %v3979
      %4237 = vst.msk [vmem:[#allocation2 + $0x5e0] sm:$0xff] %vm4048, %v3980
      %4238 = vst.msk [vmem:[#allocation2 + $0x5e8] sm:$0xff] %vm4048, %v3981
      %4239 = vst.msk [vmem:[#allocation2 + $0x5f0] sm:$0xff] %vm4048, %v3982
      %4240 = vst.msk [vmem:[#allocation2 + $0x5f8] sm:$0xff] %vm4048, %v3983
      %4241 = vst.msk [vmem:[#allocation2 + $0x600] sm:$0xff] %vm4048, %v3984
      %4242 = vst.msk [vmem:[#allocation2 + $0x608] sm:$0xff] %vm4048, %v3985
      %4243 = vst.msk [vmem:[#allocation2 + $0x610] sm:$0xff] %vm4048, %v3986
      %4244 = vst.msk [vmem:[#allocation2 + $0x618] sm:$0xff] %vm4048, %v3987
      %4245 = vst.msk [vmem:[#allocation2 + $0x620] sm:$0xff] %vm4048, %v3988
      %4246 = vst.msk [vmem:[#allocation2 + $0x628] sm:$0xff] %vm4048, %v3989
      %4247 = vst.msk [vmem:[#allocation2 + $0x630] sm:$0xff] %vm4048, %v3990
      %4248 = vst.msk [vmem:[#allocation2 + $0x638] sm:$0xff] %vm4048, %v3991
      %4249 = vst.msk [vmem:[#allocation2 + $0x640] sm:$0xff] %vm4048, %v3992
      %4250 = vst.msk [vmem:[#allocation2 + $0x648] sm:$0xff] %vm4048, %v3993
      %4251 = vst.msk [vmem:[#allocation2 + $0x650] sm:$0xff] %vm4048, %v3994
      %4252 = vst.msk [vmem:[#allocation2 + $0x658] sm:$0xff] %vm4048, %v3995
      %4253 = vst.msk [vmem:[#allocation2 + $0x660] sm:$0xff] %vm4048, %v3996
      %4254 = vst.msk [vmem:[#allocation2 + $0x668] sm:$0xff] %vm4048, %v3997
      %4255 = vst.msk [vmem:[#allocation2 + $0x670] sm:$0xff] %vm4048, %v3998
      %4256 = vst.msk [vmem:[#allocation2 + $0x678] sm:$0xff] %vm4048, %v3999
      %4257 = vst.msk [vmem:[#allocation2 + $0x680] sm:$0xff] %vm4048, %v4000
      %4258 = vst.msk [vmem:[#allocation2 + $0x688] sm:$0xff] %vm4048, %v4001
      %4259 = vst.msk [vmem:[#allocation2 + $0x690] sm:$0xff] %vm4048, %v4002
      %4260 = vst.msk [vmem:[#allocation2 + $0x698] sm:$0xff] %vm4048, %v4003
      %4261 = vst.msk [vmem:[#allocation2 + $0x6a0] sm:$0xff] %vm4048, %v4004
      %4262 = vst.msk [vmem:[#allocation2 + $0x6a8] sm:$0xff] %vm4048, %v4005
      %4263 = vst.msk [vmem:[#allocation2 + $0x6b0] sm:$0xff] %vm4048, %v4006
      %4264 = vst.msk [vmem:[#allocation2 + $0x6b8] sm:$0xff] %vm4048, %v4007
      %4265 = vst.msk [vmem:[#allocation2 + $0x6c0] sm:$0xff] %vm4048, %v4008
      %4266 = vst.msk [vmem:[#allocation2 + $0x6c8] sm:$0xff] %vm4048, %v4009
      %4267 = vst.msk [vmem:[#allocation2 + $0x6d0] sm:$0xff] %vm4048, %v4010
      %4268 = vst.msk [vmem:[#allocation2 + $0x6d8] sm:$0xff] %vm4048, %v4011
      %4269 = vst.msk [vmem:[#allocation2 + $0x6e0] sm:$0xff] %vm4048, %v4012
      %4270 = vst.msk [vmem:[#allocation2 + $0x6e8] sm:$0xff] %vm4048, %v4013
      %4271 = vst.msk [vmem:[#allocation2 + $0x6f0] sm:$0xff] %vm4048, %v4014
      %4272 = vst.msk [vmem:[#allocation2 + $0x6f8] sm:$0xff] %vm4048, %v4015
      %4273 = vst.msk [vmem:[#allocation2 + $0x700] sm:$0xff] %vm4048, %v4016
      %4274 = vst.msk [vmem:[#allocation2 + $0x708] sm:$0xff] %vm4048, %v4017
      %4275 = vst.msk [vmem:[#allocation2 + $0x710] sm:$0xff] %vm4048, %v4018
      %4276 = vst.msk [vmem:[#allocation2 + $0x718] sm:$0xff] %vm4048, %v4019
      %4277 = vst.msk [vmem:[#allocation2 + $0x720] sm:$0xff] %vm4048, %v4020
      %4278 = vst.msk [vmem:[#allocation2 + $0x728] sm:$0xff] %vm4048, %v4021
      %4279 = vst.msk [vmem:[#allocation2 + $0x730] sm:$0xff] %vm4048, %v4022
      %4280 = vst.msk [vmem:[#allocation2 + $0x738] sm:$0xff] %vm4048, %v4023
      %4281 = vst.msk [vmem:[#allocation2 + $0x740] sm:$0xff] %vm4048, %v4024
      %4282 = vst.msk [vmem:[#allocation2 + $0x748] sm:$0xff] %vm4048, %v4025
      %4283 = vst.msk [vmem:[#allocation2 + $0x750] sm:$0xff] %vm4048, %v4026
      %4284 = vst.msk [vmem:[#allocation2 + $0x758] sm:$0xff] %vm4048, %v4027
      %4285 = vst.msk [vmem:[#allocation2 + $0x760] sm:$0xff] %vm4048, %v4028
      %4286 = vst.msk [vmem:[#allocation2 + $0x768] sm:$0xff] %vm4048, %v4029
      %4287 = vst.msk [vmem:[#allocation2 + $0x770] sm:$0xff] %vm4048, %v4030
      %4288 = vst.msk [vmem:[#allocation2 + $0x778] sm:$0xff] %vm4048, %v4031
      %4289 = vst.msk [vmem:[#allocation2 + $0x780] sm:$0xff] %vm4048, %v4032
      %4290 = vst.msk [vmem:[#allocation2 + $0x788] sm:$0xff] %vm4048, %v4033
      %4291 = vst.msk [vmem:[#allocation2 + $0x790] sm:$0xff] %vm4048, %v4034
      %4292 = vst.msk [vmem:[#allocation2 + $0x798] sm:$0xff] %vm4048, %v4035
      %4293 = vst.msk [vmem:[#allocation2 + $0x7a0] sm:$0xff] %vm4048, %v4036
      %4294 = vst.msk [vmem:[#allocation2 + $0x7a8] sm:$0xff] %vm4048, %v4037
      %4295 = vst.msk [vmem:[#allocation2 + $0x7b0] sm:$0xff] %vm4048, %v4038
      %4296 = vst.msk [vmem:[#allocation2 + $0x7b8] sm:$0xff] %vm4048, %v4039
      %4297 = vst.msk [vmem:[#allocation2 + $0x7c0] sm:$0xff] %vm4048, %v4040
      %4298 = vst.msk [vmem:[#allocation2 + $0x7c8] sm:$0xff] %vm4048, %v4041
      %4299 = vst.msk [vmem:[#allocation2 + $0x7d0] sm:$0xff] %vm4048, %v4042
      %4300 = vst.msk [vmem:[#allocation2 + $0x7d8] sm:$0xff] %vm4048, %v4043
      %4301 = vst.msk [vmem:[#allocation2 + $0x7e0] sm:$0xff] %vm4048, %v4044
      %4302 = vst.msk [vmem:[#allocation2 + $0x7e8] sm:$0xff] %vm4048, %v4045
      %4303 = vst.msk [vmem:[#allocation2 + $0x7f0] sm:$0xff] %vm4048, %v4046
      %4304 = vst.msk [vmem:[#allocation2 + $0x7f8] sm:$0xff] %vm4048, %v4047
      %v4305 = vld [vmem:[#allocation2] ss:$4 sm:$0xff]
      %s4306 = scalar_lea.vmem [#allocation2], 32
      %v4307 = vld [vmem:[%s4306] ss:$4 sm:$0xff]
      %s4308 = scalar_lea.vmem [#allocation2], 64
      %v4309 = vld [vmem:[%s4308] ss:$4 sm:$0xff]
      %s4310 = scalar_lea.vmem [#allocation2], 96
      %v4311 = vld [vmem:[%s4310] ss:$4 sm:$0xff]
      %s4312 = scalar_lea.vmem [#allocation2], 128
      %v4313 = vld [vmem:[%s4312] ss:$4 sm:$0xff]
      %s4314 = scalar_lea.vmem [#allocation2], 160
      %v4315 = vld [vmem:[%s4314] ss:$4 sm:$0xff]
      %s4316 = scalar_lea.vmem [#allocation2], 192
      %v4317 = vld [vmem:[%s4316] ss:$4 sm:$0xff]
      %s4318 = scalar_lea.vmem [#allocation2], 224
      %v4319 = vld [vmem:[%s4318] ss:$4 sm:$0xff]
      %s4320 = scalar_lea.vmem [#allocation2], 256
      %v4321 = vld [vmem:[%s4320] ss:$4 sm:$0xff]
      %s4322 = scalar_lea.vmem [#allocation2], 288
      %v4323 = vld [vmem:[%s4322] ss:$4 sm:$0xff]
      %s4324 = scalar_lea.vmem [#allocation2], 320
      %v4325 = vld [vmem:[%s4324] ss:$4 sm:$0xff]
      %s4326 = scalar_lea.vmem [#allocation2], 352
      %v4327 = vld [vmem:[%s4326] ss:$4 sm:$0xff]
      %s4328 = scalar_lea.vmem [#allocation2], 384
      %v4329 = vld [vmem:[%s4328] ss:$4 sm:$0xff]
      %s4330 = scalar_lea.vmem [#allocation2], 416
      %v4331 = vld [vmem:[%s4330] ss:$4 sm:$0xff]
      %s4332 = scalar_lea.vmem [#allocation2], 448
      %v4333 = vld [vmem:[%s4332] ss:$4 sm:$0xff]
      %s4334 = scalar_lea.vmem [#allocation2], 480
      %v4335 = vld [vmem:[%s4334] ss:$4 sm:$0xff]
      %s4336 = scalar_lea.vmem [#allocation2], 512
      %v4337 = vld [vmem:[%s4336] ss:$4 sm:$0xff]
      %s4338 = scalar_lea.vmem [#allocation2], 544
      %v4339 = vld [vmem:[%s4338] ss:$4 sm:$0xff]
      %s4340 = scalar_lea.vmem [#allocation2], 576
      %v4341 = vld [vmem:[%s4340] ss:$4 sm:$0xff]
      %s4342 = scalar_lea.vmem [#allocation2], 608
      %v4343 = vld [vmem:[%s4342] ss:$4 sm:$0xff]
      %s4344 = scalar_lea.vmem [#allocation2], 640
      %v4345 = vld [vmem:[%s4344] ss:$4 sm:$0xff]
      %s4346 = scalar_lea.vmem [#allocation2], 672
      %v4347 = vld [vmem:[%s4346] ss:$4 sm:$0xff]
      %s4348 = scalar_lea.vmem [#allocation2], 704
      %v4349 = vld [vmem:[%s4348] ss:$4 sm:$0xff]
      %s4350 = scalar_lea.vmem [#allocation2], 736
      %v4351 = vld [vmem:[%s4350] ss:$4 sm:$0xff]
      %s4352 = scalar_lea.vmem [#allocation2], 768
      %v4353 = vld [vmem:[%s4352] ss:$4 sm:$0xff]
      %s4354 = scalar_lea.vmem [#allocation2], 800
      %v4355 = vld [vmem:[%s4354] ss:$4 sm:$0xff]
      %s4356 = scalar_lea.vmem [#allocation2], 832
      %v4357 = vld [vmem:[%s4356] ss:$4 sm:$0xff]
      %s4358 = scalar_lea.vmem [#allocation2], 864
      %v4359 = vld [vmem:[%s4358] ss:$4 sm:$0xff]
      %s4360 = scalar_lea.vmem [#allocation2], 896
      %v4361 = vld [vmem:[%s4360] ss:$4 sm:$0xff]
      %s4362 = scalar_lea.vmem [#allocation2], 928
      %v4363 = vld [vmem:[%s4362] ss:$4 sm:$0xff]
      %s4364 = scalar_lea.vmem [#allocation2], 960
      %v4365 = vld [vmem:[%s4364] ss:$4 sm:$0xff]
      %s4366 = scalar_lea.vmem [#allocation2], 992
      %v4367 = vld [vmem:[%s4366] ss:$4 sm:$0xff]
      %s4368 = scalar_lea.vmem [#allocation2], 1024
      %v4369 = vld [vmem:[%s4368] ss:$4 sm:$0xff]
      %s4370 = scalar_lea.vmem [#allocation2], 1056
      %v4371 = vld [vmem:[%s4370] ss:$4 sm:$0xff]
      %s4372 = scalar_lea.vmem [#allocation2], 1088
      %v4373 = vld [vmem:[%s4372] ss:$4 sm:$0xff]
      %s4374 = scalar_lea.vmem [#allocation2], 1120
      %v4375 = vld [vmem:[%s4374] ss:$4 sm:$0xff]
      %s4376 = scalar_lea.vmem [#allocation2], 1152
      %v4377 = vld [vmem:[%s4376] ss:$4 sm:$0xff]
      %s4378 = scalar_lea.vmem [#allocation2], 1184
      %v4379 = vld [vmem:[%s4378] ss:$4 sm:$0xff]
      %s4380 = scalar_lea.vmem [#allocation2], 1216
      %v4381 = vld [vmem:[%s4380] ss:$4 sm:$0xff]
      %s4382 = scalar_lea.vmem [#allocation2], 1248
      %v4383 = vld [vmem:[%s4382] ss:$4 sm:$0xff]
      %s4384 = scalar_lea.vmem [#allocation2], 1280
      %v4385 = vld [vmem:[%s4384] ss:$4 sm:$0xff]
      %s4386 = scalar_lea.vmem [#allocation2], 1312
      %v4387 = vld [vmem:[%s4386] ss:$4 sm:$0xff]
      %s4388 = scalar_lea.vmem [#allocation2], 1344
      %v4389 = vld [vmem:[%s4388] ss:$4 sm:$0xff]
      %s4390 = scalar_lea.vmem [#allocation2], 1376
      %v4391 = vld [vmem:[%s4390] ss:$4 sm:$0xff]
      %s4392 = scalar_lea.vmem [#allocation2], 1408
      %v4393 = vld [vmem:[%s4392] ss:$4 sm:$0xff]
      %s4394 = scalar_lea.vmem [#allocation2], 1440
      %v4395 = vld [vmem:[%s4394] ss:$4 sm:$0xff]
      %s4396 = scalar_lea.vmem [#allocation2], 1472
      %v4397 = vld [vmem:[%s4396] ss:$4 sm:$0xff]
      %s4398 = scalar_lea.vmem [#allocation2], 1504
      %v4399 = vld [vmem:[%s4398] ss:$4 sm:$0xff]
      %s4400 = scalar_lea.vmem [#allocation2], 1536
      %v4401 = vld [vmem:[%s4400] ss:$4 sm:$0xff]
      %s4402 = scalar_lea.vmem [#allocation2], 1568
      %v4403 = vld [vmem:[%s4402] ss:$4 sm:$0xff]
      %s4404 = scalar_lea.vmem [#allocation2], 1600
      %v4405 = vld [vmem:[%s4404] ss:$4 sm:$0xff]
      %s4406 = scalar_lea.vmem [#allocation2], 1632
      %v4407 = vld [vmem:[%s4406] ss:$4 sm:$0xff]
      %s4408 = scalar_lea.vmem [#allocation2], 1664
      %v4409 = vld [vmem:[%s4408] ss:$4 sm:$0xff]
      %s4410 = scalar_lea.vmem [#allocation2], 1696
      %v4411 = vld [vmem:[%s4410] ss:$4 sm:$0xff]
      %s4412 = scalar_lea.vmem [#allocation2], 1728
      %v4413 = vld [vmem:[%s4412] ss:$4 sm:$0xff]
      %s4414 = scalar_lea.vmem [#allocation2], 1760
      %v4415 = vld [vmem:[%s4414] ss:$4 sm:$0xff]
      %s4416 = scalar_lea.vmem [#allocation2], 1792
      %v4417 = vld [vmem:[%s4416] ss:$4 sm:$0xff]
      %s4418 = scalar_lea.vmem [#allocation2], 1824
      %v4419 = vld [vmem:[%s4418] ss:$4 sm:$0xff]
      %s4420 = scalar_lea.vmem [#allocation2], 1856
      %v4421 = vld [vmem:[%s4420] ss:$4 sm:$0xff]
      %s4422 = scalar_lea.vmem [#allocation2], 1888
      %v4423 = vld [vmem:[%s4422] ss:$4 sm:$0xff]
      %s4424 = scalar_lea.vmem [#allocation2], 1920
      %v4425 = vld [vmem:[%s4424] ss:$4 sm:$0xff]
      %s4426 = scalar_lea.vmem [#allocation2], 1952
      %v4427 = vld [vmem:[%s4426] ss:$4 sm:$0xff]
      %s4428 = scalar_lea.vmem [#allocation2], 1984
      %v4429 = vld [vmem:[%s4428] ss:$4 sm:$0xff]
      %s4430 = scalar_lea.vmem [#allocation2], 2016
      %v4431 = vld [vmem:[%s4430] ss:$4 sm:$0xff]
      %v4432 = vld [vmem:[%s7] sm:$0xff]
      %s4433 = scalar_lea.vmem [#allocation2], 1
      %v4434 = vld [vmem:[%s4433] ss:$4 sm:$0xff]
      %s4435 = scalar_lea.vmem [#allocation2], 33
      %v4436 = vld [vmem:[%s4435] ss:$4 sm:$0xff]
      %s4437 = scalar_lea.vmem [#allocation2], 65
      %v4438 = vld [vmem:[%s4437] ss:$4 sm:$0xff]
      %s4439 = scalar_lea.vmem [#allocation2], 97
      %v4440 = vld [vmem:[%s4439] ss:$4 sm:$0xff]
      %s4441 = scalar_lea.vmem [#allocation2], 129
      %v4442 = vld [vmem:[%s4441] ss:$4 sm:$0xff]
      %s4443 = scalar_lea.vmem [#allocation2], 161
      %v4444 = vld [vmem:[%s4443] ss:$4 sm:$0xff]
      %s4445 = scalar_lea.vmem [#allocation2], 193
      %v4446 = vld [vmem:[%s4445] ss:$4 sm:$0xff]
      %s4447 = scalar_lea.vmem [#allocation2], 225
      %v4448 = vld [vmem:[%s4447] ss:$4 sm:$0xff]
      %s4449 = scalar_lea.vmem [#allocation2], 257
      %v4450 = vld [vmem:[%s4449] ss:$4 sm:$0xff]
      %s4451 = scalar_lea.vmem [#allocation2], 289
      %v4452 = vld [vmem:[%s4451] ss:$4 sm:$0xff]
      %s4453 = scalar_lea.vmem [#allocation2], 321
      %v4454 = vld [vmem:[%s4453] ss:$4 sm:$0xff]
      %s4455 = scalar_lea.vmem [#allocation2], 353
      %v4456 = vld [vmem:[%s4455] ss:$4 sm:$0xff]
      %s4457 = scalar_lea.vmem [#allocation2], 385
      %v4458 = vld [vmem:[%s4457] ss:$4 sm:$0xff]
      %s4459 = scalar_lea.vmem [#allocation2], 417
      %v4460 = vld [vmem:[%s4459] ss:$4 sm:$0xff]
      %s4461 = scalar_lea.vmem [#allocation2], 449
      %v4462 = vld [vmem:[%s4461] ss:$4 sm:$0xff]
      %s4463 = scalar_lea.vmem [#allocation2], 481
      %v4464 = vld [vmem:[%s4463] ss:$4 sm:$0xff]
      %s4465 = scalar_lea.vmem [#allocation2], 513
      %v4466 = vld [vmem:[%s4465] ss:$4 sm:$0xff]
      %s4467 = scalar_lea.vmem [#allocation2], 545
      %v4468 = vld [vmem:[%s4467] ss:$4 sm:$0xff]
      %s4469 = scalar_lea.vmem [#allocation2], 577
      %v4470 = vld [vmem:[%s4469] ss:$4 sm:$0xff]
      %s4471 = scalar_lea.vmem [#allocation2], 609
      %v4472 = vld [vmem:[%s4471] ss:$4 sm:$0xff]
      %s4473 = scalar_lea.vmem [#allocation2], 641
      %v4474 = vld [vmem:[%s4473] ss:$4 sm:$0xff]
      %s4475 = scalar_lea.vmem [#allocation2], 673
      %v4476 = vld [vmem:[%s4475] ss:$4 sm:$0xff]
      %s4477 = scalar_lea.vmem [#allocation2], 705
      %v4478 = vld [vmem:[%s4477] ss:$4 sm:$0xff]
      %s4479 = scalar_lea.vmem [#allocation2], 737
      %v4480 = vld [vmem:[%s4479] ss:$4 sm:$0xff]
      %s4481 = scalar_lea.vmem [#allocation2], 769
      %v4482 = vld [vmem:[%s4481] ss:$4 sm:$0xff]
      %s4483 = scalar_lea.vmem [#allocation2], 801
      %v4484 = vld [vmem:[%s4483] ss:$4 sm:$0xff]
      %s4485 = scalar_lea.vmem [#allocation2], 833
      %v4486 = vld [vmem:[%s4485] ss:$4 sm:$0xff]
      %s4487 = scalar_lea.vmem [#allocation2], 865
      %v4488 = vld [vmem:[%s4487] ss:$4 sm:$0xff]
      %s4489 = scalar_lea.vmem [#allocation2], 897
      %v4490 = vld [vmem:[%s4489] ss:$4 sm:$0xff]
      %s4491 = scalar_lea.vmem [#allocation2], 929
      %v4492 = vld [vmem:[%s4491] ss:$4 sm:$0xff]
      %s4493 = scalar_lea.vmem [#allocation2], 961
      %v4494 = vld [vmem:[%s4493] ss:$4 sm:$0xff]
      %s4495 = scalar_lea.vmem [#allocation2], 993
      %v4496 = vld [vmem:[%s4495] ss:$4 sm:$0xff]
      %s4497 = scalar_lea.vmem [#allocation2], 1025
      %v4498 = vld [vmem:[%s4497] ss:$4 sm:$0xff]
      %s4499 = scalar_lea.vmem [#allocation2], 1057
      %v4500 = vld [vmem:[%s4499] ss:$4 sm:$0xff]
      %s4501 = scalar_lea.vmem [#allocation2], 1089
      %v4502 = vld [vmem:[%s4501] ss:$4 sm:$0xff]
      %s4503 = scalar_lea.vmem [#allocation2], 1121
      %v4504 = vld [vmem:[%s4503] ss:$4 sm:$0xff]
      %s4505 = scalar_lea.vmem [#allocation2], 1153
      %v4506 = vld [vmem:[%s4505] ss:$4 sm:$0xff]
      %s4507 = scalar_lea.vmem [#allocation2], 1185
      %v4508 = vld [vmem:[%s4507] ss:$4 sm:$0xff]
      %s4509 = scalar_lea.vmem [#allocation2], 1217
      %v4510 = vld [vmem:[%s4509] ss:$4 sm:$0xff]
      %s4511 = scalar_lea.vmem [#allocation2], 1249
      %v4512 = vld [vmem:[%s4511] ss:$4 sm:$0xff]
      %s4513 = scalar_lea.vmem [#allocation2], 1281
      %v4514 = vld [vmem:[%s4513] ss:$4 sm:$0xff]
      %s4515 = scalar_lea.vmem [#allocation2], 1313
      %v4516 = vld [vmem:[%s4515] ss:$4 sm:$0xff]
      %s4517 = scalar_lea.vmem [#allocation2], 1345
      %v4518 = vld [vmem:[%s4517] ss:$4 sm:$0xff]
      %s4519 = scalar_lea.vmem [#allocation2], 1377
      %v4520 = vld [vmem:[%s4519] ss:$4 sm:$0xff]
      %s4521 = scalar_lea.vmem [#allocation2], 1409
      %v4522 = vld [vmem:[%s4521] ss:$4 sm:$0xff]
      %s4523 = scalar_lea.vmem [#allocation2], 1441
      %v4524 = vld [vmem:[%s4523] ss:$4 sm:$0xff]
      %s4525 = scalar_lea.vmem [#allocation2], 1473
      %v4526 = vld [vmem:[%s4525] ss:$4 sm:$0xff]
      %s4527 = scalar_lea.vmem [#allocation2], 1505
      %v4528 = vld [vmem:[%s4527] ss:$4 sm:$0xff]
      %s4529 = scalar_lea.vmem [#allocation2], 1537
      %v4530 = vld [vmem:[%s4529] ss:$4 sm:$0xff]
      %s4531 = scalar_lea.vmem [#allocation2], 1569
      %v4532 = vld [vmem:[%s4531] ss:$4 sm:$0xff]
      %s4533 = scalar_lea.vmem [#allocation2], 1601
      %v4534 = vld [vmem:[%s4533] ss:$4 sm:$0xff]
      %s4535 = scalar_lea.vmem [#allocation2], 1633
      %v4536 = vld [vmem:[%s4535] ss:$4 sm:$0xff]
      %s4537 = scalar_lea.vmem [#allocation2], 1665
      %v4538 = vld [vmem:[%s4537] ss:$4 sm:$0xff]
      %s4539 = scalar_lea.vmem [#allocation2], 1697
      %v4540 = vld [vmem:[%s4539] ss:$4 sm:$0xff]
      %s4541 = scalar_lea.vmem [#allocation2], 1729
      %v4542 = vld [vmem:[%s4541] ss:$4 sm:$0xff]
      %s4543 = scalar_lea.vmem [#allocation2], 1761
      %v4544 = vld [vmem:[%s4543] ss:$4 sm:$0xff]
      %s4545 = scalar_lea.vmem [#allocation2], 1793
      %v4546 = vld [vmem:[%s4545] ss:$4 sm:$0xff]
      %s4547 = scalar_lea.vmem [#allocation2], 1825
      %v4548 = vld [vmem:[%s4547] ss:$4 sm:$0xff]
      %s4549 = scalar_lea.vmem [#allocation2], 1857
      %v4550 = vld [vmem:[%s4549] ss:$4 sm:$0xff]
      %s4551 = scalar_lea.vmem [#allocation2], 1889
      %v4552 = vld [vmem:[%s4551] ss:$4 sm:$0xff]
      %s4553 = scalar_lea.vmem [#allocation2], 1921
      %v4554 = vld [vmem:[%s4553] ss:$4 sm:$0xff]
      %s4555 = scalar_lea.vmem [#allocation2], 1953
      %v4556 = vld [vmem:[%s4555] ss:$4 sm:$0xff]
      %s4557 = scalar_lea.vmem [#allocation2], 1985
      %v4558 = vld [vmem:[%s4557] ss:$4 sm:$0xff]
      %s4559 = scalar_lea.vmem [#allocation2], 2017
      %v4560 = vld [vmem:[%s4559] ss:$4 sm:$0xff]
      %v4561 = vld [vmem:[%s7 + $0x8] sm:$0xff]
      %v4563 = vsel %vm4048, %v4434, 0
      %v4566 = vsel %vm4048, %v4436, 0
      %v4569 = vsel %vm4048, %v4438, 0
      %v4572 = vsel %vm4048, %v4440, 0
      %v4575 = vsel %vm4048, %v4442, 0
      %v4578 = vsel %vm4048, %v4444, 0
      %v4581 = vsel %vm4048, %v4446, 0
      %v4584 = vsel %vm4048, %v4448, 0
      %v4587 = vsel %vm4048, %v4450, 0
      %v4590 = vsel %vm4048, %v4452, 0
      %v4593 = vsel %vm4048, %v4454, 0
      %v4596 = vsel %vm4048, %v4456, 0
      %v4599 = vsel %vm4048, %v4458, 0
      %v4602 = vsel %vm4048, %v4460, 0
      %v4605 = vsel %vm4048, %v4462, 0
      %v4608 = vsel %vm4048, %v4464, 0
      %v4611 = vsel %vm4048, %v4466, 0
      %v4614 = vsel %vm4048, %v4468, 0
      %v4617 = vsel %vm4048, %v4470, 0
      %v4620 = vsel %vm4048, %v4472, 0
      %v4623 = vsel %vm4048, %v4474, 0
      %v4626 = vsel %vm4048, %v4476, 0
      %v4629 = vsel %vm4048, %v4478, 0
      %v4632 = vsel %vm4048, %v4480, 0
      %v4635 = vsel %vm4048, %v4482, 0
      %v4638 = vsel %vm4048, %v4484, 0
      %v4641 = vsel %vm4048, %v4486, 0
      %v4644 = vsel %vm4048, %v4488, 0
      %v4647 = vsel %vm4048, %v4490, 0
      %v4650 = vsel %vm4048, %v4492, 0
      %v4653 = vsel %vm4048, %v4494, 0
      %v4656 = vsel %vm4048, %v4496, 0
      %v4659 = vsel %vm4048, %v4498, 0
      %v4662 = vsel %vm4048, %v4500, 0
      %v4665 = vsel %vm4048, %v4502, 0
      %v4668 = vsel %vm4048, %v4504, 0
      %v4671 = vsel %vm4048, %v4506, 0
      %v4674 = vsel %vm4048, %v4508, 0
      %v4677 = vsel %vm4048, %v4510, 0
      %v4680 = vsel %vm4048, %v4512, 0
      %v4683 = vsel %vm4048, %v4514, 0
      %v4686 = vsel %vm4048, %v4516, 0
      %v4689 = vsel %vm4048, %v4518, 0
      %v4692 = vsel %vm4048, %v4520, 0
      %v4695 = vsel %vm4048, %v4522, 0
      %v4698 = vsel %vm4048, %v4524, 0
      %v4701 = vsel %vm4048, %v4526, 0
      %v4704 = vsel %vm4048, %v4528, 0
      %v4707 = vsel %vm4048, %v4530, 0
      %v4710 = vsel %vm4048, %v4532, 0
      %v4713 = vsel %vm4048, %v4534, 0
      %v4716 = vsel %vm4048, %v4536, 0
      %v4719 = vsel %vm4048, %v4538, 0
      %v4722 = vsel %vm4048, %v4540, 0
      %v4725 = vsel %vm4048, %v4542, 0
      %v4728 = vsel %vm4048, %v4544, 0
      %v4731 = vsel %vm4048, %v4546, 0
      %v4734 = vsel %vm4048, %v4548, 0
      %v4737 = vsel %vm4048, %v4550, 0
      %v4740 = vsel %vm4048, %v4552, 0
      %v4743 = vsel %vm4048, %v4554, 0
      %v4746 = vsel %vm4048, %v4556, 0
      %v4749 = vsel %vm4048, %v4558, 0
      %v4752 = vsel %vm4048, %v4560, 0
      %4754 = vmatprep.subr.mxu0 0.0
      %4755 = vmatpush1.msra.mxu0 %v4561
      %4756 = vmatprep.subr.mxu0 0.0
      %4757 = vmatpush1.msra.mxu0 0.0
      %4758 = vmatprep.subr.mxu0 0.0
      %4759 = vmatpush1.msra.mxu0 0.0
      %4760 = vmatprep.subr.mxu0 0.0
      %4761 = vmatpush1.msra.mxu0 0.0
      %4762 = vmatprep.subr.mxu0 0.0
      %4763 = vmatpush1.msra.mxu0 0.0
      %4764 = vmatprep.subr.mxu0 0.0
      %4765 = vmatpush1.msra.mxu0 0.0
      %4766 = vmatprep.subr.mxu0 0.0
      %4767 = vmatpush1.msra.mxu0 0.0
      %4768 = vmatprep.subr.mxu0 0.0
      %4769 = vmatpush1.msra.mxu0 0.0
      %4770 = vmatprep.subr.mxu0 0.0
      %4771 = vmatpush1.msra.mxu0 0.0
      %4772 = vmatprep.subr.mxu0 0.0
      %4773 = vmatpush1.msra.mxu0 0.0
      %4774 = vmatprep.subr.mxu0 0.0
      %4775 = vmatpush1.msra.mxu0 0.0
      %4776 = vmatprep.subr.mxu0 0.0
      %4777 = vmatpush1.msra.mxu0 0.0
      %4778 = vmatprep.subr.mxu0 0.0
      %4779 = vmatpush1.msra.mxu0 0.0
      %4780 = vmatprep.subr.mxu0 0.0
      %4781 = vmatpush1.msra.mxu0 0.0
      %4782 = vmatprep.subr.mxu0 0.0
      %4783 = vmatpush1.msra.mxu0 0.0
      %4784 = vmatprep.subr.mxu0 0.0
      %4785 = vmatpush1.msra.mxu0 0.0
      %4786 = vmatprep.subr.mxu0 0.0
      %4787 = vmatpush1.msra.mxu0 0.0
      %4788 = vmatprep.subr.mxu0 0.0
      %4789 = vmatpush1.msra.mxu0 0.0
      %4790 = vmatprep.subr.mxu0 0.0
      %4791 = vmatpush1.msra.mxu0 0.0
      %4792 = vmatprep.subr.mxu0 0.0
      %4793 = vmatpush1.msra.mxu0 0.0
      %4794 = vmatprep.subr.mxu0 0.0
      %4795 = vmatpush1.msra.mxu0 0.0
      %4796 = vmatprep.subr.mxu0 0.0
      %4797 = vmatpush1.msra.mxu0 0.0
      %4798 = vmatprep.subr.mxu0 0.0
      %4799 = vmatpush1.msra.mxu0 0.0
      %4800 = vmatprep.subr.mxu0 0.0
      %4801 = vmatpush1.msra.mxu0 0.0
      %4802 = vmatprep.subr.mxu0 0.0
      %4803 = vmatpush1.msra.mxu0 0.0
      %4804 = vmatprep.subr.mxu0 0.0
      %4805 = vmatpush1.msra.mxu0 0.0
      %4806 = vmatprep.subr.mxu0 0.0
      %4807 = vmatpush1.msra.mxu0 0.0
      %4808 = vmatprep.subr.mxu0 0.0
      %4809 = vmatpush1.msra.mxu0 0.0
      %4810 = vmatprep.subr.mxu0 0.0
      %4811 = vmatpush1.msra.mxu0 0.0
      %4812 = vmatprep.subr.mxu0 0.0
      %4813 = vmatpush1.msra.mxu0 0.0
      %4814 = vmatprep.subr.mxu0 0.0
      %4815 = vmatpush1.msra.mxu0 0.0
      %4816 = vmatprep.subr.mxu0 0.0
      %4817 = vmatpush1.msra.mxu0 0.0
      %4818 = vmatprep.mubr.f32.mxu0 0.0
      %4819 = vmatmul.mubr.f32.gmra.mrb[0].mxu0 %v4563
      %v4820 = vpop.f32.mrb[0].mxu0
      %v4821 = vadd.f32 0.0, %v4820
      %v4822 = vpop.f32.mrb[0].mxu0
      %4823 = vmatprep.mubr.f32.mxu0 0.0
      %4824 = vmatmul.mubr.f32.gmra.mrb[0].mxu0 %v4566
      %v4825 = vpop.f32.mrb[0].mxu0
      %v4826 = vadd.f32 0.0, %v4825
      %v4827 = vpop.f32.mrb[0].mxu0
      %4828 = vmatprep.mubr.f32.mxu0 0.0
      %4829 = vmatmul.mubr.f32.gmra.mrb[0].mxu0 %v4569
      %v4830 = vpop.f32.mrb[0].mxu0
      %v4831 = vadd.f32 0.0, %v4830
      %v4832 = vpop.f32.mrb[0].mxu0
      %4833 = vmatprep.mubr.f32.mxu0 0.0
      %4834 = vmatmul.mubr.f32.gmra.mrb[0].mxu0 %v4572
      %v4835 = vpop.f32.mrb[0].mxu0
      %v4836 = vadd.f32 0.0, %v4835
      %v4837 = vpop.f32.mrb[0].mxu0
      %4838 = vmatprep.mubr.f32.mxu0 0.0
      %4839 = vmatmul.mubr.f32.gmra.mrb[0].mxu0 %v4575
      %v4840 = vpop.f32.mrb[0].mxu0
      %v4841 = vadd.f32 0.0, %v4840
      %v4842 = vpop.f32.mrb[0].mxu0
      %4843 = vmatprep.mubr.f32.mxu0 0.0
      %4844 = vmatmul.mubr.f32.gmra.mrb[0].mxu0 %v4578
      %v4845 = vpop.f32.mrb[0].mxu0
      %v4846 = vadd.f32 0.0, %v4845
      %v4847 = vpop.f32.mrb[0].mxu0
      %4848 = vmatprep.mubr.f32.mxu0 0.0
      %4849 = vmatmul.mubr.f32.gmra.mrb[0].mxu0 %v4581
      %v4850 = vpop.f32.mrb[0].mxu0
      %v4851 = vadd.f32 0.0, %v4850
      %v4852 = vpop.f32.mrb[0].mxu0
      %4853 = vmatprep.mubr.f32.mxu0 0.0
      %4854 = vmatmul.mubr.f32.gmra.mrb[0].mxu0 %v4584
      %v4855 = vpop.f32.mrb[0].mxu0
      %v4856 = vadd.f32 0.0, %v4855
      %v4857 = vpop.f32.mrb[0].mxu0
      %4858 = vmatprep.mubr.f32.mxu0 0.0
      %4859 = vmatmul.mubr.f32.gmra.mrb[0].mxu0 %v4587
      %v4860 = vpop.f32.mrb[0].mxu0
      %v4861 = vadd.f32 0.0, %v4860
      %v4862 = vpop.f32.mrb[0].mxu0
      %4863 = vmatprep.mubr.f32.mxu0 0.0
      %4864 = vmatmul.mubr.f32.gmra.mrb[0].mxu0 %v4590
      %v4865 = vpop.f32.mrb[0].mxu0
      %v4866 = vadd.f32 0.0, %v4865
      %v4867 = vpop.f32.mrb[0].mxu0
      %4868 = vmatprep.mubr.f32.mxu0 0.0
      %4869 = vmatmul.mubr.f32.gmra.mrb[0].mxu0 %v4593
      %v4870 = vpop.f32.mrb[0].mxu0
      %v4871 = vadd.f32 0.0, %v4870
      %v4872 = vpop.f32.mrb[0].mxu0
      %4873 = vmatprep.mubr.f32.mxu0 0.0
      %4874 = vmatmul.mubr.f32.gmra.mrb[0].mxu0 %v4596
      %v4875 = vpop.f32.mrb[0].mxu0
      %v4876 = vadd.f32 0.0, %v4875
      %v4877 = vpop.f32.mrb[0].mxu0
      %4878 = vmatprep.mubr.f32.mxu0 0.0
      %4879 = vmatmul.mubr.f32.gmra.mrb[0].mxu0 %v4599
      %v4880 = vpop.f32.mrb[0].mxu0
      %v4881 = vadd.f32 0.0, %v4880
      %v4882 = vpop.f32.mrb[0].mxu0
      %4883 = vmatprep.mubr.f32.mxu0 0.0
      %4884 = vmatmul.mubr.f32.gmra.mrb[0].mxu0 %v4602
      %v4885 = vpop.f32.mrb[0].mxu0
      %v4886 = vadd.f32 0.0, %v4885
      %v4887 = vpop.f32.mrb[0].mxu0
      %4888 = vmatprep.mubr.f32.mxu0 0.0
      %4889 = vmatmul.mubr.f32.gmra.mrb[0].mxu0 %v4605
      %v4890 = vpop.f32.mrb[0].mxu0
      %v4891 = vadd.f32 0.0, %v4890
      %v4892 = vpop.f32.mrb[0].mxu0
      %4893 = vmatprep.mubr.f32.mxu0 0.0
      %4894 = vmatmul.mubr.f32.gmra.mrb[0].mxu0 %v4608
      %v4895 = vpop.f32.mrb[0].mxu0
      %v4896 = vadd.f32 0.0, %v4895
      %v4897 = vpop.f32.mrb[0].mxu0
      %4898 = vmatprep.mubr.f32.mxu0 0.0
      %4899 = vmatmul.mubr.f32.gmra.mrb[0].mxu0 %v4611
      %v4900 = vpop.f32.mrb[0].mxu0
      %v4901 = vadd.f32 0.0, %v4900
      %v4902 = vpop.f32.mrb[0].mxu0
      %4903 = vmatprep.mubr.f32.mxu0 0.0
      %4904 = vmatmul.mubr.f32.gmra.mrb[0].mxu0 %v4614
      %v4905 = vpop.f32.mrb[0].mxu0
      %v4906 = vadd.f32 0.0, %v4905
      %v4907 = vpop.f32.mrb[0].mxu0
      %4908 = vmatprep.mubr.f32.mxu0 0.0
      %4909 = vmatmul.mubr.f32.gmra.mrb[0].mxu0 %v4617
      %v4910 = vpop.f32.mrb[0].mxu0
      %v4911 = vadd.f32 0.0, %v4910
      %v4912 = vpop.f32.mrb[0].mxu0
      %4913 = vmatprep.mubr.f32.mxu0 0.0
      %4914 = vmatmul.mubr.f32.gmra.mrb[0].mxu0 %v4620
      %v4915 = vpop.f32.mrb[0].mxu0
      %v4916 = vadd.f32 0.0, %v4915
      %v4917 = vpop.f32.mrb[0].mxu0
      %4918 = vmatprep.mubr.f32.mxu0 0.0
      %4919 = vmatmul.mubr.f32.gmra.mrb[0].mxu0 %v4623
      %v4920 = vpop.f32.mrb[0].mxu0
      %v4921 = vadd.f32 0.0, %v4920
      %v4922 = vpop.f32.mrb[0].mxu0
      %4923 = vmatprep.mubr.f32.mxu0 0.0
      %4924 = vmatmul.mubr.f32.gmra.mrb[0].mxu0 %v4626
      %v4925 = vpop.f32.mrb[0].mxu0
      %v4926 = vadd.f32 0.0, %v4925
      %v4927 = vpop.f32.mrb[0].mxu0
      %4928 = vmatprep.mubr.f32.mxu0 0.0
      %4929 = vmatmul.mubr.f32.gmra.mrb[0].mxu0 %v4629
      %v4930 = vpop.f32.mrb[0].mxu0
      %v4931 = vadd.f32 0.0, %v4930
      %v4932 = vpop.f32.mrb[0].mxu0
      %4933 = vmatprep.mubr.f32.mxu0 0.0
      %4934 = vmatmul.mubr.f32.gmra.mrb[0].mxu0 %v4632
      %v4935 = vpop.f32.mrb[0].mxu0
      %v4936 = vadd.f32 0.0, %v4935
      %v4937 = vpop.f32.mrb[0].mxu0
      %4938 = vmatprep.mubr.f32.mxu0 0.0
      %4939 = vmatmul.mubr.f32.gmra.mrb[0].mxu0 %v4635
      %v4940 = vpop.f32.mrb[0].mxu0
      %v4941 = vadd.f32 0.0, %v4940
      %v4942 = vpop.f32.mrb[0].mxu0
      %4943 = vmatprep.mubr.f32.mxu0 0.0
      %4944 = vmatmul.mubr.f32.gmra.mrb[0].mxu0 %v4638
      %v4945 = vpop.f32.mrb[0].mxu0
      %v4946 = vadd.f32 0.0, %v4945
      %v4947 = vpop.f32.mrb[0].mxu0
      %4948 = vmatprep.mubr.f32.mxu0 0.0
      %4949 = vmatmul.mubr.f32.gmra.mrb[0].mxu0 %v4641
      %v4950 = vpop.f32.mrb[0].mxu0
      %v4951 = vadd.f32 0.0, %v4950
      %v4952 = vpop.f32.mrb[0].mxu0
      %4953 = vmatprep.mubr.f32.mxu0 0.0
      %4954 = vmatmul.mubr.f32.gmra.mrb[0].mxu0 %v4644
      %v4955 = vpop.f32.mrb[0].mxu0
      %v4956 = vadd.f32 0.0, %v4955
      %v4957 = vpop.f32.mrb[0].mxu0
      %4958 = vmatprep.mubr.f32.mxu0 0.0
      %4959 = vmatmul.mubr.f32.gmra.mrb[0].mxu0 %v4647
      %v4960 = vpop.f32.mrb[0].mxu0
      %v4961 = vadd.f32 0.0, %v4960
      %v4962 = vpop.f32.mrb[0].mxu0
      %4963 = vmatprep.mubr.f32.mxu0 0.0
      %4964 = vmatmul.mubr.f32.gmra.mrb[0].mxu0 %v4650
      %v4965 = vpop.f32.mrb[0].mxu0
      %v4966 = vadd.f32 0.0, %v4965
      %v4967 = vpop.f32.mrb[0].mxu0
      %4968 = vmatprep.mubr.f32.mxu0 0.0
      %4969 = vmatmul.mubr.f32.gmra.mrb[0].mxu0 %v4653
      %v4970 = vpop.f32.mrb[0].mxu0
      %v4971 = vadd.f32 0.0, %v4970
      %v4972 = vpop.f32.mrb[0].mxu0
      %4973 = vmatprep.mubr.f32.mxu0 0.0
      %4974 = vmatmul.mubr.f32.gmra.mrb[0].mxu0 %v4656
      %v4975 = vpop.f32.mrb[0].mxu0
      %v4976 = vadd.f32 0.0, %v4975
      %v4977 = vpop.f32.mrb[0].mxu0
      %4978 = vmatprep.mubr.f32.mxu0 0.0
      %4979 = vmatmul.mubr.f32.gmra.mrb[0].mxu0 %v4659
      %v4980 = vpop.f32.mrb[0].mxu0
      %v4981 = vadd.f32 0.0, %v4980
      %v4982 = vpop.f32.mrb[0].mxu0
      %4983 = vmatprep.mubr.f32.mxu0 0.0
      %4984 = vmatmul.mubr.f32.gmra.mrb[0].mxu0 %v4662
      %v4985 = vpop.f32.mrb[0].mxu0
      %v4986 = vadd.f32 0.0, %v4985
      %v4987 = vpop.f32.mrb[0].mxu0
      %4988 = vmatprep.mubr.f32.mxu0 0.0
      %4989 = vmatmul.mubr.f32.gmra.mrb[0].mxu0 %v4665
      %v4990 = vpop.f32.mrb[0].mxu0
      %v4991 = vadd.f32 0.0, %v4990
      %v4992 = vpop.f32.mrb[0].mxu0
      %4993 = vmatprep.mubr.f32.mxu0 0.0
      %4994 = vmatmul.mubr.f32.gmra.mrb[0].mxu0 %v4668
      %v4995 = vpop.f32.mrb[0].mxu0
      %v4996 = vadd.f32 0.0, %v4995
      %v4997 = vpop.f32.mrb[0].mxu0
      %4998 = vmatprep.mubr.f32.mxu0 0.0
      %4999 = vmatmul.mubr.f32.gmra.mrb[0].mxu0 %v4671
      %v5000 = vpop.f32.mrb[0].mxu0
      %v5001 = vadd.f32 0.0, %v5000
      %v5002 = vpop.f32.mrb[0].mxu0
      %5003 = vmatprep.mubr.f32.mxu0 0.0
      %5004 = vmatmul.mubr.f32.gmra.mrb[0].mxu0 %v4674
      %v5005 = vpop.f32.mrb[0].mxu0
      %v5006 = vadd.f32 0.0, %v5005
      %v5007 = vpop.f32.mrb[0].mxu0
      %5008 = vmatprep.mubr.f32.mxu0 0.0
      %5009 = vmatmul.mubr.f32.gmra.mrb[0].mxu0 %v4677
      %v5010 = vpop.f32.mrb[0].mxu0
      %v5011 = vadd.f32 0.0, %v5010
      %v5012 = vpop.f32.mrb[0].mxu0
      %5013 = vmatprep.mubr.f32.mxu0 0.0
      %5014 = vmatmul.mubr.f32.gmra.mrb[0].mxu0 %v4680
      %v5015 = vpop.f32.mrb[0].mxu0
      %v5016 = vadd.f32 0.0, %v5015
      %v5017 = vpop.f32.mrb[0].mxu0
      %5018 = vmatprep.mubr.f32.mxu0 0.0
      %5019 = vmatmul.mubr.f32.gmra.mrb[0].mxu0 %v4683
      %v5020 = vpop.f32.mrb[0].mxu0
      %v5021 = vadd.f32 0.0, %v5020
      %v5022 = vpop.f32.mrb[0].mxu0
      %5023 = vmatprep.mubr.f32.mxu0 0.0
      %5024 = vmatmul.mubr.f32.gmra.mrb[0].mxu0 %v4686
      %v5025 = vpop.f32.mrb[0].mxu0
      %v5026 = vadd.f32 0.0, %v5025
      %v5027 = vpop.f32.mrb[0].mxu0
      %5028 = vmatprep.mubr.f32.mxu0 0.0
      %5029 = vmatmul.mubr.f32.gmra.mrb[0].mxu0 %v4689
      %v5030 = vpop.f32.mrb[0].mxu0
      %v5031 = vadd.f32 0.0, %v5030
      %v5032 = vpop.f32.mrb[0].mxu0
      %5033 = vmatprep.mubr.f32.mxu0 0.0
      %5034 = vmatmul.mubr.f32.gmra.mrb[0].mxu0 %v4692
      %v5035 = vpop.f32.mrb[0].mxu0
      %v5036 = vadd.f32 0.0, %v5035
      %v5037 = vpop.f32.mrb[0].mxu0
      %5038 = vmatprep.mubr.f32.mxu0 0.0
      %5039 = vmatmul.mubr.f32.gmra.mrb[0].mxu0 %v4695
      %v5040 = vpop.f32.mrb[0].mxu0
      %v5041 = vadd.f32 0.0, %v5040
      %v5042 = vpop.f32.mrb[0].mxu0
      %5043 = vmatprep.mubr.f32.mxu0 0.0
      %5044 = vmatmul.mubr.f32.gmra.mrb[0].mxu0 %v4698
      %v5045 = vpop.f32.mrb[0].mxu0
      %v5046 = vadd.f32 0.0, %v5045
      %v5047 = vpop.f32.mrb[0].mxu0
      %5048 = vmatprep.mubr.f32.mxu0 0.0
      %5049 = vmatmul.mubr.f32.gmra.mrb[0].mxu0 %v4701
      %v5050 = vpop.f32.mrb[0].mxu0
      %v5051 = vadd.f32 0.0, %v5050
      %v5052 = vpop.f32.mrb[0].mxu0
      %5053 = vmatprep.mubr.f32.mxu0 0.0
      %5054 = vmatmul.mubr.f32.gmra.mrb[0].mxu0 %v4704
      %v5055 = vpop.f32.mrb[0].mxu0
      %v5056 = vadd.f32 0.0, %v5055
      %v5057 = vpop.f32.mrb[0].mxu0
      %5058 = vmatprep.mubr.f32.mxu0 0.0
      %5059 = vmatmul.mubr.f32.gmra.mrb[0].mxu0 %v4707
      %v5060 = vpop.f32.mrb[0].mxu0
      %v5061 = vadd.f32 0.0, %v5060
      %v5062 = vpop.f32.mrb[0].mxu0
      %5063 = vmatprep.mubr.f32.mxu0 0.0
      %5064 = vmatmul.mubr.f32.gmra.mrb[0].mxu0 %v4710
      %v5065 = vpop.f32.mrb[0].mxu0
      %v5066 = vadd.f32 0.0, %v5065
      %v5067 = vpop.f32.mrb[0].mxu0
      %5068 = vmatprep.mubr.f32.mxu0 0.0
      %5069 = vmatmul.mubr.f32.gmra.mrb[0].mxu0 %v4713
      %v5070 = vpop.f32.mrb[0].mxu0
      %v5071 = vadd.f32 0.0, %v5070
      %v5072 = vpop.f32.mrb[0].mxu0
      %5073 = vmatprep.mubr.f32.mxu0 0.0
      %5074 = vmatmul.mubr.f32.gmra.mrb[0].mxu0 %v4716
      %v5075 = vpop.f32.mrb[0].mxu0
      %v5076 = vadd.f32 0.0, %v5075
      %v5077 = vpop.f32.mrb[0].mxu0
      %5078 = vmatprep.mubr.f32.mxu0 0.0
      %5079 = vmatmul.mubr.f32.gmra.mrb[0].mxu0 %v4719
      %v5080 = vpop.f32.mrb[0].mxu0
      %v5081 = vadd.f32 0.0, %v5080
      %v5082 = vpop.f32.mrb[0].mxu0
      %5083 = vmatprep.mubr.f32.mxu0 0.0
      %5084 = vmatmul.mubr.f32.gmra.mrb[0].mxu0 %v4722
      %v5085 = vpop.f32.mrb[0].mxu0
      %v5086 = vadd.f32 0.0, %v5085
      %v5087 = vpop.f32.mrb[0].mxu0
      %5088 = vmatprep.mubr.f32.mxu0 0.0
      %5089 = vmatmul.mubr.f32.gmra.mrb[0].mxu0 %v4725
      %v5090 = vpop.f32.mrb[0].mxu0
      %v5091 = vadd.f32 0.0, %v5090
      %v5092 = vpop.f32.mrb[0].mxu0
      %5093 = vmatprep.mubr.f32.mxu0 0.0
      %5094 = vmatmul.mubr.f32.gmra.mrb[0].mxu0 %v4728
      %v5095 = vpop.f32.mrb[0].mxu0
      %v5096 = vadd.f32 0.0, %v5095
      %v5097 = vpop.f32.mrb[0].mxu0
      %5098 = vmatprep.mubr.f32.mxu0 0.0
      %5099 = vmatmul.mubr.f32.gmra.mrb[0].mxu0 %v4731
      %v5100 = vpop.f32.mrb[0].mxu0
      %v5101 = vadd.f32 0.0, %v5100
      %v5102 = vpop.f32.mrb[0].mxu0
      %5103 = vmatprep.mubr.f32.mxu0 0.0
      %5104 = vmatmul.mubr.f32.gmra.mrb[0].mxu0 %v4734
      %v5105 = vpop.f32.mrb[0].mxu0
      %v5106 = vadd.f32 0.0, %v5105
      %v5107 = vpop.f32.mrb[0].mxu0
      %5108 = vmatprep.mubr.f32.mxu0 0.0
      %5109 = vmatmul.mubr.f32.gmra.mrb[0].mxu0 %v4737
      %v5110 = vpop.f32.mrb[0].mxu0
      %v5111 = vadd.f32 0.0, %v5110
      %v5112 = vpop.f32.mrb[0].mxu0
      %5113 = vmatprep.mubr.f32.mxu0 0.0
      %5114 = vmatmul.mubr.f32.gmra.mrb[0].mxu0 %v4740
      %v5115 = vpop.f32.mrb[0].mxu0
      %v5116 = vadd.f32 0.0, %v5115
      %v5117 = vpop.f32.mrb[0].mxu0
      %5118 = vmatprep.mubr.f32.mxu0 0.0
      %5119 = vmatmul.mubr.f32.gmra.mrb[0].mxu0 %v4743
      %v5120 = vpop.f32.mrb[0].mxu0
      %v5121 = vadd.f32 0.0, %v5120
      %v5122 = vpop.f32.mrb[0].mxu0
      %5123 = vmatprep.mubr.f32.mxu0 0.0
      %5124 = vmatmul.mubr.f32.gmra.mrb[0].mxu0 %v4746
      %v5125 = vpop.f32.mrb[0].mxu0
      %v5126 = vadd.f32 0.0, %v5125
      %v5127 = vpop.f32.mrb[0].mxu0
      %5128 = vmatprep.mubr.f32.mxu0 0.0
      %5129 = vmatmul.mubr.f32.gmra.mrb[0].mxu0 %v4749
      %v5130 = vpop.f32.mrb[0].mxu0
      %v5131 = vadd.f32 0.0, %v5130
      %v5132 = vpop.f32.mrb[0].mxu0
      %5133 = vmatprep.mubr.f32.mxu0 0.0
      %5134 = vmatmul.mubr.f32.gmra.mrb[0].mxu0 %v4752
      %v5135 = vpop.f32.mrb[0].mxu0
      %v5136 = vadd.f32 0.0, %v5135
      %v5137 = vpop.f32.mrb[0].mxu0
      %5138 = vdwg.mxu0
      %v5140 = vsel %vm4048, %v4305, 0
      %v5143 = vsel %vm4048, %v4307, 0
      %v5146 = vsel %vm4048, %v4309, 0
      %v5149 = vsel %vm4048, %v4311, 0
      %v5152 = vsel %vm4048, %v4313, 0
      %v5155 = vsel %vm4048, %v4315, 0
      %v5158 = vsel %vm4048, %v4317, 0
      %v5161 = vsel %vm4048, %v4319, 0
      %v5164 = vsel %vm4048, %v4321, 0
      %v5167 = vsel %vm4048, %v4323, 0
      %v5170 = vsel %vm4048, %v4325, 0
      %v5173 = vsel %vm4048, %v4327, 0
      %v5176 = vsel %vm4048, %v4329, 0
      %v5179 = vsel %vm4048, %v4331, 0
      %v5182 = vsel %vm4048, %v4333, 0
      %v5185 = vsel %vm4048, %v4335, 0
      %v5188 = vsel %vm4048, %v4337, 0
      %v5191 = vsel %vm4048, %v4339, 0
      %v5194 = vsel %vm4048, %v4341, 0
      %v5197 = vsel %vm4048, %v4343, 0
      %v5200 = vsel %vm4048, %v4345, 0
      %v5203 = vsel %vm4048, %v4347, 0
      %v5206 = vsel %vm4048, %v4349, 0
      %v5209 = vsel %vm4048, %v4351, 0
      %v5212 = vsel %vm4048, %v4353, 0
      %v5215 = vsel %vm4048, %v4355, 0
      %v5218 = vsel %vm4048, %v4357, 0
      %v5221 = vsel %vm4048, %v4359, 0
      %v5224 = vsel %vm4048, %v4361, 0
      %v5227 = vsel %vm4048, %v4363, 0
      %v5230 = vsel %vm4048, %v4365, 0
      %v5233 = vsel %vm4048, %v4367, 0
      %v5236 = vsel %vm4048, %v4369, 0
      %v5239 = vsel %vm4048, %v4371, 0
      %v5242 = vsel %vm4048, %v4373, 0
      %v5245 = vsel %vm4048, %v4375, 0
      %v5248 = vsel %vm4048, %v4377, 0
      %v5251 = vsel %vm4048, %v4379, 0
      %v5254 = vsel %vm4048, %v4381, 0
      %v5257 = vsel %vm4048, %v4383, 0
      %v5260 = vsel %vm4048, %v4385, 0
      %v5263 = vsel %vm4048, %v4387, 0
      %v5266 = vsel %vm4048, %v4389, 0
      %v5269 = vsel %vm4048, %v4391, 0
      %v5272 = vsel %vm4048, %v4393, 0
      %v5275 = vsel %vm4048, %v4395, 0
      %v5278 = vsel %vm4048, %v4397, 0
      %v5281 = vsel %vm4048, %v4399, 0
      %v5284 = vsel %vm4048, %v4401, 0
      %v5287 = vsel %vm4048, %v4403, 0
      %v5290 = vsel %vm4048, %v4405, 0
      %v5293 = vsel %vm4048, %v4407, 0
      %v5296 = vsel %vm4048, %v4409, 0
      %v5299 = vsel %vm4048, %v4411, 0
      %v5302 = vsel %vm4048, %v4413, 0
      %v5305 = vsel %vm4048, %v4415, 0
      %v5308 = vsel %vm4048, %v4417, 0
      %v5311 = vsel %vm4048, %v4419, 0
      %v5314 = vsel %vm4048, %v4421, 0
      %v5317 = vsel %vm4048, %v4423, 0
      %v5320 = vsel %vm4048, %v4425, 0
      %v5323 = vsel %vm4048, %v4427, 0
      %v5326 = vsel %vm4048, %v4429, 0
      %v5329 = vsel %vm4048, %v4431, 0
      %5331 = vmatprep.subr.mxu0 0.0
      %5332 = vmatpush1.msra.mxu0 %v4432
      %5333 = vmatprep.subr.mxu0 0.0
      %5334 = vmatpush1.msra.mxu0 0.0
      %5335 = vmatprep.subr.mxu0 0.0
      %5336 = vmatpush1.msra.mxu0 0.0
      %5337 = vmatprep.subr.mxu0 0.0
      %5338 = vmatpush1.msra.mxu0 0.0
      %5339 = vmatprep.subr.mxu0 0.0
      %5340 = vmatpush1.msra.mxu0 0.0
      %5341 = vmatprep.subr.mxu0 0.0
      %5342 = vmatpush1.msra.mxu0 0.0
      %5343 = vmatprep.subr.mxu0 0.0
      %5344 = vmatpush1.msra.mxu0 0.0
      %5345 = vmatprep.subr.mxu0 0.0
      %5346 = vmatpush1.msra.mxu0 0.0
      %5347 = vmatprep.subr.mxu0 0.0
      %5348 = vmatpush1.msra.mxu0 0.0
      %5349 = vmatprep.subr.mxu0 0.0
      %5350 = vmatpush1.msra.mxu0 0.0
      %5351 = vmatprep.subr.mxu0 0.0
      %5352 = vmatpush1.msra.mxu0 0.0
      %5353 = vmatprep.subr.mxu0 0.0
      %5354 = vmatpush1.msra.mxu0 0.0
      %5355 = vmatprep.subr.mxu0 0.0
      %5356 = vmatpush1.msra.mxu0 0.0
      %5357 = vmatprep.subr.mxu0 0.0
      %5358 = vmatpush1.msra.mxu0 0.0
      %5359 = vmatprep.subr.mxu0 0.0
      %5360 = vmatpush1.msra.mxu0 0.0
      %5361 = vmatprep.subr.mxu0 0.0
      %5362 = vmatpush1.msra.mxu0 0.0
      %5363 = vmatprep.subr.mxu0 0.0
      %5364 = vmatpush1.msra.mxu0 0.0
      %5365 = vmatprep.subr.mxu0 0.0
      %5366 = vmatpush1.msra.mxu0 0.0
      %5367 = vmatprep.subr.mxu0 0.0
      %5368 = vmatpush1.msra.mxu0 0.0
      %5369 = vmatprep.subr.mxu0 0.0
      %5370 = vmatpush1.msra.mxu0 0.0
      %5371 = vmatprep.subr.mxu0 0.0
      %5372 = vmatpush1.msra.mxu0 0.0
      %5373 = vmatprep.subr.mxu0 0.0
      %5374 = vmatpush1.msra.mxu0 0.0
      %5375 = vmatprep.subr.mxu0 0.0
      %5376 = vmatpush1.msra.mxu0 0.0
      %5377 = vmatprep.subr.mxu0 0.0
      %5378 = vmatpush1.msra.mxu0 0.0
      %5379 = vmatprep.subr.mxu0 0.0
      %5380 = vmatpush1.msra.mxu0 0.0
      %5381 = vmatprep.subr.mxu0 0.0
      %5382 = vmatpush1.msra.mxu0 0.0
      %5383 = vmatprep.subr.mxu0 0.0
      %5384 = vmatpush1.msra.mxu0 0.0
      %5385 = vmatprep.subr.mxu0 0.0
      %5386 = vmatpush1.msra.mxu0 0.0
      %5387 = vmatprep.subr.mxu0 0.0
      %5388 = vmatpush1.msra.mxu0 0.0
      %5389 = vmatprep.subr.mxu0 0.0
      %5390 = vmatpush1.msra.mxu0 0.0
      %5391 = vmatprep.subr.mxu0 0.0
      %5392 = vmatpush1.msra.mxu0 0.0
      %5393 = vmatprep.subr.mxu0 0.0
      %5394 = vmatpush1.msra.mxu0 0.0
      %5395 = vmatprep.mubr.f32.mxu0 0.0
      %5396 = vmatmul.mubr.f32.gmra.mrb[0].mxu0 %v5140
      %v5397 = vpop.f32.mrb[0].mxu0
      %v5398 = vadd.f32 %v4821, %v5397
      %v5399 = vpop.f32.mrb[0].mxu0
      %5400 = vmatprep.mubr.f32.mxu0 0.0
      %5401 = vmatmul.mubr.f32.gmra.mrb[0].mxu0 %v5143
      %v5402 = vpop.f32.mrb[0].mxu0
      %v5403 = vadd.f32 %v4826, %v5402
      %v5404 = vpop.f32.mrb[0].mxu0
      %5405 = vmatprep.mubr.f32.mxu0 0.0
      %5406 = vmatmul.mubr.f32.gmra.mrb[0].mxu0 %v5146
      %v5407 = vpop.f32.mrb[0].mxu0
      %v5408 = vadd.f32 %v4831, %v5407
      %v5409 = vpop.f32.mrb[0].mxu0
      %5410 = vmatprep.mubr.f32.mxu0 0.0
      %5411 = vmatmul.mubr.f32.gmra.mrb[0].mxu0 %v5149
      %v5412 = vpop.f32.mrb[0].mxu0
      %v5413 = vadd.f32 %v4836, %v5412
      %v5414 = vpop.f32.mrb[0].mxu0
      %5415 = vmatprep.mubr.f32.mxu0 0.0
      %5416 = vmatmul.mubr.f32.gmra.mrb[0].mxu0 %v5152
      %v5417 = vpop.f32.mrb[0].mxu0
      %v5418 = vadd.f32 %v4841, %v5417
      %v5419 = vpop.f32.mrb[0].mxu0
      %5420 = vmatprep.mubr.f32.mxu0 0.0
      %5421 = vmatmul.mubr.f32.gmra.mrb[0].mxu0 %v5155
      %v5422 = vpop.f32.mrb[0].mxu0
      %v5423 = vadd.f32 %v4846, %v5422
      %v5424 = vpop.f32.mrb[0].mxu0
      %5425 = vmatprep.mubr.f32.mxu0 0.0
      %5426 = vmatmul.mubr.f32.gmra.mrb[0].mxu0 %v5158
      %v5427 = vpop.f32.mrb[0].mxu0
      %v5428 = vadd.f32 %v4851, %v5427
      %v5429 = vpop.f32.mrb[0].mxu0
      %5430 = vmatprep.mubr.f32.mxu0 0.0
      %5431 = vmatmul.mubr.f32.gmra.mrb[0].mxu0 %v5161
      %v5432 = vpop.f32.mrb[0].mxu0
      %v5433 = vadd.f32 %v4856, %v5432
      %v5434 = vpop.f32.mrb[0].mxu0
      %5435 = vmatprep.mubr.f32.mxu0 0.0
      %5436 = vmatmul.mubr.f32.gmra.mrb[0].mxu0 %v5164
      %v5437 = vpop.f32.mrb[0].mxu0
      %v5438 = vadd.f32 %v4861, %v5437
      %v5439 = vpop.f32.mrb[0].mxu0
      %5440 = vmatprep.mubr.f32.mxu0 0.0
      %5441 = vmatmul.mubr.f32.gmra.mrb[0].mxu0 %v5167
      %v5442 = vpop.f32.mrb[0].mxu0
      %v5443 = vadd.f32 %v4866, %v5442
      %v5444 = vpop.f32.mrb[0].mxu0
      %5445 = vmatprep.mubr.f32.mxu0 0.0
      %5446 = vmatmul.mubr.f32.gmra.mrb[0].mxu0 %v5170
      %v5447 = vpop.f32.mrb[0].mxu0
      %v5448 = vadd.f32 %v4871, %v5447
      %v5449 = vpop.f32.mrb[0].mxu0
      %5450 = vmatprep.mubr.f32.mxu0 0.0
      %5451 = vmatmul.mubr.f32.gmra.mrb[0].mxu0 %v5173
      %v5452 = vpop.f32.mrb[0].mxu0
      %v5453 = vadd.f32 %v4876, %v5452
      %v5454 = vpop.f32.mrb[0].mxu0
      %5455 = vmatprep.mubr.f32.mxu0 0.0
      %5456 = vmatmul.mubr.f32.gmra.mrb[0].mxu0 %v5176
      %v5457 = vpop.f32.mrb[0].mxu0
      %v5458 = vadd.f32 %v4881, %v5457
      %v5459 = vpop.f32.mrb[0].mxu0
      %5460 = vmatprep.mubr.f32.mxu0 0.0
      %5461 = vmatmul.mubr.f32.gmra.mrb[0].mxu0 %v5179
      %v5462 = vpop.f32.mrb[0].mxu0
      %v5463 = vadd.f32 %v4886, %v5462
      %v5464 = vpop.f32.mrb[0].mxu0
      %5465 = vmatprep.mubr.f32.mxu0 0.0
      %5466 = vmatmul.mubr.f32.gmra.mrb[0].mxu0 %v5182
      %v5467 = vpop.f32.mrb[0].mxu0
      %v5468 = vadd.f32 %v4891, %v5467
      %v5469 = vpop.f32.mrb[0].mxu0
      %5470 = vmatprep.mubr.f32.mxu0 0.0
      %5471 = vmatmul.mubr.f32.gmra.mrb[0].mxu0 %v5185
      %v5472 = vpop.f32.mrb[0].mxu0
      %v5473 = vadd.f32 %v4896, %v5472
      %v5474 = vpop.f32.mrb[0].mxu0
      %5475 = vmatprep.mubr.f32.mxu0 0.0
      %5476 = vmatmul.mubr.f32.gmra.mrb[0].mxu0 %v5188
      %v5477 = vpop.f32.mrb[0].mxu0
      %v5478 = vadd.f32 %v4901, %v5477
      %v5479 = vpop.f32.mrb[0].mxu0
      %5480 = vmatprep.mubr.f32.mxu0 0.0
      %5481 = vmatmul.mubr.f32.gmra.mrb[0].mxu0 %v5191
      %v5482 = vpop.f32.mrb[0].mxu0
      %v5483 = vadd.f32 %v4906, %v5482
      %v5484 = vpop.f32.mrb[0].mxu0
      %5485 = vmatprep.mubr.f32.mxu0 0.0
      %5486 = vmatmul.mubr.f32.gmra.mrb[0].mxu0 %v5194
      %v5487 = vpop.f32.mrb[0].mxu0
      %v5488 = vadd.f32 %v4911, %v5487
      %v5489 = vpop.f32.mrb[0].mxu0
      %5490 = vmatprep.mubr.f32.mxu0 0.0
      %5491 = vmatmul.mubr.f32.gmra.mrb[0].mxu0 %v5197
      %v5492 = vpop.f32.mrb[0].mxu0
      %v5493 = vadd.f32 %v4916, %v5492
      %v5494 = vpop.f32.mrb[0].mxu0
      %5495 = vmatprep.mubr.f32.mxu0 0.0
      %5496 = vmatmul.mubr.f32.gmra.mrb[0].mxu0 %v5200
      %v5497 = vpop.f32.mrb[0].mxu0
      %v5498 = vadd.f32 %v4921, %v5497
      %v5499 = vpop.f32.mrb[0].mxu0
      %5500 = vmatprep.mubr.f32.mxu0 0.0
      %5501 = vmatmul.mubr.f32.gmra.mrb[0].mxu0 %v5203
      %v5502 = vpop.f32.mrb[0].mxu0
      %v5503 = vadd.f32 %v4926, %v5502
      %v5504 = vpop.f32.mrb[0].mxu0
      %5505 = vmatprep.mubr.f32.mxu0 0.0
      %5506 = vmatmul.mubr.f32.gmra.mrb[0].mxu0 %v5206
      %v5507 = vpop.f32.mrb[0].mxu0
      %v5508 = vadd.f32 %v4931, %v5507
      %v5509 = vpop.f32.mrb[0].mxu0
      %5510 = vmatprep.mubr.f32.mxu0 0.0
      %5511 = vmatmul.mubr.f32.gmra.mrb[0].mxu0 %v5209
      %v5512 = vpop.f32.mrb[0].mxu0
      %v5513 = vadd.f32 %v4936, %v5512
      %v5514 = vpop.f32.mrb[0].mxu0
      %5515 = vmatprep.mubr.f32.mxu0 0.0
      %5516 = vmatmul.mubr.f32.gmra.mrb[0].mxu0 %v5212
      %v5517 = vpop.f32.mrb[0].mxu0
      %v5518 = vadd.f32 %v4941, %v5517
      %v5519 = vpop.f32.mrb[0].mxu0
      %5520 = vmatprep.mubr.f32.mxu0 0.0
      %5521 = vmatmul.mubr.f32.gmra.mrb[0].mxu0 %v5215
      %v5522 = vpop.f32.mrb[0].mxu0
      %v5523 = vadd.f32 %v4946, %v5522
      %v5524 = vpop.f32.mrb[0].mxu0
      %5525 = vmatprep.mubr.f32.mxu0 0.0
      %5526 = vmatmul.mubr.f32.gmra.mrb[0].mxu0 %v5218
      %v5527 = vpop.f32.mrb[0].mxu0
      %v5528 = vadd.f32 %v4951, %v5527
      %v5529 = vpop.f32.mrb[0].mxu0
      %5530 = vmatprep.mubr.f32.mxu0 0.0
      %5531 = vmatmul.mubr.f32.gmra.mrb[0].mxu0 %v5221
      %v5532 = vpop.f32.mrb[0].mxu0
      %v5533 = vadd.f32 %v4956, %v5532
      %v5534 = vpop.f32.mrb[0].mxu0
      %5535 = vmatprep.mubr.f32.mxu0 0.0
      %5536 = vmatmul.mubr.f32.gmra.mrb[0].mxu0 %v5224
      %v5537 = vpop.f32.mrb[0].mxu0
      %v5538 = vadd.f32 %v4961, %v5537
      %v5539 = vpop.f32.mrb[0].mxu0
      %5540 = vmatprep.mubr.f32.mxu0 0.0
      %5541 = vmatmul.mubr.f32.gmra.mrb[0].mxu0 %v5227
      %v5542 = vpop.f32.mrb[0].mxu0
      %v5543 = vadd.f32 %v4966, %v5542
      %v5544 = vpop.f32.mrb[0].mxu0
      %5545 = vmatprep.mubr.f32.mxu0 0.0
      %5546 = vmatmul.mubr.f32.gmra.mrb[0].mxu0 %v5230
      %v5547 = vpop.f32.mrb[0].mxu0
      %v5548 = vadd.f32 %v4971, %v5547
      %v5549 = vpop.f32.mrb[0].mxu0
      %5550 = vmatprep.mubr.f32.mxu0 0.0
      %5551 = vmatmul.mubr.f32.gmra.mrb[0].mxu0 %v5233
      %v5552 = vpop.f32.mrb[0].mxu0
      %v5553 = vadd.f32 %v4976, %v5552
      %v5554 = vpop.f32.mrb[0].mxu0
      %5555 = vmatprep.mubr.f32.mxu0 0.0
      %5556 = vmatmul.mubr.f32.gmra.mrb[0].mxu0 %v5236
      %v5557 = vpop.f32.mrb[0].mxu0
      %v5558 = vadd.f32 %v4981, %v5557
      %v5559 = vpop.f32.mrb[0].mxu0
      %5560 = vmatprep.mubr.f32.mxu0 0.0
      %5561 = vmatmul.mubr.f32.gmra.mrb[0].mxu0 %v5239
      %v5562 = vpop.f32.mrb[0].mxu0
      %v5563 = vadd.f32 %v4986, %v5562
      %v5564 = vpop.f32.mrb[0].mxu0
      %5565 = vmatprep.mubr.f32.mxu0 0.0
      %5566 = vmatmul.mubr.f32.gmra.mrb[0].mxu0 %v5242
      %v5567 = vpop.f32.mrb[0].mxu0
      %v5568 = vadd.f32 %v4991, %v5567
      %v5569 = vpop.f32.mrb[0].mxu0
      %5570 = vmatprep.mubr.f32.mxu0 0.0
      %5571 = vmatmul.mubr.f32.gmra.mrb[0].mxu0 %v5245
      %v5572 = vpop.f32.mrb[0].mxu0
      %v5573 = vadd.f32 %v4996, %v5572
      %v5574 = vpop.f32.mrb[0].mxu0
      %5575 = vmatprep.mubr.f32.mxu0 0.0
      %5576 = vmatmul.mubr.f32.gmra.mrb[0].mxu0 %v5248
      %v5577 = vpop.f32.mrb[0].mxu0
      %v5578 = vadd.f32 %v5001, %v5577
      %v5579 = vpop.f32.mrb[0].mxu0
      %5580 = vmatprep.mubr.f32.mxu0 0.0
      %5581 = vmatmul.mubr.f32.gmra.mrb[0].mxu0 %v5251
      %v5582 = vpop.f32.mrb[0].mxu0
      %v5583 = vadd.f32 %v5006, %v5582
      %v5584 = vpop.f32.mrb[0].mxu0
      %5585 = vmatprep.mubr.f32.mxu0 0.0
      %5586 = vmatmul.mubr.f32.gmra.mrb[0].mxu0 %v5254
      %v5587 = vpop.f32.mrb[0].mxu0
      %v5588 = vadd.f32 %v5011, %v5587
      %v5589 = vpop.f32.mrb[0].mxu0
      %5590 = vmatprep.mubr.f32.mxu0 0.0
      %5591 = vmatmul.mubr.f32.gmra.mrb[0].mxu0 %v5257
      %v5592 = vpop.f32.mrb[0].mxu0
      %v5593 = vadd.f32 %v5016, %v5592
      %v5594 = vpop.f32.mrb[0].mxu0
      %5595 = vmatprep.mubr.f32.mxu0 0.0
      %5596 = vmatmul.mubr.f32.gmra.mrb[0].mxu0 %v5260
      %v5597 = vpop.f32.mrb[0].mxu0
      %v5598 = vadd.f32 %v5021, %v5597
      %v5599 = vpop.f32.mrb[0].mxu0
      %5600 = vmatprep.mubr.f32.mxu0 0.0
      %5601 = vmatmul.mubr.f32.gmra.mrb[0].mxu0 %v5263
      %v5602 = vpop.f32.mrb[0].mxu0
      %v5603 = vadd.f32 %v5026, %v5602
      %v5604 = vpop.f32.mrb[0].mxu0
      %5605 = vmatprep.mubr.f32.mxu0 0.0
      %5606 = vmatmul.mubr.f32.gmra.mrb[0].mxu0 %v5266
      %v5607 = vpop.f32.mrb[0].mxu0
      %v5608 = vadd.f32 %v5031, %v5607
      %v5609 = vpop.f32.mrb[0].mxu0
      %5610 = vmatprep.mubr.f32.mxu0 0.0
      %5611 = vmatmul.mubr.f32.gmra.mrb[0].mxu0 %v5269
      %v5612 = vpop.f32.mrb[0].mxu0
      %v5613 = vadd.f32 %v5036, %v5612
      %v5614 = vpop.f32.mrb[0].mxu0
      %5615 = vmatprep.mubr.f32.mxu0 0.0
      %5616 = vmatmul.mubr.f32.gmra.mrb[0].mxu0 %v5272
      %v5617 = vpop.f32.mrb[0].mxu0
      %v5618 = vadd.f32 %v5041, %v5617
      %v5619 = vpop.f32.mrb[0].mxu0
      %5620 = vmatprep.mubr.f32.mxu0 0.0
      %5621 = vmatmul.mubr.f32.gmra.mrb[0].mxu0 %v5275
      %v5622 = vpop.f32.mrb[0].mxu0
      %v5623 = vadd.f32 %v5046, %v5622
      %v5624 = vpop.f32.mrb[0].mxu0
      %5625 = vmatprep.mubr.f32.mxu0 0.0
      %5626 = vmatmul.mubr.f32.gmra.mrb[0].mxu0 %v5278
      %v5627 = vpop.f32.mrb[0].mxu0
      %v5628 = vadd.f32 %v5051, %v5627
      %v5629 = vpop.f32.mrb[0].mxu0
      %5630 = vmatprep.mubr.f32.mxu0 0.0
      %5631 = vmatmul.mubr.f32.gmra.mrb[0].mxu0 %v5281
      %v5632 = vpop.f32.mrb[0].mxu0
      %v5633 = vadd.f32 %v5056, %v5632
      %v5634 = vpop.f32.mrb[0].mxu0
      %5635 = vmatprep.mubr.f32.mxu0 0.0
      %5636 = vmatmul.mubr.f32.gmra.mrb[0].mxu0 %v5284
      %v5637 = vpop.f32.mrb[0].mxu0
      %v5638 = vadd.f32 %v5061, %v5637
      %v5639 = vpop.f32.mrb[0].mxu0
      %5640 = vmatprep.mubr.f32.mxu0 0.0
      %5641 = vmatmul.mubr.f32.gmra.mrb[0].mxu0 %v5287
      %v5642 = vpop.f32.mrb[0].mxu0
      %v5643 = vadd.f32 %v5066, %v5642
      %v5644 = vpop.f32.mrb[0].mxu0
      %5645 = vmatprep.mubr.f32.mxu0 0.0
      %5646 = vmatmul.mubr.f32.gmra.mrb[0].mxu0 %v5290
      %v5647 = vpop.f32.mrb[0].mxu0
      %v5648 = vadd.f32 %v5071, %v5647
      %v5649 = vpop.f32.mrb[0].mxu0
      %5650 = vmatprep.mubr.f32.mxu0 0.0
      %5651 = vmatmul.mubr.f32.gmra.mrb[0].mxu0 %v5293
      %v5652 = vpop.f32.mrb[0].mxu0
      %v5653 = vadd.f32 %v5076, %v5652
      %v5654 = vpop.f32.mrb[0].mxu0
      %5655 = vmatprep.mubr.f32.mxu0 0.0
      %5656 = vmatmul.mubr.f32.gmra.mrb[0].mxu0 %v5296
      %v5657 = vpop.f32.mrb[0].mxu0
      %v5658 = vadd.f32 %v5081, %v5657
      %v5659 = vpop.f32.mrb[0].mxu0
      %5660 = vmatprep.mubr.f32.mxu0 0.0
      %5661 = vmatmul.mubr.f32.gmra.mrb[0].mxu0 %v5299
      %v5662 = vpop.f32.mrb[0].mxu0
      %v5663 = vadd.f32 %v5086, %v5662
      %v5664 = vpop.f32.mrb[0].mxu0
      %5665 = vmatprep.mubr.f32.mxu0 0.0
      %5666 = vmatmul.mubr.f32.gmra.mrb[0].mxu0 %v5302
      %v5667 = vpop.f32.mrb[0].mxu0
      %v5668 = vadd.f32 %v5091, %v5667
      %v5669 = vpop.f32.mrb[0].mxu0
      %5670 = vmatprep.mubr.f32.mxu0 0.0
      %5671 = vmatmul.mubr.f32.gmra.mrb[0].mxu0 %v5305
      %v5672 = vpop.f32.mrb[0].mxu0
      %v5673 = vadd.f32 %v5096, %v5672
      %v5674 = vpop.f32.mrb[0].mxu0
      %5675 = vmatprep.mubr.f32.mxu0 0.0
      %5676 = vmatmul.mubr.f32.gmra.mrb[0].mxu0 %v5308
      %v5677 = vpop.f32.mrb[0].mxu0
      %v5678 = vadd.f32 %v5101, %v5677
      %v5679 = vpop.f32.mrb[0].mxu0
      %5680 = vmatprep.mubr.f32.mxu0 0.0
      %5681 = vmatmul.mubr.f32.gmra.mrb[0].mxu0 %v5311
      %v5682 = vpop.f32.mrb[0].mxu0
      %v5683 = vadd.f32 %v5106, %v5682
      %v5684 = vpop.f32.mrb[0].mxu0
      %5685 = vmatprep.mubr.f32.mxu0 0.0
      %5686 = vmatmul.mubr.f32.gmra.mrb[0].mxu0 %v5314
      %v5687 = vpop.f32.mrb[0].mxu0
      %v5688 = vadd.f32 %v5111, %v5687
      %v5689 = vpop.f32.mrb[0].mxu0
      %5690 = vmatprep.mubr.f32.mxu0 0.0
      %5691 = vmatmul.mubr.f32.gmra.mrb[0].mxu0 %v5317
      %v5692 = vpop.f32.mrb[0].mxu0
      %v5693 = vadd.f32 %v5116, %v5692
      %v5694 = vpop.f32.mrb[0].mxu0
      %5695 = vmatprep.mubr.f32.mxu0 0.0
      %5696 = vmatmul.mubr.f32.gmra.mrb[0].mxu0 %v5320
      %v5697 = vpop.f32.mrb[0].mxu0
      %v5698 = vadd.f32 %v5121, %v5697
      %v5699 = vpop.f32.mrb[0].mxu0
      %5700 = vmatprep.mubr.f32.mxu0 0.0
      %5701 = vmatmul.mubr.f32.gmra.mrb[0].mxu0 %v5323
      %v5702 = vpop.f32.mrb[0].mxu0
      %v5703 = vadd.f32 %v5126, %v5702
      %v5704 = vpop.f32.mrb[0].mxu0
      %5705 = vmatprep.mubr.f32.mxu0 0.0
      %5706 = vmatmul.mubr.f32.gmra.mrb[0].mxu0 %v5326
      %v5707 = vpop.f32.mrb[0].mxu0
      %v5708 = vadd.f32 %v5131, %v5707
      %v5709 = vpop.f32.mrb[0].mxu0
      %5710 = vmatprep.mubr.f32.mxu0 0.0
      %5711 = vmatmul.mubr.f32.gmra.mrb[0].mxu0 %v5329
      %v5712 = vpop.f32.mrb[0].mxu0
      %v5713 = vadd.f32 %v5136, %v5712
      %v5714 = vpop.f32.mrb[0].mxu0
      %5715 = vdwg.mxu0
      %s5716 = scalar_lea.vmem [#allocation2], 2
      %v5717 = vld [vmem:[%s5716] ss:$4 sm:$0xff]
      %s5718 = scalar_lea.vmem [#allocation2], 34
      %v5719 = vld [vmem:[%s5718] ss:$4 sm:$0xff]
      %s5720 = scalar_lea.vmem [#allocation2], 66
      %v5721 = vld [vmem:[%s5720] ss:$4 sm:$0xff]
      %s5722 = scalar_lea.vmem [#allocation2], 98
      %v5723 = vld [vmem:[%s5722] ss:$4 sm:$0xff]
      %s5724 = scalar_lea.vmem [#allocation2], 130
      %v5725 = vld [vmem:[%s5724] ss:$4 sm:$0xff]
      %s5726 = scalar_lea.vmem [#allocation2], 162
      %v5727 = vld [vmem:[%s5726] ss:$4 sm:$0xff]
      %s5728 = scalar_lea.vmem [#allocation2], 194
      %v5729 = vld [vmem:[%s5728] ss:$4 sm:$0xff]
      %s5730 = scalar_lea.vmem [#allocation2], 226
      %v5731 = vld [vmem:[%s5730] ss:$4 sm:$0xff]
      %s5732 = scalar_lea.vmem [#allocation2], 258
      %v5733 = vld [vmem:[%s5732] ss:$4 sm:$0xff]
      %s5734 = scalar_lea.vmem [#allocation2], 290
      %v5735 = vld [vmem:[%s5734] ss:$4 sm:$0xff]
      %s5736 = scalar_lea.vmem [#allocation2], 322
      %v5737 = vld [vmem:[%s5736] ss:$4 sm:$0xff]
      %s5738 = scalar_lea.vmem [#allocation2], 354
      %v5739 = vld [vmem:[%s5738] ss:$4 sm:$0xff]
      %s5740 = scalar_lea.vmem [#allocation2], 386
      %v5741 = vld [vmem:[%s5740] ss:$4 sm:$0xff]
      %s5742 = scalar_lea.vmem [#allocation2], 418
      %v5743 = vld [vmem:[%s5742] ss:$4 sm:$0xff]
      %s5744 = scalar_lea.vmem [#allocation2], 450
      %v5745 = vld [vmem:[%s5744] ss:$4 sm:$0xff]
      %s5746 = scalar_lea.vmem [#allocation2], 482
      %v5747 = vld [vmem:[%s5746] ss:$4 sm:$0xff]
      %s5748 = scalar_lea.vmem [#allocation2], 514
      %v5749 = vld [vmem:[%s5748] ss:$4 sm:$0xff]
      %s5750 = scalar_lea.vmem [#allocation2], 546
      %v5751 = vld [vmem:[%s5750] ss:$4 sm:$0xff]
      %s5752 = scalar_lea.vmem [#allocation2], 578
      %v5753 = vld [vmem:[%s5752] ss:$4 sm:$0xff]
      %s5754 = scalar_lea.vmem [#allocation2], 610
      %v5755 = vld [vmem:[%s5754] ss:$4 sm:$0xff]
      %s5756 = scalar_lea.vmem [#allocation2], 642
      %v5757 = vld [vmem:[%s5756] ss:$4 sm:$0xff]
      %s5758 = scalar_lea.vmem [#allocation2], 674
      %v5759 = vld [vmem:[%s5758] ss:$4 sm:$0xff]
      %s5760 = scalar_lea.vmem [#allocation2], 706
      %v5761 = vld [vmem:[%s5760] ss:$4 sm:$0xff]
      %s5762 = scalar_lea.vmem [#allocation2], 738
      %v5763 = vld [vmem:[%s5762] ss:$4 sm:$0xff]
      %s5764 = scalar_lea.vmem [#allocation2], 770
      %v5765 = vld [vmem:[%s5764] ss:$4 sm:$0xff]
      %s5766 = scalar_lea.vmem [#allocation2], 802
      %v5767 = vld [vmem:[%s5766] ss:$4 sm:$0xff]
      %s5768 = scalar_lea.vmem [#allocation2], 834
      %v5769 = vld [vmem:[%s5768] ss:$4 sm:$0xff]
      %s5770 = scalar_lea.vmem [#allocation2], 866
      %v5771 = vld [vmem:[%s5770] ss:$4 sm:$0xff]
      %s5772 = scalar_lea.vmem [#allocation2], 898
      %v5773 = vld [vmem:[%s5772] ss:$4 sm:$0xff]
      %s5774 = scalar_lea.vmem [#allocation2], 930
      %v5775 = vld [vmem:[%s5774] ss:$4 sm:$0xff]
      %s5776 = scalar_lea.vmem [#allocation2], 962
      %v5777 = vld [vmem:[%s5776] ss:$4 sm:$0xff]
      %s5778 = scalar_lea.vmem [#allocation2], 994
      %v5779 = vld [vmem:[%s5778] ss:$4 sm:$0xff]
      %s5780 = scalar_lea.vmem [#allocation2], 1026
      %v5781 = vld [vmem:[%s5780] ss:$4 sm:$0xff]
      %s5782 = scalar_lea.vmem [#allocation2], 1058
      %v5783 = vld [vmem:[%s5782] ss:$4 sm:$0xff]
      %s5784 = scalar_lea.vmem [#allocation2], 1090
      %v5785 = vld [vmem:[%s5784] ss:$4 sm:$0xff]
      %s5786 = scalar_lea.vmem [#allocation2], 1122
      %v5787 = vld [vmem:[%s5786] ss:$4 sm:$0xff]
      %s5788 = scalar_lea.vmem [#allocation2], 1154
      %v5789 = vld [vmem:[%s5788] ss:$4 sm:$0xff]
      %s5790 = scalar_lea.vmem [#allocation2], 1186
      %v5791 = vld [vmem:[%s5790] ss:$4 sm:$0xff]
      %s5792 = scalar_lea.vmem [#allocation2], 1218
      %v5793 = vld [vmem:[%s5792] ss:$4 sm:$0xff]
      %s5794 = scalar_lea.vmem [#allocation2], 1250
      %v5795 = vld [vmem:[%s5794] ss:$4 sm:$0xff]
      %s5796 = scalar_lea.vmem [#allocation2], 1282
      %v5797 = vld [vmem:[%s5796] ss:$4 sm:$0xff]
      %s5798 = scalar_lea.vmem [#allocation2], 1314
      %v5799 = vld [vmem:[%s5798] ss:$4 sm:$0xff]
      %s5800 = scalar_lea.vmem [#allocation2], 1346
      %v5801 = vld [vmem:[%s5800] ss:$4 sm:$0xff]
      %s5802 = scalar_lea.vmem [#allocation2], 1378
      %v5803 = vld [vmem:[%s5802] ss:$4 sm:$0xff]
      %s5804 = scalar_lea.vmem [#allocation2], 1410
      %v5805 = vld [vmem:[%s5804] ss:$4 sm:$0xff]
      %s5806 = scalar_lea.vmem [#allocation2], 1442
      %v5807 = vld [vmem:[%s5806] ss:$4 sm:$0xff]
      %s5808 = scalar_lea.vmem [#allocation2], 1474
      %v5809 = vld [vmem:[%s5808] ss:$4 sm:$0xff]
      %s5810 = scalar_lea.vmem [#allocation2], 1506
      %v5811 = vld [vmem:[%s5810] ss:$4 sm:$0xff]
      %s5812 = scalar_lea.vmem [#allocation2], 1538
      %v5813 = vld [vmem:[%s5812] ss:$4 sm:$0xff]
      %s5814 = scalar_lea.vmem [#allocation2], 1570
      %v5815 = vld [vmem:[%s5814] ss:$4 sm:$0xff]
      %s5816 = scalar_lea.vmem [#allocation2], 1602
      %v5817 = vld [vmem:[%s5816] ss:$4 sm:$0xff]
      %s5818 = scalar_lea.vmem [#allocation2], 1634
      %v5819 = vld [vmem:[%s5818] ss:$4 sm:$0xff]
      %s5820 = scalar_lea.vmem [#allocation2], 1666
      %v5821 = vld [vmem:[%s5820] ss:$4 sm:$0xff]
      %s5822 = scalar_lea.vmem [#allocation2], 1698
      %v5823 = vld [vmem:[%s5822] ss:$4 sm:$0xff]
      %s5824 = scalar_lea.vmem [#allocation2], 1730
      %v5825 = vld [vmem:[%s5824] ss:$4 sm:$0xff]
      %s5826 = scalar_lea.vmem [#allocation2], 1762
      %v5827 = vld [vmem:[%s5826] ss:$4 sm:$0xff]
      %s5828 = scalar_lea.vmem [#allocation2], 1794
      %v5829 = vld [vmem:[%s5828] ss:$4 sm:$0xff]
      %s5830 = scalar_lea.vmem [#allocation2], 1826
      %v5831 = vld [vmem:[%s5830] ss:$4 sm:$0xff]
      %s5832 = scalar_lea.vmem [#allocation2], 1858
      %v5833 = vld [vmem:[%s5832] ss:$4 sm:$0xff]
      %s5834 = scalar_lea.vmem [#allocation2], 1890
      %v5835 = vld [vmem:[%s5834] ss:$4 sm:$0xff]
      %s5836 = scalar_lea.vmem [#allocation2], 1922
      %v5837 = vld [vmem:[%s5836] ss:$4 sm:$0xff]
      %s5838 = scalar_lea.vmem [#allocation2], 1954
      %v5839 = vld [vmem:[%s5838] ss:$4 sm:$0xff]
      %s5840 = scalar_lea.vmem [#allocation2], 1986
      %v5841 = vld [vmem:[%s5840] ss:$4 sm:$0xff]
      %s5842 = scalar_lea.vmem [#allocation2], 2018
      %v5843 = vld [vmem:[%s5842] ss:$4 sm:$0xff]
      %v5844 = vld [vmem:[%s7 + $0x10] sm:$0xff]
      %v5846 = vsel %vm4048, %v5717, 0
      %v5849 = vsel %vm4048, %v5719, 0
      %v5852 = vsel %vm4048, %v5721, 0
      %v5855 = vsel %vm4048, %v5723, 0
      %v5858 = vsel %vm4048, %v5725, 0
      %v5861 = vsel %vm4048, %v5727, 0
      %v5864 = vsel %vm4048, %v5729, 0
      %v5867 = vsel %vm4048, %v5731, 0
      %v5870 = vsel %vm4048, %v5733, 0
      %v5873 = vsel %vm4048, %v5735, 0
      %v5876 = vsel %vm4048, %v5737, 0
      %v5879 = vsel %vm4048, %v5739, 0
      %v5882 = vsel %vm4048, %v5741, 0
      %v5885 = vsel %vm4048, %v5743, 0
      %v5888 = vsel %vm4048, %v5745, 0
      %v5891 = vsel %vm4048, %v5747, 0
      %v5894 = vsel %vm4048, %v5749, 0
      %v5897 = vsel %vm4048, %v5751, 0
      %v5900 = vsel %vm4048, %v5753, 0
      %v5903 = vsel %vm4048, %v5755, 0
      %v5906 = vsel %vm4048, %v5757, 0
      %v5909 = vsel %vm4048, %v5759, 0
      %v5912 = vsel %vm4048, %v5761, 0
      %v5915 = vsel %vm4048, %v5763, 0
      %v5918 = vsel %vm4048, %v5765, 0
      %v5921 = vsel %vm4048, %v5767, 0
      %v5924 = vsel %vm4048, %v5769, 0
      %v5927 = vsel %vm4048, %v5771, 0
      %v5930 = vsel %vm4048, %v5773, 0
      %v5933 = vsel %vm4048, %v5775, 0
      %v5936 = vsel %vm4048, %v5777, 0
      %v5939 = vsel %vm4048, %v5779, 0
      %v5942 = vsel %vm4048, %v5781, 0
      %v5945 = vsel %vm4048, %v5783, 0
      %v5948 = vsel %vm4048, %v5785, 0
      %v5951 = vsel %vm4048, %v5787, 0
      %v5954 = vsel %vm4048, %v5789, 0
      %v5957 = vsel %vm4048, %v5791, 0
      %v5960 = vsel %vm4048, %v5793, 0
      %v5963 = vsel %vm4048, %v5795, 0
      %v5966 = vsel %vm4048, %v5797, 0
      %v5969 = vsel %vm4048, %v5799, 0
      %v5972 = vsel %vm4048, %v5801, 0
      %v5975 = vsel %vm4048, %v5803, 0
      %v5978 = vsel %vm4048, %v5805, 0
      %v5981 = vsel %vm4048, %v5807, 0
      %v5984 = vsel %vm4048, %v5809, 0
      %v5987 = vsel %vm4048, %v5811, 0
      %v5990 = vsel %vm4048, %v5813, 0
      %v5993 = vsel %vm4048, %v5815, 0
      %v5996 = vsel %vm4048, %v5817, 0
      %v5999 = vsel %vm4048, %v5819, 0
      %v6002 = vsel %vm4048, %v5821, 0
      %v6005 = vsel %vm4048, %v5823, 0
      %v6008 = vsel %vm4048, %v5825, 0
      %v6011 = vsel %vm4048, %v5827, 0
      %v6014 = vsel %vm4048, %v5829, 0
      %v6017 = vsel %vm4048, %v5831, 0
      %v6020 = vsel %vm4048, %v5833, 0
      %v6023 = vsel %vm4048, %v5835, 0
      %v6026 = vsel %vm4048, %v5837, 0
      %v6029 = vsel %vm4048, %v5839, 0
      %v6032 = vsel %vm4048, %v5841, 0
      %v6035 = vsel %vm4048, %v5843, 0
      %6037 = vmatprep.subr.mxu0 0.0
      %6038 = vmatpush1.msra.mxu0 %v5844
      %6039 = vmatprep.subr.mxu0 0.0
      %6040 = vmatpush1.msra.mxu0 0.0
      %6041 = vmatprep.subr.mxu0 0.0
      %6042 = vmatpush1.msra.mxu0 0.0
      %6043 = vmatprep.subr.mxu0 0.0
      %6044 = vmatpush1.msra.mxu0 0.0
      %6045 = vmatprep.subr.mxu0 0.0
      %6046 = vmatpush1.msra.mxu0 0.0
      %6047 = vmatprep.subr.mxu0 0.0
      %6048 = vmatpush1.msra.mxu0 0.0
      %6049 = vmatprep.subr.mxu0 0.0
      %6050 = vmatpush1.msra.mxu0 0.0
      %6051 = vmatprep.subr.mxu0 0.0
      %6052 = vmatpush1.msra.mxu0 0.0
      %6053 = vmatprep.subr.mxu0 0.0
      %6054 = vmatpush1.msra.mxu0 0.0
      %6055 = vmatprep.subr.mxu0 0.0
      %6056 = vmatpush1.msra.mxu0 0.0
      %6057 = vmatprep.subr.mxu0 0.0
      %6058 = vmatpush1.msra.mxu0 0.0
      %6059 = vmatprep.subr.mxu0 0.0
      %6060 = vmatpush1.msra.mxu0 0.0
      %6061 = vmatprep.subr.mxu0 0.0
      %6062 = vmatpush1.msra.mxu0 0.0
      %6063 = vmatprep.subr.mxu0 0.0
      %6064 = vmatpush1.msra.mxu0 0.0
      %6065 = vmatprep.subr.mxu0 0.0
      %6066 = vmatpush1.msra.mxu0 0.0
      %6067 = vmatprep.subr.mxu0 0.0
      %6068 = vmatpush1.msra.mxu0 0.0
      %6069 = vmatprep.subr.mxu0 0.0
      %6070 = vmatpush1.msra.mxu0 0.0
      %6071 = vmatprep.subr.mxu0 0.0
      %6072 = vmatpush1.msra.mxu0 0.0
      %6073 = vmatprep.subr.mxu0 0.0
      %6074 = vmatpush1.msra.mxu0 0.0
      %6075 = vmatprep.subr.mxu0 0.0
      %6076 = vmatpush1.msra.mxu0 0.0
      %6077 = vmatprep.subr.mxu0 0.0
      %6078 = vmatpush1.msra.mxu0 0.0
      %6079 = vmatprep.subr.mxu0 0.0
      %6080 = vmatpush1.msra.mxu0 0.0
      %6081 = vmatprep.subr.mxu0 0.0
      %6082 = vmatpush1.msra.mxu0 0.0
      %6083 = vmatprep.subr.mxu0 0.0
      %6084 = vmatpush1.msra.mxu0 0.0
      %6085 = vmatprep.subr.mxu0 0.0
      %6086 = vmatpush1.msra.mxu0 0.0
      %6087 = vmatprep.subr.mxu0 0.0
      %6088 = vmatpush1.msra.mxu0 0.0
      %6089 = vmatprep.subr.mxu0 0.0
      %6090 = vmatpush1.msra.mxu0 0.0
      %6091 = vmatprep.subr.mxu0 0.0
      %6092 = vmatpush1.msra.mxu0 0.0
      %6093 = vmatprep.subr.mxu0 0.0
      %6094 = vmatpush1.msra.mxu0 0.0
      %6095 = vmatprep.subr.mxu0 0.0
      %6096 = vmatpush1.msra.mxu0 0.0
      %6097 = vmatprep.subr.mxu0 0.0
      %6098 = vmatpush1.msra.mxu0 0.0
      %6099 = vmatprep.subr.mxu0 0.0
      %6100 = vmatpush1.msra.mxu0 0.0
      %6101 = vmatprep.mubr.f32.mxu0 0.0
      %6102 = vmatmul.mubr.f32.gmra.mrb[0].mxu0 %v5846
      %v6103 = vpop.f32.mrb[0].mxu0
      %v6104 = vadd.f32 0.0, %v6103
      %v6105 = vpop.f32.mrb[0].mxu0
      %6106 = vmatprep.mubr.f32.mxu0 0.0
      %6107 = vmatmul.mubr.f32.gmra.mrb[0].mxu0 %v5849
      %v6108 = vpop.f32.mrb[0].mxu0
      %v6109 = vadd.f32 0.0, %v6108
      %v6110 = vpop.f32.mrb[0].mxu0
      %6111 = vmatprep.mubr.f32.mxu0 0.0
      %6112 = vmatmul.mubr.f32.gmra.mrb[0].mxu0 %v5852
      %v6113 = vpop.f32.mrb[0].mxu0
      %v6114 = vadd.f32 0.0, %v6113
      %v6115 = vpop.f32.mrb[0].mxu0
      %6116 = vmatprep.mubr.f32.mxu0 0.0
      %6117 = vmatmul.mubr.f32.gmra.mrb[0].mxu0 %v5855
      %v6118 = vpop.f32.mrb[0].mxu0
      %v6119 = vadd.f32 0.0, %v6118
      %v6120 = vpop.f32.mrb[0].mxu0
      %6121 = vmatprep.mubr.f32.mxu0 0.0
      %6122 = vmatmul.mubr.f32.gmra.mrb[0].mxu0 %v5858
      %v6123 = vpop.f32.mrb[0].mxu0
      %v6124 = vadd.f32 0.0, %v6123
      %v6125 = vpop.f32.mrb[0].mxu0
      %6126 = vmatprep.mubr.f32.mxu0 0.0
      %6127 = vmatmul.mubr.f32.gmra.mrb[0].mxu0 %v5861
      %v6128 = vpop.f32.mrb[0].mxu0
      %v6129 = vadd.f32 0.0, %v6128
      %v6130 = vpop.f32.mrb[0].mxu0
      %6131 = vmatprep.mubr.f32.mxu0 0.0
      %6132 = vmatmul.mubr.f32.gmra.mrb[0].mxu0 %v5864
      %v6133 = vpop.f32.mrb[0].mxu0
      %v6134 = vadd.f32 0.0, %v6133
      %v6135 = vpop.f32.mrb[0].mxu0
      %6136 = vmatprep.mubr.f32.mxu0 0.0
      %6137 = vmatmul.mubr.f32.gmra.mrb[0].mxu0 %v5867
      %v6138 = vpop.f32.mrb[0].mxu0
      %v6139 = vadd.f32 0.0, %v6138
      %v6140 = vpop.f32.mrb[0].mxu0
      %6141 = vmatprep.mubr.f32.mxu0 0.0
      %6142 = vmatmul.mubr.f32.gmra.mrb[0].mxu0 %v5870
      %v6143 = vpop.f32.mrb[0].mxu0
      %v6144 = vadd.f32 0.0, %v6143
      %v6145 = vpop.f32.mrb[0].mxu0
      %6146 = vmatprep.mubr.f32.mxu0 0.0
      %6147 = vmatmul.mubr.f32.gmra.mrb[0].mxu0 %v5873
      %v6148 = vpop.f32.mrb[0].mxu0
      %v6149 = vadd.f32 0.0, %v6148
      %v6150 = vpop.f32.mrb[0].mxu0
      %6151 = vmatprep.mubr.f32.mxu0 0.0
      %6152 = vmatmul.mubr.f32.gmra.mrb[0].mxu0 %v5876
      %v6153 = vpop.f32.mrb[0].mxu0
      %v6154 = vadd.f32 0.0, %v6153
      %v6155 = vpop.f32.mrb[0].mxu0
      %6156 = vmatprep.mubr.f32.mxu0 0.0
      %6157 = vmatmul.mubr.f32.gmra.mrb[0].mxu0 %v5879
      %v6158 = vpop.f32.mrb[0].mxu0
      %v6159 = vadd.f32 0.0, %v6158
      %v6160 = vpop.f32.mrb[0].mxu0
      %6161 = vmatprep.mubr.f32.mxu0 0.0
      %6162 = vmatmul.mubr.f32.gmra.mrb[0].mxu0 %v5882
      %v6163 = vpop.f32.mrb[0].mxu0
      %v6164 = vadd.f32 0.0, %v6163
      %v6165 = vpop.f32.mrb[0].mxu0
      %6166 = vmatprep.mubr.f32.mxu0 0.0
      %6167 = vmatmul.mubr.f32.gmra.mrb[0].mxu0 %v5885
      %v6168 = vpop.f32.mrb[0].mxu0
      %v6169 = vadd.f32 0.0, %v6168
      %v6170 = vpop.f32.mrb[0].mxu0
      %6171 = vmatprep.mubr.f32.mxu0 0.0
      %6172 = vmatmul.mubr.f32.gmra.mrb[0].mxu0 %v5888
      %v6173 = vpop.f32.mrb[0].mxu0
      %v6174 = vadd.f32 0.0, %v6173
      %v6175 = vpop.f32.mrb[0].mxu0
      %6176 = vmatprep.mubr.f32.mxu0 0.0
      %6177 = vmatmul.mubr.f32.gmra.mrb[0].mxu0 %v5891
      %v6178 = vpop.f32.mrb[0].mxu0
      %v6179 = vadd.f32 0.0, %v6178
      %v6180 = vpop.f32.mrb[0].mxu0
      %6181 = vmatprep.mubr.f32.mxu0 0.0
      %6182 = vmatmul.mubr.f32.gmra.mrb[0].mxu0 %v5894
      %v6183 = vpop.f32.mrb[0].mxu0
      %v6184 = vadd.f32 0.0, %v6183
      %v6185 = vpop.f32.mrb[0].mxu0
      %6186 = vmatprep.mubr.f32.mxu0 0.0
      %6187 = vmatmul.mubr.f32.gmra.mrb[0].mxu0 %v5897
      %v6188 = vpop.f32.mrb[0].mxu0
      %v6189 = vadd.f32 0.0, %v6188
      %v6190 = vpop.f32.mrb[0].mxu0
      %6191 = vmatprep.mubr.f32.mxu0 0.0
      %6192 = vmatmul.mubr.f32.gmra.mrb[0].mxu0 %v5900
      %v6193 = vpop.f32.mrb[0].mxu0
      %v6194 = vadd.f32 0.0, %v6193
      %v6195 = vpop.f32.mrb[0].mxu0
      %6196 = vmatprep.mubr.f32.mxu0 0.0
      %6197 = vmatmul.mubr.f32.gmra.mrb[0].mxu0 %v5903
      %v6198 = vpop.f32.mrb[0].mxu0
      %v6199 = vadd.f32 0.0, %v6198
      %v6200 = vpop.f32.mrb[0].mxu0
      %6201 = vmatprep.mubr.f32.mxu0 0.0
      %6202 = vmatmul.mubr.f32.gmra.mrb[0].mxu0 %v5906
      %v6203 = vpop.f32.mrb[0].mxu0
      %v6204 = vadd.f32 0.0, %v6203
      %v6205 = vpop.f32.mrb[0].mxu0
      %6206 = vmatprep.mubr.f32.mxu0 0.0
      %6207 = vmatmul.mubr.f32.gmra.mrb[0].mxu0 %v5909
      %v6208 = vpop.f32.mrb[0].mxu0
      %v6209 = vadd.f32 0.0, %v6208
      %v6210 = vpop.f32.mrb[0].mxu0
      %6211 = vmatprep.mubr.f32.mxu0 0.0
      %6212 = vmatmul.mubr.f32.gmra.mrb[0].mxu0 %v5912
      %v6213 = vpop.f32.mrb[0].mxu0
      %v6214 = vadd.f32 0.0, %v6213
      %v6215 = vpop.f32.mrb[0].mxu0
      %6216 = vmatprep.mubr.f32.mxu0 0.0
      %6217 = vmatmul.mubr.f32.gmra.mrb[0].mxu0 %v5915
      %v6218 = vpop.f32.mrb[0].mxu0
      %v6219 = vadd.f32 0.0, %v6218
      %v6220 = vpop.f32.mrb[0].mxu0
      %6221 = vmatprep.mubr.f32.mxu0 0.0
      %6222 = vmatmul.mubr.f32.gmra.mrb[0].mxu0 %v5918
      %v6223 = vpop.f32.mrb[0].mxu0
      %v6224 = vadd.f32 0.0, %v6223
      %v6225 = vpop.f32.mrb[0].mxu0
      %6226 = vmatprep.mubr.f32.mxu0 0.0
      %6227 = vmatmul.mubr.f32.gmra.mrb[0].mxu0 %v5921
      %v6228 = vpop.f32.mrb[0].mxu0
      %v6229 = vadd.f32 0.0, %v6228
      %v6230 = vpop.f32.mrb[0].mxu0
      %6231 = vmatprep.mubr.f32.mxu0 0.0
      %6232 = vmatmul.mubr.f32.gmra.mrb[0].mxu0 %v5924
      %v6233 = vpop.f32.mrb[0].mxu0
      %v6234 = vadd.f32 0.0, %v6233
      %v6235 = vpop.f32.mrb[0].mxu0
      %6236 = vmatprep.mubr.f32.mxu0 0.0
      %6237 = vmatmul.mubr.f32.gmra.mrb[0].mxu0 %v5927
      %v6238 = vpop.f32.mrb[0].mxu0
      %v6239 = vadd.f32 0.0, %v6238
      %v6240 = vpop.f32.mrb[0].mxu0
      %6241 = vmatprep.mubr.f32.mxu0 0.0
      %6242 = vmatmul.mubr.f32.gmra.mrb[0].mxu0 %v5930
      %v6243 = vpop.f32.mrb[0].mxu0
      %v6244 = vadd.f32 0.0, %v6243
      %v6245 = vpop.f32.mrb[0].mxu0
      %6246 = vmatprep.mubr.f32.mxu0 0.0
      %6247 = vmatmul.mubr.f32.gmra.mrb[0].mxu0 %v5933
      %v6248 = vpop.f32.mrb[0].mxu0
      %v6249 = vadd.f32 0.0, %v6248
      %v6250 = vpop.f32.mrb[0].mxu0
      %6251 = vmatprep.mubr.f32.mxu0 0.0
      %6252 = vmatmul.mubr.f32.gmra.mrb[0].mxu0 %v5936
      %v6253 = vpop.f32.mrb[0].mxu0
      %v6254 = vadd.f32 0.0, %v6253
      %v6255 = vpop.f32.mrb[0].mxu0
      %6256 = vmatprep.mubr.f32.mxu0 0.0
      %6257 = vmatmul.mubr.f32.gmra.mrb[0].mxu0 %v5939
      %v6258 = vpop.f32.mrb[0].mxu0
      %v6259 = vadd.f32 0.0, %v6258
      %v6260 = vpop.f32.mrb[0].mxu0
      %6261 = vmatprep.mubr.f32.mxu0 0.0
      %6262 = vmatmul.mubr.f32.gmra.mrb[0].mxu0 %v5942
      %v6263 = vpop.f32.mrb[0].mxu0
      %v6264 = vadd.f32 0.0, %v6263
      %v6265 = vpop.f32.mrb[0].mxu0
      %6266 = vmatprep.mubr.f32.mxu0 0.0
      %6267 = vmatmul.mubr.f32.gmra.mrb[0].mxu0 %v5945
      %v6268 = vpop.f32.mrb[0].mxu0
      %v6269 = vadd.f32 0.0, %v6268
      %v6270 = vpop.f32.mrb[0].mxu0
      %6271 = vmatprep.mubr.f32.mxu0 0.0
      %6272 = vmatmul.mubr.f32.gmra.mrb[0].mxu0 %v5948
      %v6273 = vpop.f32.mrb[0].mxu0
      %v6274 = vadd.f32 0.0, %v6273
      %v6275 = vpop.f32.mrb[0].mxu0
      %6276 = vmatprep.mubr.f32.mxu0 0.0
      %6277 = vmatmul.mubr.f32.gmra.mrb[0].mxu0 %v5951
      %v6278 = vpop.f32.mrb[0].mxu0
      %v6279 = vadd.f32 0.0, %v6278
      %v6280 = vpop.f32.mrb[0].mxu0
      %6281 = vmatprep.mubr.f32.mxu0 0.0
      %6282 = vmatmul.mubr.f32.gmra.mrb[0].mxu0 %v5954
      %v6283 = vpop.f32.mrb[0].mxu0
      %v6284 = vadd.f32 0.0, %v6283
      %v6285 = vpop.f32.mrb[0].mxu0
      %6286 = vmatprep.mubr.f32.mxu0 0.0
      %6287 = vmatmul.mubr.f32.gmra.mrb[0].mxu0 %v5957
      %v6288 = vpop.f32.mrb[0].mxu0
      %v6289 = vadd.f32 0.0, %v6288
      %v6290 = vpop.f32.mrb[0].mxu0
      %6291 = vmatprep.mubr.f32.mxu0 0.0
      %6292 = vmatmul.mubr.f32.gmra.mrb[0].mxu0 %v5960
      %v6293 = vpop.f32.mrb[0].mxu0
      %v6294 = vadd.f32 0.0, %v6293
      %v6295 = vpop.f32.mrb[0].mxu0
      %6296 = vmatprep.mubr.f32.mxu0 0.0
      %6297 = vmatmul.mubr.f32.gmra.mrb[0].mxu0 %v5963
      %v6298 = vpop.f32.mrb[0].mxu0
      %v6299 = vadd.f32 0.0, %v6298
      %v6300 = vpop.f32.mrb[0].mxu0
      %6301 = vmatprep.mubr.f32.mxu0 0.0
      %6302 = vmatmul.mubr.f32.gmra.mrb[0].mxu0 %v5966
      %v6303 = vpop.f32.mrb[0].mxu0
      %v6304 = vadd.f32 0.0, %v6303
      %v6305 = vpop.f32.mrb[0].mxu0
      %6306 = vmatprep.mubr.f32.mxu0 0.0
      %6307 = vmatmul.mubr.f32.gmra.mrb[0].mxu0 %v5969
      %v6308 = vpop.f32.mrb[0].mxu0
      %v6309 = vadd.f32 0.0, %v6308
      %v6310 = vpop.f32.mrb[0].mxu0
      %6311 = vmatprep.mubr.f32.mxu0 0.0
      %6312 = vmatmul.mubr.f32.gmra.mrb[0].mxu0 %v5972
      %v6313 = vpop.f32.mrb[0].mxu0
      %v6314 = vadd.f32 0.0, %v6313
      %v6315 = vpop.f32.mrb[0].mxu0
      %6316 = vmatprep.mubr.f32.mxu0 0.0
      %6317 = vmatmul.mubr.f32.gmra.mrb[0].mxu0 %v5975
      %v6318 = vpop.f32.mrb[0].mxu0
      %v6319 = vadd.f32 0.0, %v6318
      %v6320 = vpop.f32.mrb[0].mxu0
      %6321 = vmatprep.mubr.f32.mxu0 0.0
      %6322 = vmatmul.mubr.f32.gmra.mrb[0].mxu0 %v5978
      %v6323 = vpop.f32.mrb[0].mxu0
      %v6324 = vadd.f32 0.0, %v6323
      %v6325 = vpop.f32.mrb[0].mxu0
      %6326 = vmatprep.mubr.f32.mxu0 0.0
      %6327 = vmatmul.mubr.f32.gmra.mrb[0].mxu0 %v5981
      %v6328 = vpop.f32.mrb[0].mxu0
      %v6329 = vadd.f32 0.0, %v6328
      %v6330 = vpop.f32.mrb[0].mxu0
      %6331 = vmatprep.mubr.f32.mxu0 0.0
      %6332 = vmatmul.mubr.f32.gmra.mrb[0].mxu0 %v5984
      %v6333 = vpop.f32.mrb[0].mxu0
      %v6334 = vadd.f32 0.0, %v6333
      %v6335 = vpop.f32.mrb[0].mxu0
      %6336 = vmatprep.mubr.f32.mxu0 0.0
      %6337 = vmatmul.mubr.f32.gmra.mrb[0].mxu0 %v5987
      %v6338 = vpop.f32.mrb[0].mxu0
      %v6339 = vadd.f32 0.0, %v6338
      %v6340 = vpop.f32.mrb[0].mxu0
      %6341 = vmatprep.mubr.f32.mxu0 0.0
      %6342 = vmatmul.mubr.f32.gmra.mrb[0].mxu0 %v5990
      %v6343 = vpop.f32.mrb[0].mxu0
      %v6344 = vadd.f32 0.0, %v6343
      %v6345 = vpop.f32.mrb[0].mxu0
      %6346 = vmatprep.mubr.f32.mxu0 0.0
      %6347 = vmatmul.mubr.f32.gmra.mrb[0].mxu0 %v5993
      %v6348 = vpop.f32.mrb[0].mxu0
      %v6349 = vadd.f32 0.0, %v6348
      %v6350 = vpop.f32.mrb[0].mxu0
      %6351 = vmatprep.mubr.f32.mxu0 0.0
      %6352 = vmatmul.mubr.f32.gmra.mrb[0].mxu0 %v5996
      %v6353 = vpop.f32.mrb[0].mxu0
      %v6354 = vadd.f32 0.0, %v6353
      %v6355 = vpop.f32.mrb[0].mxu0
      %6356 = vmatprep.mubr.f32.mxu0 0.0
      %6357 = vmatmul.mubr.f32.gmra.mrb[0].mxu0 %v5999
      %v6358 = vpop.f32.mrb[0].mxu0
      %v6359 = vadd.f32 0.0, %v6358
      %v6360 = vpop.f32.mrb[0].mxu0
      %6361 = vmatprep.mubr.f32.mxu0 0.0
      %6362 = vmatmul.mubr.f32.gmra.mrb[0].mxu0 %v6002
      %v6363 = vpop.f32.mrb[0].mxu0
      %v6364 = vadd.f32 0.0, %v6363
      %v6365 = vpop.f32.mrb[0].mxu0
      %6366 = vmatprep.mubr.f32.mxu0 0.0
      %6367 = vmatmul.mubr.f32.gmra.mrb[0].mxu0 %v6005
      %v6368 = vpop.f32.mrb[0].mxu0
      %v6369 = vadd.f32 0.0, %v6368
      %v6370 = vpop.f32.mrb[0].mxu0
      %6371 = vmatprep.mubr.f32.mxu0 0.0
      %6372 = vmatmul.mubr.f32.gmra.mrb[0].mxu0 %v6008
      %v6373 = vpop.f32.mrb[0].mxu0
      %v6374 = vadd.f32 0.0, %v6373
      %v6375 = vpop.f32.mrb[0].mxu0
      %6376 = vmatprep.mubr.f32.mxu0 0.0
      %6377 = vmatmul.mubr.f32.gmra.mrb[0].mxu0 %v6011
      %v6378 = vpop.f32.mrb[0].mxu0
      %v6379 = vadd.f32 0.0, %v6378
      %v6380 = vpop.f32.mrb[0].mxu0
      %6381 = vmatprep.mubr.f32.mxu0 0.0
      %6382 = vmatmul.mubr.f32.gmra.mrb[0].mxu0 %v6014
      %v6383 = vpop.f32.mrb[0].mxu0
      %v6384 = vadd.f32 0.0, %v6383
      %v6385 = vpop.f32.mrb[0].mxu0
      %6386 = vmatprep.mubr.f32.mxu0 0.0
      %6387 = vmatmul.mubr.f32.gmra.mrb[0].mxu0 %v6017
      %v6388 = vpop.f32.mrb[0].mxu0
      %v6389 = vadd.f32 0.0, %v6388
      %v6390 = vpop.f32.mrb[0].mxu0
      %6391 = vmatprep.mubr.f32.mxu0 0.0
      %6392 = vmatmul.mubr.f32.gmra.mrb[0].mxu0 %v6020
      %v6393 = vpop.f32.mrb[0].mxu0
      %v6394 = vadd.f32 0.0, %v6393
      %v6395 = vpop.f32.mrb[0].mxu0
      %6396 = vmatprep.mubr.f32.mxu0 0.0
      %6397 = vmatmul.mubr.f32.gmra.mrb[0].mxu0 %v6023
      %v6398 = vpop.f32.mrb[0].mxu0
      %v6399 = vadd.f32 0.0, %v6398
      %v6400 = vpop.f32.mrb[0].mxu0
      %6401 = vmatprep.mubr.f32.mxu0 0.0
      %6402 = vmatmul.mubr.f32.gmra.mrb[0].mxu0 %v6026
      %v6403 = vpop.f32.mrb[0].mxu0
      %v6404 = vadd.f32 0.0, %v6403
      %v6405 = vpop.f32.mrb[0].mxu0
      %6406 = vmatprep.mubr.f32.mxu0 0.0
      %6407 = vmatmul.mubr.f32.gmra.mrb[0].mxu0 %v6029
      %v6408 = vpop.f32.mrb[0].mxu0
      %v6409 = vadd.f32 0.0, %v6408
      %v6410 = vpop.f32.mrb[0].mxu0
      %6411 = vmatprep.mubr.f32.mxu0 0.0
      %6412 = vmatmul.mubr.f32.gmra.mrb[0].mxu0 %v6032
      %v6413 = vpop.f32.mrb[0].mxu0
      %v6414 = vadd.f32 0.0, %v6413
      %v6415 = vpop.f32.mrb[0].mxu0
      %6416 = vmatprep.mubr.f32.mxu0 0.0
      %6417 = vmatmul.mubr.f32.gmra.mrb[0].mxu0 %v6035
      %v6418 = vpop.f32.mrb[0].mxu0
      %v6419 = vadd.f32 0.0, %v6418
      %v6420 = vpop.f32.mrb[0].mxu0
      %6421 = vdwg.mxu0
      %v6422 = vadd.f32 %v5398, %v6104
      %v6423 = vadd.f32 %v5403, %v6109
      %v6424 = vadd.f32 %v5408, %v6114
      %v6425 = vadd.f32 %v5413, %v6119
      %v6426 = vadd.f32 %v5418, %v6124
      %v6427 = vadd.f32 %v5423, %v6129
      %v6428 = vadd.f32 %v5428, %v6134
      %v6429 = vadd.f32 %v5433, %v6139
      %v6430 = vadd.f32 %v5438, %v6144
      %v6431 = vadd.f32 %v5443, %v6149
      %v6432 = vadd.f32 %v5448, %v6154
      %v6433 = vadd.f32 %v5453, %v6159
      %v6434 = vadd.f32 %v5458, %v6164
      %v6435 = vadd.f32 %v5463, %v6169
      %v6436 = vadd.f32 %v5468, %v6174
      %v6437 = vadd.f32 %v5473, %v6179
      %v6438 = vadd.f32 %v5478, %v6184
      %v6439 = vadd.f32 %v5483, %v6189
      %v6440 = vadd.f32 %v5488, %v6194
      %v6441 = vadd.f32 %v5493, %v6199
      %v6442 = vadd.f32 %v5498, %v6204
      %v6443 = vadd.f32 %v5503, %v6209
      %v6444 = vadd.f32 %v5508, %v6214
      %v6445 = vadd.f32 %v5513, %v6219
      %v6446 = vadd.f32 %v5518, %v6224
      %v6447 = vadd.f32 %v5523, %v6229
      %v6448 = vadd.f32 %v5528, %v6234
      %v6449 = vadd.f32 %v5533, %v6239
      %v6450 = vadd.f32 %v5538, %v6244
      %v6451 = vadd.f32 %v5543, %v6249
      %v6452 = vadd.f32 %v5548, %v6254
      %v6453 = vadd.f32 %v5553, %v6259
      %v6454 = vadd.f32 %v5558, %v6264
      %v6455 = vadd.f32 %v5563, %v6269
      %v6456 = vadd.f32 %v5568, %v6274
      %v6457 = vadd.f32 %v5573, %v6279
      %v6458 = vadd.f32 %v5578, %v6284
      %v6459 = vadd.f32 %v5583, %v6289
      %v6460 = vadd.f32 %v5588, %v6294
      %v6461 = vadd.f32 %v5593, %v6299
      %v6462 = vadd.f32 %v5598, %v6304
      %v6463 = vadd.f32 %v5603, %v6309
      %v6464 = vadd.f32 %v5608, %v6314
      %v6465 = vadd.f32 %v5613, %v6319
      %v6466 = vadd.f32 %v5618, %v6324
      %v6467 = vadd.f32 %v5623, %v6329
      %v6468 = vadd.f32 %v5628, %v6334
      %v6469 = vadd.f32 %v5633, %v6339
      %v6470 = vadd.f32 %v5638, %v6344
      %v6471 = vadd.f32 %v5643, %v6349
      %v6472 = vadd.f32 %v5648, %v6354
      %v6473 = vadd.f32 %v5653, %v6359
      %v6474 = vadd.f32 %v5658, %v6364
      %v6475 = vadd.f32 %v5663, %v6369
      %v6476 = vadd.f32 %v5668, %v6374
      %v6477 = vadd.f32 %v5673, %v6379
      %v6478 = vadd.f32 %v5678, %v6384
      %v6479 = vadd.f32 %v5683, %v6389
      %v6480 = vadd.f32 %v5688, %v6394
      %v6481 = vadd.f32 %v5693, %v6399
      %v6482 = vadd.f32 %v5698, %v6404
      %v6483 = vadd.f32 %v5703, %v6409
      %v6484 = vadd.f32 %v5708, %v6414
      %v6485 = vadd.f32 %v5713, %v6419
      %s6486 = scalar_lea.vmem [#allocation2], 3
      %v6487 = vld [vmem:[%s6486] ss:$4 sm:$0xff]
      %s6488 = scalar_lea.vmem [#allocation2], 35
      %v6489 = vld [vmem:[%s6488] ss:$4 sm:$0xff]
      %s6490 = scalar_lea.vmem [#allocation2], 67
      %v6491 = vld [vmem:[%s6490] ss:$4 sm:$0xff]
      %s6492 = scalar_lea.vmem [#allocation2], 99
      %v6493 = vld [vmem:[%s6492] ss:$4 sm:$0xff]
      %s6494 = scalar_lea.vmem [#allocation2], 131
      %v6495 = vld [vmem:[%s6494] ss:$4 sm:$0xff]
      %s6496 = scalar_lea.vmem [#allocation2], 163
      %v6497 = vld [vmem:[%s6496] ss:$4 sm:$0xff]
      %s6498 = scalar_lea.vmem [#allocation2], 195
      %v6499 = vld [vmem:[%s6498] ss:$4 sm:$0xff]
      %s6500 = scalar_lea.vmem [#allocation2], 227
      %v6501 = vld [vmem:[%s6500] ss:$4 sm:$0xff]
      %s6502 = scalar_lea.vmem [#allocation2], 259
      %v6503 = vld [vmem:[%s6502] ss:$4 sm:$0xff]
      %s6504 = scalar_lea.vmem [#allocation2], 291
      %v6505 = vld [vmem:[%s6504] ss:$4 sm:$0xff]
      %s6506 = scalar_lea.vmem [#allocation2], 323
      %v6507 = vld [vmem:[%s6506] ss:$4 sm:$0xff]
      %s6508 = scalar_lea.vmem [#allocation2], 355
      %v6509 = vld [vmem:[%s6508] ss:$4 sm:$0xff]
      %s6510 = scalar_lea.vmem [#allocation2], 387
      %v6511 = vld [vmem:[%s6510] ss:$4 sm:$0xff]
      %s6512 = scalar_lea.vmem [#allocation2], 419
      %v6513 = vld [vmem:[%s6512] ss:$4 sm:$0xff]
      %s6514 = scalar_lea.vmem [#allocation2], 451
      %v6515 = vld [vmem:[%s6514] ss:$4 sm:$0xff]
      %s6516 = scalar_lea.vmem [#allocation2], 483
      %v6517 = vld [vmem:[%s6516] ss:$4 sm:$0xff]
      %s6518 = scalar_lea.vmem [#allocation2], 515
      %v6519 = vld [vmem:[%s6518] ss:$4 sm:$0xff]
      %s6520 = scalar_lea.vmem [#allocation2], 547
      %v6521 = vld [vmem:[%s6520] ss:$4 sm:$0xff]
      %s6522 = scalar_lea.vmem [#allocation2], 579
      %v6523 = vld [vmem:[%s6522] ss:$4 sm:$0xff]
      %s6524 = scalar_lea.vmem [#allocation2], 611
      %v6525 = vld [vmem:[%s6524] ss:$4 sm:$0xff]
      %s6526 = scalar_lea.vmem [#allocation2], 643
      %v6527 = vld [vmem:[%s6526] ss:$4 sm:$0xff]
      %s6528 = scalar_lea.vmem [#allocation2], 675
      %v6529 = vld [vmem:[%s6528] ss:$4 sm:$0xff]
      %s6530 = scalar_lea.vmem [#allocation2], 707
      %v6531 = vld [vmem:[%s6530] ss:$4 sm:$0xff]
      %s6532 = scalar_lea.vmem [#allocation2], 739
      %v6533 = vld [vmem:[%s6532] ss:$4 sm:$0xff]
      %s6534 = scalar_lea.vmem [#allocation2], 771
      %v6535 = vld [vmem:[%s6534] ss:$4 sm:$0xff]
      %s6536 = scalar_lea.vmem [#allocation2], 803
      %v6537 = vld [vmem:[%s6536] ss:$4 sm:$0xff]
      %s6538 = scalar_lea.vmem [#allocation2], 835
      %v6539 = vld [vmem:[%s6538] ss:$4 sm:$0xff]
      %s6540 = scalar_lea.vmem [#allocation2], 867
      %v6541 = vld [vmem:[%s6540] ss:$4 sm:$0xff]
      %s6542 = scalar_lea.vmem [#allocation2], 899
      %v6543 = vld [vmem:[%s6542] ss:$4 sm:$0xff]
      %s6544 = scalar_lea.vmem [#allocation2], 931
      %v6545 = vld [vmem:[%s6544] ss:$4 sm:$0xff]
      %s6546 = scalar_lea.vmem [#allocation2], 963
      %v6547 = vld [vmem:[%s6546] ss:$4 sm:$0xff]
      %s6548 = scalar_lea.vmem [#allocation2], 995
      %v6549 = vld [vmem:[%s6548] ss:$4 sm:$0xff]
      %s6550 = scalar_lea.vmem [#allocation2], 1027
      %v6551 = vld [vmem:[%s6550] ss:$4 sm:$0xff]
      %s6552 = scalar_lea.vmem [#allocation2], 1059
      %v6553 = vld [vmem:[%s6552] ss:$4 sm:$0xff]
      %s6554 = scalar_lea.vmem [#allocation2], 1091
      %v6555 = vld [vmem:[%s6554] ss:$4 sm:$0xff]
      %s6556 = scalar_lea.vmem [#allocation2], 1123
      %v6557 = vld [vmem:[%s6556] ss:$4 sm:$0xff]
      %s6558 = scalar_lea.vmem [#allocation2], 1155
      %v6559 = vld [vmem:[%s6558] ss:$4 sm:$0xff]
      %s6560 = scalar_lea.vmem [#allocation2], 1187
      %v6561 = vld [vmem:[%s6560] ss:$4 sm:$0xff]
      %s6562 = scalar_lea.vmem [#allocation2], 1219
      %v6563 = vld [vmem:[%s6562] ss:$4 sm:$0xff]
      %s6564 = scalar_lea.vmem [#allocation2], 1251
      %v6565 = vld [vmem:[%s6564] ss:$4 sm:$0xff]
      %s6566 = scalar_lea.vmem [#allocation2], 1283
      %v6567 = vld [vmem:[%s6566] ss:$4 sm:$0xff]
      %s6568 = scalar_lea.vmem [#allocation2], 1315
      %v6569 = vld [vmem:[%s6568] ss:$4 sm:$0xff]
      %s6570 = scalar_lea.vmem [#allocation2], 1347
      %v6571 = vld [vmem:[%s6570] ss:$4 sm:$0xff]
      %s6572 = scalar_lea.vmem [#allocation2], 1379
      %v6573 = vld [vmem:[%s6572] ss:$4 sm:$0xff]
      %s6574 = scalar_lea.vmem [#allocation2], 1411
      %v6575 = vld [vmem:[%s6574] ss:$4 sm:$0xff]
      %s6576 = scalar_lea.vmem [#allocation2], 1443
      %v6577 = vld [vmem:[%s6576] ss:$4 sm:$0xff]
      %s6578 = scalar_lea.vmem [#allocation2], 1475
      %v6579 = vld [vmem:[%s6578] ss:$4 sm:$0xff]
      %s6580 = scalar_lea.vmem [#allocation2], 1507
      %v6581 = vld [vmem:[%s6580] ss:$4 sm:$0xff]
      %s6582 = scalar_lea.vmem [#allocation2], 1539
      %v6583 = vld [vmem:[%s6582] ss:$4 sm:$0xff]
      %s6584 = scalar_lea.vmem [#allocation2], 1571
      %v6585 = vld [vmem:[%s6584] ss:$4 sm:$0xff]
      %s6586 = scalar_lea.vmem [#allocation2], 1603
      %v6587 = vld [vmem:[%s6586] ss:$4 sm:$0xff]
      %s6588 = scalar_lea.vmem [#allocation2], 1635
      %v6589 = vld [vmem:[%s6588] ss:$4 sm:$0xff]
      %s6590 = scalar_lea.vmem [#allocation2], 1667
      %v6591 = vld [vmem:[%s6590] ss:$4 sm:$0xff]
      %s6592 = scalar_lea.vmem [#allocation2], 1699
      %v6593 = vld [vmem:[%s6592] ss:$4 sm:$0xff]
      %s6594 = scalar_lea.vmem [#allocation2], 1731
      %v6595 = vld [vmem:[%s6594] ss:$4 sm:$0xff]
      %s6596 = scalar_lea.vmem [#allocation2], 1763
      %v6597 = vld [vmem:[%s6596] ss:$4 sm:$0xff]
      %s6598 = scalar_lea.vmem [#allocation2], 1795
      %v6599 = vld [vmem:[%s6598] ss:$4 sm:$0xff]
      %s6600 = scalar_lea.vmem [#allocation2], 1827
      %v6601 = vld [vmem:[%s6600] ss:$4 sm:$0xff]
      %s6602 = scalar_lea.vmem [#allocation2], 1859
      %v6603 = vld [vmem:[%s6602] ss:$4 sm:$0xff]
      %s6604 = scalar_lea.vmem [#allocation2], 1891
      %v6605 = vld [vmem:[%s6604] ss:$4 sm:$0xff]
      %s6606 = scalar_lea.vmem [#allocation2], 1923
      %v6607 = vld [vmem:[%s6606] ss:$4 sm:$0xff]
      %s6608 = scalar_lea.vmem [#allocation2], 1955
      %v6609 = vld [vmem:[%s6608] ss:$4 sm:$0xff]
      %s6610 = scalar_lea.vmem [#allocation2], 1987
      %v6611 = vld [vmem:[%s6610] ss:$4 sm:$0xff]
      %s6612 = scalar_lea.vmem [#allocation2], 2019
      %v6613 = vld [vmem:[%s6612] ss:$4 sm:$0xff]
      %v6614 = vld [vmem:[%s7 + $0x18] sm:$0xff]
      %v6616 = vsel %vm4048, %v6487, 0
      %v6619 = vsel %vm4048, %v6489, 0
      %v6622 = vsel %vm4048, %v6491, 0
      %v6625 = vsel %vm4048, %v6493, 0
      %v6628 = vsel %vm4048, %v6495, 0
      %v6631 = vsel %vm4048, %v6497, 0
      %v6634 = vsel %vm4048, %v6499, 0
      %v6637 = vsel %vm4048, %v6501, 0
      %v6640 = vsel %vm4048, %v6503, 0
      %v6643 = vsel %vm4048, %v6505, 0
      %v6646 = vsel %vm4048, %v6507, 0
      %v6649 = vsel %vm4048, %v6509, 0
      %v6652 = vsel %vm4048, %v6511, 0
      %v6655 = vsel %vm4048, %v6513, 0
      %v6658 = vsel %vm4048, %v6515, 0
      %v6661 = vsel %vm4048, %v6517, 0
      %v6664 = vsel %vm4048, %v6519, 0
      %v6667 = vsel %vm4048, %v6521, 0
      %v6670 = vsel %vm4048, %v6523, 0
      %v6673 = vsel %vm4048, %v6525, 0
      %v6676 = vsel %vm4048, %v6527, 0
      %v6679 = vsel %vm4048, %v6529, 0
      %v6682 = vsel %vm4048, %v6531, 0
      %v6685 = vsel %vm4048, %v6533, 0
      %v6688 = vsel %vm4048, %v6535, 0
      %v6691 = vsel %vm4048, %v6537, 0
      %v6694 = vsel %vm4048, %v6539, 0
      %v6697 = vsel %vm4048, %v6541, 0
      %v6700 = vsel %vm4048, %v6543, 0
      %v6703 = vsel %vm4048, %v6545, 0
      %v6706 = vsel %vm4048, %v6547, 0
      %v6709 = vsel %vm4048, %v6549, 0
      %v6712 = vsel %vm4048, %v6551, 0
      %v6715 = vsel %vm4048, %v6553, 0
      %v6718 = vsel %vm4048, %v6555, 0
      %v6721 = vsel %vm4048, %v6557, 0
      %v6724 = vsel %vm4048, %v6559, 0
      %v6727 = vsel %vm4048, %v6561, 0
      %v6730 = vsel %vm4048, %v6563, 0
      %v6733 = vsel %vm4048, %v6565, 0
      %v6736 = vsel %vm4048, %v6567, 0
      %v6739 = vsel %vm4048, %v6569, 0
      %v6742 = vsel %vm4048, %v6571, 0
      %v6745 = vsel %vm4048, %v6573, 0
      %v6748 = vsel %vm4048, %v6575, 0
      %v6751 = vsel %vm4048, %v6577, 0
      %v6754 = vsel %vm4048, %v6579, 0
      %v6757 = vsel %vm4048, %v6581, 0
      %v6760 = vsel %vm4048, %v6583, 0
      %v6763 = vsel %vm4048, %v6585, 0
      %v6766 = vsel %vm4048, %v6587, 0
      %v6769 = vsel %vm4048, %v6589, 0
      %v6772 = vsel %vm4048, %v6591, 0
      %v6775 = vsel %vm4048, %v6593, 0
      %v6778 = vsel %vm4048, %v6595, 0
      %v6781 = vsel %vm4048, %v6597, 0
      %v6784 = vsel %vm4048, %v6599, 0
      %v6787 = vsel %vm4048, %v6601, 0
      %v6790 = vsel %vm4048, %v6603, 0
      %v6793 = vsel %vm4048, %v6605, 0
      %v6796 = vsel %vm4048, %v6607, 0
      %v6799 = vsel %vm4048, %v6609, 0
      %v6802 = vsel %vm4048, %v6611, 0
      %v6805 = vsel %vm4048, %v6613, 0
      %6807 = vmatprep.subr.mxu0 0.0
      %6808 = vmatpush1.msra.mxu0 %v6614
      %6809 = vmatprep.subr.mxu0 0.0
      %6810 = vmatpush1.msra.mxu0 0.0
      %6811 = vmatprep.subr.mxu0 0.0
      %6812 = vmatpush1.msra.mxu0 0.0
      %6813 = vmatprep.subr.mxu0 0.0
      %6814 = vmatpush1.msra.mxu0 0.0
      %6815 = vmatprep.subr.mxu0 0.0
      %6816 = vmatpush1.msra.mxu0 0.0
      %6817 = vmatprep.subr.mxu0 0.0
      %6818 = vmatpush1.msra.mxu0 0.0
      %6819 = vmatprep.subr.mxu0 0.0
      %6820 = vmatpush1.msra.mxu0 0.0
      %6821 = vmatprep.subr.mxu0 0.0
      %6822 = vmatpush1.msra.mxu0 0.0
      %6823 = vmatprep.subr.mxu0 0.0
      %6824 = vmatpush1.msra.mxu0 0.0
      %6825 = vmatprep.subr.mxu0 0.0
      %6826 = vmatpush1.msra.mxu0 0.0
      %6827 = vmatprep.subr.mxu0 0.0
      %6828 = vmatpush1.msra.mxu0 0.0
      %6829 = vmatprep.subr.mxu0 0.0
      %6830 = vmatpush1.msra.mxu0 0.0
      %6831 = vmatprep.subr.mxu0 0.0
      %6832 = vmatpush1.msra.mxu0 0.0
      %6833 = vmatprep.subr.mxu0 0.0
      %6834 = vmatpush1.msra.mxu0 0.0
      %6835 = vmatprep.subr.mxu0 0.0
      %6836 = vmatpush1.msra.mxu0 0.0
      %6837 = vmatprep.subr.mxu0 0.0
      %6838 = vmatpush1.msra.mxu0 0.0
      %6839 = vmatprep.subr.mxu0 0.0
      %6840 = vmatpush1.msra.mxu0 0.0
      %6841 = vmatprep.subr.mxu0 0.0
      %6842 = vmatpush1.msra.mxu0 0.0
      %6843 = vmatprep.subr.mxu0 0.0
      %6844 = vmatpush1.msra.mxu0 0.0
      %6845 = vmatprep.subr.mxu0 0.0
      %6846 = vmatpush1.msra.mxu0 0.0
      %6847 = vmatprep.subr.mxu0 0.0
      %6848 = vmatpush1.msra.mxu0 0.0
      %6849 = vmatprep.subr.mxu0 0.0
      %6850 = vmatpush1.msra.mxu0 0.0
      %6851 = vmatprep.subr.mxu0 0.0
      %6852 = vmatpush1.msra.mxu0 0.0
      %6853 = vmatprep.subr.mxu0 0.0
      %6854 = vmatpush1.msra.mxu0 0.0
      %6855 = vmatprep.subr.mxu0 0.0
      %6856 = vmatpush1.msra.mxu0 0.0
      %6857 = vmatprep.subr.mxu0 0.0
      %6858 = vmatpush1.msra.mxu0 0.0
      %6859 = vmatprep.subr.mxu0 0.0
      %6860 = vmatpush1.msra.mxu0 0.0
      %6861 = vmatprep.subr.mxu0 0.0
      %6862 = vmatpush1.msra.mxu0 0.0
      %6863 = vmatprep.subr.mxu0 0.0
      %6864 = vmatpush1.msra.mxu0 0.0
      %6865 = vmatprep.subr.mxu0 0.0
      %6866 = vmatpush1.msra.mxu0 0.0
      %6867 = vmatprep.subr.mxu0 0.0
      %6868 = vmatpush1.msra.mxu0 0.0
      %6869 = vmatprep.subr.mxu0 0.0
      %6870 = vmatpush1.msra.mxu0 0.0
      %6871 = vmatprep.mubr.f32.mxu0 0.0
      %6872 = vmatmul.mubr.f32.gmra.mrb[0].mxu0 %v6616
      %v6873 = vpop.f32.mrb[0].mxu0
      %v6874 = vadd.f32 0.0, %v6873
      %v6875 = vpop.f32.mrb[0].mxu0
      %6876 = vmatprep.mubr.f32.mxu0 0.0
      %6877 = vmatmul.mubr.f32.gmra.mrb[0].mxu0 %v6619
      %v6878 = vpop.f32.mrb[0].mxu0
      %v6879 = vadd.f32 0.0, %v6878
      %v6880 = vpop.f32.mrb[0].mxu0
      %6881 = vmatprep.mubr.f32.mxu0 0.0
      %6882 = vmatmul.mubr.f32.gmra.mrb[0].mxu0 %v6622
      %v6883 = vpop.f32.mrb[0].mxu0
      %v6884 = vadd.f32 0.0, %v6883
      %v6885 = vpop.f32.mrb[0].mxu0
      %6886 = vmatprep.mubr.f32.mxu0 0.0
      %6887 = vmatmul.mubr.f32.gmra.mrb[0].mxu0 %v6625
      %v6888 = vpop.f32.mrb[0].mxu0
      %v6889 = vadd.f32 0.0, %v6888
      %v6890 = vpop.f32.mrb[0].mxu0
      %6891 = vmatprep.mubr.f32.mxu0 0.0
      %6892 = vmatmul.mubr.f32.gmra.mrb[0].mxu0 %v6628
      %v6893 = vpop.f32.mrb[0].mxu0
      %v6894 = vadd.f32 0.0, %v6893
      %v6895 = vpop.f32.mrb[0].mxu0
      %6896 = vmatprep.mubr.f32.mxu0 0.0
      %6897 = vmatmul.mubr.f32.gmra.mrb[0].mxu0 %v6631
      %v6898 = vpop.f32.mrb[0].mxu0
      %v6899 = vadd.f32 0.0, %v6898
      %v6900 = vpop.f32.mrb[0].mxu0
      %6901 = vmatprep.mubr.f32.mxu0 0.0
      %6902 = vmatmul.mubr.f32.gmra.mrb[0].mxu0 %v6634
      %v6903 = vpop.f32.mrb[0].mxu0
      %v6904 = vadd.f32 0.0, %v6903
      %v6905 = vpop.f32.mrb[0].mxu0
      %6906 = vmatprep.mubr.f32.mxu0 0.0
      %6907 = vmatmul.mubr.f32.gmra.mrb[0].mxu0 %v6637
      %v6908 = vpop.f32.mrb[0].mxu0
      %v6909 = vadd.f32 0.0, %v6908
      %v6910 = vpop.f32.mrb[0].mxu0
      %6911 = vmatprep.mubr.f32.mxu0 0.0
      %6912 = vmatmul.mubr.f32.gmra.mrb[0].mxu0 %v6640
      %v6913 = vpop.f32.mrb[0].mxu0
      %v6914 = vadd.f32 0.0, %v6913
      %v6915 = vpop.f32.mrb[0].mxu0
      %6916 = vmatprep.mubr.f32.mxu0 0.0
      %6917 = vmatmul.mubr.f32.gmra.mrb[0].mxu0 %v6643
      %v6918 = vpop.f32.mrb[0].mxu0
      %v6919 = vadd.f32 0.0, %v6918
      %v6920 = vpop.f32.mrb[0].mxu0
      %6921 = vmatprep.mubr.f32.mxu0 0.0
      %6922 = vmatmul.mubr.f32.gmra.mrb[0].mxu0 %v6646
      %v6923 = vpop.f32.mrb[0].mxu0
      %v6924 = vadd.f32 0.0, %v6923
      %v6925 = vpop.f32.mrb[0].mxu0
      %6926 = vmatprep.mubr.f32.mxu0 0.0
      %6927 = vmatmul.mubr.f32.gmra.mrb[0].mxu0 %v6649
      %v6928 = vpop.f32.mrb[0].mxu0
      %v6929 = vadd.f32 0.0, %v6928
      %v6930 = vpop.f32.mrb[0].mxu0
      %6931 = vmatprep.mubr.f32.mxu0 0.0
      %6932 = vmatmul.mubr.f32.gmra.mrb[0].mxu0 %v6652
      %v6933 = vpop.f32.mrb[0].mxu0
      %v6934 = vadd.f32 0.0, %v6933
      %v6935 = vpop.f32.mrb[0].mxu0
      %6936 = vmatprep.mubr.f32.mxu0 0.0
      %6937 = vmatmul.mubr.f32.gmra.mrb[0].mxu0 %v6655
      %v6938 = vpop.f32.mrb[0].mxu0
      %v6939 = vadd.f32 0.0, %v6938
      %v6940 = vpop.f32.mrb[0].mxu0
      %6941 = vmatprep.mubr.f32.mxu0 0.0
      %6942 = vmatmul.mubr.f32.gmra.mrb[0].mxu0 %v6658
      %v6943 = vpop.f32.mrb[0].mxu0
      %v6944 = vadd.f32 0.0, %v6943
      %v6945 = vpop.f32.mrb[0].mxu0
      %6946 = vmatprep.mubr.f32.mxu0 0.0
      %6947 = vmatmul.mubr.f32.gmra.mrb[0].mxu0 %v6661
      %v6948 = vpop.f32.mrb[0].mxu0
      %v6949 = vadd.f32 0.0, %v6948
      %v6950 = vpop.f32.mrb[0].mxu0
      %6951 = vmatprep.mubr.f32.mxu0 0.0
      %6952 = vmatmul.mubr.f32.gmra.mrb[0].mxu0 %v6664
      %v6953 = vpop.f32.mrb[0].mxu0
      %v6954 = vadd.f32 0.0, %v6953
      %v6955 = vpop.f32.mrb[0].mxu0
      %6956 = vmatprep.mubr.f32.mxu0 0.0
      %6957 = vmatmul.mubr.f32.gmra.mrb[0].mxu0 %v6667
      %v6958 = vpop.f32.mrb[0].mxu0
      %v6959 = vadd.f32 0.0, %v6958
      %v6960 = vpop.f32.mrb[0].mxu0
      %6961 = vmatprep.mubr.f32.mxu0 0.0
      %6962 = vmatmul.mubr.f32.gmra.mrb[0].mxu0 %v6670
      %v6963 = vpop.f32.mrb[0].mxu0
      %v6964 = vadd.f32 0.0, %v6963
      %v6965 = vpop.f32.mrb[0].mxu0
      %6966 = vmatprep.mubr.f32.mxu0 0.0
      %6967 = vmatmul.mubr.f32.gmra.mrb[0].mxu0 %v6673
      %v6968 = vpop.f32.mrb[0].mxu0
      %v6969 = vadd.f32 0.0, %v6968
      %v6970 = vpop.f32.mrb[0].mxu0
      %6971 = vmatprep.mubr.f32.mxu0 0.0
      %6972 = vmatmul.mubr.f32.gmra.mrb[0].mxu0 %v6676
      %v6973 = vpop.f32.mrb[0].mxu0
      %v6974 = vadd.f32 0.0, %v6973
      %v6975 = vpop.f32.mrb[0].mxu0
      %6976 = vmatprep.mubr.f32.mxu0 0.0
      %6977 = vmatmul.mubr.f32.gmra.mrb[0].mxu0 %v6679
      %v6978 = vpop.f32.mrb[0].mxu0
      %v6979 = vadd.f32 0.0, %v6978
      %v6980 = vpop.f32.mrb[0].mxu0
      %6981 = vmatprep.mubr.f32.mxu0 0.0
      %6982 = vmatmul.mubr.f32.gmra.mrb[0].mxu0 %v6682
      %v6983 = vpop.f32.mrb[0].mxu0
      %v6984 = vadd.f32 0.0, %v6983
      %v6985 = vpop.f32.mrb[0].mxu0
      %6986 = vmatprep.mubr.f32.mxu0 0.0
      %6987 = vmatmul.mubr.f32.gmra.mrb[0].mxu0 %v6685
      %v6988 = vpop.f32.mrb[0].mxu0
      %v6989 = vadd.f32 0.0, %v6988
      %v6990 = vpop.f32.mrb[0].mxu0
      %6991 = vmatprep.mubr.f32.mxu0 0.0
      %6992 = vmatmul.mubr.f32.gmra.mrb[0].mxu0 %v6688
      %v6993 = vpop.f32.mrb[0].mxu0
      %v6994 = vadd.f32 0.0, %v6993
      %v6995 = vpop.f32.mrb[0].mxu0
      %6996 = vmatprep.mubr.f32.mxu0 0.0
      %6997 = vmatmul.mubr.f32.gmra.mrb[0].mxu0 %v6691
      %v6998 = vpop.f32.mrb[0].mxu0
      %v6999 = vadd.f32 0.0, %v6998
      %v7000 = vpop.f32.mrb[0].mxu0
      %7001 = vmatprep.mubr.f32.mxu0 0.0
      %7002 = vmatmul.mubr.f32.gmra.mrb[0].mxu0 %v6694
      %v7003 = vpop.f32.mrb[0].mxu0
      %v7004 = vadd.f32 0.0, %v7003
      %v7005 = vpop.f32.mrb[0].mxu0
      %7006 = vmatprep.mubr.f32.mxu0 0.0
      %7007 = vmatmul.mubr.f32.gmra.mrb[0].mxu0 %v6697
      %v7008 = vpop.f32.mrb[0].mxu0
      %v7009 = vadd.f32 0.0, %v7008
      %v7010 = vpop.f32.mrb[0].mxu0
      %7011 = vmatprep.mubr.f32.mxu0 0.0
      %7012 = vmatmul.mubr.f32.gmra.mrb[0].mxu0 %v6700
      %v7013 = vpop.f32.mrb[0].mxu0
      %v7014 = vadd.f32 0.0, %v7013
      %v7015 = vpop.f32.mrb[0].mxu0
      %7016 = vmatprep.mubr.f32.mxu0 0.0
      %7017 = vmatmul.mubr.f32.gmra.mrb[0].mxu0 %v6703
      %v7018 = vpop.f32.mrb[0].mxu0
      %v7019 = vadd.f32 0.0, %v7018
      %v7020 = vpop.f32.mrb[0].mxu0
      %7021 = vmatprep.mubr.f32.mxu0 0.0
      %7022 = vmatmul.mubr.f32.gmra.mrb[0].mxu0 %v6706
      %v7023 = vpop.f32.mrb[0].mxu0
      %v7024 = vadd.f32 0.0, %v7023
      %v7025 = vpop.f32.mrb[0].mxu0
      %7026 = vmatprep.mubr.f32.mxu0 0.0
      %7027 = vmatmul.mubr.f32.gmra.mrb[0].mxu0 %v6709
      %v7028 = vpop.f32.mrb[0].mxu0
      %v7029 = vadd.f32 0.0, %v7028
      %v7030 = vpop.f32.mrb[0].mxu0
      %7031 = vmatprep.mubr.f32.mxu0 0.0
      %7032 = vmatmul.mubr.f32.gmra.mrb[0].mxu0 %v6712
      %v7033 = vpop.f32.mrb[0].mxu0
      %v7034 = vadd.f32 0.0, %v7033
      %v7035 = vpop.f32.mrb[0].mxu0
      %7036 = vmatprep.mubr.f32.mxu0 0.0
      %7037 = vmatmul.mubr.f32.gmra.mrb[0].mxu0 %v6715
      %v7038 = vpop.f32.mrb[0].mxu0
      %v7039 = vadd.f32 0.0, %v7038
      %v7040 = vpop.f32.mrb[0].mxu0
      %7041 = vmatprep.mubr.f32.mxu0 0.0
      %7042 = vmatmul.mubr.f32.gmra.mrb[0].mxu0 %v6718
      %v7043 = vpop.f32.mrb[0].mxu0
      %v7044 = vadd.f32 0.0, %v7043
      %v7045 = vpop.f32.mrb[0].mxu0
      %7046 = vmatprep.mubr.f32.mxu0 0.0
      %7047 = vmatmul.mubr.f32.gmra.mrb[0].mxu0 %v6721
      %v7048 = vpop.f32.mrb[0].mxu0
      %v7049 = vadd.f32 0.0, %v7048
      %v7050 = vpop.f32.mrb[0].mxu0
      %7051 = vmatprep.mubr.f32.mxu0 0.0
      %7052 = vmatmul.mubr.f32.gmra.mrb[0].mxu0 %v6724
      %v7053 = vpop.f32.mrb[0].mxu0
      %v7054 = vadd.f32 0.0, %v7053
      %v7055 = vpop.f32.mrb[0].mxu0
      %7056 = vmatprep.mubr.f32.mxu0 0.0
      %7057 = vmatmul.mubr.f32.gmra.mrb[0].mxu0 %v6727
      %v7058 = vpop.f32.mrb[0].mxu0
      %v7059 = vadd.f32 0.0, %v7058
      %v7060 = vpop.f32.mrb[0].mxu0
      %7061 = vmatprep.mubr.f32.mxu0 0.0
      %7062 = vmatmul.mubr.f32.gmra.mrb[0].mxu0 %v6730
      %v7063 = vpop.f32.mrb[0].mxu0
      %v7064 = vadd.f32 0.0, %v7063
      %v7065 = vpop.f32.mrb[0].mxu0
      %7066 = vmatprep.mubr.f32.mxu0 0.0
      %7067 = vmatmul.mubr.f32.gmra.mrb[0].mxu0 %v6733
      %v7068 = vpop.f32.mrb[0].mxu0
      %v7069 = vadd.f32 0.0, %v7068
      %v7070 = vpop.f32.mrb[0].mxu0
      %7071 = vmatprep.mubr.f32.mxu0 0.0
      %7072 = vmatmul.mubr.f32.gmra.mrb[0].mxu0 %v6736
      %v7073 = vpop.f32.mrb[0].mxu0
      %v7074 = vadd.f32 0.0, %v7073
      %v7075 = vpop.f32.mrb[0].mxu0
      %7076 = vmatprep.mubr.f32.mxu0 0.0
      %7077 = vmatmul.mubr.f32.gmra.mrb[0].mxu0 %v6739
      %v7078 = vpop.f32.mrb[0].mxu0
      %v7079 = vadd.f32 0.0, %v7078
      %v7080 = vpop.f32.mrb[0].mxu0
      %7081 = vmatprep.mubr.f32.mxu0 0.0
      %7082 = vmatmul.mubr.f32.gmra.mrb[0].mxu0 %v6742
      %v7083 = vpop.f32.mrb[0].mxu0
      %v7084 = vadd.f32 0.0, %v7083
      %v7085 = vpop.f32.mrb[0].mxu0
      %7086 = vmatprep.mubr.f32.mxu0 0.0
      %7087 = vmatmul.mubr.f32.gmra.mrb[0].mxu0 %v6745
      %v7088 = vpop.f32.mrb[0].mxu0
      %v7089 = vadd.f32 0.0, %v7088
      %v7090 = vpop.f32.mrb[0].mxu0
      %7091 = vmatprep.mubr.f32.mxu0 0.0
      %7092 = vmatmul.mubr.f32.gmra.mrb[0].mxu0 %v6748
      %v7093 = vpop.f32.mrb[0].mxu0
      %v7094 = vadd.f32 0.0, %v7093
      %v7095 = vpop.f32.mrb[0].mxu0
      %7096 = vmatprep.mubr.f32.mxu0 0.0
      %7097 = vmatmul.mubr.f32.gmra.mrb[0].mxu0 %v6751
      %v7098 = vpop.f32.mrb[0].mxu0
      %v7099 = vadd.f32 0.0, %v7098
      %v7100 = vpop.f32.mrb[0].mxu0
      %7101 = vmatprep.mubr.f32.mxu0 0.0
      %7102 = vmatmul.mubr.f32.gmra.mrb[0].mxu0 %v6754
      %v7103 = vpop.f32.mrb[0].mxu0
      %v7104 = vadd.f32 0.0, %v7103
      %v7105 = vpop.f32.mrb[0].mxu0
      %7106 = vmatprep.mubr.f32.mxu0 0.0
      %7107 = vmatmul.mubr.f32.gmra.mrb[0].mxu0 %v6757
      %v7108 = vpop.f32.mrb[0].mxu0
      %v7109 = vadd.f32 0.0, %v7108
      %v7110 = vpop.f32.mrb[0].mxu0
      %7111 = vmatprep.mubr.f32.mxu0 0.0
      %7112 = vmatmul.mubr.f32.gmra.mrb[0].mxu0 %v6760
      %v7113 = vpop.f32.mrb[0].mxu0
      %v7114 = vadd.f32 0.0, %v7113
      %v7115 = vpop.f32.mrb[0].mxu0
      %7116 = vmatprep.mubr.f32.mxu0 0.0
      %7117 = vmatmul.mubr.f32.gmra.mrb[0].mxu0 %v6763
      %v7118 = vpop.f32.mrb[0].mxu0
      %v7119 = vadd.f32 0.0, %v7118
      %v7120 = vpop.f32.mrb[0].mxu0
      %7121 = vmatprep.mubr.f32.mxu0 0.0
      %7122 = vmatmul.mubr.f32.gmra.mrb[0].mxu0 %v6766
      %v7123 = vpop.f32.mrb[0].mxu0
      %v7124 = vadd.f32 0.0, %v7123
      %v7125 = vpop.f32.mrb[0].mxu0
      %7126 = vmatprep.mubr.f32.mxu0 0.0
      %7127 = vmatmul.mubr.f32.gmra.mrb[0].mxu0 %v6769
      %v7128 = vpop.f32.mrb[0].mxu0
      %v7129 = vadd.f32 0.0, %v7128
      %v7130 = vpop.f32.mrb[0].mxu0
      %7131 = vmatprep.mubr.f32.mxu0 0.0
      %7132 = vmatmul.mubr.f32.gmra.mrb[0].mxu0 %v6772
      %v7133 = vpop.f32.mrb[0].mxu0
      %v7134 = vadd.f32 0.0, %v7133
      %v7135 = vpop.f32.mrb[0].mxu0
      %7136 = vmatprep.mubr.f32.mxu0 0.0
      %7137 = vmatmul.mubr.f32.gmra.mrb[0].mxu0 %v6775
      %v7138 = vpop.f32.mrb[0].mxu0
      %v7139 = vadd.f32 0.0, %v7138
      %v7140 = vpop.f32.mrb[0].mxu0
      %7141 = vmatprep.mubr.f32.mxu0 0.0
      %7142 = vmatmul.mubr.f32.gmra.mrb[0].mxu0 %v6778
      %v7143 = vpop.f32.mrb[0].mxu0
      %v7144 = vadd.f32 0.0, %v7143
      %v7145 = vpop.f32.mrb[0].mxu0
      %7146 = vmatprep.mubr.f32.mxu0 0.0
      %7147 = vmatmul.mubr.f32.gmra.mrb[0].mxu0 %v6781
      %v7148 = vpop.f32.mrb[0].mxu0
      %v7149 = vadd.f32 0.0, %v7148
      %v7150 = vpop.f32.mrb[0].mxu0
      %7151 = vmatprep.mubr.f32.mxu0 0.0
      %7152 = vmatmul.mubr.f32.gmra.mrb[0].mxu0 %v6784
      %v7153 = vpop.f32.mrb[0].mxu0
      %v7154 = vadd.f32 0.0, %v7153
      %v7155 = vpop.f32.mrb[0].mxu0
      %7156 = vmatprep.mubr.f32.mxu0 0.0
      %7157 = vmatmul.mubr.f32.gmra.mrb[0].mxu0 %v6787
      %v7158 = vpop.f32.mrb[0].mxu0
      %v7159 = vadd.f32 0.0, %v7158
      %v7160 = vpop.f32.mrb[0].mxu0
      %7161 = vmatprep.mubr.f32.mxu0 0.0
      %7162 = vmatmul.mubr.f32.gmra.mrb[0].mxu0 %v6790
      %v7163 = vpop.f32.mrb[0].mxu0
      %v7164 = vadd.f32 0.0, %v7163
      %v7165 = vpop.f32.mrb[0].mxu0
      %7166 = vmatprep.mubr.f32.mxu0 0.0
      %7167 = vmatmul.mubr.f32.gmra.mrb[0].mxu0 %v6793
      %v7168 = vpop.f32.mrb[0].mxu0
      %v7169 = vadd.f32 0.0, %v7168
      %v7170 = vpop.f32.mrb[0].mxu0
      %7171 = vmatprep.mubr.f32.mxu0 0.0
      %7172 = vmatmul.mubr.f32.gmra.mrb[0].mxu0 %v6796
      %v7173 = vpop.f32.mrb[0].mxu0
      %v7174 = vadd.f32 0.0, %v7173
      %v7175 = vpop.f32.mrb[0].mxu0
      %7176 = vmatprep.mubr.f32.mxu0 0.0
      %7177 = vmatmul.mubr.f32.gmra.mrb[0].mxu0 %v6799
      %v7178 = vpop.f32.mrb[0].mxu0
      %v7179 = vadd.f32 0.0, %v7178
      %v7180 = vpop.f32.mrb[0].mxu0
      %7181 = vmatprep.mubr.f32.mxu0 0.0
      %7182 = vmatmul.mubr.f32.gmra.mrb[0].mxu0 %v6802
      %v7183 = vpop.f32.mrb[0].mxu0
      %v7184 = vadd.f32 0.0, %v7183
      %v7185 = vpop.f32.mrb[0].mxu0
      %7186 = vmatprep.mubr.f32.mxu0 0.0
      %7187 = vmatmul.mubr.f32.gmra.mrb[0].mxu0 %v6805
      %v7188 = vpop.f32.mrb[0].mxu0
      %v7189 = vadd.f32 0.0, %v7188
      %v7190 = vpop.f32.mrb[0].mxu0
      %7191 = vdwg.mxu0
      %v7192 = vadd.f32 %v6422, %v6874
      %v7193 = vadd.f32 %v6423, %v6879
      %v7194 = vadd.f32 %v6424, %v6884
      %v7195 = vadd.f32 %v6425, %v6889
      %v7196 = vadd.f32 %v6426, %v6894
      %v7197 = vadd.f32 %v6427, %v6899
      %v7198 = vadd.f32 %v6428, %v6904
      %v7199 = vadd.f32 %v6429, %v6909
      %v7200 = vadd.f32 %v6430, %v6914
      %v7201 = vadd.f32 %v6431, %v6919
      %v7202 = vadd.f32 %v6432, %v6924
      %v7203 = vadd.f32 %v6433, %v6929
      %v7204 = vadd.f32 %v6434, %v6934
      %v7205 = vadd.f32 %v6435, %v6939
      %v7206 = vadd.f32 %v6436, %v6944
      %v7207 = vadd.f32 %v6437, %v6949
      %v7208 = vadd.f32 %v6438, %v6954
      %v7209 = vadd.f32 %v6439, %v6959
      %v7210 = vadd.f32 %v6440, %v6964
      %v7211 = vadd.f32 %v6441, %v6969
      %v7212 = vadd.f32 %v6442, %v6974
      %v7213 = vadd.f32 %v6443, %v6979
      %v7214 = vadd.f32 %v6444, %v6984
      %v7215 = vadd.f32 %v6445, %v6989
      %v7216 = vadd.f32 %v6446, %v6994
      %v7217 = vadd.f32 %v6447, %v6999
      %v7218 = vadd.f32 %v6448, %v7004
      %v7219 = vadd.f32 %v6449, %v7009
      %v7220 = vadd.f32 %v6450, %v7014
      %v7221 = vadd.f32 %v6451, %v7019
      %v7222 = vadd.f32 %v6452, %v7024
      %v7223 = vadd.f32 %v6453, %v7029
      %v7224 = vadd.f32 %v6454, %v7034
      %v7225 = vadd.f32 %v6455, %v7039
      %v7226 = vadd.f32 %v6456, %v7044
      %v7227 = vadd.f32 %v6457, %v7049
      %v7228 = vadd.f32 %v6458, %v7054
      %v7229 = vadd.f32 %v6459, %v7059
      %v7230 = vadd.f32 %v6460, %v7064
      %v7231 = vadd.f32 %v6461, %v7069
      %v7232 = vadd.f32 %v6462, %v7074
      %v7233 = vadd.f32 %v6463, %v7079
      %v7234 = vadd.f32 %v6464, %v7084
      %v7235 = vadd.f32 %v6465, %v7089
      %v7236 = vadd.f32 %v6466, %v7094
      %v7237 = vadd.f32 %v6467, %v7099
      %v7238 = vadd.f32 %v6468, %v7104
      %v7239 = vadd.f32 %v6469, %v7109
      %v7240 = vadd.f32 %v6470, %v7114
      %v7241 = vadd.f32 %v6471, %v7119
      %v7242 = vadd.f32 %v6472, %v7124
      %v7243 = vadd.f32 %v6473, %v7129
      %v7244 = vadd.f32 %v6474, %v7134
      %v7245 = vadd.f32 %v6475, %v7139
      %v7246 = vadd.f32 %v6476, %v7144
      %v7247 = vadd.f32 %v6477, %v7149
      %v7248 = vadd.f32 %v6478, %v7154
      %v7249 = vadd.f32 %v6479, %v7159
      %v7250 = vadd.f32 %v6480, %v7164
      %v7251 = vadd.f32 %v6481, %v7169
      %v7252 = vadd.f32 %v6482, %v7174
      %v7253 = vadd.f32 %v6483, %v7179
      %v7254 = vadd.f32 %v6484, %v7184
      %v7255 = vadd.f32 %v6485, %v7189
      %v7256 = vld [vmem:[%s8] sm:$0x1]
      %v7258 = vlaneseq
      %v7259 = vshrl.u32 %v7258, 7
      %v7260 = vsub.s32 0, %v7259
      %v7261 = vrot.slane %v7256, %v7260
      %v7263 = vadd.f32 %v7192, %v7261
      %v7264 = vadd.f32 %v7193, %v7261
      %v7265 = vadd.f32 %v7194, %v7261
      %v7266 = vadd.f32 %v7195, %v7261
      %v7267 = vadd.f32 %v7196, %v7261
      %v7268 = vadd.f32 %v7197, %v7261
      %v7269 = vadd.f32 %v7198, %v7261
      %v7270 = vadd.f32 %v7199, %v7261
      %v7271 = vadd.f32 %v7200, %v7261
      %v7272 = vadd.f32 %v7201, %v7261
      %v7273 = vadd.f32 %v7202, %v7261
      %v7274 = vadd.f32 %v7203, %v7261
      %v7275 = vadd.f32 %v7204, %v7261
      %v7276 = vadd.f32 %v7205, %v7261
      %v7277 = vadd.f32 %v7206, %v7261
      %v7278 = vadd.f32 %v7207, %v7261
      %v7279 = vadd.f32 %v7208, %v7261
      %v7280 = vadd.f32 %v7209, %v7261
      %v7281 = vadd.f32 %v7210, %v7261
      %v7282 = vadd.f32 %v7211, %v7261
      %v7283 = vadd.f32 %v7212, %v7261
      %v7284 = vadd.f32 %v7213, %v7261
      %v7285 = vadd.f32 %v7214, %v7261
      %v7286 = vadd.f32 %v7215, %v7261
      %v7287 = vadd.f32 %v7216, %v7261
      %v7288 = vadd.f32 %v7217, %v7261
      %v7289 = vadd.f32 %v7218, %v7261
      %v7290 = vadd.f32 %v7219, %v7261
      %v7291 = vadd.f32 %v7220, %v7261
      %v7292 = vadd.f32 %v7221, %v7261
      %v7293 = vadd.f32 %v7222, %v7261
      %v7294 = vadd.f32 %v7223, %v7261
      %v7295 = vadd.f32 %v7224, %v7261
      %v7296 = vadd.f32 %v7225, %v7261
      %v7297 = vadd.f32 %v7226, %v7261
      %v7298 = vadd.f32 %v7227, %v7261
      %v7299 = vadd.f32 %v7228, %v7261
      %v7300 = vadd.f32 %v7229, %v7261
      %v7301 = vadd.f32 %v7230, %v7261
      %v7302 = vadd.f32 %v7231, %v7261
      %v7303 = vadd.f32 %v7232, %v7261
      %v7304 = vadd.f32 %v7233, %v7261
      %v7305 = vadd.f32 %v7234, %v7261
      %v7306 = vadd.f32 %v7235, %v7261
      %v7307 = vadd.f32 %v7236, %v7261
      %v7308 = vadd.f32 %v7237, %v7261
      %v7309 = vadd.f32 %v7238, %v7261
      %v7310 = vadd.f32 %v7239, %v7261
      %v7311 = vadd.f32 %v7240, %v7261
      %v7312 = vadd.f32 %v7241, %v7261
      %v7313 = vadd.f32 %v7242, %v7261
      %v7314 = vadd.f32 %v7243, %v7261
      %v7315 = vadd.f32 %v7244, %v7261
      %v7316 = vadd.f32 %v7245, %v7261
      %v7317 = vadd.f32 %v7246, %v7261
      %v7318 = vadd.f32 %v7247, %v7261
      %v7319 = vadd.f32 %v7248, %v7261
      %v7320 = vadd.f32 %v7249, %v7261
      %v7321 = vadd.f32 %v7250, %v7261
      %v7322 = vadd.f32 %v7251, %v7261
      %v7323 = vadd.f32 %v7252, %v7261
      %v7324 = vadd.f32 %v7253, %v7261
      %v7325 = vadd.f32 %v7254, %v7261
      %v7326 = vadd.f32 %v7255, %v7261
      %v7327 = vmax.f32 %v7263, 0.0
      %v7328 = vmax.f32 %v7264, 0.0
      %v7329 = vmax.f32 %v7265, 0.0
      %v7330 = vmax.f32 %v7266, 0.0
      %v7331 = vmax.f32 %v7267, 0.0
      %v7332 = vmax.f32 %v7268, 0.0
      %v7333 = vmax.f32 %v7269, 0.0
      %v7334 = vmax.f32 %v7270, 0.0
      %v7335 = vmax.f32 %v7271, 0.0
      %v7336 = vmax.f32 %v7272, 0.0
      %v7337 = vmax.f32 %v7273, 0.0
      %v7338 = vmax.f32 %v7274, 0.0
      %v7339 = vmax.f32 %v7275, 0.0
      %v7340 = vmax.f32 %v7276, 0.0
      %v7341 = vmax.f32 %v7277, 0.0
      %v7342 = vmax.f32 %v7278, 0.0
      %v7343 = vmax.f32 %v7279, 0.0
      %v7344 = vmax.f32 %v7280, 0.0
      %v7345 = vmax.f32 %v7281, 0.0
      %v7346 = vmax.f32 %v7282, 0.0
      %v7347 = vmax.f32 %v7283, 0.0
      %v7348 = vmax.f32 %v7284, 0.0
      %v7349 = vmax.f32 %v7285, 0.0
      %v7350 = vmax.f32 %v7286, 0.0
      %v7351 = vmax.f32 %v7287, 0.0
      %v7352 = vmax.f32 %v7288, 0.0
      %v7353 = vmax.f32 %v7289, 0.0
      %v7354 = vmax.f32 %v7290, 0.0
      %v7355 = vmax.f32 %v7291, 0.0
      %v7356 = vmax.f32 %v7292, 0.0
      %v7357 = vmax.f32 %v7293, 0.0
      %v7358 = vmax.f32 %v7294, 0.0
      %v7359 = vmax.f32 %v7295, 0.0
      %v7360 = vmax.f32 %v7296, 0.0
      %v7361 = vmax.f32 %v7297, 0.0
      %v7362 = vmax.f32 %v7298, 0.0
      %v7363 = vmax.f32 %v7299, 0.0
      %v7364 = vmax.f32 %v7300, 0.0
      %v7365 = vmax.f32 %v7301, 0.0
      %v7366 = vmax.f32 %v7302, 0.0
      %v7367 = vmax.f32 %v7303, 0.0
      %v7368 = vmax.f32 %v7304, 0.0
      %v7369 = vmax.f32 %v7305, 0.0
      %v7370 = vmax.f32 %v7306, 0.0
      %v7371 = vmax.f32 %v7307, 0.0
      %v7372 = vmax.f32 %v7308, 0.0
      %v7373 = vmax.f32 %v7309, 0.0
      %v7374 = vmax.f32 %v7310, 0.0
      %v7375 = vmax.f32 %v7311, 0.0
      %v7376 = vmax.f32 %v7312, 0.0
      %v7377 = vmax.f32 %v7313, 0.0
      %v7378 = vmax.f32 %v7314, 0.0
      %v7379 = vmax.f32 %v7315, 0.0
      %v7380 = vmax.f32 %v7316, 0.0
      %v7381 = vmax.f32 %v7317, 0.0
      %v7382 = vmax.f32 %v7318, 0.0
      %v7383 = vmax.f32 %v7319, 0.0
      %v7384 = vmax.f32 %v7320, 0.0
      %v7385 = vmax.f32 %v7321, 0.0
      %v7386 = vmax.f32 %v7322, 0.0
      %v7387 = vmax.f32 %v7323, 0.0
      %v7388 = vmax.f32 %v7324, 0.0
      %v7389 = vmax.f32 %v7325, 0.0
      %v7390 = vmax.f32 %v7326, 0.0
      %v7391 = vld [vmem:[%s884] sm:$0xff]
      %v7392 = vld [vmem:[%s884 + $0x8] sm:$0xff]
      %v7393 = vld [vmem:[%s884 + $0x10] sm:$0xff]
      %v7394 = vld [vmem:[%s884 + $0x18] sm:$0xff]
      %v7395 = vld [vmem:[%s884 + $0x20] sm:$0xff]
      %v7396 = vld [vmem:[%s884 + $0x28] sm:$0xff]
      %v7397 = vld [vmem:[%s884 + $0x30] sm:$0xff]
      %v7398 = vld [vmem:[%s884 + $0x38] sm:$0xff]
      %v7399 = vld [vmem:[%s884 + $0x40] sm:$0xff]
      %v7400 = vld [vmem:[%s884 + $0x48] sm:$0xff]
      %v7401 = vld [vmem:[%s884 + $0x50] sm:$0xff]
      %v7402 = vld [vmem:[%s884 + $0x58] sm:$0xff]
      %v7403 = vld [vmem:[%s884 + $0x60] sm:$0xff]
      %v7404 = vld [vmem:[%s884 + $0x68] sm:$0xff]
      %v7405 = vld [vmem:[%s884 + $0x70] sm:$0xff]
      %v7406 = vld [vmem:[%s884 + $0x78] sm:$0xff]
      %v7407 = vld [vmem:[%s884 + $0x80] sm:$0xff]
      %v7408 = vld [vmem:[%s884 + $0x88] sm:$0xff]
      %v7409 = vld [vmem:[%s884 + $0x90] sm:$0xff]
      %v7410 = vld [vmem:[%s884 + $0x98] sm:$0xff]
      %v7411 = vld [vmem:[%s884 + $0xa0] sm:$0xff]
      %v7412 = vld [vmem:[%s884 + $0xa8] sm:$0xff]
      %v7413 = vld [vmem:[%s884 + $0xb0] sm:$0xff]
      %v7414 = vld [vmem:[%s884 + $0xb8] sm:$0xff]
      %v7415 = vld [vmem:[%s884 + $0xc0] sm:$0xff]
      %v7416 = vld [vmem:[%s884 + $0xc8] sm:$0xff]
      %v7417 = vld [vmem:[%s884 + $0xd0] sm:$0xff]
      %v7418 = vld [vmem:[%s884 + $0xd8] sm:$0xff]
      %v7419 = vld [vmem:[%s884 + $0xe0] sm:$0xff]
      %v7420 = vld [vmem:[%s884 + $0xe8] sm:$0xff]
      %v7421 = vld [vmem:[%s884 + $0xf0] sm:$0xff]
      %v7422 = vld [vmem:[%s884 + $0xf8] sm:$0xff]
      %v7423 = vld [vmem:[%s884 + $0x100] sm:$0xff]
      %v7424 = vld [vmem:[%s884 + $0x108] sm:$0xff]
      %v7425 = vld [vmem:[%s884 + $0x110] sm:$0xff]
      %v7426 = vld [vmem:[%s884 + $0x118] sm:$0xff]
      %v7427 = vld [vmem:[%s884 + $0x120] sm:$0xff]
      %v7428 = vld [vmem:[%s884 + $0x128] sm:$0xff]
      %v7429 = vld [vmem:[%s884 + $0x130] sm:$0xff]
      %v7430 = vld [vmem:[%s884 + $0x138] sm:$0xff]
      %v7431 = vld [vmem:[%s884 + $0x140] sm:$0xff]
      %v7432 = vld [vmem:[%s884 + $0x148] sm:$0xff]
      %v7433 = vld [vmem:[%s884 + $0x150] sm:$0xff]
      %v7434 = vld [vmem:[%s884 + $0x158] sm:$0xff]
      %v7435 = vld [vmem:[%s884 + $0x160] sm:$0xff]
      %v7436 = vld [vmem:[%s884 + $0x168] sm:$0xff]
      %v7437 = vld [vmem:[%s884 + $0x170] sm:$0xff]
      %v7438 = vld [vmem:[%s884 + $0x178] sm:$0xff]
      %v7439 = vld [vmem:[%s884 + $0x180] sm:$0xff]
      %v7440 = vld [vmem:[%s884 + $0x188] sm:$0xff]
      %v7441 = vld [vmem:[%s884 + $0x190] sm:$0xff]
      %v7442 = vld [vmem:[%s884 + $0x198] sm:$0xff]
      %v7443 = vld [vmem:[%s884 + $0x1a0] sm:$0xff]
      %v7444 = vld [vmem:[%s884 + $0x1a8] sm:$0xff]
      %v7445 = vld [vmem:[%s884 + $0x1b0] sm:$0xff]
      %v7446 = vld [vmem:[%s884 + $0x1b8] sm:$0xff]
      %v7447 = vld [vmem:[%s884 + $0x1c0] sm:$0xff]
      %v7448 = vld [vmem:[%s884 + $0x1c8] sm:$0xff]
      %v7449 = vld [vmem:[%s884 + $0x1d0] sm:$0xff]
      %v7450 = vld [vmem:[%s884 + $0x1d8] sm:$0xff]
      %v7451 = vld [vmem:[%s884 + $0x1e0] sm:$0xff]
      %v7452 = vld [vmem:[%s884 + $0x1e8] sm:$0xff]
      %v7453 = vld [vmem:[%s884 + $0x1f0] sm:$0xff]
      %v7454 = vld [vmem:[%s884 + $0x1f8] sm:$0xff]
      %v7455 = vadd.f32 %v7327, %v7391
      %v7456 = vadd.f32 %v7328, %v7392
      %v7457 = vadd.f32 %v7329, %v7393
      %v7458 = vadd.f32 %v7330, %v7394
      %v7459 = vadd.f32 %v7331, %v7395
      %v7460 = vadd.f32 %v7332, %v7396
      %v7461 = vadd.f32 %v7333, %v7397
      %v7462 = vadd.f32 %v7334, %v7398
      %v7463 = vadd.f32 %v7335, %v7399
      %v7464 = vadd.f32 %v7336, %v7400
      %v7465 = vadd.f32 %v7337, %v7401
      %v7466 = vadd.f32 %v7338, %v7402
      %v7467 = vadd.f32 %v7339, %v7403
      %v7468 = vadd.f32 %v7340, %v7404
      %v7469 = vadd.f32 %v7341, %v7405
      %v7470 = vadd.f32 %v7342, %v7406
      %v7471 = vadd.f32 %v7343, %v7407
      %v7472 = vadd.f32 %v7344, %v7408
      %v7473 = vadd.f32 %v7345, %v7409
      %v7474 = vadd.f32 %v7346, %v7410
      %v7475 = vadd.f32 %v7347, %v7411
      %v7476 = vadd.f32 %v7348, %v7412
      %v7477 = vadd.f32 %v7349, %v7413
      %v7478 = vadd.f32 %v7350, %v7414
      %v7479 = vadd.f32 %v7351, %v7415
      %v7480 = vadd.f32 %v7352, %v7416
      %v7481 = vadd.f32 %v7353, %v7417
      %v7482 = vadd.f32 %v7354, %v7418
      %v7483 = vadd.f32 %v7355, %v7419
      %v7484 = vadd.f32 %v7356, %v7420
      %v7485 = vadd.f32 %v7357, %v7421
      %v7486 = vadd.f32 %v7358, %v7422
      %v7487 = vadd.f32 %v7359, %v7423
      %v7488 = vadd.f32 %v7360, %v7424
      %v7489 = vadd.f32 %v7361, %v7425
      %v7490 = vadd.f32 %v7362, %v7426
      %v7491 = vadd.f32 %v7363, %v7427
      %v7492 = vadd.f32 %v7364, %v7428
      %v7493 = vadd.f32 %v7365, %v7429
      %v7494 = vadd.f32 %v7366, %v7430
      %v7495 = vadd.f32 %v7367, %v7431
      %v7496 = vadd.f32 %v7368, %v7432
      %v7497 = vadd.f32 %v7369, %v7433
      %v7498 = vadd.f32 %v7370, %v7434
      %v7499 = vadd.f32 %v7371, %v7435
      %v7500 = vadd.f32 %v7372, %v7436
      %v7501 = vadd.f32 %v7373, %v7437
      %v7502 = vadd.f32 %v7374, %v7438
      %v7503 = vadd.f32 %v7375, %v7439
      %v7504 = vadd.f32 %v7376, %v7440
      %v7505 = vadd.f32 %v7377, %v7441
      %v7506 = vadd.f32 %v7378, %v7442
      %v7507 = vadd.f32 %v7379, %v7443
      %v7508 = vadd.f32 %v7380, %v7444
      %v7509 = vadd.f32 %v7381, %v7445
      %v7510 = vadd.f32 %v7382, %v7446
      %v7511 = vadd.f32 %v7383, %v7447
      %v7512 = vadd.f32 %v7384, %v7448
      %v7513 = vadd.f32 %v7385, %v7449
      %v7514 = vadd.f32 %v7386, %v7450
      %v7515 = vadd.f32 %v7387, %v7451
      %v7516 = vadd.f32 %v7388, %v7452
      %v7517 = vadd.f32 %v7389, %v7453
      %v7518 = vadd.f32 %v7390, %v7454
      %7519 = vst.msk [vmem:[#allocation3] sm:$0xff] %vm4048, %v7455
      %7520 = vst.msk [vmem:[#allocation3 + $0x8] sm:$0xff] %vm4048, %v7456
      %7521 = vst.msk [vmem:[#allocation3 + $0x10] sm:$0xff] %vm4048, %v7457
      %7522 = vst.msk [vmem:[#allocation3 + $0x18] sm:$0xff] %vm4048, %v7458
      %7523 = vst.msk [vmem:[#allocation3 + $0x20] sm:$0xff] %vm4048, %v7459
      %7524 = vst.msk [vmem:[#allocation3 + $0x28] sm:$0xff] %vm4048, %v7460
      %7525 = vst.msk [vmem:[#allocation3 + $0x30] sm:$0xff] %vm4048, %v7461
      %7526 = vst.msk [vmem:[#allocation3 + $0x38] sm:$0xff] %vm4048, %v7462
      %7527 = vst.msk [vmem:[#allocation3 + $0x40] sm:$0xff] %vm4048, %v7463
      %7528 = vst.msk [vmem:[#allocation3 + $0x48] sm:$0xff] %vm4048, %v7464
      %7529 = vst.msk [vmem:[#allocation3 + $0x50] sm:$0xff] %vm4048, %v7465
      %7530 = vst.msk [vmem:[#allocation3 + $0x58] sm:$0xff] %vm4048, %v7466
      %7531 = vst.msk [vmem:[#allocation3 + $0x60] sm:$0xff] %vm4048, %v7467
      %7532 = vst.msk [vmem:[#allocation3 + $0x68] sm:$0xff] %vm4048, %v7468
      %7533 = vst.msk [vmem:[#allocation3 + $0x70] sm:$0xff] %vm4048, %v7469
      %7534 = vst.msk [vmem:[#allocation3 + $0x78] sm:$0xff] %vm4048, %v7470
      %7535 = vst.msk [vmem:[#allocation3 + $0x80] sm:$0xff] %vm4048, %v7471
      %7536 = vst.msk [vmem:[#allocation3 + $0x88] sm:$0xff] %vm4048, %v7472
      %7537 = vst.msk [vmem:[#allocation3 + $0x90] sm:$0xff] %vm4048, %v7473
      %7538 = vst.msk [vmem:[#allocation3 + $0x98] sm:$0xff] %vm4048, %v7474
      %7539 = vst.msk [vmem:[#allocation3 + $0xa0] sm:$0xff] %vm4048, %v7475
      %7540 = vst.msk [vmem:[#allocation3 + $0xa8] sm:$0xff] %vm4048, %v7476
      %7541 = vst.msk [vmem:[#allocation3 + $0xb0] sm:$0xff] %vm4048, %v7477
      %7542 = vst.msk [vmem:[#allocation3 + $0xb8] sm:$0xff] %vm4048, %v7478
      %7543 = vst.msk [vmem:[#allocation3 + $0xc0] sm:$0xff] %vm4048, %v7479
      %7544 = vst.msk [vmem:[#allocation3 + $0xc8] sm:$0xff] %vm4048, %v7480
      %7545 = vst.msk [vmem:[#allocation3 + $0xd0] sm:$0xff] %vm4048, %v7481
      %7546 = vst.msk [vmem:[#allocation3 + $0xd8] sm:$0xff] %vm4048, %v7482
      %7547 = vst.msk [vmem:[#allocation3 + $0xe0] sm:$0xff] %vm4048, %v7483
      %7548 = vst.msk [vmem:[#allocation3 + $0xe8] sm:$0xff] %vm4048, %v7484
      %7549 = vst.msk [vmem:[#allocation3 + $0xf0] sm:$0xff] %vm4048, %v7485
      %7550 = vst.msk [vmem:[#allocation3 + $0xf8] sm:$0xff] %vm4048, %v7486
      %7551 = vst.msk [vmem:[#allocation3 + $0x100] sm:$0xff] %vm4048, %v7487
      %7552 = vst.msk [vmem:[#allocation3 + $0x108] sm:$0xff] %vm4048, %v7488
      %7553 = vst.msk [vmem:[#allocation3 + $0x110] sm:$0xff] %vm4048, %v7489
      %7554 = vst.msk [vmem:[#allocation3 + $0x118] sm:$0xff] %vm4048, %v7490
      %7555 = vst.msk [vmem:[#allocation3 + $0x120] sm:$0xff] %vm4048, %v7491
      %7556 = vst.msk [vmem:[#allocation3 + $0x128] sm:$0xff] %vm4048, %v7492
      %7557 = vst.msk [vmem:[#allocation3 + $0x130] sm:$0xff] %vm4048, %v7493
      %7558 = vst.msk [vmem:[#allocation3 + $0x138] sm:$0xff] %vm4048, %v7494
      %7559 = vst.msk [vmem:[#allocation3 + $0x140] sm:$0xff] %vm4048, %v7495
      %7560 = vst.msk [vmem:[#allocation3 + $0x148] sm:$0xff] %vm4048, %v7496
      %7561 = vst.msk [vmem:[#allocation3 + $0x150] sm:$0xff] %vm4048, %v7497
      %7562 = vst.msk [vmem:[#allocation3 + $0x158] sm:$0xff] %vm4048, %v7498
      %7563 = vst.msk [vmem:[#allocation3 + $0x160] sm:$0xff] %vm4048, %v7499
      %7564 = vst.msk [vmem:[#allocation3 + $0x168] sm:$0xff] %vm4048, %v7500
      %7565 = vst.msk [vmem:[#allocation3 + $0x170] sm:$0xff] %vm4048, %v7501
      %7566 = vst.msk [vmem:[#allocation3 + $0x178] sm:$0xff] %vm4048, %v7502
      %7567 = vst.msk [vmem:[#allocation3 + $0x180] sm:$0xff] %vm4048, %v7503
      %7568 = vst.msk [vmem:[#allocation3 + $0x188] sm:$0xff] %vm4048, %v7504
      %7569 = vst.msk [vmem:[#allocation3 + $0x190] sm:$0xff] %vm4048, %v7505
      %7570 = vst.msk [vmem:[#allocation3 + $0x198] sm:$0xff] %vm4048, %v7506
      %7571 = vst.msk [vmem:[#allocation3 + $0x1a0] sm:$0xff] %vm4048, %v7507
      %7572 = vst.msk [vmem:[#allocation3 + $0x1a8] sm:$0xff] %vm4048, %v7508
      %7573 = vst.msk [vmem:[#allocation3 + $0x1b0] sm:$0xff] %vm4048, %v7509
      %7574 = vst.msk [vmem:[#allocation3 + $0x1b8] sm:$0xff] %vm4048, %v7510
      %7575 = vst.msk [vmem:[#allocation3 + $0x1c0] sm:$0xff] %vm4048, %v7511
      %7576 = vst.msk [vmem:[#allocation3 + $0x1c8] sm:$0xff] %vm4048, %v7512
      %7577 = vst.msk [vmem:[#allocation3 + $0x1d0] sm:$0xff] %vm4048, %v7513
      %7578 = vst.msk [vmem:[#allocation3 + $0x1d8] sm:$0xff] %vm4048, %v7514
      %7579 = vst.msk [vmem:[#allocation3 + $0x1e0] sm:$0xff] %vm4048, %v7515
      %7580 = vst.msk [vmem:[#allocation3 + $0x1e8] sm:$0xff] %vm4048, %v7516
      %7581 = vst.msk [vmem:[#allocation3 + $0x1f0] sm:$0xff] %vm4048, %v7517
      %7582 = vst.msk [vmem:[#allocation3 + $0x1f8] sm:$0xff] %vm4048, %v7518
      %v7583 = vld [vmem:[#allocation3] ss:$4 sm:$0xff]
      %s7584 = scalar_lea.vmem [#allocation3], 32
      %v7585 = vld [vmem:[%s7584] ss:$4 sm:$0xff]
      %s7586 = scalar_lea.vmem [#allocation3], 64
      %v7587 = vld [vmem:[%s7586] ss:$4 sm:$0xff]
      %s7588 = scalar_lea.vmem [#allocation3], 96
      %v7589 = vld [vmem:[%s7588] ss:$4 sm:$0xff]
      %s7590 = scalar_lea.vmem [#allocation3], 128
      %v7591 = vld [vmem:[%s7590] ss:$4 sm:$0xff]
      %s7592 = scalar_lea.vmem [#allocation3], 160
      %v7593 = vld [vmem:[%s7592] ss:$4 sm:$0xff]
      %s7594 = scalar_lea.vmem [#allocation3], 192
      %v7595 = vld [vmem:[%s7594] ss:$4 sm:$0xff]
      %s7596 = scalar_lea.vmem [#allocation3], 224
      %v7597 = vld [vmem:[%s7596] ss:$4 sm:$0xff]
      %s7598 = scalar_lea.vmem [#allocation3], 256
      %v7599 = vld [vmem:[%s7598] ss:$4 sm:$0xff]
      %s7600 = scalar_lea.vmem [#allocation3], 288
      %v7601 = vld [vmem:[%s7600] ss:$4 sm:$0xff]
      %s7602 = scalar_lea.vmem [#allocation3], 320
      %v7603 = vld [vmem:[%s7602] ss:$4 sm:$0xff]
      %s7604 = scalar_lea.vmem [#allocation3], 352
      %v7605 = vld [vmem:[%s7604] ss:$4 sm:$0xff]
      %s7606 = scalar_lea.vmem [#allocation3], 384
      %v7607 = vld [vmem:[%s7606] ss:$4 sm:$0xff]
      %s7608 = scalar_lea.vmem [#allocation3], 416
      %v7609 = vld [vmem:[%s7608] ss:$4 sm:$0xff]
      %s7610 = scalar_lea.vmem [#allocation3], 448
      %v7611 = vld [vmem:[%s7610] ss:$4 sm:$0xff]
      %s7612 = scalar_lea.vmem [#allocation3], 480
      %v7613 = vld [vmem:[%s7612] ss:$4 sm:$0xff]
      %v7614 = vld [vmem:[%s9] sm:$0xff]
      %s7615 = scalar_lea.vmem [#allocation3], 1
      %v7616 = vld [vmem:[%s7615] ss:$4 sm:$0xff]
      %s7617 = scalar_lea.vmem [#allocation3], 33
      %v7618 = vld [vmem:[%s7617] ss:$4 sm:$0xff]
      %s7619 = scalar_lea.vmem [#allocation3], 65
      %v7620 = vld [vmem:[%s7619] ss:$4 sm:$0xff]
      %s7621 = scalar_lea.vmem [#allocation3], 97
      %v7622 = vld [vmem:[%s7621] ss:$4 sm:$0xff]
      %s7623 = scalar_lea.vmem [#allocation3], 129
      %v7624 = vld [vmem:[%s7623] ss:$4 sm:$0xff]
      %s7625 = scalar_lea.vmem [#allocation3], 161
      %v7626 = vld [vmem:[%s7625] ss:$4 sm:$0xff]
      %s7627 = scalar_lea.vmem [#allocation3], 193
      %v7628 = vld [vmem:[%s7627] ss:$4 sm:$0xff]
      %s7629 = scalar_lea.vmem [#allocation3], 225
      %v7630 = vld [vmem:[%s7629] ss:$4 sm:$0xff]
      %s7631 = scalar_lea.vmem [#allocation3], 257
      %v7632 = vld [vmem:[%s7631] ss:$4 sm:$0xff]
      %s7633 = scalar_lea.vmem [#allocation3], 289
      %v7634 = vld [vmem:[%s7633] ss:$4 sm:$0xff]
      %s7635 = scalar_lea.vmem [#allocation3], 321
      %v7636 = vld [vmem:[%s7635] ss:$4 sm:$0xff]
      %s7637 = scalar_lea.vmem [#allocation3], 353
      %v7638 = vld [vmem:[%s7637] ss:$4 sm:$0xff]
      %s7639 = scalar_lea.vmem [#allocation3], 385
      %v7640 = vld [vmem:[%s7639] ss:$4 sm:$0xff]
      %s7641 = scalar_lea.vmem [#allocation3], 417
      %v7642 = vld [vmem:[%s7641] ss:$4 sm:$0xff]
      %s7643 = scalar_lea.vmem [#allocation3], 449
      %v7644 = vld [vmem:[%s7643] ss:$4 sm:$0xff]
      %s7645 = scalar_lea.vmem [#allocation3], 481
      %v7646 = vld [vmem:[%s7645] ss:$4 sm:$0xff]
      %v7647 = vld [vmem:[%s9 + $0x8] sm:$0xff]
      %v7649 = vsel %vm4048, %v7616, 0
      %v7652 = vsel %vm4048, %v7618, 0
      %v7655 = vsel %vm4048, %v7620, 0
      %v7658 = vsel %vm4048, %v7622, 0
      %v7661 = vsel %vm4048, %v7624, 0
      %v7664 = vsel %vm4048, %v7626, 0
      %v7667 = vsel %vm4048, %v7628, 0
      %v7670 = vsel %vm4048, %v7630, 0
      %v7673 = vsel %vm4048, %v7632, 0
      %v7676 = vsel %vm4048, %v7634, 0
      %v7679 = vsel %vm4048, %v7636, 0
      %v7682 = vsel %vm4048, %v7638, 0
      %v7685 = vsel %vm4048, %v7640, 0
      %v7688 = vsel %vm4048, %v7642, 0
      %v7691 = vsel %vm4048, %v7644, 0
      %v7694 = vsel %vm4048, %v7646, 0
      %7696 = vmatprep.subr.mxu0 0.0
      %7697 = vmatpush1.msra.mxu0 %v7647
      %7698 = vmatprep.subr.mxu0 0.0
      %7699 = vmatpush1.msra.mxu0 0.0
      %7700 = vmatprep.subr.mxu0 0.0
      %7701 = vmatpush1.msra.mxu0 0.0
      %7702 = vmatprep.subr.mxu0 0.0
      %7703 = vmatpush1.msra.mxu0 0.0
      %7704 = vmatprep.subr.mxu0 0.0
      %7705 = vmatpush1.msra.mxu0 0.0
      %7706 = vmatprep.subr.mxu0 0.0
      %7707 = vmatpush1.msra.mxu0 0.0
      %7708 = vmatprep.subr.mxu0 0.0
      %7709 = vmatpush1.msra.mxu0 0.0
      %7710 = vmatprep.subr.mxu0 0.0
      %7711 = vmatpush1.msra.mxu0 0.0
      %7712 = vmatprep.subr.mxu0 0.0
      %7713 = vmatpush1.msra.mxu0 0.0
      %7714 = vmatprep.subr.mxu0 0.0
      %7715 = vmatpush1.msra.mxu0 0.0
      %7716 = vmatprep.subr.mxu0 0.0
      %7717 = vmatpush1.msra.mxu0 0.0
      %7718 = vmatprep.subr.mxu0 0.0
      %7719 = vmatpush1.msra.mxu0 0.0
      %7720 = vmatprep.subr.mxu0 0.0
      %7721 = vmatpush1.msra.mxu0 0.0
      %7722 = vmatprep.subr.mxu0 0.0
      %7723 = vmatpush1.msra.mxu0 0.0
      %7724 = vmatprep.subr.mxu0 0.0
      %7725 = vmatpush1.msra.mxu0 0.0
      %7726 = vmatprep.subr.mxu0 0.0
      %7727 = vmatpush1.msra.mxu0 0.0
      %7728 = vmatprep.subr.mxu0 0.0
      %7729 = vmatpush1.msra.mxu0 0.0
      %7730 = vmatprep.subr.mxu0 0.0
      %7731 = vmatpush1.msra.mxu0 0.0
      %7732 = vmatprep.subr.mxu0 0.0
      %7733 = vmatpush1.msra.mxu0 0.0
      %7734 = vmatprep.subr.mxu0 0.0
      %7735 = vmatpush1.msra.mxu0 0.0
      %7736 = vmatprep.subr.mxu0 0.0
      %7737 = vmatpush1.msra.mxu0 0.0
      %7738 = vmatprep.subr.mxu0 0.0
      %7739 = vmatpush1.msra.mxu0 0.0
      %7740 = vmatprep.subr.mxu0 0.0
      %7741 = vmatpush1.msra.mxu0 0.0
      %7742 = vmatprep.subr.mxu0 0.0
      %7743 = vmatpush1.msra.mxu0 0.0
      %7744 = vmatprep.subr.mxu0 0.0
      %7745 = vmatpush1.msra.mxu0 0.0
      %7746 = vmatprep.subr.mxu0 0.0
      %7747 = vmatpush1.msra.mxu0 0.0
      %7748 = vmatprep.subr.mxu0 0.0
      %7749 = vmatpush1.msra.mxu0 0.0
      %7750 = vmatprep.subr.mxu0 0.0
      %7751 = vmatpush1.msra.mxu0 0.0
      %7752 = vmatprep.subr.mxu0 0.0
      %7753 = vmatpush1.msra.mxu0 0.0
      %7754 = vmatprep.subr.mxu0 0.0
      %7755 = vmatpush1.msra.mxu0 0.0
      %7756 = vmatprep.subr.mxu0 0.0
      %7757 = vmatpush1.msra.mxu0 0.0
      %7758 = vmatprep.subr.mxu0 0.0
      %7759 = vmatpush1.msra.mxu0 0.0
      %7760 = vmatprep.mubr.f32.mxu0 0.0
      %7761 = vmatmul.mubr.f32.gmra.mrb[0].mxu0 %v7649
      %v7762 = vpop.f32.mrb[0].mxu0
      %v7763 = vadd.f32 0.0, %v7762
      %v7764 = vpop.f32.mrb[0].mxu0
      %7765 = vmatprep.mubr.f32.mxu0 0.0
      %7766 = vmatmul.mubr.f32.gmra.mrb[0].mxu0 %v7652
      %v7767 = vpop.f32.mrb[0].mxu0
      %v7768 = vadd.f32 0.0, %v7767
      %v7769 = vpop.f32.mrb[0].mxu0
      %7770 = vmatprep.mubr.f32.mxu0 0.0
      %7771 = vmatmul.mubr.f32.gmra.mrb[0].mxu0 %v7655
      %v7772 = vpop.f32.mrb[0].mxu0
      %v7773 = vadd.f32 0.0, %v7772
      %v7774 = vpop.f32.mrb[0].mxu0
      %7775 = vmatprep.mubr.f32.mxu0 0.0
      %7776 = vmatmul.mubr.f32.gmra.mrb[0].mxu0 %v7658
      %v7777 = vpop.f32.mrb[0].mxu0
      %v7778 = vadd.f32 0.0, %v7777
      %v7779 = vpop.f32.mrb[0].mxu0
      %7780 = vmatprep.mubr.f32.mxu0 0.0
      %7781 = vmatmul.mubr.f32.gmra.mrb[0].mxu0 %v7661
      %v7782 = vpop.f32.mrb[0].mxu0
      %v7783 = vadd.f32 0.0, %v7782
      %v7784 = vpop.f32.mrb[0].mxu0
      %7785 = vmatprep.mubr.f32.mxu0 0.0
      %7786 = vmatmul.mubr.f32.gmra.mrb[0].mxu0 %v7664
      %v7787 = vpop.f32.mrb[0].mxu0
      %v7788 = vadd.f32 0.0, %v7787
      %v7789 = vpop.f32.mrb[0].mxu0
      %7790 = vmatprep.mubr.f32.mxu0 0.0
      %7791 = vmatmul.mubr.f32.gmra.mrb[0].mxu0 %v7667
      %v7792 = vpop.f32.mrb[0].mxu0
      %v7793 = vadd.f32 0.0, %v7792
      %v7794 = vpop.f32.mrb[0].mxu0
      %7795 = vmatprep.mubr.f32.mxu0 0.0
      %7796 = vmatmul.mubr.f32.gmra.mrb[0].mxu0 %v7670
      %v7797 = vpop.f32.mrb[0].mxu0
      %v7798 = vadd.f32 0.0, %v7797
      %v7799 = vpop.f32.mrb[0].mxu0
      %7800 = vmatprep.mubr.f32.mxu0 0.0
      %7801 = vmatmul.mubr.f32.gmra.mrb[0].mxu0 %v7673
      %v7802 = vpop.f32.mrb[0].mxu0
      %v7803 = vadd.f32 0.0, %v7802
      %v7804 = vpop.f32.mrb[0].mxu0
      %7805 = vmatprep.mubr.f32.mxu0 0.0
      %7806 = vmatmul.mubr.f32.gmra.mrb[0].mxu0 %v7676
      %v7807 = vpop.f32.mrb[0].mxu0
      %v7808 = vadd.f32 0.0, %v7807
      %v7809 = vpop.f32.mrb[0].mxu0
      %7810 = vmatprep.mubr.f32.mxu0 0.0
      %7811 = vmatmul.mubr.f32.gmra.mrb[0].mxu0 %v7679
      %v7812 = vpop.f32.mrb[0].mxu0
      %v7813 = vadd.f32 0.0, %v7812
      %v7814 = vpop.f32.mrb[0].mxu0
      %7815 = vmatprep.mubr.f32.mxu0 0.0
      %7816 = vmatmul.mubr.f32.gmra.mrb[0].mxu0 %v7682
      %v7817 = vpop.f32.mrb[0].mxu0
      %v7818 = vadd.f32 0.0, %v7817
      %v7819 = vpop.f32.mrb[0].mxu0
      %7820 = vmatprep.mubr.f32.mxu0 0.0
      %7821 = vmatmul.mubr.f32.gmra.mrb[0].mxu0 %v7685
      %v7822 = vpop.f32.mrb[0].mxu0
      %v7823 = vadd.f32 0.0, %v7822
      %v7824 = vpop.f32.mrb[0].mxu0
      %7825 = vmatprep.mubr.f32.mxu0 0.0
      %7826 = vmatmul.mubr.f32.gmra.mrb[0].mxu0 %v7688
      %v7827 = vpop.f32.mrb[0].mxu0
      %v7828 = vadd.f32 0.0, %v7827
      %v7829 = vpop.f32.mrb[0].mxu0
      %7830 = vmatprep.mubr.f32.mxu0 0.0
      %7831 = vmatmul.mubr.f32.gmra.mrb[0].mxu0 %v7691
      %v7832 = vpop.f32.mrb[0].mxu0
      %v7833 = vadd.f32 0.0, %v7832
      %v7834 = vpop.f32.mrb[0].mxu0
      %7835 = vmatprep.mubr.f32.mxu0 0.0
      %7836 = vmatmul.mubr.f32.gmra.mrb[0].mxu0 %v7694
      %v7837 = vpop.f32.mrb[0].mxu0
      %v7838 = vadd.f32 0.0, %v7837
      %v7839 = vpop.f32.mrb[0].mxu0
      %7840 = vdwg.mxu0
      %v7842 = vsel %vm4048, %v7583, 0
      %v7845 = vsel %vm4048, %v7585, 0
      %v7848 = vsel %vm4048, %v7587, 0
      %v7851 = vsel %vm4048, %v7589, 0
      %v7854 = vsel %vm4048, %v7591, 0
      %v7857 = vsel %vm4048, %v7593, 0
      %v7860 = vsel %vm4048, %v7595, 0
      %v7863 = vsel %vm4048, %v7597, 0
      %v7866 = vsel %vm4048, %v7599, 0
      %v7869 = vsel %vm4048, %v7601, 0
      %v7872 = vsel %vm4048, %v7603, 0
      %v7875 = vsel %vm4048, %v7605, 0
      %v7878 = vsel %vm4048, %v7607, 0
      %v7881 = vsel %vm4048, %v7609, 0
      %v7884 = vsel %vm4048, %v7611, 0
      %v7887 = vsel %vm4048, %v7613, 0
      %7889 = vmatprep.subr.mxu0 0.0
      %7890 = vmatpush1.msra.mxu0 %v7614
      %7891 = vmatprep.subr.mxu0 0.0
      %7892 = vmatpush1.msra.mxu0 0.0
      %7893 = vmatprep.subr.mxu0 0.0
      %7894 = vmatpush1.msra.mxu0 0.0
      %7895 = vmatprep.subr.mxu0 0.0
      %7896 = vmatpush1.msra.mxu0 0.0
      %7897 = vmatprep.subr.mxu0 0.0
      %7898 = vmatpush1.msra.mxu0 0.0
      %7899 = vmatprep.subr.mxu0 0.0
      %7900 = vmatpush1.msra.mxu0 0.0
      %7901 = vmatprep.subr.mxu0 0.0
      %7902 = vmatpush1.msra.mxu0 0.0
      %7903 = vmatprep.subr.mxu0 0.0
      %7904 = vmatpush1.msra.mxu0 0.0
      %7905 = vmatprep.subr.mxu0 0.0
      %7906 = vmatpush1.msra.mxu0 0.0
      %7907 = vmatprep.subr.mxu0 0.0
      %7908 = vmatpush1.msra.mxu0 0.0
      %7909 = vmatprep.subr.mxu0 0.0
      %7910 = vmatpush1.msra.mxu0 0.0
      %7911 = vmatprep.subr.mxu0 0.0
      %7912 = vmatpush1.msra.mxu0 0.0
      %7913 = vmatprep.subr.mxu0 0.0
      %7914 = vmatpush1.msra.mxu0 0.0
      %7915 = vmatprep.subr.mxu0 0.0
      %7916 = vmatpush1.msra.mxu0 0.0
      %7917 = vmatprep.subr.mxu0 0.0
      %7918 = vmatpush1.msra.mxu0 0.0
      %7919 = vmatprep.subr.mxu0 0.0
      %7920 = vmatpush1.msra.mxu0 0.0
      %7921 = vmatprep.subr.mxu0 0.0
      %7922 = vmatpush1.msra.mxu0 0.0
      %7923 = vmatprep.subr.mxu0 0.0
      %7924 = vmatpush1.msra.mxu0 0.0
      %7925 = vmatprep.subr.mxu0 0.0
      %7926 = vmatpush1.msra.mxu0 0.0
      %7927 = vmatprep.subr.mxu0 0.0
      %7928 = vmatpush1.msra.mxu0 0.0
      %7929 = vmatprep.subr.mxu0 0.0
      %7930 = vmatpush1.msra.mxu0 0.0
      %7931 = vmatprep.subr.mxu0 0.0
      %7932 = vmatpush1.msra.mxu0 0.0
      %7933 = vmatprep.subr.mxu0 0.0
      %7934 = vmatpush1.msra.mxu0 0.0
      %7935 = vmatprep.subr.mxu0 0.0
      %7936 = vmatpush1.msra.mxu0 0.0
      %7937 = vmatprep.subr.mxu0 0.0
      %7938 = vmatpush1.msra.mxu0 0.0
      %7939 = vmatprep.subr.mxu0 0.0
      %7940 = vmatpush1.msra.mxu0 0.0
      %7941 = vmatprep.subr.mxu0 0.0
      %7942 = vmatpush1.msra.mxu0 0.0
      %7943 = vmatprep.subr.mxu0 0.0
      %7944 = vmatpush1.msra.mxu0 0.0
      %7945 = vmatprep.subr.mxu0 0.0
      %7946 = vmatpush1.msra.mxu0 0.0
      %7947 = vmatprep.subr.mxu0 0.0
      %7948 = vmatpush1.msra.mxu0 0.0
      %7949 = vmatprep.subr.mxu0 0.0
      %7950 = vmatpush1.msra.mxu0 0.0
      %7951 = vmatprep.subr.mxu0 0.0
      %7952 = vmatpush1.msra.mxu0 0.0
      %7953 = vmatprep.mubr.f32.mxu0 0.0
      %7954 = vmatmul.mubr.f32.gmra.mrb[0].mxu0 %v7842
      %v7955 = vpop.f32.mrb[0].mxu0
      %v7956 = vadd.f32 %v7763, %v7955
      %v7957 = vpop.f32.mrb[0].mxu0
      %7958 = vmatprep.mubr.f32.mxu0 0.0
      %7959 = vmatmul.mubr.f32.gmra.mrb[0].mxu0 %v7845
      %v7960 = vpop.f32.mrb[0].mxu0
      %v7961 = vadd.f32 %v7768, %v7960
      %v7962 = vpop.f32.mrb[0].mxu0
      %7963 = vmatprep.mubr.f32.mxu0 0.0
      %7964 = vmatmul.mubr.f32.gmra.mrb[0].mxu0 %v7848
      %v7965 = vpop.f32.mrb[0].mxu0
      %v7966 = vadd.f32 %v7773, %v7965
      %v7967 = vpop.f32.mrb[0].mxu0
      %7968 = vmatprep.mubr.f32.mxu0 0.0
      %7969 = vmatmul.mubr.f32.gmra.mrb[0].mxu0 %v7851
      %v7970 = vpop.f32.mrb[0].mxu0
      %v7971 = vadd.f32 %v7778, %v7970
      %v7972 = vpop.f32.mrb[0].mxu0
      %7973 = vmatprep.mubr.f32.mxu0 0.0
      %7974 = vmatmul.mubr.f32.gmra.mrb[0].mxu0 %v7854
      %v7975 = vpop.f32.mrb[0].mxu0
      %v7976 = vadd.f32 %v7783, %v7975
      %v7977 = vpop.f32.mrb[0].mxu0
      %7978 = vmatprep.mubr.f32.mxu0 0.0
      %7979 = vmatmul.mubr.f32.gmra.mrb[0].mxu0 %v7857
      %v7980 = vpop.f32.mrb[0].mxu0
      %v7981 = vadd.f32 %v7788, %v7980
      %v7982 = vpop.f32.mrb[0].mxu0
      %7983 = vmatprep.mubr.f32.mxu0 0.0
      %7984 = vmatmul.mubr.f32.gmra.mrb[0].mxu0 %v7860
      %v7985 = vpop.f32.mrb[0].mxu0
      %v7986 = vadd.f32 %v7793, %v7985
      %v7987 = vpop.f32.mrb[0].mxu0
      %7988 = vmatprep.mubr.f32.mxu0 0.0
      %7989 = vmatmul.mubr.f32.gmra.mrb[0].mxu0 %v7863
      %v7990 = vpop.f32.mrb[0].mxu0
      %v7991 = vadd.f32 %v7798, %v7990
      %v7992 = vpop.f32.mrb[0].mxu0
      %7993 = vmatprep.mubr.f32.mxu0 0.0
      %7994 = vmatmul.mubr.f32.gmra.mrb[0].mxu0 %v7866
      %v7995 = vpop.f32.mrb[0].mxu0
      %v7996 = vadd.f32 %v7803, %v7995
      %v7997 = vpop.f32.mrb[0].mxu0
      %7998 = vmatprep.mubr.f32.mxu0 0.0
      %7999 = vmatmul.mubr.f32.gmra.mrb[0].mxu0 %v7869
      %v8000 = vpop.f32.mrb[0].mxu0
      %v8001 = vadd.f32 %v7808, %v8000
      %v8002 = vpop.f32.mrb[0].mxu0
      %8003 = vmatprep.mubr.f32.mxu0 0.0
      %8004 = vmatmul.mubr.f32.gmra.mrb[0].mxu0 %v7872
      %v8005 = vpop.f32.mrb[0].mxu0
      %v8006 = vadd.f32 %v7813, %v8005
      %v8007 = vpop.f32.mrb[0].mxu0
      %8008 = vmatprep.mubr.f32.mxu0 0.0
      %8009 = vmatmul.mubr.f32.gmra.mrb[0].mxu0 %v7875
      %v8010 = vpop.f32.mrb[0].mxu0
      %v8011 = vadd.f32 %v7818, %v8010
      %v8012 = vpop.f32.mrb[0].mxu0
      %8013 = vmatprep.mubr.f32.mxu0 0.0
      %8014 = vmatmul.mubr.f32.gmra.mrb[0].mxu0 %v7878
      %v8015 = vpop.f32.mrb[0].mxu0
      %v8016 = vadd.f32 %v7823, %v8015
      %v8017 = vpop.f32.mrb[0].mxu0
      %8018 = vmatprep.mubr.f32.mxu0 0.0
      %8019 = vmatmul.mubr.f32.gmra.mrb[0].mxu0 %v7881
      %v8020 = vpop.f32.mrb[0].mxu0
      %v8021 = vadd.f32 %v7828, %v8020
      %v8022 = vpop.f32.mrb[0].mxu0
      %8023 = vmatprep.mubr.f32.mxu0 0.0
      %8024 = vmatmul.mubr.f32.gmra.mrb[0].mxu0 %v7884
      %v8025 = vpop.f32.mrb[0].mxu0
      %v8026 = vadd.f32 %v7833, %v8025
      %v8027 = vpop.f32.mrb[0].mxu0
      %8028 = vmatprep.mubr.f32.mxu0 0.0
      %8029 = vmatmul.mubr.f32.gmra.mrb[0].mxu0 %v7887
      %v8030 = vpop.f32.mrb[0].mxu0
      %v8031 = vadd.f32 %v7838, %v8030
      %v8032 = vpop.f32.mrb[0].mxu0
      %8033 = vdwg.mxu0
      %s8034 = scalar_lea.vmem [#allocation3], 2
      %v8035 = vld [vmem:[%s8034] ss:$4 sm:$0xff]
      %s8036 = scalar_lea.vmem [#allocation3], 34
      %v8037 = vld [vmem:[%s8036] ss:$4 sm:$0xff]
      %s8038 = scalar_lea.vmem [#allocation3], 66
      %v8039 = vld [vmem:[%s8038] ss:$4 sm:$0xff]
      %s8040 = scalar_lea.vmem [#allocation3], 98
      %v8041 = vld [vmem:[%s8040] ss:$4 sm:$0xff]
      %s8042 = scalar_lea.vmem [#allocation3], 130
      %v8043 = vld [vmem:[%s8042] ss:$4 sm:$0xff]
      %s8044 = scalar_lea.vmem [#allocation3], 162
      %v8045 = vld [vmem:[%s8044] ss:$4 sm:$0xff]
      %s8046 = scalar_lea.vmem [#allocation3], 194
      %v8047 = vld [vmem:[%s8046] ss:$4 sm:$0xff]
      %s8048 = scalar_lea.vmem [#allocation3], 226
      %v8049 = vld [vmem:[%s8048] ss:$4 sm:$0xff]
      %s8050 = scalar_lea.vmem [#allocation3], 258
      %v8051 = vld [vmem:[%s8050] ss:$4 sm:$0xff]
      %s8052 = scalar_lea.vmem [#allocation3], 290
      %v8053 = vld [vmem:[%s8052] ss:$4 sm:$0xff]
      %s8054 = scalar_lea.vmem [#allocation3], 322
      %v8055 = vld [vmem:[%s8054] ss:$4 sm:$0xff]
      %s8056 = scalar_lea.vmem [#allocation3], 354
      %v8057 = vld [vmem:[%s8056] ss:$4 sm:$0xff]
      %s8058 = scalar_lea.vmem [#allocation3], 386
      %v8059 = vld [vmem:[%s8058] ss:$4 sm:$0xff]
      %s8060 = scalar_lea.vmem [#allocation3], 418
      %v8061 = vld [vmem:[%s8060] ss:$4 sm:$0xff]
      %s8062 = scalar_lea.vmem [#allocation3], 450
      %v8063 = vld [vmem:[%s8062] ss:$4 sm:$0xff]
      %s8064 = scalar_lea.vmem [#allocation3], 482
      %v8065 = vld [vmem:[%s8064] ss:$4 sm:$0xff]
      %v8066 = vld [vmem:[%s9 + $0x10] sm:$0xff]
      %v8068 = vsel %vm4048, %v8035, 0
      %v8071 = vsel %vm4048, %v8037, 0
      %v8074 = vsel %vm4048, %v8039, 0
      %v8077 = vsel %vm4048, %v8041, 0
      %v8080 = vsel %vm4048, %v8043, 0
      %v8083 = vsel %vm4048, %v8045, 0
      %v8086 = vsel %vm4048, %v8047, 0
      %v8089 = vsel %vm4048, %v8049, 0
      %v8092 = vsel %vm4048, %v8051, 0
      %v8095 = vsel %vm4048, %v8053, 0
      %v8098 = vsel %vm4048, %v8055, 0
      %v8101 = vsel %vm4048, %v8057, 0
      %v8104 = vsel %vm4048, %v8059, 0
      %v8107 = vsel %vm4048, %v8061, 0
      %v8110 = vsel %vm4048, %v8063, 0
      %v8113 = vsel %vm4048, %v8065, 0
      %8115 = vmatprep.subr.mxu0 0.0
      %8116 = vmatpush1.msra.mxu0 %v8066
      %8117 = vmatprep.subr.mxu0 0.0
      %8118 = vmatpush1.msra.mxu0 0.0
      %8119 = vmatprep.subr.mxu0 0.0
      %8120 = vmatpush1.msra.mxu0 0.0
      %8121 = vmatprep.subr.mxu0 0.0
      %8122 = vmatpush1.msra.mxu0 0.0
      %8123 = vmatprep.subr.mxu0 0.0
      %8124 = vmatpush1.msra.mxu0 0.0
      %8125 = vmatprep.subr.mxu0 0.0
      %8126 = vmatpush1.msra.mxu0 0.0
      %8127 = vmatprep.subr.mxu0 0.0
      %8128 = vmatpush1.msra.mxu0 0.0
      %8129 = vmatprep.subr.mxu0 0.0
      %8130 = vmatpush1.msra.mxu0 0.0
      %8131 = vmatprep.subr.mxu0 0.0
      %8132 = vmatpush1.msra.mxu0 0.0
      %8133 = vmatprep.subr.mxu0 0.0
      %8134 = vmatpush1.msra.mxu0 0.0
      %8135 = vmatprep.subr.mxu0 0.0
      %8136 = vmatpush1.msra.mxu0 0.0
      %8137 = vmatprep.subr.mxu0 0.0
      %8138 = vmatpush1.msra.mxu0 0.0
      %8139 = vmatprep.subr.mxu0 0.0
      %8140 = vmatpush1.msra.mxu0 0.0
      %8141 = vmatprep.subr.mxu0 0.0
      %8142 = vmatpush1.msra.mxu0 0.0
      %8143 = vmatprep.subr.mxu0 0.0
      %8144 = vmatpush1.msra.mxu0 0.0
      %8145 = vmatprep.subr.mxu0 0.0
      %8146 = vmatpush1.msra.mxu0 0.0
      %8147 = vmatprep.subr.mxu0 0.0
      %8148 = vmatpush1.msra.mxu0 0.0
      %8149 = vmatprep.subr.mxu0 0.0
      %8150 = vmatpush1.msra.mxu0 0.0
      %8151 = vmatprep.subr.mxu0 0.0
      %8152 = vmatpush1.msra.mxu0 0.0
      %8153 = vmatprep.subr.mxu0 0.0
      %8154 = vmatpush1.msra.mxu0 0.0
      %8155 = vmatprep.subr.mxu0 0.0
      %8156 = vmatpush1.msra.mxu0 0.0
      %8157 = vmatprep.subr.mxu0 0.0
      %8158 = vmatpush1.msra.mxu0 0.0
      %8159 = vmatprep.subr.mxu0 0.0
      %8160 = vmatpush1.msra.mxu0 0.0
      %8161 = vmatprep.subr.mxu0 0.0
      %8162 = vmatpush1.msra.mxu0 0.0
      %8163 = vmatprep.subr.mxu0 0.0
      %8164 = vmatpush1.msra.mxu0 0.0
      %8165 = vmatprep.subr.mxu0 0.0
      %8166 = vmatpush1.msra.mxu0 0.0
      %8167 = vmatprep.subr.mxu0 0.0
      %8168 = vmatpush1.msra.mxu0 0.0
      %8169 = vmatprep.subr.mxu0 0.0
      %8170 = vmatpush1.msra.mxu0 0.0
      %8171 = vmatprep.subr.mxu0 0.0
      %8172 = vmatpush1.msra.mxu0 0.0
      %8173 = vmatprep.subr.mxu0 0.0
      %8174 = vmatpush1.msra.mxu0 0.0
      %8175 = vmatprep.subr.mxu0 0.0
      %8176 = vmatpush1.msra.mxu0 0.0
      %8177 = vmatprep.subr.mxu0 0.0
      %8178 = vmatpush1.msra.mxu0 0.0
      %8179 = vmatprep.mubr.f32.mxu0 0.0
      %8180 = vmatmul.mubr.f32.gmra.mrb[0].mxu0 %v8068
      %v8181 = vpop.f32.mrb[0].mxu0
      %v8182 = vadd.f32 0.0, %v8181
      %v8183 = vpop.f32.mrb[0].mxu0
      %8184 = vmatprep.mubr.f32.mxu0 0.0
      %8185 = vmatmul.mubr.f32.gmra.mrb[0].mxu0 %v8071
      %v8186 = vpop.f32.mrb[0].mxu0
      %v8187 = vadd.f32 0.0, %v8186
      %v8188 = vpop.f32.mrb[0].mxu0
      %8189 = vmatprep.mubr.f32.mxu0 0.0
      %8190 = vmatmul.mubr.f32.gmra.mrb[0].mxu0 %v8074
      %v8191 = vpop.f32.mrb[0].mxu0
      %v8192 = vadd.f32 0.0, %v8191
      %v8193 = vpop.f32.mrb[0].mxu0
      %8194 = vmatprep.mubr.f32.mxu0 0.0
      %8195 = vmatmul.mubr.f32.gmra.mrb[0].mxu0 %v8077
      %v8196 = vpop.f32.mrb[0].mxu0
      %v8197 = vadd.f32 0.0, %v8196
      %v8198 = vpop.f32.mrb[0].mxu0
      %8199 = vmatprep.mubr.f32.mxu0 0.0
      %8200 = vmatmul.mubr.f32.gmra.mrb[0].mxu0 %v8080
      %v8201 = vpop.f32.mrb[0].mxu0
      %v8202 = vadd.f32 0.0, %v8201
      %v8203 = vpop.f32.mrb[0].mxu0
      %8204 = vmatprep.mubr.f32.mxu0 0.0
      %8205 = vmatmul.mubr.f32.gmra.mrb[0].mxu0 %v8083
      %v8206 = vpop.f32.mrb[0].mxu0
      %v8207 = vadd.f32 0.0, %v8206
      %v8208 = vpop.f32.mrb[0].mxu0
      %8209 = vmatprep.mubr.f32.mxu0 0.0
      %8210 = vmatmul.mubr.f32.gmra.mrb[0].mxu0 %v8086
      %v8211 = vpop.f32.mrb[0].mxu0
      %v8212 = vadd.f32 0.0, %v8211
      %v8213 = vpop.f32.mrb[0].mxu0
      %8214 = vmatprep.mubr.f32.mxu0 0.0
      %8215 = vmatmul.mubr.f32.gmra.mrb[0].mxu0 %v8089
      %v8216 = vpop.f32.mrb[0].mxu0
      %v8217 = vadd.f32 0.0, %v8216
      %v8218 = vpop.f32.mrb[0].mxu0
      %8219 = vmatprep.mubr.f32.mxu0 0.0
      %8220 = vmatmul.mubr.f32.gmra.mrb[0].mxu0 %v8092
      %v8221 = vpop.f32.mrb[0].mxu0
      %v8222 = vadd.f32 0.0, %v8221
      %v8223 = vpop.f32.mrb[0].mxu0
      %8224 = vmatprep.mubr.f32.mxu0 0.0
      %8225 = vmatmul.mubr.f32.gmra.mrb[0].mxu0 %v8095
      %v8226 = vpop.f32.mrb[0].mxu0
      %v8227 = vadd.f32 0.0, %v8226
      %v8228 = vpop.f32.mrb[0].mxu0
      %8229 = vmatprep.mubr.f32.mxu0 0.0
      %8230 = vmatmul.mubr.f32.gmra.mrb[0].mxu0 %v8098
      %v8231 = vpop.f32.mrb[0].mxu0
      %v8232 = vadd.f32 0.0, %v8231
      %v8233 = vpop.f32.mrb[0].mxu0
      %8234 = vmatprep.mubr.f32.mxu0 0.0
      %8235 = vmatmul.mubr.f32.gmra.mrb[0].mxu0 %v8101
      %v8236 = vpop.f32.mrb[0].mxu0
      %v8237 = vadd.f32 0.0, %v8236
      %v8238 = vpop.f32.mrb[0].mxu0
      %8239 = vmatprep.mubr.f32.mxu0 0.0
      %8240 = vmatmul.mubr.f32.gmra.mrb[0].mxu0 %v8104
      %v8241 = vpop.f32.mrb[0].mxu0
      %v8242 = vadd.f32 0.0, %v8241
      %v8243 = vpop.f32.mrb[0].mxu0
      %8244 = vmatprep.mubr.f32.mxu0 0.0
      %8245 = vmatmul.mubr.f32.gmra.mrb[0].mxu0 %v8107
      %v8246 = vpop.f32.mrb[0].mxu0
      %v8247 = vadd.f32 0.0, %v8246
      %v8248 = vpop.f32.mrb[0].mxu0
      %8249 = vmatprep.mubr.f32.mxu0 0.0
      %8250 = vmatmul.mubr.f32.gmra.mrb[0].mxu0 %v8110
      %v8251 = vpop.f32.mrb[0].mxu0
      %v8252 = vadd.f32 0.0, %v8251
      %v8253 = vpop.f32.mrb[0].mxu0
      %8254 = vmatprep.mubr.f32.mxu0 0.0
      %8255 = vmatmul.mubr.f32.gmra.mrb[0].mxu0 %v8113
      %v8256 = vpop.f32.mrb[0].mxu0
      %v8257 = vadd.f32 0.0, %v8256
      %v8258 = vpop.f32.mrb[0].mxu0
      %8259 = vdwg.mxu0
      %v8260 = vadd.f32 %v7956, %v8182
      %v8261 = vadd.f32 %v7961, %v8187
      %v8262 = vadd.f32 %v7966, %v8192
      %v8263 = vadd.f32 %v7971, %v8197
      %v8264 = vadd.f32 %v7976, %v8202
      %v8265 = vadd.f32 %v7981, %v8207
      %v8266 = vadd.f32 %v7986, %v8212
      %v8267 = vadd.f32 %v7991, %v8217
      %v8268 = vadd.f32 %v7996, %v8222
      %v8269 = vadd.f32 %v8001, %v8227
      %v8270 = vadd.f32 %v8006, %v8232
      %v8271 = vadd.f32 %v8011, %v8237
      %v8272 = vadd.f32 %v8016, %v8242
      %v8273 = vadd.f32 %v8021, %v8247
      %v8274 = vadd.f32 %v8026, %v8252
      %v8275 = vadd.f32 %v8031, %v8257
      %s8276 = scalar_lea.vmem [#allocation3], 3
      %v8277 = vld [vmem:[%s8276] ss:$4 sm:$0xff]
      %s8278 = scalar_lea.vmem [#allocation3], 35
      %v8279 = vld [vmem:[%s8278] ss:$4 sm:$0xff]
      %s8280 = scalar_lea.vmem [#allocation3], 67
      %v8281 = vld [vmem:[%s8280] ss:$4 sm:$0xff]
      %s8282 = scalar_lea.vmem [#allocation3], 99
      %v8283 = vld [vmem:[%s8282] ss:$4 sm:$0xff]
      %s8284 = scalar_lea.vmem [#allocation3], 131
      %v8285 = vld [vmem:[%s8284] ss:$4 sm:$0xff]
      %s8286 = scalar_lea.vmem [#allocation3], 163
      %v8287 = vld [vmem:[%s8286] ss:$4 sm:$0xff]
      %s8288 = scalar_lea.vmem [#allocation3], 195
      %v8289 = vld [vmem:[%s8288] ss:$4 sm:$0xff]
      %s8290 = scalar_lea.vmem [#allocation3], 227
      %v8291 = vld [vmem:[%s8290] ss:$4 sm:$0xff]
      %s8292 = scalar_lea.vmem [#allocation3], 259
      %v8293 = vld [vmem:[%s8292] ss:$4 sm:$0xff]
      %s8294 = scalar_lea.vmem [#allocation3], 291
      %v8295 = vld [vmem:[%s8294] ss:$4 sm:$0xff]
      %s8296 = scalar_lea.vmem [#allocation3], 323
      %v8297 = vld [vmem:[%s8296] ss:$4 sm:$0xff]
      %s8298 = scalar_lea.vmem [#allocation3], 355
      %v8299 = vld [vmem:[%s8298] ss:$4 sm:$0xff]
      %s8300 = scalar_lea.vmem [#allocation3], 387
      %v8301 = vld [vmem:[%s8300] ss:$4 sm:$0xff]
      %s8302 = scalar_lea.vmem [#allocation3], 419
      %v8303 = vld [vmem:[%s8302] ss:$4 sm:$0xff]
      %s8304 = scalar_lea.vmem [#allocation3], 451
      %v8305 = vld [vmem:[%s8304] ss:$4 sm:$0xff]
      %s8306 = scalar_lea.vmem [#allocation3], 483
      %v8307 = vld [vmem:[%s8306] ss:$4 sm:$0xff]
      %v8308 = vld [vmem:[%s9 + $0x18] sm:$0xff]
      %v8310 = vsel %vm4048, %v8277, 0
      %v8313 = vsel %vm4048, %v8279, 0
      %v8316 = vsel %vm4048, %v8281, 0
      %v8319 = vsel %vm4048, %v8283, 0
      %v8322 = vsel %vm4048, %v8285, 0
      %v8325 = vsel %vm4048, %v8287, 0
      %v8328 = vsel %vm4048, %v8289, 0
      %v8331 = vsel %vm4048, %v8291, 0
      %v8334 = vsel %vm4048, %v8293, 0
      %v8337 = vsel %vm4048, %v8295, 0
      %v8340 = vsel %vm4048, %v8297, 0
      %v8343 = vsel %vm4048, %v8299, 0
      %v8346 = vsel %vm4048, %v8301, 0
      %v8349 = vsel %vm4048, %v8303, 0
      %v8352 = vsel %vm4048, %v8305, 0
      %v8355 = vsel %vm4048, %v8307, 0
      %8357 = vmatprep.subr.mxu0 0.0
      %8358 = vmatpush1.msra.mxu0 %v8308
      %8359 = vmatprep.subr.mxu0 0.0
      %8360 = vmatpush1.msra.mxu0 0.0
      %8361 = vmatprep.subr.mxu0 0.0
      %8362 = vmatpush1.msra.mxu0 0.0
      %8363 = vmatprep.subr.mxu0 0.0
      %8364 = vmatpush1.msra.mxu0 0.0
      %8365 = vmatprep.subr.mxu0 0.0
      %8366 = vmatpush1.msra.mxu0 0.0
      %8367 = vmatprep.subr.mxu0 0.0
      %8368 = vmatpush1.msra.mxu0 0.0
      %8369 = vmatprep.subr.mxu0 0.0
      %8370 = vmatpush1.msra.mxu0 0.0
      %8371 = vmatprep.subr.mxu0 0.0
      %8372 = vmatpush1.msra.mxu0 0.0
      %8373 = vmatprep.subr.mxu0 0.0
      %8374 = vmatpush1.msra.mxu0 0.0
      %8375 = vmatprep.subr.mxu0 0.0
      %8376 = vmatpush1.msra.mxu0 0.0
      %8377 = vmatprep.subr.mxu0 0.0
      %8378 = vmatpush1.msra.mxu0 0.0
      %8379 = vmatprep.subr.mxu0 0.0
      %8380 = vmatpush1.msra.mxu0 0.0
      %8381 = vmatprep.subr.mxu0 0.0
      %8382 = vmatpush1.msra.mxu0 0.0
      %8383 = vmatprep.subr.mxu0 0.0
      %8384 = vmatpush1.msra.mxu0 0.0
      %8385 = vmatprep.subr.mxu0 0.0
      %8386 = vmatpush1.msra.mxu0 0.0
      %8387 = vmatprep.subr.mxu0 0.0
      %8388 = vmatpush1.msra.mxu0 0.0
      %8389 = vmatprep.subr.mxu0 0.0
      %8390 = vmatpush1.msra.mxu0 0.0
      %8391 = vmatprep.subr.mxu0 0.0
      %8392 = vmatpush1.msra.mxu0 0.0
      %8393 = vmatprep.subr.mxu0 0.0
      %8394 = vmatpush1.msra.mxu0 0.0
      %8395 = vmatprep.subr.mxu0 0.0
      %8396 = vmatpush1.msra.mxu0 0.0
      %8397 = vmatprep.subr.mxu0 0.0
      %8398 = vmatpush1.msra.mxu0 0.0
      %8399 = vmatprep.subr.mxu0 0.0
      %8400 = vmatpush1.msra.mxu0 0.0
      %8401 = vmatprep.subr.mxu0 0.0
      %8402 = vmatpush1.msra.mxu0 0.0
      %8403 = vmatprep.subr.mxu0 0.0
      %8404 = vmatpush1.msra.mxu0 0.0
      %8405 = vmatprep.subr.mxu0 0.0
      %8406 = vmatpush1.msra.mxu0 0.0
      %8407 = vmatprep.subr.mxu0 0.0
      %8408 = vmatpush1.msra.mxu0 0.0
      %8409 = vmatprep.subr.mxu0 0.0
      %8410 = vmatpush1.msra.mxu0 0.0
      %8411 = vmatprep.subr.mxu0 0.0
      %8412 = vmatpush1.msra.mxu0 0.0
      %8413 = vmatprep.subr.mxu0 0.0
      %8414 = vmatpush1.msra.mxu0 0.0
      %8415 = vmatprep.subr.mxu0 0.0
      %8416 = vmatpush1.msra.mxu0 0.0
      %8417 = vmatprep.subr.mxu0 0.0
      %8418 = vmatpush1.msra.mxu0 0.0
      %8419 = vmatprep.subr.mxu0 0.0
      %8420 = vmatpush1.msra.mxu0 0.0
      %8421 = vmatprep.mubr.f32.mxu0 0.0
      %8422 = vmatmul.mubr.f32.gmra.mrb[0].mxu0 %v8310
      %v8423 = vpop.f32.mrb[0].mxu0
      %v8424 = vadd.f32 0.0, %v8423
      %v8425 = vpop.f32.mrb[0].mxu0
      %8426 = vmatprep.mubr.f32.mxu0 0.0
      %8427 = vmatmul.mubr.f32.gmra.mrb[0].mxu0 %v8313
      %v8428 = vpop.f32.mrb[0].mxu0
      %v8429 = vadd.f32 0.0, %v8428
      %v8430 = vpop.f32.mrb[0].mxu0
      %8431 = vmatprep.mubr.f32.mxu0 0.0
      %8432 = vmatmul.mubr.f32.gmra.mrb[0].mxu0 %v8316
      %v8433 = vpop.f32.mrb[0].mxu0
      %v8434 = vadd.f32 0.0, %v8433
      %v8435 = vpop.f32.mrb[0].mxu0
      %8436 = vmatprep.mubr.f32.mxu0 0.0
      %8437 = vmatmul.mubr.f32.gmra.mrb[0].mxu0 %v8319
      %v8438 = vpop.f32.mrb[0].mxu0
      %v8439 = vadd.f32 0.0, %v8438
      %v8440 = vpop.f32.mrb[0].mxu0
      %8441 = vmatprep.mubr.f32.mxu0 0.0
      %8442 = vmatmul.mubr.f32.gmra.mrb[0].mxu0 %v8322
      %v8443 = vpop.f32.mrb[0].mxu0
      %v8444 = vadd.f32 0.0, %v8443
      %v8445 = vpop.f32.mrb[0].mxu0
      %8446 = vmatprep.mubr.f32.mxu0 0.0
      %8447 = vmatmul.mubr.f32.gmra.mrb[0].mxu0 %v8325
      %v8448 = vpop.f32.mrb[0].mxu0
      %v8449 = vadd.f32 0.0, %v8448
      %v8450 = vpop.f32.mrb[0].mxu0
      %8451 = vmatprep.mubr.f32.mxu0 0.0
      %8452 = vmatmul.mubr.f32.gmra.mrb[0].mxu0 %v8328
      %v8453 = vpop.f32.mrb[0].mxu0
      %v8454 = vadd.f32 0.0, %v8453
      %v8455 = vpop.f32.mrb[0].mxu0
      %8456 = vmatprep.mubr.f32.mxu0 0.0
      %8457 = vmatmul.mubr.f32.gmra.mrb[0].mxu0 %v8331
      %v8458 = vpop.f32.mrb[0].mxu0
      %v8459 = vadd.f32 0.0, %v8458
      %v8460 = vpop.f32.mrb[0].mxu0
      %8461 = vmatprep.mubr.f32.mxu0 0.0
      %8462 = vmatmul.mubr.f32.gmra.mrb[0].mxu0 %v8334
      %v8463 = vpop.f32.mrb[0].mxu0
      %v8464 = vadd.f32 0.0, %v8463
      %v8465 = vpop.f32.mrb[0].mxu0
      %8466 = vmatprep.mubr.f32.mxu0 0.0
      %8467 = vmatmul.mubr.f32.gmra.mrb[0].mxu0 %v8337
      %v8468 = vpop.f32.mrb[0].mxu0
      %v8469 = vadd.f32 0.0, %v8468
      %v8470 = vpop.f32.mrb[0].mxu0
      %8471 = vmatprep.mubr.f32.mxu0 0.0
      %8472 = vmatmul.mubr.f32.gmra.mrb[0].mxu0 %v8340
      %v8473 = vpop.f32.mrb[0].mxu0
      %v8474 = vadd.f32 0.0, %v8473
      %v8475 = vpop.f32.mrb[0].mxu0
      %8476 = vmatprep.mubr.f32.mxu0 0.0
      %8477 = vmatmul.mubr.f32.gmra.mrb[0].mxu0 %v8343
      %v8478 = vpop.f32.mrb[0].mxu0
      %v8479 = vadd.f32 0.0, %v8478
      %v8480 = vpop.f32.mrb[0].mxu0
      %8481 = vmatprep.mubr.f32.mxu0 0.0
      %8482 = vmatmul.mubr.f32.gmra.mrb[0].mxu0 %v8346
      %v8483 = vpop.f32.mrb[0].mxu0
      %v8484 = vadd.f32 0.0, %v8483
      %v8485 = vpop.f32.mrb[0].mxu0
      %8486 = vmatprep.mubr.f32.mxu0 0.0
      %8487 = vmatmul.mubr.f32.gmra.mrb[0].mxu0 %v8349
      %v8488 = vpop.f32.mrb[0].mxu0
      %v8489 = vadd.f32 0.0, %v8488
      %v8490 = vpop.f32.mrb[0].mxu0
      %8491 = vmatprep.mubr.f32.mxu0 0.0
      %8492 = vmatmul.mubr.f32.gmra.mrb[0].mxu0 %v8352
      %v8493 = vpop.f32.mrb[0].mxu0
      %v8494 = vadd.f32 0.0, %v8493
      %v8495 = vpop.f32.mrb[0].mxu0
      %8496 = vmatprep.mubr.f32.mxu0 0.0
      %8497 = vmatmul.mubr.f32.gmra.mrb[0].mxu0 %v8355
      %v8498 = vpop.f32.mrb[0].mxu0
      %v8499 = vadd.f32 0.0, %v8498
      %v8500 = vpop.f32.mrb[0].mxu0
      %8501 = vdwg.mxu0
      %v8502 = vadd.f32 %v8260, %v8424
      %v8503 = vadd.f32 %v8261, %v8429
      %v8504 = vadd.f32 %v8262, %v8434
      %v8505 = vadd.f32 %v8263, %v8439
      %v8506 = vadd.f32 %v8264, %v8444
      %v8507 = vadd.f32 %v8265, %v8449
      %v8508 = vadd.f32 %v8266, %v8454
      %v8509 = vadd.f32 %v8267, %v8459
      %v8510 = vadd.f32 %v8268, %v8464
      %v8511 = vadd.f32 %v8269, %v8469
      %v8512 = vadd.f32 %v8270, %v8474
      %v8513 = vadd.f32 %v8271, %v8479
      %v8514 = vadd.f32 %v8272, %v8484
      %v8515 = vadd.f32 %v8273, %v8489
      %v8516 = vadd.f32 %v8274, %v8494
      %v8517 = vadd.f32 %v8275, %v8499
      %v8518 = vld [vmem:[%s10] sm:$0x1]
      %v8520 = vlaneseq
      %v8521 = vshrl.u32 %v8520, 7
      %v8522 = vsub.s32 0, %v8521
      %v8523 = vrot.slane %v8518, %v8522
      %v8525 = vadd.f32 %v8502, %v8523
      %v8526 = vadd.f32 %v8503, %v8523
      %v8527 = vadd.f32 %v8504, %v8523
      %v8528 = vadd.f32 %v8505, %v8523
      %v8529 = vadd.f32 %v8506, %v8523
      %v8530 = vadd.f32 %v8507, %v8523
      %v8531 = vadd.f32 %v8508, %v8523
      %v8532 = vadd.f32 %v8509, %v8523
      %v8533 = vadd.f32 %v8510, %v8523
      %v8534 = vadd.f32 %v8511, %v8523
      %v8535 = vadd.f32 %v8512, %v8523
      %v8536 = vadd.f32 %v8513, %v8523
      %v8537 = vadd.f32 %v8514, %v8523
      %v8538 = vadd.f32 %v8515, %v8523
      %v8539 = vadd.f32 %v8516, %v8523
      %v8540 = vadd.f32 %v8517, %v8523
      %v8541 = vmax.f32 %v8525, 0.0
      %v8542 = vmax.f32 %v8526, 0.0
      %v8543 = vmax.f32 %v8527, 0.0
      %v8544 = vmax.f32 %v8528, 0.0
      %v8545 = vmax.f32 %v8529, 0.0
      %v8546 = vmax.f32 %v8530, 0.0
      %v8547 = vmax.f32 %v8531, 0.0
      %v8548 = vmax.f32 %v8532, 0.0
      %v8549 = vmax.f32 %v8533, 0.0
      %v8550 = vmax.f32 %v8534, 0.0
      %v8551 = vmax.f32 %v8535, 0.0
      %v8552 = vmax.f32 %v8536, 0.0
      %v8553 = vmax.f32 %v8537, 0.0
      %v8554 = vmax.f32 %v8538, 0.0
      %v8555 = vmax.f32 %v8539, 0.0
      %v8556 = vmax.f32 %v8540, 0.0
      %v8557 = vld [vmem:[%s889] sm:$0xff]
      %v8558 = vld [vmem:[%s889 + $0x8] sm:$0xff]
      %v8559 = vld [vmem:[%s889 + $0x10] sm:$0xff]
      %v8560 = vld [vmem:[%s889 + $0x18] sm:$0xff]
      %v8561 = vld [vmem:[%s889 + $0x20] sm:$0xff]
      %v8562 = vld [vmem:[%s889 + $0x28] sm:$0xff]
      %v8563 = vld [vmem:[%s889 + $0x30] sm:$0xff]
      %v8564 = vld [vmem:[%s889 + $0x38] sm:$0xff]
      %v8565 = vld [vmem:[%s889 + $0x40] sm:$0xff]
      %v8566 = vld [vmem:[%s889 + $0x48] sm:$0xff]
      %v8567 = vld [vmem:[%s889 + $0x50] sm:$0xff]
      %v8568 = vld [vmem:[%s889 + $0x58] sm:$0xff]
      %v8569 = vld [vmem:[%s889 + $0x60] sm:$0xff]
      %v8570 = vld [vmem:[%s889 + $0x68] sm:$0xff]
      %v8571 = vld [vmem:[%s889 + $0x70] sm:$0xff]
      %v8572 = vld [vmem:[%s889 + $0x78] sm:$0xff]
      %v8573 = vadd.f32 %v8541, %v8557
      %v8574 = vadd.f32 %v8542, %v8558
      %v8575 = vadd.f32 %v8543, %v8559
      %v8576 = vadd.f32 %v8544, %v8560
      %v8577 = vadd.f32 %v8545, %v8561
      %v8578 = vadd.f32 %v8546, %v8562
      %v8579 = vadd.f32 %v8547, %v8563
      %v8580 = vadd.f32 %v8548, %v8564
      %v8581 = vadd.f32 %v8549, %v8565
      %v8582 = vadd.f32 %v8550, %v8566
      %v8583 = vadd.f32 %v8551, %v8567
      %v8584 = vadd.f32 %v8552, %v8568
      %v8585 = vadd.f32 %v8553, %v8569
      %v8586 = vadd.f32 %v8554, %v8570
      %v8587 = vadd.f32 %v8555, %v8571
      %v8588 = vadd.f32 %v8556, %v8572
      %8589 = vst.msk [vmem:[#allocation4] sm:$0xff] %vm4048, %v8573
      %8590 = vst.msk [vmem:[#allocation4 + $0x8] sm:$0xff] %vm4048, %v8574
      %8591 = vst.msk [vmem:[#allocation4 + $0x10] sm:$0xff] %vm4048, %v8575
      %8592 = vst.msk [vmem:[#allocation4 + $0x18] sm:$0xff] %vm4048, %v8576
      %8593 = vst.msk [vmem:[#allocation4 + $0x20] sm:$0xff] %vm4048, %v8577
      %8594 = vst.msk [vmem:[#allocation4 + $0x28] sm:$0xff] %vm4048, %v8578
      %8595 = vst.msk [vmem:[#allocation4 + $0x30] sm:$0xff] %vm4048, %v8579
      %8596 = vst.msk [vmem:[#allocation4 + $0x38] sm:$0xff] %vm4048, %v8580
      %8597 = vst.msk [vmem:[#allocation4 + $0x40] sm:$0xff] %vm4048, %v8581
      %8598 = vst.msk [vmem:[#allocation4 + $0x48] sm:$0xff] %vm4048, %v8582
      %8599 = vst.msk [vmem:[#allocation4 + $0x50] sm:$0xff] %vm4048, %v8583
      %8600 = vst.msk [vmem:[#allocation4 + $0x58] sm:$0xff] %vm4048, %v8584
      %8601 = vst.msk [vmem:[#allocation4 + $0x60] sm:$0xff] %vm4048, %v8585
      %8602 = vst.msk [vmem:[#allocation4 + $0x68] sm:$0xff] %vm4048, %v8586
      %8603 = vst.msk [vmem:[#allocation4 + $0x70] sm:$0xff] %vm4048, %v8587
      %8604 = vst.msk [vmem:[#allocation4 + $0x78] sm:$0xff] %vm4048, %v8588
      %v8605 = vld [vmem:[#allocation4] ss:$4 sm:$0xff]
      %s8606 = scalar_lea.vmem [#allocation4], 32
      %v8607 = vld [vmem:[%s8606] ss:$4 sm:$0xff]
      %s8608 = scalar_lea.vmem [#allocation4], 64
      %v8609 = vld [vmem:[%s8608] ss:$4 sm:$0xff]
      %s8610 = scalar_lea.vmem [#allocation4], 96
      %v8611 = vld [vmem:[%s8610] ss:$4 sm:$0xff]
      %v8612 = vld [vmem:[%s11] sm:$0xff]
      %s8613 = scalar_lea.vmem [#allocation4], 1
      %v8614 = vld [vmem:[%s8613] ss:$4 sm:$0xff]
      %s8615 = scalar_lea.vmem [#allocation4], 33
      %v8616 = vld [vmem:[%s8615] ss:$4 sm:$0xff]
      %s8617 = scalar_lea.vmem [#allocation4], 65
      %v8618 = vld [vmem:[%s8617] ss:$4 sm:$0xff]
      %s8619 = scalar_lea.vmem [#allocation4], 97
      %v8620 = vld [vmem:[%s8619] ss:$4 sm:$0xff]
      %v8621 = vld [vmem:[%s11 + $0x8] sm:$0xff]
      %v8623 = vsel %vm4048, %v8614, 0
      %v8626 = vsel %vm4048, %v8616, 0
      %v8629 = vsel %vm4048, %v8618, 0
      %v8632 = vsel %vm4048, %v8620, 0
      %8634 = vmatprep.subr.mxu0 0.0
      %8635 = vmatpush1.msra.mxu0 %v8621
      %8636 = vmatprep.subr.mxu0 0.0
      %8637 = vmatpush1.msra.mxu0 0.0
      %8638 = vmatprep.subr.mxu0 0.0
      %8639 = vmatpush1.msra.mxu0 0.0
      %8640 = vmatprep.subr.mxu0 0.0
      %8641 = vmatpush1.msra.mxu0 0.0
      %8642 = vmatprep.subr.mxu0 0.0
      %8643 = vmatpush1.msra.mxu0 0.0
      %8644 = vmatprep.subr.mxu0 0.0
      %8645 = vmatpush1.msra.mxu0 0.0
      %8646 = vmatprep.subr.mxu0 0.0
      %8647 = vmatpush1.msra.mxu0 0.0
      %8648 = vmatprep.subr.mxu0 0.0
      %8649 = vmatpush1.msra.mxu0 0.0
      %8650 = vmatprep.subr.mxu0 0.0
      %8651 = vmatpush1.msra.mxu0 0.0
      %8652 = vmatprep.subr.mxu0 0.0
      %8653 = vmatpush1.msra.mxu0 0.0
      %8654 = vmatprep.subr.mxu0 0.0
      %8655 = vmatpush1.msra.mxu0 0.0
      %8656 = vmatprep.subr.mxu0 0.0
      %8657 = vmatpush1.msra.mxu0 0.0
      %8658 = vmatprep.subr.mxu0 0.0
      %8659 = vmatpush1.msra.mxu0 0.0
      %8660 = vmatprep.subr.mxu0 0.0
      %8661 = vmatpush1.msra.mxu0 0.0
      %8662 = vmatprep.subr.mxu0 0.0
      %8663 = vmatpush1.msra.mxu0 0.0
      %8664 = vmatprep.subr.mxu0 0.0
      %8665 = vmatpush1.msra.mxu0 0.0
      %8666 = vmatprep.subr.mxu0 0.0
      %8667 = vmatpush1.msra.mxu0 0.0
      %8668 = vmatprep.subr.mxu0 0.0
      %8669 = vmatpush1.msra.mxu0 0.0
      %8670 = vmatprep.subr.mxu0 0.0
      %8671 = vmatpush1.msra.mxu0 0.0
      %8672 = vmatprep.subr.mxu0 0.0
      %8673 = vmatpush1.msra.mxu0 0.0
      %8674 = vmatprep.subr.mxu0 0.0
      %8675 = vmatpush1.msra.mxu0 0.0
      %8676 = vmatprep.subr.mxu0 0.0
      %8677 = vmatpush1.msra.mxu0 0.0
      %8678 = vmatprep.subr.mxu0 0.0
      %8679 = vmatpush1.msra.mxu0 0.0
      %8680 = vmatprep.subr.mxu0 0.0
      %8681 = vmatpush1.msra.mxu0 0.0
      %8682 = vmatprep.subr.mxu0 0.0
      %8683 = vmatpush1.msra.mxu0 0.0
      %8684 = vmatprep.subr.mxu0 0.0
      %8685 = vmatpush1.msra.mxu0 0.0
      %8686 = vmatprep.subr.mxu0 0.0
      %8687 = vmatpush1.msra.mxu0 0.0
      %8688 = vmatprep.subr.mxu0 0.0
      %8689 = vmatpush1.msra.mxu0 0.0
      %8690 = vmatprep.subr.mxu0 0.0
      %8691 = vmatpush1.msra.mxu0 0.0
      %8692 = vmatprep.subr.mxu0 0.0
      %8693 = vmatpush1.msra.mxu0 0.0
      %8694 = vmatprep.subr.mxu0 0.0
      %8695 = vmatpush1.msra.mxu0 0.0
      %8696 = vmatprep.subr.mxu0 0.0
      %8697 = vmatpush1.msra.mxu0 0.0
      %8698 = vmatprep.mubr.f32.mxu0 0.0
      %8699 = vmatmul.mubr.f32.gmra.mrb[0].mxu0 %v8623
      %v8700 = vpop.f32.mrb[0].mxu0
      %v8701 = vadd.f32 0.0, %v8700
      %v8702 = vpop.f32.mrb[0].mxu0
      %8703 = vmatprep.mubr.f32.mxu0 0.0
      %8704 = vmatmul.mubr.f32.gmra.mrb[0].mxu0 %v8626
      %v8705 = vpop.f32.mrb[0].mxu0
      %v8706 = vadd.f32 0.0, %v8705
      %v8707 = vpop.f32.mrb[0].mxu0
      %8708 = vmatprep.mubr.f32.mxu0 0.0
      %8709 = vmatmul.mubr.f32.gmra.mrb[0].mxu0 %v8629
      %v8710 = vpop.f32.mrb[0].mxu0
      %v8711 = vadd.f32 0.0, %v8710
      %v8712 = vpop.f32.mrb[0].mxu0
      %8713 = vmatprep.mubr.f32.mxu0 0.0
      %8714 = vmatmul.mubr.f32.gmra.mrb[0].mxu0 %v8632
      %v8715 = vpop.f32.mrb[0].mxu0
      %v8716 = vadd.f32 0.0, %v8715
      %v8717 = vpop.f32.mrb[0].mxu0
      %8718 = vdwg.mxu0
      %v8720 = vsel %vm4048, %v8605, 0
      %v8723 = vsel %vm4048, %v8607, 0
      %v8726 = vsel %vm4048, %v8609, 0
      %v8729 = vsel %vm4048, %v8611, 0
      %8731 = vmatprep.subr.mxu0 0.0
      %8732 = vmatpush1.msra.mxu0 %v8612
      %8733 = vmatprep.subr.mxu0 0.0
      %8734 = vmatpush1.msra.mxu0 0.0
      %8735 = vmatprep.subr.mxu0 0.0
      %8736 = vmatpush1.msra.mxu0 0.0
      %8737 = vmatprep.subr.mxu0 0.0
      %8738 = vmatpush1.msra.mxu0 0.0
      %8739 = vmatprep.subr.mxu0 0.0
      %8740 = vmatpush1.msra.mxu0 0.0
      %8741 = vmatprep.subr.mxu0 0.0
      %8742 = vmatpush1.msra.mxu0 0.0
      %8743 = vmatprep.subr.mxu0 0.0
      %8744 = vmatpush1.msra.mxu0 0.0
      %8745 = vmatprep.subr.mxu0 0.0
      %8746 = vmatpush1.msra.mxu0 0.0
      %8747 = vmatprep.subr.mxu0 0.0
      %8748 = vmatpush1.msra.mxu0 0.0
      %8749 = vmatprep.subr.mxu0 0.0
      %8750 = vmatpush1.msra.mxu0 0.0
      %8751 = vmatprep.subr.mxu0 0.0
      %8752 = vmatpush1.msra.mxu0 0.0
      %8753 = vmatprep.subr.mxu0 0.0
      %8754 = vmatpush1.msra.mxu0 0.0
      %8755 = vmatprep.subr.mxu0 0.0
      %8756 = vmatpush1.msra.mxu0 0.0
      %8757 = vmatprep.subr.mxu0 0.0
      %8758 = vmatpush1.msra.mxu0 0.0
      %8759 = vmatprep.subr.mxu0 0.0
      %8760 = vmatpush1.msra.mxu0 0.0
      %8761 = vmatprep.subr.mxu0 0.0
      %8762 = vmatpush1.msra.mxu0 0.0
      %8763 = vmatprep.subr.mxu0 0.0
      %8764 = vmatpush1.msra.mxu0 0.0
      %8765 = vmatprep.subr.mxu0 0.0
      %8766 = vmatpush1.msra.mxu0 0.0
      %8767 = vmatprep.subr.mxu0 0.0
      %8768 = vmatpush1.msra.mxu0 0.0
      %8769 = vmatprep.subr.mxu0 0.0
      %8770 = vmatpush1.msra.mxu0 0.0
      %8771 = vmatprep.subr.mxu0 0.0
      %8772 = vmatpush1.msra.mxu0 0.0
      %8773 = vmatprep.subr.mxu0 0.0
      %8774 = vmatpush1.msra.mxu0 0.0
      %8775 = vmatprep.subr.mxu0 0.0
      %8776 = vmatpush1.msra.mxu0 0.0
      %8777 = vmatprep.subr.mxu0 0.0
      %8778 = vmatpush1.msra.mxu0 0.0
      %8779 = vmatprep.subr.mxu0 0.0
      %8780 = vmatpush1.msra.mxu0 0.0
      %8781 = vmatprep.subr.mxu0 0.0
      %8782 = vmatpush1.msra.mxu0 0.0
      %8783 = vmatprep.subr.mxu0 0.0
      %8784 = vmatpush1.msra.mxu0 0.0
      %8785 = vmatprep.subr.mxu0 0.0
      %8786 = vmatpush1.msra.mxu0 0.0
      %8787 = vmatprep.subr.mxu0 0.0
      %8788 = vmatpush1.msra.mxu0 0.0
      %8789 = vmatprep.subr.mxu0 0.0
      %8790 = vmatpush1.msra.mxu0 0.0
      %8791 = vmatprep.subr.mxu0 0.0
      %8792 = vmatpush1.msra.mxu0 0.0
      %8793 = vmatprep.subr.mxu0 0.0
      %8794 = vmatpush1.msra.mxu0 0.0
      %8795 = vmatprep.mubr.f32.mxu0 0.0
      %8796 = vmatmul.mubr.f32.gmra.mrb[0].mxu0 %v8720
      %v8797 = vpop.f32.mrb[0].mxu0
      %v8798 = vadd.f32 %v8701, %v8797
      %v8799 = vpop.f32.mrb[0].mxu0
      %8800 = vmatprep.mubr.f32.mxu0 0.0
      %8801 = vmatmul.mubr.f32.gmra.mrb[0].mxu0 %v8723
      %v8802 = vpop.f32.mrb[0].mxu0
      %v8803 = vadd.f32 %v8706, %v8802
      %v8804 = vpop.f32.mrb[0].mxu0
      %8805 = vmatprep.mubr.f32.mxu0 0.0
      %8806 = vmatmul.mubr.f32.gmra.mrb[0].mxu0 %v8726
      %v8807 = vpop.f32.mrb[0].mxu0
      %v8808 = vadd.f32 %v8711, %v8807
      %v8809 = vpop.f32.mrb[0].mxu0
      %8810 = vmatprep.mubr.f32.mxu0 0.0
      %8811 = vmatmul.mubr.f32.gmra.mrb[0].mxu0 %v8729
      %v8812 = vpop.f32.mrb[0].mxu0
      %v8813 = vadd.f32 %v8716, %v8812
      %v8814 = vpop.f32.mrb[0].mxu0
      %8815 = vdwg.mxu0
      %s8816 = scalar_lea.vmem [#allocation4], 2
      %v8817 = vld [vmem:[%s8816] ss:$4 sm:$0xff]
      %s8818 = scalar_lea.vmem [#allocation4], 34
      %v8819 = vld [vmem:[%s8818] ss:$4 sm:$0xff]
      %s8820 = scalar_lea.vmem [#allocation4], 66
      %v8821 = vld [vmem:[%s8820] ss:$4 sm:$0xff]
      %s8822 = scalar_lea.vmem [#allocation4], 98
      %v8823 = vld [vmem:[%s8822] ss:$4 sm:$0xff]
      %v8824 = vld [vmem:[%s11 + $0x10] sm:$0xff]
      %v8826 = vsel %vm4048, %v8817, 0
      %v8829 = vsel %vm4048, %v8819, 0
      %v8832 = vsel %vm4048, %v8821, 0
      %v8835 = vsel %vm4048, %v8823, 0
      %8837 = vmatprep.subr.mxu0 0.0
      %8838 = vmatpush1.msra.mxu0 %v8824
      %8839 = vmatprep.subr.mxu0 0.0
      %8840 = vmatpush1.msra.mxu0 0.0
      %8841 = vmatprep.subr.mxu0 0.0
      %8842 = vmatpush1.msra.mxu0 0.0
      %8843 = vmatprep.subr.mxu0 0.0
      %8844 = vmatpush1.msra.mxu0 0.0
      %8845 = vmatprep.subr.mxu0 0.0
      %8846 = vmatpush1.msra.mxu0 0.0
      %8847 = vmatprep.subr.mxu0 0.0
      %8848 = vmatpush1.msra.mxu0 0.0
      %8849 = vmatprep.subr.mxu0 0.0
      %8850 = vmatpush1.msra.mxu0 0.0
      %8851 = vmatprep.subr.mxu0 0.0
      %8852 = vmatpush1.msra.mxu0 0.0
      %8853 = vmatprep.subr.mxu0 0.0
      %8854 = vmatpush1.msra.mxu0 0.0
      %8855 = vmatprep.subr.mxu0 0.0
      %8856 = vmatpush1.msra.mxu0 0.0
      %8857 = vmatprep.subr.mxu0 0.0
      %8858 = vmatpush1.msra.mxu0 0.0
      %8859 = vmatprep.subr.mxu0 0.0
      %8860 = vmatpush1.msra.mxu0 0.0
      %8861 = vmatprep.subr.mxu0 0.0
      %8862 = vmatpush1.msra.mxu0 0.0
      %8863 = vmatprep.subr.mxu0 0.0
      %8864 = vmatpush1.msra.mxu0 0.0
      %8865 = vmatprep.subr.mxu0 0.0
      %8866 = vmatpush1.msra.mxu0 0.0
      %8867 = vmatprep.subr.mxu0 0.0
      %8868 = vmatpush1.msra.mxu0 0.0
      %8869 = vmatprep.subr.mxu0 0.0
      %8870 = vmatpush1.msra.mxu0 0.0
      %8871 = vmatprep.subr.mxu0 0.0
      %8872 = vmatpush1.msra.mxu0 0.0
      %8873 = vmatprep.subr.mxu0 0.0
      %8874 = vmatpush1.msra.mxu0 0.0
      %8875 = vmatprep.subr.mxu0 0.0
      %8876 = vmatpush1.msra.mxu0 0.0
      %8877 = vmatprep.subr.mxu0 0.0
      %8878 = vmatpush1.msra.mxu0 0.0
      %8879 = vmatprep.subr.mxu0 0.0
      %8880 = vmatpush1.msra.mxu0 0.0
      %8881 = vmatprep.subr.mxu0 0.0
      %8882 = vmatpush1.msra.mxu0 0.0
      %8883 = vmatprep.subr.mxu0 0.0
      %8884 = vmatpush1.msra.mxu0 0.0
      %8885 = vmatprep.subr.mxu0 0.0
      %8886 = vmatpush1.msra.mxu0 0.0
      %8887 = vmatprep.subr.mxu0 0.0
      %8888 = vmatpush1.msra.mxu0 0.0
      %8889 = vmatprep.subr.mxu0 0.0
      %8890 = vmatpush1.msra.mxu0 0.0
      %8891 = vmatprep.subr.mxu0 0.0
      %8892 = vmatpush1.msra.mxu0 0.0
      %8893 = vmatprep.subr.mxu0 0.0
      %8894 = vmatpush1.msra.mxu0 0.0
      %8895 = vmatprep.subr.mxu0 0.0
      %8896 = vmatpush1.msra.mxu0 0.0
      %8897 = vmatprep.subr.mxu0 0.0
      %8898 = vmatpush1.msra.mxu0 0.0
      %8899 = vmatprep.subr.mxu0 0.0
      %8900 = vmatpush1.msra.mxu0 0.0
      %8901 = vmatprep.mubr.f32.mxu0 0.0
      %8902 = vmatmul.mubr.f32.gmra.mrb[0].mxu0 %v8826
      %v8903 = vpop.f32.mrb[0].mxu0
      %v8904 = vadd.f32 0.0, %v8903
      %v8905 = vpop.f32.mrb[0].mxu0
      %8906 = vmatprep.mubr.f32.mxu0 0.0
      %8907 = vmatmul.mubr.f32.gmra.mrb[0].mxu0 %v8829
      %v8908 = vpop.f32.mrb[0].mxu0
      %v8909 = vadd.f32 0.0, %v8908
      %v8910 = vpop.f32.mrb[0].mxu0
      %8911 = vmatprep.mubr.f32.mxu0 0.0
      %8912 = vmatmul.mubr.f32.gmra.mrb[0].mxu0 %v8832
      %v8913 = vpop.f32.mrb[0].mxu0
      %v8914 = vadd.f32 0.0, %v8913
      %v8915 = vpop.f32.mrb[0].mxu0
      %8916 = vmatprep.mubr.f32.mxu0 0.0
      %8917 = vmatmul.mubr.f32.gmra.mrb[0].mxu0 %v8835
      %v8918 = vpop.f32.mrb[0].mxu0
      %v8919 = vadd.f32 0.0, %v8918
      %v8920 = vpop.f32.mrb[0].mxu0
      %8921 = vdwg.mxu0
      %v8922 = vadd.f32 %v8798, %v8904
      %v8923 = vadd.f32 %v8803, %v8909
      %v8924 = vadd.f32 %v8808, %v8914
      %v8925 = vadd.f32 %v8813, %v8919
      %s8926 = scalar_lea.vmem [#allocation4], 3
      %v8927 = vld [vmem:[%s8926] ss:$4 sm:$0xff]
      %s8928 = scalar_lea.vmem [#allocation4], 35
      %v8929 = vld [vmem:[%s8928] ss:$4 sm:$0xff]
      %s8930 = scalar_lea.vmem [#allocation4], 67
      %v8931 = vld [vmem:[%s8930] ss:$4 sm:$0xff]
      %s8932 = scalar_lea.vmem [#allocation4], 99
      %v8933 = vld [vmem:[%s8932] ss:$4 sm:$0xff]
      %v8934 = vld [vmem:[%s11 + $0x18] sm:$0xff]
      %v8936 = vsel %vm4048, %v8927, 0
      %v8939 = vsel %vm4048, %v8929, 0
      %v8942 = vsel %vm4048, %v8931, 0
      %v8945 = vsel %vm4048, %v8933, 0
      %8947 = vmatprep.subr.mxu0 0.0
      %8948 = vmatpush1.msra.mxu0 %v8934
      %8949 = vmatprep.subr.mxu0 0.0
      %8950 = vmatpush1.msra.mxu0 0.0
      %8951 = vmatprep.subr.mxu0 0.0
      %8952 = vmatpush1.msra.mxu0 0.0
      %8953 = vmatprep.subr.mxu0 0.0
      %8954 = vmatpush1.msra.mxu0 0.0
      %8955 = vmatprep.subr.mxu0 0.0
      %8956 = vmatpush1.msra.mxu0 0.0
      %8957 = vmatprep.subr.mxu0 0.0
      %8958 = vmatpush1.msra.mxu0 0.0
      %8959 = vmatprep.subr.mxu0 0.0
      %8960 = vmatpush1.msra.mxu0 0.0
      %8961 = vmatprep.subr.mxu0 0.0
      %8962 = vmatpush1.msra.mxu0 0.0
      %8963 = vmatprep.subr.mxu0 0.0
      %8964 = vmatpush1.msra.mxu0 0.0
      %8965 = vmatprep.subr.mxu0 0.0
      %8966 = vmatpush1.msra.mxu0 0.0
      %8967 = vmatprep.subr.mxu0 0.0
      %8968 = vmatpush1.msra.mxu0 0.0
      %8969 = vmatprep.subr.mxu0 0.0
      %8970 = vmatpush1.msra.mxu0 0.0
      %8971 = vmatprep.subr.mxu0 0.0
      %8972 = vmatpush1.msra.mxu0 0.0
      %8973 = vmatprep.subr.mxu0 0.0
      %8974 = vmatpush1.msra.mxu0 0.0
      %8975 = vmatprep.subr.mxu0 0.0
      %8976 = vmatpush1.msra.mxu0 0.0
      %8977 = vmatprep.subr.mxu0 0.0
      %8978 = vmatpush1.msra.mxu0 0.0
      %8979 = vmatprep.subr.mxu0 0.0
      %8980 = vmatpush1.msra.mxu0 0.0
      %8981 = vmatprep.subr.mxu0 0.0
      %8982 = vmatpush1.msra.mxu0 0.0
      %8983 = vmatprep.subr.mxu0 0.0
      %8984 = vmatpush1.msra.mxu0 0.0
      %8985 = vmatprep.subr.mxu0 0.0
      %8986 = vmatpush1.msra.mxu0 0.0
      %8987 = vmatprep.subr.mxu0 0.0
      %8988 = vmatpush1.msra.mxu0 0.0
      %8989 = vmatprep.subr.mxu0 0.0
      %8990 = vmatpush1.msra.mxu0 0.0
      %8991 = vmatprep.subr.mxu0 0.0
      %8992 = vmatpush1.msra.mxu0 0.0
      %8993 = vmatprep.subr.mxu0 0.0
      %8994 = vmatpush1.msra.mxu0 0.0
      %8995 = vmatprep.subr.mxu0 0.0
      %8996 = vmatpush1.msra.mxu0 0.0
      %8997 = vmatprep.subr.mxu0 0.0
      %8998 = vmatpush1.msra.mxu0 0.0
      %8999 = vmatprep.subr.mxu0 0.0
      %9000 = vmatpush1.msra.mxu0 0.0
      %9001 = vmatprep.subr.mxu0 0.0
      %9002 = vmatpush1.msra.mxu0 0.0
      %9003 = vmatprep.subr.mxu0 0.0
      %9004 = vmatpush1.msra.mxu0 0.0
      %9005 = vmatprep.subr.mxu0 0.0
      %9006 = vmatpush1.msra.mxu0 0.0
      %9007 = vmatprep.subr.mxu0 0.0
      %9008 = vmatpush1.msra.mxu0 0.0
      %9009 = vmatprep.subr.mxu0 0.0
      %9010 = vmatpush1.msra.mxu0 0.0
      %9011 = vmatprep.mubr.f32.mxu0 0.0
      %9012 = vmatmul.mubr.f32.gmra.mrb[0].mxu0 %v8936
      %v9013 = vpop.f32.mrb[0].mxu0
      %v9014 = vadd.f32 0.0, %v9013
      %v9015 = vpop.f32.mrb[0].mxu0
      %9016 = vmatprep.mubr.f32.mxu0 0.0
      %9017 = vmatmul.mubr.f32.gmra.mrb[0].mxu0 %v8939
      %v9018 = vpop.f32.mrb[0].mxu0
      %v9019 = vadd.f32 0.0, %v9018
      %v9020 = vpop.f32.mrb[0].mxu0
      %9021 = vmatprep.mubr.f32.mxu0 0.0
      %9022 = vmatmul.mubr.f32.gmra.mrb[0].mxu0 %v8942
      %v9023 = vpop.f32.mrb[0].mxu0
      %v9024 = vadd.f32 0.0, %v9023
      %v9025 = vpop.f32.mrb[0].mxu0
      %9026 = vmatprep.mubr.f32.mxu0 0.0
      %9027 = vmatmul.mubr.f32.gmra.mrb[0].mxu0 %v8945
      %v9028 = vpop.f32.mrb[0].mxu0
      %v9029 = vadd.f32 0.0, %v9028
      %v9030 = vpop.f32.mrb[0].mxu0
      %9031 = vdwg.mxu0
      %v9032 = vadd.f32 %v8922, %v9014
      %v9033 = vadd.f32 %v8923, %v9019
      %v9034 = vadd.f32 %v8924, %v9024
      %v9035 = vadd.f32 %v8925, %v9029
      %v9036 = vld [vmem:[%s12] sm:$0x1]
      %v9038 = vlaneseq
      %v9039 = vshrl.u32 %v9038, 7
      %v9040 = vsub.s32 0, %v9039
      %v9041 = vrot.slane %v9036, %v9040
      %v9043 = vadd.f32 %v9032, %v9041
      %v9044 = vadd.f32 %v9033, %v9041
      %v9045 = vadd.f32 %v9034, %v9041
      %v9046 = vadd.f32 %v9035, %v9041
      %v9047 = vmax.f32 %v9043, 0.0
      %v9048 = vmax.f32 %v9044, 0.0
      %v9049 = vmax.f32 %v9045, 0.0
      %v9050 = vmax.f32 %v9046, 0.0
      %v9051 = vld [vmem:[%s894] sm:$0xff]
      %v9052 = vld [vmem:[%s894 + $0x8] sm:$0xff]
      %v9053 = vld [vmem:[%s894 + $0x10] sm:$0xff]
      %v9054 = vld [vmem:[%s894 + $0x18] sm:$0xff]
      %v9055 = vadd.f32 %v9047, %v9051
      %v9056 = vadd.f32 %v9048, %v9052
      %v9057 = vadd.f32 %v9049, %v9053
      %v9058 = vadd.f32 %v9050, %v9054
      %9059 = vst.msk [vmem:[#allocation5] sm:$0xff] %vm4048, %v9055
      %9060 = vst.msk [vmem:[#allocation5 + $0x8] sm:$0xff] %vm4048, %v9056
      %9061 = vst.msk [vmem:[#allocation5 + $0x10] sm:$0xff] %vm4048, %v9057
      %9062 = vst.msk [vmem:[#allocation5 + $0x18] sm:$0xff] %vm4048, %v9058
      %v9063 = vld [vmem:[#allocation5] ss:$16 sm:$0x3]
      %v9064 = vld [vmem:[%s13] sm:$0xff]
      %s9065 = scalar_lea.vmem [#allocation5], 1
      %v9066 = vld [vmem:[%s9065] ss:$16 sm:$0x3]
      %v9067 = vld [vmem:[%s13 + $0x8] sm:$0xff]
      %v9069 = vsel %vm4048, %v9066, 0
      %9071 = vmatprep.subr.mxu0 0.0
      %9072 = vmatpush1.msra.mxu0 %v9067
      %9073 = vmatprep.subr.mxu0 0.0
      %9074 = vmatpush1.msra.mxu0 0.0
      %9075 = vmatprep.subr.mxu0 0.0
      %9076 = vmatpush1.msra.mxu0 0.0
      %9077 = vmatprep.subr.mxu0 0.0
      %9078 = vmatpush1.msra.mxu0 0.0
      %9079 = vmatprep.subr.mxu0 0.0
      %9080 = vmatpush1.msra.mxu0 0.0
      %9081 = vmatprep.subr.mxu0 0.0
      %9082 = vmatpush1.msra.mxu0 0.0
      %9083 = vmatprep.subr.mxu0 0.0
      %9084 = vmatpush1.msra.mxu0 0.0
      %9085 = vmatprep.subr.mxu0 0.0
      %9086 = vmatpush1.msra.mxu0 0.0
      %9087 = vmatprep.subr.mxu0 0.0
      %9088 = vmatpush1.msra.mxu0 0.0
      %9089 = vmatprep.subr.mxu0 0.0
      %9090 = vmatpush1.msra.mxu0 0.0
      %9091 = vmatprep.subr.mxu0 0.0
      %9092 = vmatpush1.msra.mxu0 0.0
      %9093 = vmatprep.subr.mxu0 0.0
      %9094 = vmatpush1.msra.mxu0 0.0
      %9095 = vmatprep.subr.mxu0 0.0
      %9096 = vmatpush1.msra.mxu0 0.0
      %9097 = vmatprep.subr.mxu0 0.0
      %9098 = vmatpush1.msra.mxu0 0.0
      %9099 = vmatprep.subr.mxu0 0.0
      %9100 = vmatpush1.msra.mxu0 0.0
      %9101 = vmatprep.subr.mxu0 0.0
      %9102 = vmatpush1.msra.mxu0 0.0
      %9103 = vmatprep.subr.mxu0 0.0
      %9104 = vmatpush1.msra.mxu0 0.0
      %9105 = vmatprep.subr.mxu0 0.0
      %9106 = vmatpush1.msra.mxu0 0.0
      %9107 = vmatprep.subr.mxu0 0.0
      %9108 = vmatpush1.msra.mxu0 0.0
      %9109 = vmatprep.subr.mxu0 0.0
      %9110 = vmatpush1.msra.mxu0 0.0
      %9111 = vmatprep.subr.mxu0 0.0
      %9112 = vmatpush1.msra.mxu0 0.0
      %9113 = vmatprep.subr.mxu0 0.0
      %9114 = vmatpush1.msra.mxu0 0.0
      %9115 = vmatprep.subr.mxu0 0.0
      %9116 = vmatpush1.msra.mxu0 0.0
      %9117 = vmatprep.subr.mxu0 0.0
      %9118 = vmatpush1.msra.mxu0 0.0
      %9119 = vmatprep.subr.mxu0 0.0
      %9120 = vmatpush1.msra.mxu0 0.0
      %9121 = vmatprep.subr.mxu0 0.0
      %9122 = vmatpush1.msra.mxu0 0.0
      %9123 = vmatprep.subr.mxu0 0.0
      %9124 = vmatpush1.msra.mxu0 0.0
      %9125 = vmatprep.subr.mxu0 0.0
      %9126 = vmatpush1.msra.mxu0 0.0
      %9127 = vmatprep.subr.mxu0 0.0
      %9128 = vmatpush1.msra.mxu0 0.0
      %9129 = vmatprep.subr.mxu0 0.0
      %9130 = vmatpush1.msra.mxu0 0.0
      %9131 = vmatprep.subr.mxu0 0.0
      %9132 = vmatpush1.msra.mxu0 0.0
      %9133 = vmatprep.subr.mxu0 0.0
      %9134 = vmatpush1.msra.mxu0 0.0
      %9135 = vmatprep.mubr.f32.mxu0 0.0
      %9136 = vmatmul.mubr.f32.gmra.mrb[0].mxu0 %v9069
      %v9137 = vpop.f32.mrb[0].mxu0
      %v9138 = vadd.f32 0.0, %v9137
      %v9139 = vpop.f32.mrb[0].mxu0
      %9140 = vdwg.mxu0
      %v9142 = vsel %vm4048, %v9063, 0
      %9144 = vmatprep.subr.mxu0 0.0
      %9145 = vmatpush1.msra.mxu0 %v9064
      %9146 = vmatprep.subr.mxu0 0.0
      %9147 = vmatpush1.msra.mxu0 0.0
      %9148 = vmatprep.subr.mxu0 0.0
      %9149 = vmatpush1.msra.mxu0 0.0
      %9150 = vmatprep.subr.mxu0 0.0
      %9151 = vmatpush1.msra.mxu0 0.0
      %9152 = vmatprep.subr.mxu0 0.0
      %9153 = vmatpush1.msra.mxu0 0.0
      %9154 = vmatprep.subr.mxu0 0.0
      %9155 = vmatpush1.msra.mxu0 0.0
      %9156 = vmatprep.subr.mxu0 0.0
      %9157 = vmatpush1.msra.mxu0 0.0
      %9158 = vmatprep.subr.mxu0 0.0
      %9159 = vmatpush1.msra.mxu0 0.0
      %9160 = vmatprep.subr.mxu0 0.0
      %9161 = vmatpush1.msra.mxu0 0.0
      %9162 = vmatprep.subr.mxu0 0.0
      %9163 = vmatpush1.msra.mxu0 0.0
      %9164 = vmatprep.subr.mxu0 0.0
      %9165 = vmatpush1.msra.mxu0 0.0
      %9166 = vmatprep.subr.mxu0 0.0
      %9167 = vmatpush1.msra.mxu0 0.0
      %9168 = vmatprep.subr.mxu0 0.0
      %9169 = vmatpush1.msra.mxu0 0.0
      %9170 = vmatprep.subr.mxu0 0.0
      %9171 = vmatpush1.msra.mxu0 0.0
      %9172 = vmatprep.subr.mxu0 0.0
      %9173 = vmatpush1.msra.mxu0 0.0
      %9174 = vmatprep.subr.mxu0 0.0
      %9175 = vmatpush1.msra.mxu0 0.0
      %9176 = vmatprep.subr.mxu0 0.0
      %9177 = vmatpush1.msra.mxu0 0.0
      %9178 = vmatprep.subr.mxu0 0.0
      %9179 = vmatpush1.msra.mxu0 0.0
      %9180 = vmatprep.subr.mxu0 0.0
      %9181 = vmatpush1.msra.mxu0 0.0
      %9182 = vmatprep.subr.mxu0 0.0
      %9183 = vmatpush1.msra.mxu0 0.0
      %9184 = vmatprep.subr.mxu0 0.0
      %9185 = vmatpush1.msra.mxu0 0.0
      %9186 = vmatprep.subr.mxu0 0.0
      %9187 = vmatpush1.msra.mxu0 0.0
      %9188 = vmatprep.subr.mxu0 0.0
      %9189 = vmatpush1.msra.mxu0 0.0
      %9190 = vmatprep.subr.mxu0 0.0
      %9191 = vmatpush1.msra.mxu0 0.0
      %9192 = vmatprep.subr.mxu0 0.0
      %9193 = vmatpush1.msra.mxu0 0.0
      %9194 = vmatprep.subr.mxu0 0.0
      %9195 = vmatpush1.msra.mxu0 0.0
      %9196 = vmatprep.subr.mxu0 0.0
      %9197 = vmatpush1.msra.mxu0 0.0
      %9198 = vmatprep.subr.mxu0 0.0
      %9199 = vmatpush1.msra.mxu0 0.0
      %9200 = vmatprep.subr.mxu0 0.0
      %9201 = vmatpush1.msra.mxu0 0.0
      %9202 = vmatprep.subr.mxu0 0.0
      %9203 = vmatpush1.msra.mxu0 0.0
      %9204 = vmatprep.subr.mxu0 0.0
      %9205 = vmatpush1.msra.mxu0 0.0
      %9206 = vmatprep.subr.mxu0 0.0
      %9207 = vmatpush1.msra.mxu0 0.0
      %9208 = vmatprep.mubr.f32.mxu0 0.0
      %9209 = vmatmul.mubr.f32.gmra.mrb[0].mxu0 %v9142
      %v9210 = vpop.f32.mrb[0].mxu0
      %v9211 = vadd.f32 %v9138, %v9210
      %v9212 = vpop.f32.mrb[0].mxu0
      %9213 = vdwg.mxu0
      %s9214 = scalar_lea.vmem [#allocation5], 2
      %v9215 = vld [vmem:[%s9214] ss:$16 sm:$0x3]
      %v9216 = vld [vmem:[%s13 + $0x10] sm:$0xff]
      %v9218 = vsel %vm4048, %v9215, 0
      %9220 = vmatprep.subr.mxu0 0.0
      %9221 = vmatpush1.msra.mxu0 %v9216
      %9222 = vmatprep.subr.mxu0 0.0
      %9223 = vmatpush1.msra.mxu0 0.0
      %9224 = vmatprep.subr.mxu0 0.0
      %9225 = vmatpush1.msra.mxu0 0.0
      %9226 = vmatprep.subr.mxu0 0.0
      %9227 = vmatpush1.msra.mxu0 0.0
      %9228 = vmatprep.subr.mxu0 0.0
      %9229 = vmatpush1.msra.mxu0 0.0
      %9230 = vmatprep.subr.mxu0 0.0
      %9231 = vmatpush1.msra.mxu0 0.0
      %9232 = vmatprep.subr.mxu0 0.0
      %9233 = vmatpush1.msra.mxu0 0.0
      %9234 = vmatprep.subr.mxu0 0.0
      %9235 = vmatpush1.msra.mxu0 0.0
      %9236 = vmatprep.subr.mxu0 0.0
      %9237 = vmatpush1.msra.mxu0 0.0
      %9238 = vmatprep.subr.mxu0 0.0
      %9239 = vmatpush1.msra.mxu0 0.0
      %9240 = vmatprep.subr.mxu0 0.0
      %9241 = vmatpush1.msra.mxu0 0.0
      %9242 = vmatprep.subr.mxu0 0.0
      %9243 = vmatpush1.msra.mxu0 0.0
      %9244 = vmatprep.subr.mxu0 0.0
      %9245 = vmatpush1.msra.mxu0 0.0
      %9246 = vmatprep.subr.mxu0 0.0
      %9247 = vmatpush1.msra.mxu0 0.0
      %9248 = vmatprep.subr.mxu0 0.0
      %9249 = vmatpush1.msra.mxu0 0.0
      %9250 = vmatprep.subr.mxu0 0.0
      %9251 = vmatpush1.msra.mxu0 0.0
      %9252 = vmatprep.subr.mxu0 0.0
      %9253 = vmatpush1.msra.mxu0 0.0
      %9254 = vmatprep.subr.mxu0 0.0
      %9255 = vmatpush1.msra.mxu0 0.0
      %9256 = vmatprep.subr.mxu0 0.0
      %9257 = vmatpush1.msra.mxu0 0.0
      %9258 = vmatprep.subr.mxu0 0.0
      %9259 = vmatpush1.msra.mxu0 0.0
      %9260 = vmatprep.subr.mxu0 0.0
      %9261 = vmatpush1.msra.mxu0 0.0
      %9262 = vmatprep.subr.mxu0 0.0
      %9263 = vmatpush1.msra.mxu0 0.0
      %9264 = vmatprep.subr.mxu0 0.0
      %9265 = vmatpush1.msra.mxu0 0.0
      %9266 = vmatprep.subr.mxu0 0.0
      %9267 = vmatpush1.msra.mxu0 0.0
      %9268 = vmatprep.subr.mxu0 0.0
      %9269 = vmatpush1.msra.mxu0 0.0
      %9270 = vmatprep.subr.mxu0 0.0
      %9271 = vmatpush1.msra.mxu0 0.0
      %9272 = vmatprep.subr.mxu0 0.0
      %9273 = vmatpush1.msra.mxu0 0.0
      %9274 = vmatprep.subr.mxu0 0.0
      %9275 = vmatpush1.msra.mxu0 0.0
      %9276 = vmatprep.subr.mxu0 0.0
      %9277 = vmatpush1.msra.mxu0 0.0
      %9278 = vmatprep.subr.mxu0 0.0
      %9279 = vmatpush1.msra.mxu0 0.0
      %9280 = vmatprep.subr.mxu0 0.0
      %9281 = vmatpush1.msra.mxu0 0.0
      %9282 = vmatprep.subr.mxu0 0.0
      %9283 = vmatpush1.msra.mxu0 0.0
      %9284 = vmatprep.mubr.f32.mxu0 0.0
      %9285 = vmatmul.mubr.f32.gmra.mrb[0].mxu0 %v9218
      %v9286 = vpop.f32.mrb[0].mxu0
      %v9287 = vadd.f32 0.0, %v9286
      %v9288 = vpop.f32.mrb[0].mxu0
      %9289 = vdwg.mxu0
      %v9290 = vadd.f32 %v9211, %v9287
      %s9291 = scalar_lea.vmem [#allocation5], 3
      %v9292 = vld [vmem:[%s9291] ss:$16 sm:$0x3]
      %v9293 = vld [vmem:[%s13 + $0x18] sm:$0xff]
      %v9295 = vsel %vm4048, %v9292, 0
      %9297 = vmatprep.subr.mxu0 0.0
      %9298 = vmatpush1.msra.mxu0 %v9293
      %9299 = vmatprep.subr.mxu0 0.0
      %9300 = vmatpush1.msra.mxu0 0.0
      %9301 = vmatprep.subr.mxu0 0.0
      %9302 = vmatpush1.msra.mxu0 0.0
      %9303 = vmatprep.subr.mxu0 0.0
      %9304 = vmatpush1.msra.mxu0 0.0
      %9305 = vmatprep.subr.mxu0 0.0
      %9306 = vmatpush1.msra.mxu0 0.0
      %9307 = vmatprep.subr.mxu0 0.0
      %9308 = vmatpush1.msra.mxu0 0.0
      %9309 = vmatprep.subr.mxu0 0.0
      %9310 = vmatpush1.msra.mxu0 0.0
      %9311 = vmatprep.subr.mxu0 0.0
      %9312 = vmatpush1.msra.mxu0 0.0
      %9313 = vmatprep.subr.mxu0 0.0
      %9314 = vmatpush1.msra.mxu0 0.0
      %9315 = vmatprep.subr.mxu0 0.0
      %9316 = vmatpush1.msra.mxu0 0.0
      %9317 = vmatprep.subr.mxu0 0.0
      %9318 = vmatpush1.msra.mxu0 0.0
      %9319 = vmatprep.subr.mxu0 0.0
      %9320 = vmatpush1.msra.mxu0 0.0
      %9321 = vmatprep.subr.mxu0 0.0
      %9322 = vmatpush1.msra.mxu0 0.0
      %9323 = vmatprep.subr.mxu0 0.0
      %9324 = vmatpush1.msra.mxu0 0.0
      %9325 = vmatprep.subr.mxu0 0.0
      %9326 = vmatpush1.msra.mxu0 0.0
      %9327 = vmatprep.subr.mxu0 0.0
      %9328 = vmatpush1.msra.mxu0 0.0
      %9329 = vmatprep.subr.mxu0 0.0
      %9330 = vmatpush1.msra.mxu0 0.0
      %9331 = vmatprep.subr.mxu0 0.0
      %9332 = vmatpush1.msra.mxu0 0.0
      %9333 = vmatprep.subr.mxu0 0.0
      %9334 = vmatpush1.msra.mxu0 0.0
      %9335 = vmatprep.subr.mxu0 0.0
      %9336 = vmatpush1.msra.mxu0 0.0
      %9337 = vmatprep.subr.mxu0 0.0
      %9338 = vmatpush1.msra.mxu0 0.0
      %9339 = vmatprep.subr.mxu0 0.0
      %9340 = vmatpush1.msra.mxu0 0.0
      %9341 = vmatprep.subr.mxu0 0.0
      %9342 = vmatpush1.msra.mxu0 0.0
      %9343 = vmatprep.subr.mxu0 0.0
      %9344 = vmatpush1.msra.mxu0 0.0
      %9345 = vmatprep.subr.mxu0 0.0
      %9346 = vmatpush1.msra.mxu0 0.0
      %9347 = vmatprep.subr.mxu0 0.0
      %9348 = vmatpush1.msra.mxu0 0.0
      %9349 = vmatprep.subr.mxu0 0.0
      %9350 = vmatpush1.msra.mxu0 0.0
      %9351 = vmatprep.subr.mxu0 0.0
      %9352 = vmatpush1.msra.mxu0 0.0
      %9353 = vmatprep.subr.mxu0 0.0
      %9354 = vmatpush1.msra.mxu0 0.0
      %9355 = vmatprep.subr.mxu0 0.0
      %9356 = vmatpush1.msra.mxu0 0.0
      %9357 = vmatprep.subr.mxu0 0.0
      %9358 = vmatpush1.msra.mxu0 0.0
      %9359 = vmatprep.subr.mxu0 0.0
      %9360 = vmatpush1.msra.mxu0 0.0
      %9361 = vmatprep.mubr.f32.mxu0 0.0
      %9362 = vmatmul.mubr.f32.gmra.mrb[0].mxu0 %v9295
      %v9363 = vpop.f32.mrb[0].mxu0
      %v9364 = vadd.f32 0.0, %v9363
      %v9365 = vpop.f32.mrb[0].mxu0
      %9366 = vdwg.mxu0
      %v9367 = vadd.f32 %v9290, %v9364
      %s9368 = scalar_lea.vmem [#allocation5], 4
      %v9369 = vld [vmem:[%s9368] ss:$16 sm:$0x3]
      %v9370 = vld [vmem:[%s13 + $0x20] sm:$0xff]
      %v9372 = vsel %vm4048, %v9369, 0
      %9374 = vmatprep.subr.mxu0 0.0
      %9375 = vmatpush1.msra.mxu0 %v9370
      %9376 = vmatprep.subr.mxu0 0.0
      %9377 = vmatpush1.msra.mxu0 0.0
      %9378 = vmatprep.subr.mxu0 0.0
      %9379 = vmatpush1.msra.mxu0 0.0
      %9380 = vmatprep.subr.mxu0 0.0
      %9381 = vmatpush1.msra.mxu0 0.0
      %9382 = vmatprep.subr.mxu0 0.0
      %9383 = vmatpush1.msra.mxu0 0.0
      %9384 = vmatprep.subr.mxu0 0.0
      %9385 = vmatpush1.msra.mxu0 0.0
      %9386 = vmatprep.subr.mxu0 0.0
      %9387 = vmatpush1.msra.mxu0 0.0
      %9388 = vmatprep.subr.mxu0 0.0
      %9389 = vmatpush1.msra.mxu0 0.0
      %9390 = vmatprep.subr.mxu0 0.0
      %9391 = vmatpush1.msra.mxu0 0.0
      %9392 = vmatprep.subr.mxu0 0.0
      %9393 = vmatpush1.msra.mxu0 0.0
      %9394 = vmatprep.subr.mxu0 0.0
      %9395 = vmatpush1.msra.mxu0 0.0
      %9396 = vmatprep.subr.mxu0 0.0
      %9397 = vmatpush1.msra.mxu0 0.0
      %9398 = vmatprep.subr.mxu0 0.0
      %9399 = vmatpush1.msra.mxu0 0.0
      %9400 = vmatprep.subr.mxu0 0.0
      %9401 = vmatpush1.msra.mxu0 0.0
      %9402 = vmatprep.subr.mxu0 0.0
      %9403 = vmatpush1.msra.mxu0 0.0
      %9404 = vmatprep.subr.mxu0 0.0
      %9405 = vmatpush1.msra.mxu0 0.0
      %9406 = vmatprep.subr.mxu0 0.0
      %9407 = vmatpush1.msra.mxu0 0.0
      %9408 = vmatprep.subr.mxu0 0.0
      %9409 = vmatpush1.msra.mxu0 0.0
      %9410 = vmatprep.subr.mxu0 0.0
      %9411 = vmatpush1.msra.mxu0 0.0
      %9412 = vmatprep.subr.mxu0 0.0
      %9413 = vmatpush1.msra.mxu0 0.0
      %9414 = vmatprep.subr.mxu0 0.0
      %9415 = vmatpush1.msra.mxu0 0.0
      %9416 = vmatprep.subr.mxu0 0.0
      %9417 = vmatpush1.msra.mxu0 0.0
      %9418 = vmatprep.subr.mxu0 0.0
      %9419 = vmatpush1.msra.mxu0 0.0
      %9420 = vmatprep.subr.mxu0 0.0
      %9421 = vmatpush1.msra.mxu0 0.0
      %9422 = vmatprep.subr.mxu0 0.0
      %9423 = vmatpush1.msra.mxu0 0.0
      %9424 = vmatprep.subr.mxu0 0.0
      %9425 = vmatpush1.msra.mxu0 0.0
      %9426 = vmatprep.subr.mxu0 0.0
      %9427 = vmatpush1.msra.mxu0 0.0
      %9428 = vmatprep.subr.mxu0 0.0
      %9429 = vmatpush1.msra.mxu0 0.0
      %9430 = vmatprep.subr.mxu0 0.0
      %9431 = vmatpush1.msra.mxu0 0.0
      %9432 = vmatprep.subr.mxu0 0.0
      %9433 = vmatpush1.msra.mxu0 0.0
      %9434 = vmatprep.subr.mxu0 0.0
      %9435 = vmatpush1.msra.mxu0 0.0
      %9436 = vmatprep.subr.mxu0 0.0
      %9437 = vmatpush1.msra.mxu0 0.0
      %9438 = vmatprep.mubr.f32.mxu0 0.0
      %9439 = vmatmul.mubr.f32.gmra.mrb[0].mxu0 %v9372
      %v9440 = vpop.f32.mrb[0].mxu0
      %v9441 = vadd.f32 0.0, %v9440
      %v9442 = vpop.f32.mrb[0].mxu0
      %9443 = vdwg.mxu0
      %v9444 = vadd.f32 %v9367, %v9441
      %s9445 = scalar_lea.vmem [#allocation5], 5
      %v9446 = vld [vmem:[%s9445] ss:$16 sm:$0x3]
      %v9447 = vld [vmem:[%s13 + $0x28] sm:$0xff]
      %v9449 = vsel %vm4048, %v9446, 0
      %9451 = vmatprep.subr.mxu0 0.0
      %9452 = vmatpush1.msra.mxu0 %v9447
      %9453 = vmatprep.subr.mxu0 0.0
      %9454 = vmatpush1.msra.mxu0 0.0
      %9455 = vmatprep.subr.mxu0 0.0
      %9456 = vmatpush1.msra.mxu0 0.0
      %9457 = vmatprep.subr.mxu0 0.0
      %9458 = vmatpush1.msra.mxu0 0.0
      %9459 = vmatprep.subr.mxu0 0.0
      %9460 = vmatpush1.msra.mxu0 0.0
      %9461 = vmatprep.subr.mxu0 0.0
      %9462 = vmatpush1.msra.mxu0 0.0
      %9463 = vmatprep.subr.mxu0 0.0
      %9464 = vmatpush1.msra.mxu0 0.0
      %9465 = vmatprep.subr.mxu0 0.0
      %9466 = vmatpush1.msra.mxu0 0.0
      %9467 = vmatprep.subr.mxu0 0.0
      %9468 = vmatpush1.msra.mxu0 0.0
      %9469 = vmatprep.subr.mxu0 0.0
      %9470 = vmatpush1.msra.mxu0 0.0
      %9471 = vmatprep.subr.mxu0 0.0
      %9472 = vmatpush1.msra.mxu0 0.0
      %9473 = vmatprep.subr.mxu0 0.0
      %9474 = vmatpush1.msra.mxu0 0.0
      %9475 = vmatprep.subr.mxu0 0.0
      %9476 = vmatpush1.msra.mxu0 0.0
      %9477 = vmatprep.subr.mxu0 0.0
      %9478 = vmatpush1.msra.mxu0 0.0
      %9479 = vmatprep.subr.mxu0 0.0
      %9480 = vmatpush1.msra.mxu0 0.0
      %9481 = vmatprep.subr.mxu0 0.0
      %9482 = vmatpush1.msra.mxu0 0.0
      %9483 = vmatprep.subr.mxu0 0.0
      %9484 = vmatpush1.msra.mxu0 0.0
      %9485 = vmatprep.subr.mxu0 0.0
      %9486 = vmatpush1.msra.mxu0 0.0
      %9487 = vmatprep.subr.mxu0 0.0
      %9488 = vmatpush1.msra.mxu0 0.0
      %9489 = vmatprep.subr.mxu0 0.0
      %9490 = vmatpush1.msra.mxu0 0.0
      %9491 = vmatprep.subr.mxu0 0.0
      %9492 = vmatpush1.msra.mxu0 0.0
      %9493 = vmatprep.subr.mxu0 0.0
      %9494 = vmatpush1.msra.mxu0 0.0
      %9495 = vmatprep.subr.mxu0 0.0
      %9496 = vmatpush1.msra.mxu0 0.0
      %9497 = vmatprep.subr.mxu0 0.0
      %9498 = vmatpush1.msra.mxu0 0.0
      %9499 = vmatprep.subr.mxu0 0.0
      %9500 = vmatpush1.msra.mxu0 0.0
      %9501 = vmatprep.subr.mxu0 0.0
      %9502 = vmatpush1.msra.mxu0 0.0
      %9503 = vmatprep.subr.mxu0 0.0
      %9504 = vmatpush1.msra.mxu0 0.0
      %9505 = vmatprep.subr.mxu0 0.0
      %9506 = vmatpush1.msra.mxu0 0.0
      %9507 = vmatprep.subr.mxu0 0.0
      %9508 = vmatpush1.msra.mxu0 0.0
      %9509 = vmatprep.subr.mxu0 0.0
      %9510 = vmatpush1.msra.mxu0 0.0
      %9511 = vmatprep.subr.mxu0 0.0
      %9512 = vmatpush1.msra.mxu0 0.0
      %9513 = vmatprep.subr.mxu0 0.0
      %9514 = vmatpush1.msra.mxu0 0.0
      %9515 = vmatprep.mubr.f32.mxu0 0.0
      %9516 = vmatmul.mubr.f32.gmra.mrb[0].mxu0 %v9449
      %v9517 = vpop.f32.mrb[0].mxu0
      %v9518 = vadd.f32 0.0, %v9517
      %v9519 = vpop.f32.mrb[0].mxu0
      %9520 = vdwg.mxu0
      %v9521 = vadd.f32 %v9444, %v9518
      %s9522 = scalar_lea.vmem [#allocation5], 6
      %v9523 = vld [vmem:[%s9522] ss:$16 sm:$0x3]
      %v9524 = vld [vmem:[%s13 + $0x30] sm:$0xff]
      %v9526 = vsel %vm4048, %v9523, 0
      %9528 = vmatprep.subr.mxu0 0.0
      %9529 = vmatpush1.msra.mxu0 %v9524
      %9530 = vmatprep.subr.mxu0 0.0
      %9531 = vmatpush1.msra.mxu0 0.0
      %9532 = vmatprep.subr.mxu0 0.0
      %9533 = vmatpush1.msra.mxu0 0.0
      %9534 = vmatprep.subr.mxu0 0.0
      %9535 = vmatpush1.msra.mxu0 0.0
      %9536 = vmatprep.subr.mxu0 0.0
      %9537 = vmatpush1.msra.mxu0 0.0
      %9538 = vmatprep.subr.mxu0 0.0
      %9539 = vmatpush1.msra.mxu0 0.0
      %9540 = vmatprep.subr.mxu0 0.0
      %9541 = vmatpush1.msra.mxu0 0.0
      %9542 = vmatprep.subr.mxu0 0.0
      %9543 = vmatpush1.msra.mxu0 0.0
      %9544 = vmatprep.subr.mxu0 0.0
      %9545 = vmatpush1.msra.mxu0 0.0
      %9546 = vmatprep.subr.mxu0 0.0
      %9547 = vmatpush1.msra.mxu0 0.0
      %9548 = vmatprep.subr.mxu0 0.0
      %9549 = vmatpush1.msra.mxu0 0.0
      %9550 = vmatprep.subr.mxu0 0.0
      %9551 = vmatpush1.msra.mxu0 0.0
      %9552 = vmatprep.subr.mxu0 0.0
      %9553 = vmatpush1.msra.mxu0 0.0
      %9554 = vmatprep.subr.mxu0 0.0
      %9555 = vmatpush1.msra.mxu0 0.0
      %9556 = vmatprep.subr.mxu0 0.0
      %9557 = vmatpush1.msra.mxu0 0.0
      %9558 = vmatprep.subr.mxu0 0.0
      %9559 = vmatpush1.msra.mxu0 0.0
      %9560 = vmatprep.subr.mxu0 0.0
      %9561 = vmatpush1.msra.mxu0 0.0
      %9562 = vmatprep.subr.mxu0 0.0
      %9563 = vmatpush1.msra.mxu0 0.0
      %9564 = vmatprep.subr.mxu0 0.0
      %9565 = vmatpush1.msra.mxu0 0.0
      %9566 = vmatprep.subr.mxu0 0.0
      %9567 = vmatpush1.msra.mxu0 0.0
      %9568 = vmatprep.subr.mxu0 0.0
      %9569 = vmatpush1.msra.mxu0 0.0
      %9570 = vmatprep.subr.mxu0 0.0
      %9571 = vmatpush1.msra.mxu0 0.0
      %9572 = vmatprep.subr.mxu0 0.0
      %9573 = vmatpush1.msra.mxu0 0.0
      %9574 = vmatprep.subr.mxu0 0.0
      %9575 = vmatpush1.msra.mxu0 0.0
      %9576 = vmatprep.subr.mxu0 0.0
      %9577 = vmatpush1.msra.mxu0 0.0
      %9578 = vmatprep.subr.mxu0 0.0
      %9579 = vmatpush1.msra.mxu0 0.0
      %9580 = vmatprep.subr.mxu0 0.0
      %9581 = vmatpush1.msra.mxu0 0.0
      %9582 = vmatprep.subr.mxu0 0.0
      %9583 = vmatpush1.msra.mxu0 0.0
      %9584 = vmatprep.subr.mxu0 0.0
      %9585 = vmatpush1.msra.mxu0 0.0
      %9586 = vmatprep.subr.mxu0 0.0
      %9587 = vmatpush1.msra.mxu0 0.0
      %9588 = vmatprep.subr.mxu0 0.0
      %9589 = vmatpush1.msra.mxu0 0.0
      %9590 = vmatprep.subr.mxu0 0.0
      %9591 = vmatpush1.msra.mxu0 0.0
      %9592 = vmatprep.mubr.f32.mxu0 0.0
      %9593 = vmatmul.mubr.f32.gmra.mrb[0].mxu0 %v9526
      %v9594 = vpop.f32.mrb[0].mxu0
      %v9595 = vadd.f32 0.0, %v9594
      %v9596 = vpop.f32.mrb[0].mxu0
      %9597 = vdwg.mxu0
      %v9598 = vadd.f32 %v9521, %v9595
      %s9599 = scalar_lea.vmem [#allocation5], 7
      %v9600 = vld [vmem:[%s9599] ss:$16 sm:$0x3]
      %v9601 = vld [vmem:[%s13 + $0x38] sm:$0xff]
      %v9603 = vsel %vm4048, %v9600, 0
      %9605 = vmatprep.subr.mxu0 0.0
      %9606 = vmatpush1.msra.mxu0 %v9601
      %9607 = vmatprep.subr.mxu0 0.0
      %9608 = vmatpush1.msra.mxu0 0.0
      %9609 = vmatprep.subr.mxu0 0.0
      %9610 = vmatpush1.msra.mxu0 0.0
      %9611 = vmatprep.subr.mxu0 0.0
      %9612 = vmatpush1.msra.mxu0 0.0
      %9613 = vmatprep.subr.mxu0 0.0
      %9614 = vmatpush1.msra.mxu0 0.0
      %9615 = vmatprep.subr.mxu0 0.0
      %9616 = vmatpush1.msra.mxu0 0.0
      %9617 = vmatprep.subr.mxu0 0.0
      %9618 = vmatpush1.msra.mxu0 0.0
      %9619 = vmatprep.subr.mxu0 0.0
      %9620 = vmatpush1.msra.mxu0 0.0
      %9621 = vmatprep.subr.mxu0 0.0
      %9622 = vmatpush1.msra.mxu0 0.0
      %9623 = vmatprep.subr.mxu0 0.0
      %9624 = vmatpush1.msra.mxu0 0.0
      %9625 = vmatprep.subr.mxu0 0.0
      %9626 = vmatpush1.msra.mxu0 0.0
      %9627 = vmatprep.subr.mxu0 0.0
      %9628 = vmatpush1.msra.mxu0 0.0
      %9629 = vmatprep.subr.mxu0 0.0
      %9630 = vmatpush1.msra.mxu0 0.0
      %9631 = vmatprep.subr.mxu0 0.0
      %9632 = vmatpush1.msra.mxu0 0.0
      %9633 = vmatprep.subr.mxu0 0.0
      %9634 = vmatpush1.msra.mxu0 0.0
      %9635 = vmatprep.subr.mxu0 0.0
      %9636 = vmatpush1.msra.mxu0 0.0
      %9637 = vmatprep.subr.mxu0 0.0
      %9638 = vmatpush1.msra.mxu0 0.0
      %9639 = vmatprep.subr.mxu0 0.0
      %9640 = vmatpush1.msra.mxu0 0.0
      %9641 = vmatprep.subr.mxu0 0.0
      %9642 = vmatpush1.msra.mxu0 0.0
      %9643 = vmatprep.subr.mxu0 0.0
      %9644 = vmatpush1.msra.mxu0 0.0
      %9645 = vmatprep.subr.mxu0 0.0
      %9646 = vmatpush1.msra.mxu0 0.0
      %9647 = vmatprep.subr.mxu0 0.0
      %9648 = vmatpush1.msra.mxu0 0.0
      %9649 = vmatprep.subr.mxu0 0.0
      %9650 = vmatpush1.msra.mxu0 0.0
      %9651 = vmatprep.subr.mxu0 0.0
      %9652 = vmatpush1.msra.mxu0 0.0
      %9653 = vmatprep.subr.mxu0 0.0
      %9654 = vmatpush1.msra.mxu0 0.0
      %9655 = vmatprep.subr.mxu0 0.0
      %9656 = vmatpush1.msra.mxu0 0.0
      %9657 = vmatprep.subr.mxu0 0.0
      %9658 = vmatpush1.msra.mxu0 0.0
      %9659 = vmatprep.subr.mxu0 0.0
      %9660 = vmatpush1.msra.mxu0 0.0
      %9661 = vmatprep.subr.mxu0 0.0
      %9662 = vmatpush1.msra.mxu0 0.0
      %9663 = vmatprep.subr.mxu0 0.0
      %9664 = vmatpush1.msra.mxu0 0.0
      %9665 = vmatprep.subr.mxu0 0.0
      %9666 = vmatpush1.msra.mxu0 0.0
      %9667 = vmatprep.subr.mxu0 0.0
      %9668 = vmatpush1.msra.mxu0 0.0
      %9669 = vmatprep.mubr.f32.mxu0 0.0
      %9670 = vmatmul.mubr.f32.gmra.mrb[0].mxu0 %v9603
      %v9671 = vpop.f32.mrb[0].mxu0
      %v9672 = vadd.f32 0.0, %v9671
      %v9673 = vpop.f32.mrb[0].mxu0
      %9674 = vdwg.mxu0
      %v9675 = vadd.f32 %v9598, %v9672
      %s9676 = scalar_lea.vmem [#allocation5], 8
      %v9677 = vld [vmem:[%s9676] ss:$16 sm:$0x3]
      %v9678 = vld [vmem:[%s13 + $0x40] sm:$0xff]
      %v9680 = vsel %vm4048, %v9677, 0
      %9682 = vmatprep.subr.mxu0 0.0
      %9683 = vmatpush1.msra.mxu0 %v9678
      %9684 = vmatprep.subr.mxu0 0.0
      %9685 = vmatpush1.msra.mxu0 0.0
      %9686 = vmatprep.subr.mxu0 0.0
      %9687 = vmatpush1.msra.mxu0 0.0
      %9688 = vmatprep.subr.mxu0 0.0
      %9689 = vmatpush1.msra.mxu0 0.0
      %9690 = vmatprep.subr.mxu0 0.0
      %9691 = vmatpush1.msra.mxu0 0.0
      %9692 = vmatprep.subr.mxu0 0.0
      %9693 = vmatpush1.msra.mxu0 0.0
      %9694 = vmatprep.subr.mxu0 0.0
      %9695 = vmatpush1.msra.mxu0 0.0
      %9696 = vmatprep.subr.mxu0 0.0
      %9697 = vmatpush1.msra.mxu0 0.0
      %9698 = vmatprep.subr.mxu0 0.0
      %9699 = vmatpush1.msra.mxu0 0.0
      %9700 = vmatprep.subr.mxu0 0.0
      %9701 = vmatpush1.msra.mxu0 0.0
      %9702 = vmatprep.subr.mxu0 0.0
      %9703 = vmatpush1.msra.mxu0 0.0
      %9704 = vmatprep.subr.mxu0 0.0
      %9705 = vmatpush1.msra.mxu0 0.0
      %9706 = vmatprep.subr.mxu0 0.0
      %9707 = vmatpush1.msra.mxu0 0.0
      %9708 = vmatprep.subr.mxu0 0.0
      %9709 = vmatpush1.msra.mxu0 0.0
      %9710 = vmatprep.subr.mxu0 0.0
      %9711 = vmatpush1.msra.mxu0 0.0
      %9712 = vmatprep.subr.mxu0 0.0
      %9713 = vmatpush1.msra.mxu0 0.0
      %9714 = vmatprep.subr.mxu0 0.0
      %9715 = vmatpush1.msra.mxu0 0.0
      %9716 = vmatprep.subr.mxu0 0.0
      %9717 = vmatpush1.msra.mxu0 0.0
      %9718 = vmatprep.subr.mxu0 0.0
      %9719 = vmatpush1.msra.mxu0 0.0
      %9720 = vmatprep.subr.mxu0 0.0
      %9721 = vmatpush1.msra.mxu0 0.0
      %9722 = vmatprep.subr.mxu0 0.0
      %9723 = vmatpush1.msra.mxu0 0.0
      %9724 = vmatprep.subr.mxu0 0.0
      %9725 = vmatpush1.msra.mxu0 0.0
      %9726 = vmatprep.subr.mxu0 0.0
      %9727 = vmatpush1.msra.mxu0 0.0
      %9728 = vmatprep.subr.mxu0 0.0
      %9729 = vmatpush1.msra.mxu0 0.0
      %9730 = vmatprep.subr.mxu0 0.0
      %9731 = vmatpush1.msra.mxu0 0.0
      %9732 = vmatprep.subr.mxu0 0.0
      %9733 = vmatpush1.msra.mxu0 0.0
      %9734 = vmatprep.subr.mxu0 0.0
      %9735 = vmatpush1.msra.mxu0 0.0
      %9736 = vmatprep.subr.mxu0 0.0
      %9737 = vmatpush1.msra.mxu0 0.0
      %9738 = vmatprep.subr.mxu0 0.0
      %9739 = vmatpush1.msra.mxu0 0.0
      %9740 = vmatprep.subr.mxu0 0.0
      %9741 = vmatpush1.msra.mxu0 0.0
      %9742 = vmatprep.subr.mxu0 0.0
      %9743 = vmatpush1.msra.mxu0 0.0
      %9744 = vmatprep.subr.mxu0 0.0
      %9745 = vmatpush1.msra.mxu0 0.0
      %9746 = vmatprep.mubr.f32.mxu0 0.0
      %9747 = vmatmul.mubr.f32.gmra.mrb[0].mxu0 %v9680
      %v9748 = vpop.f32.mrb[0].mxu0
      %v9749 = vadd.f32 0.0, %v9748
      %v9750 = vpop.f32.mrb[0].mxu0
      %9751 = vdwg.mxu0
      %v9752 = vadd.f32 %v9675, %v9749
      %s9753 = scalar_lea.vmem [#allocation5], 9
      %v9754 = vld [vmem:[%s9753] ss:$16 sm:$0x3]
      %v9755 = vld [vmem:[%s13 + $0x48] sm:$0xff]
      %v9757 = vsel %vm4048, %v9754, 0
      %9759 = vmatprep.subr.mxu0 0.0
      %9760 = vmatpush1.msra.mxu0 %v9755
      %9761 = vmatprep.subr.mxu0 0.0
      %9762 = vmatpush1.msra.mxu0 0.0
      %9763 = vmatprep.subr.mxu0 0.0
      %9764 = vmatpush1.msra.mxu0 0.0
      %9765 = vmatprep.subr.mxu0 0.0
      %9766 = vmatpush1.msra.mxu0 0.0
      %9767 = vmatprep.subr.mxu0 0.0
      %9768 = vmatpush1.msra.mxu0 0.0
      %9769 = vmatprep.subr.mxu0 0.0
      %9770 = vmatpush1.msra.mxu0 0.0
      %9771 = vmatprep.subr.mxu0 0.0
      %9772 = vmatpush1.msra.mxu0 0.0
      %9773 = vmatprep.subr.mxu0 0.0
      %9774 = vmatpush1.msra.mxu0 0.0
      %9775 = vmatprep.subr.mxu0 0.0
      %9776 = vmatpush1.msra.mxu0 0.0
      %9777 = vmatprep.subr.mxu0 0.0
      %9778 = vmatpush1.msra.mxu0 0.0
      %9779 = vmatprep.subr.mxu0 0.0
      %9780 = vmatpush1.msra.mxu0 0.0
      %9781 = vmatprep.subr.mxu0 0.0
      %9782 = vmatpush1.msra.mxu0 0.0
      %9783 = vmatprep.subr.mxu0 0.0
      %9784 = vmatpush1.msra.mxu0 0.0
      %9785 = vmatprep.subr.mxu0 0.0
      %9786 = vmatpush1.msra.mxu0 0.0
      %9787 = vmatprep.subr.mxu0 0.0
      %9788 = vmatpush1.msra.mxu0 0.0
      %9789 = vmatprep.subr.mxu0 0.0
      %9790 = vmatpush1.msra.mxu0 0.0
      %9791 = vmatprep.subr.mxu0 0.0
      %9792 = vmatpush1.msra.mxu0 0.0
      %9793 = vmatprep.subr.mxu0 0.0
      %9794 = vmatpush1.msra.mxu0 0.0
      %9795 = vmatprep.subr.mxu0 0.0
      %9796 = vmatpush1.msra.mxu0 0.0
      %9797 = vmatprep.subr.mxu0 0.0
      %9798 = vmatpush1.msra.mxu0 0.0
      %9799 = vmatprep.subr.mxu0 0.0
      %9800 = vmatpush1.msra.mxu0 0.0
      %9801 = vmatprep.subr.mxu0 0.0
      %9802 = vmatpush1.msra.mxu0 0.0
      %9803 = vmatprep.subr.mxu0 0.0
      %9804 = vmatpush1.msra.mxu0 0.0
      %9805 = vmatprep.subr.mxu0 0.0
      %9806 = vmatpush1.msra.mxu0 0.0
      %9807 = vmatprep.subr.mxu0 0.0
      %9808 = vmatpush1.msra.mxu0 0.0
      %9809 = vmatprep.subr.mxu0 0.0
      %9810 = vmatpush1.msra.mxu0 0.0
      %9811 = vmatprep.subr.mxu0 0.0
      %9812 = vmatpush1.msra.mxu0 0.0
      %9813 = vmatprep.subr.mxu0 0.0
      %9814 = vmatpush1.msra.mxu0 0.0
      %9815 = vmatprep.subr.mxu0 0.0
      %9816 = vmatpush1.msra.mxu0 0.0
      %9817 = vmatprep.subr.mxu0 0.0
      %9818 = vmatpush1.msra.mxu0 0.0
      %9819 = vmatprep.subr.mxu0 0.0
      %9820 = vmatpush1.msra.mxu0 0.0
      %9821 = vmatprep.subr.mxu0 0.0
      %9822 = vmatpush1.msra.mxu0 0.0
      %9823 = vmatprep.mubr.f32.mxu0 0.0
      %9824 = vmatmul.mubr.f32.gmra.mrb[0].mxu0 %v9757
      %v9825 = vpop.f32.mrb[0].mxu0
      %v9826 = vadd.f32 0.0, %v9825
      %v9827 = vpop.f32.mrb[0].mxu0
      %9828 = vdwg.mxu0
      %v9829 = vadd.f32 %v9752, %v9826
      %s9830 = scalar_lea.vmem [#allocation5], 10
      %v9831 = vld [vmem:[%s9830] ss:$16 sm:$0x3]
      %v9832 = vld [vmem:[%s13 + $0x50] sm:$0xff]
      %v9834 = vsel %vm4048, %v9831, 0
      %9836 = vmatprep.subr.mxu0 0.0
      %9837 = vmatpush1.msra.mxu0 %v9832
      %9838 = vmatprep.subr.mxu0 0.0
      %9839 = vmatpush1.msra.mxu0 0.0
      %9840 = vmatprep.subr.mxu0 0.0
      %9841 = vmatpush1.msra.mxu0 0.0
      %9842 = vmatprep.subr.mxu0 0.0
      %9843 = vmatpush1.msra.mxu0 0.0
      %9844 = vmatprep.subr.mxu0 0.0
      %9845 = vmatpush1.msra.mxu0 0.0
      %9846 = vmatprep.subr.mxu0 0.0
      %9847 = vmatpush1.msra.mxu0 0.0
      %9848 = vmatprep.subr.mxu0 0.0
      %9849 = vmatpush1.msra.mxu0 0.0
      %9850 = vmatprep.subr.mxu0 0.0
      %9851 = vmatpush1.msra.mxu0 0.0
      %9852 = vmatprep.subr.mxu0 0.0
      %9853 = vmatpush1.msra.mxu0 0.0
      %9854 = vmatprep.subr.mxu0 0.0
      %9855 = vmatpush1.msra.mxu0 0.0
      %9856 = vmatprep.subr.mxu0 0.0
      %9857 = vmatpush1.msra.mxu0 0.0
      %9858 = vmatprep.subr.mxu0 0.0
      %9859 = vmatpush1.msra.mxu0 0.0
      %9860 = vmatprep.subr.mxu0 0.0
      %9861 = vmatpush1.msra.mxu0 0.0
      %9862 = vmatprep.subr.mxu0 0.0
      %9863 = vmatpush1.msra.mxu0 0.0
      %9864 = vmatprep.subr.mxu0 0.0
      %9865 = vmatpush1.msra.mxu0 0.0
      %9866 = vmatprep.subr.mxu0 0.0
      %9867 = vmatpush1.msra.mxu0 0.0
      %9868 = vmatprep.subr.mxu0 0.0
      %9869 = vmatpush1.msra.mxu0 0.0
      %9870 = vmatprep.subr.mxu0 0.0
      %9871 = vmatpush1.msra.mxu0 0.0
      %9872 = vmatprep.subr.mxu0 0.0
      %9873 = vmatpush1.msra.mxu0 0.0
      %9874 = vmatprep.subr.mxu0 0.0
      %9875 = vmatpush1.msra.mxu0 0.0
      %9876 = vmatprep.subr.mxu0 0.0
      %9877 = vmatpush1.msra.mxu0 0.0
      %9878 = vmatprep.subr.mxu0 0.0
      %9879 = vmatpush1.msra.mxu0 0.0
      %9880 = vmatprep.subr.mxu0 0.0
      %9881 = vmatpush1.msra.mxu0 0.0
      %9882 = vmatprep.subr.mxu0 0.0
      %9883 = vmatpush1.msra.mxu0 0.0
      %9884 = vmatprep.subr.mxu0 0.0
      %9885 = vmatpush1.msra.mxu0 0.0
      %9886 = vmatprep.subr.mxu0 0.0
      %9887 = vmatpush1.msra.mxu0 0.0
      %9888 = vmatprep.subr.mxu0 0.0
      %9889 = vmatpush1.msra.mxu0 0.0
      %9890 = vmatprep.subr.mxu0 0.0
      %9891 = vmatpush1.msra.mxu0 0.0
      %9892 = vmatprep.subr.mxu0 0.0
      %9893 = vmatpush1.msra.mxu0 0.0
      %9894 = vmatprep.subr.mxu0 0.0
      %9895 = vmatpush1.msra.mxu0 0.0
      %9896 = vmatprep.subr.mxu0 0.0
      %9897 = vmatpush1.msra.mxu0 0.0
      %9898 = vmatprep.subr.mxu0 0.0
      %9899 = vmatpush1.msra.mxu0 0.0
      %9900 = vmatprep.mubr.f32.mxu0 0.0
      %9901 = vmatmul.mubr.f32.gmra.mrb[0].mxu0 %v9834
      %v9902 = vpop.f32.mrb[0].mxu0
      %v9903 = vadd.f32 0.0, %v9902
      %v9904 = vpop.f32.mrb[0].mxu0
      %9905 = vdwg.mxu0
      %v9906 = vadd.f32 %v9829, %v9903
      %s9907 = scalar_lea.vmem [#allocation5], 11
      %v9908 = vld [vmem:[%s9907] ss:$16 sm:$0x3]
      %v9909 = vld [vmem:[%s13 + $0x58] sm:$0xff]
      %v9911 = vsel %vm4048, %v9908, 0
      %9913 = vmatprep.subr.mxu0 0.0
      %9914 = vmatpush1.msra.mxu0 %v9909
      %9915 = vmatprep.subr.mxu0 0.0
      %9916 = vmatpush1.msra.mxu0 0.0
      %9917 = vmatprep.subr.mxu0 0.0
      %9918 = vmatpush1.msra.mxu0 0.0
      %9919 = vmatprep.subr.mxu0 0.0
      %9920 = vmatpush1.msra.mxu0 0.0
      %9921 = vmatprep.subr.mxu0 0.0
      %9922 = vmatpush1.msra.mxu0 0.0
      %9923 = vmatprep.subr.mxu0 0.0
      %9924 = vmatpush1.msra.mxu0 0.0
      %9925 = vmatprep.subr.mxu0 0.0
      %9926 = vmatpush1.msra.mxu0 0.0
      %9927 = vmatprep.subr.mxu0 0.0
      %9928 = vmatpush1.msra.mxu0 0.0
      %9929 = vmatprep.subr.mxu0 0.0
      %9930 = vmatpush1.msra.mxu0 0.0
      %9931 = vmatprep.subr.mxu0 0.0
      %9932 = vmatpush1.msra.mxu0 0.0
      %9933 = vmatprep.subr.mxu0 0.0
      %9934 = vmatpush1.msra.mxu0 0.0
      %9935 = vmatprep.subr.mxu0 0.0
      %9936 = vmatpush1.msra.mxu0 0.0
      %9937 = vmatprep.subr.mxu0 0.0
      %9938 = vmatpush1.msra.mxu0 0.0
      %9939 = vmatprep.subr.mxu0 0.0
      %9940 = vmatpush1.msra.mxu0 0.0
      %9941 = vmatprep.subr.mxu0 0.0
      %9942 = vmatpush1.msra.mxu0 0.0
      %9943 = vmatprep.subr.mxu0 0.0
      %9944 = vmatpush1.msra.mxu0 0.0
      %9945 = vmatprep.subr.mxu0 0.0
      %9946 = vmatpush1.msra.mxu0 0.0
      %9947 = vmatprep.subr.mxu0 0.0
      %9948 = vmatpush1.msra.mxu0 0.0
      %9949 = vmatprep.subr.mxu0 0.0
      %9950 = vmatpush1.msra.mxu0 0.0
      %9951 = vmatprep.subr.mxu0 0.0
      %9952 = vmatpush1.msra.mxu0 0.0
      %9953 = vmatprep.subr.mxu0 0.0
      %9954 = vmatpush1.msra.mxu0 0.0
      %9955 = vmatprep.subr.mxu0 0.0
      %9956 = vmatpush1.msra.mxu0 0.0
      %9957 = vmatprep.subr.mxu0 0.0
      %9958 = vmatpush1.msra.mxu0 0.0
      %9959 = vmatprep.subr.mxu0 0.0
      %9960 = vmatpush1.msra.mxu0 0.0
      %9961 = vmatprep.subr.mxu0 0.0
      %9962 = vmatpush1.msra.mxu0 0.0
      %9963 = vmatprep.subr.mxu0 0.0
      %9964 = vmatpush1.msra.mxu0 0.0
      %9965 = vmatprep.subr.mxu0 0.0
      %9966 = vmatpush1.msra.mxu0 0.0
      %9967 = vmatprep.subr.mxu0 0.0
      %9968 = vmatpush1.msra.mxu0 0.0
      %9969 = vmatprep.subr.mxu0 0.0
      %9970 = vmatpush1.msra.mxu0 0.0
      %9971 = vmatprep.subr.mxu0 0.0
      %9972 = vmatpush1.msra.mxu0 0.0
      %9973 = vmatprep.subr.mxu0 0.0
      %9974 = vmatpush1.msra.mxu0 0.0
      %9975 = vmatprep.subr.mxu0 0.0
      %9976 = vmatpush1.msra.mxu0 0.0
      %9977 = vmatprep.mubr.f32.mxu0 0.0
      %9978 = vmatmul.mubr.f32.gmra.mrb[0].mxu0 %v9911
      %v9979 = vpop.f32.mrb[0].mxu0
      %v9980 = vadd.f32 0.0, %v9979
      %v9981 = vpop.f32.mrb[0].mxu0
      %9982 = vdwg.mxu0
      %v9983 = vadd.f32 %v9906, %v9980
      %s9984 = scalar_lea.vmem [#allocation5], 12
      %v9985 = vld [vmem:[%s9984] ss:$16 sm:$0x3]
      %v9986 = vld [vmem:[%s13 + $0x60] sm:$0xff]
      %v9988 = vsel %vm4048, %v9985, 0
      %9990 = vmatprep.subr.mxu0 0.0
      %9991 = vmatpush1.msra.mxu0 %v9986
      %9992 = vmatprep.subr.mxu0 0.0
      %9993 = vmatpush1.msra.mxu0 0.0
      %9994 = vmatprep.subr.mxu0 0.0
      %9995 = vmatpush1.msra.mxu0 0.0
      %9996 = vmatprep.subr.mxu0 0.0
      %9997 = vmatpush1.msra.mxu0 0.0
      %9998 = vmatprep.subr.mxu0 0.0
      %9999 = vmatpush1.msra.mxu0 0.0
      %10000 = vmatprep.subr.mxu0 0.0
      %10001 = vmatpush1.msra.mxu0 0.0
      %10002 = vmatprep.subr.mxu0 0.0
      %10003 = vmatpush1.msra.mxu0 0.0
      %10004 = vmatprep.subr.mxu0 0.0
      %10005 = vmatpush1.msra.mxu0 0.0
      %10006 = vmatprep.subr.mxu0 0.0
      %10007 = vmatpush1.msra.mxu0 0.0
      %10008 = vmatprep.subr.mxu0 0.0
      %10009 = vmatpush1.msra.mxu0 0.0
      %10010 = vmatprep.subr.mxu0 0.0
      %10011 = vmatpush1.msra.mxu0 0.0
      %10012 = vmatprep.subr.mxu0 0.0
      %10013 = vmatpush1.msra.mxu0 0.0
      %10014 = vmatprep.subr.mxu0 0.0
      %10015 = vmatpush1.msra.mxu0 0.0
      %10016 = vmatprep.subr.mxu0 0.0
      %10017 = vmatpush1.msra.mxu0 0.0
      %10018 = vmatprep.subr.mxu0 0.0
      %10019 = vmatpush1.msra.mxu0 0.0
      %10020 = vmatprep.subr.mxu0 0.0
      %10021 = vmatpush1.msra.mxu0 0.0
      %10022 = vmatprep.subr.mxu0 0.0
      %10023 = vmatpush1.msra.mxu0 0.0
      %10024 = vmatprep.subr.mxu0 0.0
      %10025 = vmatpush1.msra.mxu0 0.0
      %10026 = vmatprep.subr.mxu0 0.0
      %10027 = vmatpush1.msra.mxu0 0.0
      %10028 = vmatprep.subr.mxu0 0.0
      %10029 = vmatpush1.msra.mxu0 0.0
      %10030 = vmatprep.subr.mxu0 0.0
      %10031 = vmatpush1.msra.mxu0 0.0
      %10032 = vmatprep.subr.mxu0 0.0
      %10033 = vmatpush1.msra.mxu0 0.0
      %10034 = vmatprep.subr.mxu0 0.0
      %10035 = vmatpush1.msra.mxu0 0.0
      %10036 = vmatprep.subr.mxu0 0.0
      %10037 = vmatpush1.msra.mxu0 0.0
      %10038 = vmatprep.subr.mxu0 0.0
      %10039 = vmatpush1.msra.mxu0 0.0
      %10040 = vmatprep.subr.mxu0 0.0
      %10041 = vmatpush1.msra.mxu0 0.0
      %10042 = vmatprep.subr.mxu0 0.0
      %10043 = vmatpush1.msra.mxu0 0.0
      %10044 = vmatprep.subr.mxu0 0.0
      %10045 = vmatpush1.msra.mxu0 0.0
      %10046 = vmatprep.subr.mxu0 0.0
      %10047 = vmatpush1.msra.mxu0 0.0
      %10048 = vmatprep.subr.mxu0 0.0
      %10049 = vmatpush1.msra.mxu0 0.0
      %10050 = vmatprep.subr.mxu0 0.0
      %10051 = vmatpush1.msra.mxu0 0.0
      %10052 = vmatprep.subr.mxu0 0.0
      %10053 = vmatpush1.msra.mxu0 0.0
      %10054 = vmatprep.mubr.f32.mxu0 0.0
      %10055 = vmatmul.mubr.f32.gmra.mrb[0].mxu0 %v9988
      %v10056 = vpop.f32.mrb[0].mxu0
      %v10057 = vadd.f32 0.0, %v10056
      %v10058 = vpop.f32.mrb[0].mxu0
      %10059 = vdwg.mxu0
      %v10060 = vadd.f32 %v9983, %v10057
      %s10061 = scalar_lea.vmem [#allocation5], 13
      %v10062 = vld [vmem:[%s10061] ss:$16 sm:$0x3]
      %v10063 = vld [vmem:[%s13 + $0x68] sm:$0xff]
      %v10065 = vsel %vm4048, %v10062, 0
      %10067 = vmatprep.subr.mxu0 0.0
      %10068 = vmatpush1.msra.mxu0 %v10063
      %10069 = vmatprep.subr.mxu0 0.0
      %10070 = vmatpush1.msra.mxu0 0.0
      %10071 = vmatprep.subr.mxu0 0.0
      %10072 = vmatpush1.msra.mxu0 0.0
      %10073 = vmatprep.subr.mxu0 0.0
      %10074 = vmatpush1.msra.mxu0 0.0
      %10075 = vmatprep.subr.mxu0 0.0
      %10076 = vmatpush1.msra.mxu0 0.0
      %10077 = vmatprep.subr.mxu0 0.0
      %10078 = vmatpush1.msra.mxu0 0.0
      %10079 = vmatprep.subr.mxu0 0.0
      %10080 = vmatpush1.msra.mxu0 0.0
      %10081 = vmatprep.subr.mxu0 0.0
      %10082 = vmatpush1.msra.mxu0 0.0
      %10083 = vmatprep.subr.mxu0 0.0
      %10084 = vmatpush1.msra.mxu0 0.0
      %10085 = vmatprep.subr.mxu0 0.0
      %10086 = vmatpush1.msra.mxu0 0.0
      %10087 = vmatprep.subr.mxu0 0.0
      %10088 = vmatpush1.msra.mxu0 0.0
      %10089 = vmatprep.subr.mxu0 0.0
      %10090 = vmatpush1.msra.mxu0 0.0
      %10091 = vmatprep.subr.mxu0 0.0
      %10092 = vmatpush1.msra.mxu0 0.0
      %10093 = vmatprep.subr.mxu0 0.0
      %10094 = vmatpush1.msra.mxu0 0.0
      %10095 = vmatprep.subr.mxu0 0.0
      %10096 = vmatpush1.msra.mxu0 0.0
      %10097 = vmatprep.subr.mxu0 0.0
      %10098 = vmatpush1.msra.mxu0 0.0
      %10099 = vmatprep.subr.mxu0 0.0
      %10100 = vmatpush1.msra.mxu0 0.0
      %10101 = vmatprep.subr.mxu0 0.0
      %10102 = vmatpush1.msra.mxu0 0.0
      %10103 = vmatprep.subr.mxu0 0.0
      %10104 = vmatpush1.msra.mxu0 0.0
      %10105 = vmatprep.subr.mxu0 0.0
      %10106 = vmatpush1.msra.mxu0 0.0
      %10107 = vmatprep.subr.mxu0 0.0
      %10108 = vmatpush1.msra.mxu0 0.0
      %10109 = vmatprep.subr.mxu0 0.0
      %10110 = vmatpush1.msra.mxu0 0.0
      %10111 = vmatprep.subr.mxu0 0.0
      %10112 = vmatpush1.msra.mxu0 0.0
      %10113 = vmatprep.subr.mxu0 0.0
      %10114 = vmatpush1.msra.mxu0 0.0
      %10115 = vmatprep.subr.mxu0 0.0
      %10116 = vmatpush1.msra.mxu0 0.0
      %10117 = vmatprep.subr.mxu0 0.0
      %10118 = vmatpush1.msra.mxu0 0.0
      %10119 = vmatprep.subr.mxu0 0.0
      %10120 = vmatpush1.msra.mxu0 0.0
      %10121 = vmatprep.subr.mxu0 0.0
      %10122 = vmatpush1.msra.mxu0 0.0
      %10123 = vmatprep.subr.mxu0 0.0
      %10124 = vmatpush1.msra.mxu0 0.0
      %10125 = vmatprep.subr.mxu0 0.0
      %10126 = vmatpush1.msra.mxu0 0.0
      %10127 = vmatprep.subr.mxu0 0.0
      %10128 = vmatpush1.msra.mxu0 0.0
      %10129 = vmatprep.subr.mxu0 0.0
      %10130 = vmatpush1.msra.mxu0 0.0
      %10131 = vmatprep.mubr.f32.mxu0 0.0
      %10132 = vmatmul.mubr.f32.gmra.mrb[0].mxu0 %v10065
      %v10133 = vpop.f32.mrb[0].mxu0
      %v10134 = vadd.f32 0.0, %v10133
      %v10135 = vpop.f32.mrb[0].mxu0
      %10136 = vdwg.mxu0
      %v10137 = vadd.f32 %v10060, %v10134
      %s10138 = scalar_lea.vmem [#allocation5], 14
      %v10139 = vld [vmem:[%s10138] ss:$16 sm:$0x3]
      %v10140 = vld [vmem:[%s13 + $0x70] sm:$0xff]
      %v10142 = vsel %vm4048, %v10139, 0
      %10144 = vmatprep.subr.mxu0 0.0
      %10145 = vmatpush1.msra.mxu0 %v10140
      %10146 = vmatprep.subr.mxu0 0.0
      %10147 = vmatpush1.msra.mxu0 0.0
      %10148 = vmatprep.subr.mxu0 0.0
      %10149 = vmatpush1.msra.mxu0 0.0
      %10150 = vmatprep.subr.mxu0 0.0
      %10151 = vmatpush1.msra.mxu0 0.0
      %10152 = vmatprep.subr.mxu0 0.0
      %10153 = vmatpush1.msra.mxu0 0.0
      %10154 = vmatprep.subr.mxu0 0.0
      %10155 = vmatpush1.msra.mxu0 0.0
      %10156 = vmatprep.subr.mxu0 0.0
      %10157 = vmatpush1.msra.mxu0 0.0
      %10158 = vmatprep.subr.mxu0 0.0
      %10159 = vmatpush1.msra.mxu0 0.0
      %10160 = vmatprep.subr.mxu0 0.0
      %10161 = vmatpush1.msra.mxu0 0.0
      %10162 = vmatprep.subr.mxu0 0.0
      %10163 = vmatpush1.msra.mxu0 0.0
      %10164 = vmatprep.subr.mxu0 0.0
      %10165 = vmatpush1.msra.mxu0 0.0
      %10166 = vmatprep.subr.mxu0 0.0
      %10167 = vmatpush1.msra.mxu0 0.0
      %10168 = vmatprep.subr.mxu0 0.0
      %10169 = vmatpush1.msra.mxu0 0.0
      %10170 = vmatprep.subr.mxu0 0.0
      %10171 = vmatpush1.msra.mxu0 0.0
      %10172 = vmatprep.subr.mxu0 0.0
      %10173 = vmatpush1.msra.mxu0 0.0
      %10174 = vmatprep.subr.mxu0 0.0
      %10175 = vmatpush1.msra.mxu0 0.0
      %10176 = vmatprep.subr.mxu0 0.0
      %10177 = vmatpush1.msra.mxu0 0.0
      %10178 = vmatprep.subr.mxu0 0.0
      %10179 = vmatpush1.msra.mxu0 0.0
      %10180 = vmatprep.subr.mxu0 0.0
      %10181 = vmatpush1.msra.mxu0 0.0
      %10182 = vmatprep.subr.mxu0 0.0
      %10183 = vmatpush1.msra.mxu0 0.0
      %10184 = vmatprep.subr.mxu0 0.0
      %10185 = vmatpush1.msra.mxu0 0.0
      %10186 = vmatprep.subr.mxu0 0.0
      %10187 = vmatpush1.msra.mxu0 0.0
      %10188 = vmatprep.subr.mxu0 0.0
      %10189 = vmatpush1.msra.mxu0 0.0
      %10190 = vmatprep.subr.mxu0 0.0
      %10191 = vmatpush1.msra.mxu0 0.0
      %10192 = vmatprep.subr.mxu0 0.0
      %10193 = vmatpush1.msra.mxu0 0.0
      %10194 = vmatprep.subr.mxu0 0.0
      %10195 = vmatpush1.msra.mxu0 0.0
      %10196 = vmatprep.subr.mxu0 0.0
      %10197 = vmatpush1.msra.mxu0 0.0
      %10198 = vmatprep.subr.mxu0 0.0
      %10199 = vmatpush1.msra.mxu0 0.0
      %10200 = vmatprep.subr.mxu0 0.0
      %10201 = vmatpush1.msra.mxu0 0.0
      %10202 = vmatprep.subr.mxu0 0.0
      %10203 = vmatpush1.msra.mxu0 0.0
      %10204 = vmatprep.subr.mxu0 0.0
      %10205 = vmatpush1.msra.mxu0 0.0
      %10206 = vmatprep.subr.mxu0 0.0
      %10207 = vmatpush1.msra.mxu0 0.0
      %10208 = vmatprep.mubr.f32.mxu0 0.0
      %10209 = vmatmul.mubr.f32.gmra.mrb[0].mxu0 %v10142
      %v10210 = vpop.f32.mrb[0].mxu0
      %v10211 = vadd.f32 0.0, %v10210
      %v10212 = vpop.f32.mrb[0].mxu0
      %10213 = vdwg.mxu0
      %v10214 = vadd.f32 %v10137, %v10211
      %s10215 = scalar_lea.vmem [#allocation5], 15
      %v10216 = vld [vmem:[%s10215] ss:$16 sm:$0x3]
      %v10217 = vld [vmem:[%s13 + $0x78] sm:$0xff]
      %v10219 = vsel %vm4048, %v10216, 0
      %10221 = vmatprep.subr.mxu0 0.0
      %10222 = vmatpush1.msra.mxu0 %v10217
      %10223 = vmatprep.subr.mxu0 0.0
      %10224 = vmatpush1.msra.mxu0 0.0
      %10225 = vmatprep.subr.mxu0 0.0
      %10226 = vmatpush1.msra.mxu0 0.0
      %10227 = vmatprep.subr.mxu0 0.0
      %10228 = vmatpush1.msra.mxu0 0.0
      %10229 = vmatprep.subr.mxu0 0.0
      %10230 = vmatpush1.msra.mxu0 0.0
      %10231 = vmatprep.subr.mxu0 0.0
      %10232 = vmatpush1.msra.mxu0 0.0
      %10233 = vmatprep.subr.mxu0 0.0
      %10234 = vmatpush1.msra.mxu0 0.0
      %10235 = vmatprep.subr.mxu0 0.0
      %10236 = vmatpush1.msra.mxu0 0.0
      %10237 = vmatprep.subr.mxu0 0.0
      %10238 = vmatpush1.msra.mxu0 0.0
      %10239 = vmatprep.subr.mxu0 0.0
      %10240 = vmatpush1.msra.mxu0 0.0
      %10241 = vmatprep.subr.mxu0 0.0
      %10242 = vmatpush1.msra.mxu0 0.0
      %10243 = vmatprep.subr.mxu0 0.0
      %10244 = vmatpush1.msra.mxu0 0.0
      %10245 = vmatprep.subr.mxu0 0.0
      %10246 = vmatpush1.msra.mxu0 0.0
      %10247 = vmatprep.subr.mxu0 0.0
      %10248 = vmatpush1.msra.mxu0 0.0
      %10249 = vmatprep.subr.mxu0 0.0
      %10250 = vmatpush1.msra.mxu0 0.0
      %10251 = vmatprep.subr.mxu0 0.0
      %10252 = vmatpush1.msra.mxu0 0.0
      %10253 = vmatprep.subr.mxu0 0.0
      %10254 = vmatpush1.msra.mxu0 0.0
      %10255 = vmatprep.subr.mxu0 0.0
      %10256 = vmatpush1.msra.mxu0 0.0
      %10257 = vmatprep.subr.mxu0 0.0
      %10258 = vmatpush1.msra.mxu0 0.0
      %10259 = vmatprep.subr.mxu0 0.0
      %10260 = vmatpush1.msra.mxu0 0.0
      %10261 = vmatprep.subr.mxu0 0.0
      %10262 = vmatpush1.msra.mxu0 0.0
      %10263 = vmatprep.subr.mxu0 0.0
      %10264 = vmatpush1.msra.mxu0 0.0
      %10265 = vmatprep.subr.mxu0 0.0
      %10266 = vmatpush1.msra.mxu0 0.0
      %10267 = vmatprep.subr.mxu0 0.0
      %10268 = vmatpush1.msra.mxu0 0.0
      %10269 = vmatprep.subr.mxu0 0.0
      %10270 = vmatpush1.msra.mxu0 0.0
      %10271 = vmatprep.subr.mxu0 0.0
      %10272 = vmatpush1.msra.mxu0 0.0
      %10273 = vmatprep.subr.mxu0 0.0
      %10274 = vmatpush1.msra.mxu0 0.0
      %10275 = vmatprep.subr.mxu0 0.0
      %10276 = vmatpush1.msra.mxu0 0.0
      %10277 = vmatprep.subr.mxu0 0.0
      %10278 = vmatpush1.msra.mxu0 0.0
      %10279 = vmatprep.subr.mxu0 0.0
      %10280 = vmatpush1.msra.mxu0 0.0
      %10281 = vmatprep.subr.mxu0 0.0
      %10282 = vmatpush1.msra.mxu0 0.0
      %10283 = vmatprep.subr.mxu0 0.0
      %10284 = vmatpush1.msra.mxu0 0.0
      %10285 = vmatprep.mubr.f32.mxu0 0.0
      %10286 = vmatmul.mubr.f32.gmra.mrb[0].mxu0 %v10219
      %v10287 = vpop.f32.mrb[0].mxu0
      %v10288 = vadd.f32 0.0, %v10287
      %v10289 = vpop.f32.mrb[0].mxu0
      %10290 = vdwg.mxu0
      %v10291 = vadd.f32 %v10214, %v10288
      %v10292 = vld [vmem:[%s14] sm:$0x1]
      %v10294 = vlaneseq
      %v10295 = vshrl.u32 %v10294, 7
      %v10296 = vsub.s32 0, %v10295
      %v10297 = vrot.slane %v10292, %v10296
      %v10299 = vadd.f32 %v10291, %v10297
      %v10300 = vmax.f32 %v10299, 0.0
      %v10301 = vld [vmem:[%s15] sm:$0xff]
      %v10302 = vld [vmem:[%s16] sm:$0x1]
      %v10304 = vlaneseq
      %v10305 = vshrl.u32 %v10304, 7
      %v10306 = vsub.s32 0, %v10305
      %v10307 = vrot.slane %v10302, %v10306
      %v10310 = vsel %vm4048, %v10300, 0
      %10312 = vmatprep.subr.mxu0 0.0
      %10313 = vmatpush1.msra.mxu0 %v10301
      %10314 = vmatprep.subr.mxu0 0.0
      %10315 = vmatpush1.msra.mxu0 0.0
      %10316 = vmatprep.subr.mxu0 0.0
      %10317 = vmatpush1.msra.mxu0 0.0
      %10318 = vmatprep.subr.mxu0 0.0
      %10319 = vmatpush1.msra.mxu0 0.0
      %10320 = vmatprep.subr.mxu0 0.0
      %10321 = vmatpush1.msra.mxu0 0.0
      %10322 = vmatprep.subr.mxu0 0.0
      %10323 = vmatpush1.msra.mxu0 0.0
      %10324 = vmatprep.subr.mxu0 0.0
      %10325 = vmatpush1.msra.mxu0 0.0
      %10326 = vmatprep.subr.mxu0 0.0
      %10327 = vmatpush1.msra.mxu0 0.0
      %10328 = vmatprep.subr.mxu0 0.0
      %10329 = vmatpush1.msra.mxu0 0.0
      %10330 = vmatprep.subr.mxu0 0.0
      %10331 = vmatpush1.msra.mxu0 0.0
      %10332 = vmatprep.subr.mxu0 0.0
      %10333 = vmatpush1.msra.mxu0 0.0
      %10334 = vmatprep.subr.mxu0 0.0
      %10335 = vmatpush1.msra.mxu0 0.0
      %10336 = vmatprep.subr.mxu0 0.0
      %10337 = vmatpush1.msra.mxu0 0.0
      %10338 = vmatprep.subr.mxu0 0.0
      %10339 = vmatpush1.msra.mxu0 0.0
      %10340 = vmatprep.subr.mxu0 0.0
      %10341 = vmatpush1.msra.mxu0 0.0
      %10342 = vmatprep.subr.mxu0 0.0
      %10343 = vmatpush1.msra.mxu0 0.0
      %10344 = vmatprep.subr.mxu0 0.0
      %10345 = vmatpush1.msra.mxu0 0.0
      %10346 = vmatprep.subr.mxu0 0.0
      %10347 = vmatpush1.msra.mxu0 0.0
      %10348 = vmatprep.subr.mxu0 0.0
      %10349 = vmatpush1.msra.mxu0 0.0
      %10350 = vmatprep.subr.mxu0 0.0
      %10351 = vmatpush1.msra.mxu0 0.0
      %10352 = vmatprep.subr.mxu0 0.0
      %10353 = vmatpush1.msra.mxu0 0.0
      %10354 = vmatprep.subr.mxu0 0.0
      %10355 = vmatpush1.msra.mxu0 0.0
      %10356 = vmatprep.subr.mxu0 0.0
      %10357 = vmatpush1.msra.mxu0 0.0
      %10358 = vmatprep.subr.mxu0 0.0
      %10359 = vmatpush1.msra.mxu0 0.0
      %10360 = vmatprep.subr.mxu0 0.0
      %10361 = vmatpush1.msra.mxu0 0.0
      %10362 = vmatprep.subr.mxu0 0.0
      %10363 = vmatpush1.msra.mxu0 0.0
      %10364 = vmatprep.subr.mxu0 0.0
      %10365 = vmatpush1.msra.mxu0 0.0
      %10366 = vmatprep.subr.mxu0 0.0
      %10367 = vmatpush1.msra.mxu0 0.0
      %10368 = vmatprep.subr.mxu0 0.0
      %10369 = vmatpush1.msra.mxu0 0.0
      %10370 = vmatprep.subr.mxu0 0.0
      %10371 = vmatpush1.msra.mxu0 0.0
      %10372 = vmatprep.subr.mxu0 0.0
      %10373 = vmatpush1.msra.mxu0 0.0
      %10374 = vmatprep.subr.mxu0 0.0
      %10375 = vmatpush1.msra.mxu0 0.0
      %10376 = vmatprep.mubr.f32.mxu0 0.0
      %10377 = vmatmul.mubr.f32.gmra.mrb[0].mxu0 %v10310
      %v10378 = vpop.f32.mrb[0].mxu0
      %v10379 = vadd.f32 %v10307, %v10378
      %v10380 = vpop.f32.mrb[0].mxu0
      %10381 = vdwg.mxu0
      %v10382 = vmax.f32 %v10379, 0.0
      %v10383 = vld [vmem:[%s17] sm:$0xff]
      %v10384 = vld [vmem:[%s17 + $0x8] sm:$0xff]
      %v10385 = vld [vmem:[%s17 + $0x10] sm:$0xff]
      %v10386 = vld [vmem:[%s17 + $0x18] sm:$0xff]
      %v10387 = vld [vmem:[%s17 + $0x20] sm:$0xff]
      %v10388 = vld [vmem:[%s17 + $0x28] sm:$0xff]
      %v10389 = vld [vmem:[%s17 + $0x30] sm:$0xff]
      %v10390 = vld [vmem:[%s17 + $0x38] sm:$0xff]
      %v10391 = vld [vmem:[%s17 + $0x40] sm:$0xff]
      %v10392 = vld [vmem:[%s17 + $0x48] sm:$0xff]
      %v10393 = vld [vmem:[%s17 + $0x50] sm:$0xff]
      %v10394 = vld [vmem:[%s17 + $0x58] sm:$0xff]
      %v10395 = vld [vmem:[%s17 + $0x60] sm:$0xff]
      %v10396 = vld [vmem:[%s17 + $0x68] sm:$0xff]
      %v10397 = vld [vmem:[%s17 + $0x70] sm:$0xff]
      %v10398 = vld [vmem:[%s17 + $0x78] sm:$0xff]
      %v10399 = vld [vmem:[%s18] sm:$0x1]
      %v10401 = vlaneseq
      %v10402 = vshrl.u32 %v10401, 7
      %v10403 = vsub.s32 0, %v10402
      %v10404 = vrot.slane %v10399, %v10403
      %10406 = vmatprep.subr.mxu0 0.0
      %10407 = vmatpush1.msra.mxu0 %v10383
      %10408 = vmatprep.subr.mxu0 0.0
      %10409 = vmatpush1.msra.mxu0 %v10384
      %10410 = vmatprep.subr.mxu0 0.0
      %10411 = vmatpush1.msra.mxu0 %v10385
      %10412 = vmatprep.subr.mxu0 0.0
      %10413 = vmatpush1.msra.mxu0 %v10386
      %10414 = vmatprep.subr.mxu0 0.0
      %10415 = vmatpush1.msra.mxu0 %v10387
      %10416 = vmatprep.subr.mxu0 0.0
      %10417 = vmatpush1.msra.mxu0 %v10388
      %10418 = vmatprep.subr.mxu0 0.0
      %10419 = vmatpush1.msra.mxu0 %v10389
      %10420 = vmatprep.subr.mxu0 0.0
      %10421 = vmatpush1.msra.mxu0 %v10390
      %10422 = vmatprep.subr.mxu0 0.0
      %10423 = vmatpush1.msra.mxu0 %v10391
      %10424 = vmatprep.subr.mxu0 0.0
      %10425 = vmatpush1.msra.mxu0 %v10392
      %10426 = vmatprep.subr.mxu0 0.0
      %10427 = vmatpush1.msra.mxu0 %v10393
      %10428 = vmatprep.subr.mxu0 0.0
      %10429 = vmatpush1.msra.mxu0 %v10394
      %10430 = vmatprep.subr.mxu0 0.0
      %10431 = vmatpush1.msra.mxu0 %v10395
      %10432 = vmatprep.subr.mxu0 0.0
      %10433 = vmatpush1.msra.mxu0 %v10396
      %10434 = vmatprep.subr.mxu0 0.0
      %10435 = vmatpush1.msra.mxu0 %v10397
      %10436 = vmatprep.subr.mxu0 0.0
      %10437 = vmatpush1.msra.mxu0 %v10398
      %10438 = vmatprep.subr.mxu0 0.0
      %10439 = vmatpush1.msra.mxu0 0.0
      %10440 = vmatprep.subr.mxu0 0.0
      %10441 = vmatpush1.msra.mxu0 0.0
      %10442 = vmatprep.subr.mxu0 0.0
      %10443 = vmatpush1.msra.mxu0 0.0
      %10444 = vmatprep.subr.mxu0 0.0
      %10445 = vmatpush1.msra.mxu0 0.0
      %10446 = vmatprep.subr.mxu0 0.0
      %10447 = vmatpush1.msra.mxu0 0.0
      %10448 = vmatprep.subr.mxu0 0.0
      %10449 = vmatpush1.msra.mxu0 0.0
      %10450 = vmatprep.subr.mxu0 0.0
      %10451 = vmatpush1.msra.mxu0 0.0
      %10452 = vmatprep.subr.mxu0 0.0
      %10453 = vmatpush1.msra.mxu0 0.0
      %10454 = vmatprep.subr.mxu0 0.0
      %10455 = vmatpush1.msra.mxu0 0.0
      %10456 = vmatprep.subr.mxu0 0.0
      %10457 = vmatpush1.msra.mxu0 0.0
      %10458 = vmatprep.subr.mxu0 0.0
      %10459 = vmatpush1.msra.mxu0 0.0
      %10460 = vmatprep.subr.mxu0 0.0
      %10461 = vmatpush1.msra.mxu0 0.0
      %10462 = vmatprep.subr.mxu0 0.0
      %10463 = vmatpush1.msra.mxu0 0.0
      %10464 = vmatprep.subr.mxu0 0.0
      %10465 = vmatpush1.msra.mxu0 0.0
      %10466 = vmatprep.subr.mxu0 0.0
      %10467 = vmatpush1.msra.mxu0 0.0
      %10468 = vmatprep.subr.mxu0 0.0
      %10469 = vmatpush1.msra.mxu0 0.0
      %10470 = vmatprep.mubr.f32.mxu0 0.0
      %10471 = vmatmul.mubr.f32.gmra.mrb[0].mxu0 %v10382
      %v10472 = vpop.f32.mrb[0].mxu0
      %v10473 = vadd.f32 %v10404, %v10472
      %v10474 = vpop.f32.mrb[0].mxu0
      %10475 = vdwg.mxu0
      %v10476 = vmax.f32 %v10473, 0.0
      %v10477 = vld [vmem:[%s19] sm:$0xff]
      %v10478 = vld [vmem:[%s19 + $0x8] sm:$0xff]
      %v10479 = vld [vmem:[%s19 + $0x10] sm:$0xff]
      %v10480 = vld [vmem:[%s19 + $0x18] sm:$0xff]
      %v10481 = vld [vmem:[%s19 + $0x20] sm:$0xff]
      %v10482 = vld [vmem:[%s19 + $0x28] sm:$0xff]
      %v10483 = vld [vmem:[%s19 + $0x30] sm:$0xff]
      %v10484 = vld [vmem:[%s19 + $0x38] sm:$0xff]
      %v10485 = vld [vmem:[%s20] sm:$0x1]
      %v10487 = vlaneseq
      %v10488 = vshrl.u32 %v10487, 7
      %v10489 = vsub.s32 0, %v10488
      %v10490 = vrot.slane %v10485, %v10489
      %vm10492 = vcmask 523264
      %v10494 = vsel %vm10492, %v10476, 0
      %10496 = vmatprep.subr.mxu0 0.0
      %10497 = vmatpush1.msra.mxu0 %v10477
      %10498 = vmatprep.subr.mxu0 0.0
      %10499 = vmatpush1.msra.mxu0 %v10478
      %10500 = vmatprep.subr.mxu0 0.0
      %10501 = vmatpush1.msra.mxu0 %v10479
      %10502 = vmatprep.subr.mxu0 0.0
      %10503 = vmatpush1.msra.mxu0 %v10480
      %10504 = vmatprep.subr.mxu0 0.0
      %10505 = vmatpush1.msra.mxu0 %v10481
      %10506 = vmatprep.subr.mxu0 0.0
      %10507 = vmatpush1.msra.mxu0 %v10482
      %10508 = vmatprep.subr.mxu0 0.0
      %10509 = vmatpush1.msra.mxu0 %v10483
      %10510 = vmatprep.subr.mxu0 0.0
      %10511 = vmatpush1.msra.mxu0 %v10484
      %10512 = vmatprep.subr.mxu0 0.0
      %10513 = vmatpush1.msra.mxu0 0.0
      %10514 = vmatprep.subr.mxu0 0.0
      %10515 = vmatpush1.msra.mxu0 0.0
      %10516 = vmatprep.subr.mxu0 0.0
      %10517 = vmatpush1.msra.mxu0 0.0
      %10518 = vmatprep.subr.mxu0 0.0
      %10519 = vmatpush1.msra.mxu0 0.0
      %10520 = vmatprep.subr.mxu0 0.0
      %10521 = vmatpush1.msra.mxu0 0.0
      %10522 = vmatprep.subr.mxu0 0.0
      %10523 = vmatpush1.msra.mxu0 0.0
      %10524 = vmatprep.subr.mxu0 0.0
      %10525 = vmatpush1.msra.mxu0 0.0
      %10526 = vmatprep.subr.mxu0 0.0
      %10527 = vmatpush1.msra.mxu0 0.0
      %10528 = vmatprep.subr.mxu0 0.0
      %10529 = vmatpush1.msra.mxu0 0.0
      %10530 = vmatprep.subr.mxu0 0.0
      %10531 = vmatpush1.msra.mxu0 0.0
      %10532 = vmatprep.subr.mxu0 0.0
      %10533 = vmatpush1.msra.mxu0 0.0
      %10534 = vmatprep.subr.mxu0 0.0
      %10535 = vmatpush1.msra.mxu0 0.0
      %10536 = vmatprep.subr.mxu0 0.0
      %10537 = vmatpush1.msra.mxu0 0.0
      %10538 = vmatprep.subr.mxu0 0.0
      %10539 = vmatpush1.msra.mxu0 0.0
      %10540 = vmatprep.subr.mxu0 0.0
      %10541 = vmatpush1.msra.mxu0 0.0
      %10542 = vmatprep.subr.mxu0 0.0
      %10543 = vmatpush1.msra.mxu0 0.0
      %10544 = vmatprep.subr.mxu0 0.0
      %10545 = vmatpush1.msra.mxu0 0.0
      %10546 = vmatprep.subr.mxu0 0.0
      %10547 = vmatpush1.msra.mxu0 0.0
      %10548 = vmatprep.subr.mxu0 0.0
      %10549 = vmatpush1.msra.mxu0 0.0
      %10550 = vmatprep.subr.mxu0 0.0
      %10551 = vmatpush1.msra.mxu0 0.0
      %10552 = vmatprep.subr.mxu0 0.0
      %10553 = vmatpush1.msra.mxu0 0.0
      %10554 = vmatprep.subr.mxu0 0.0
      %10555 = vmatpush1.msra.mxu0 0.0
      %10556 = vmatprep.subr.mxu0 0.0
      %10557 = vmatpush1.msra.mxu0 0.0
      %10558 = vmatprep.subr.mxu0 0.0
      %10559 = vmatpush1.msra.mxu0 0.0
      %10560 = vmatprep.mubr.f32.mxu0 0.0
      %10561 = vmatmul.mubr.f32.gmra.mrb[0].mxu0 %v10494
      %v10562 = vpop.f32.mrb[0].mxu0
      %v10563 = vadd.f32 %v10490, %v10562
      %v10564 = vpop.f32.mrb[0].mxu0
      %10565 = vdwg.mxu0
      %v10566 = vmax.f32 %v10563, 0.0
      %v10567 = vld [vmem:[%s21] sm:$0xff]
      %v10568 = vld [vmem:[%s21 + $0x8] sm:$0xff]
      %v10569 = vld [vmem:[%s21 + $0x10] sm:$0xff]
      %v10570 = vld [vmem:[%s21 + $0x18] sm:$0xff]
      %v10571 = vld [vmem:[%s22] sm:$0x1]
      %v10573 = vlaneseq
      %v10574 = vshrl.u32 %v10573, 7
      %v10575 = vsub.s32 0, %v10574
      %v10576 = vrot.slane %v10571, %v10575
      %v10579 = vsel %vm1166, %v10566, 0
      %10581 = vmatprep.subr.mxu0 0.0
      %10582 = vmatpush1.msra.mxu0 %v10567
      %10583 = vmatprep.subr.mxu0 0.0
      %10584 = vmatpush1.msra.mxu0 %v10568
      %10585 = vmatprep.subr.mxu0 0.0
      %10586 = vmatpush1.msra.mxu0 %v10569
      %10587 = vmatprep.subr.mxu0 0.0
      %10588 = vmatpush1.msra.mxu0 %v10570
      %10589 = vmatprep.subr.mxu0 0.0
      %10590 = vmatpush1.msra.mxu0 0.0
      %10591 = vmatprep.subr.mxu0 0.0
      %10592 = vmatpush1.msra.mxu0 0.0
      %10593 = vmatprep.subr.mxu0 0.0
      %10594 = vmatpush1.msra.mxu0 0.0
      %10595 = vmatprep.subr.mxu0 0.0
      %10596 = vmatpush1.msra.mxu0 0.0
      %10597 = vmatprep.subr.mxu0 0.0
      %10598 = vmatpush1.msra.mxu0 0.0
      %10599 = vmatprep.subr.mxu0 0.0
      %10600 = vmatpush1.msra.mxu0 0.0
      %10601 = vmatprep.subr.mxu0 0.0
      %10602 = vmatpush1.msra.mxu0 0.0
      %10603 = vmatprep.subr.mxu0 0.0
      %10604 = vmatpush1.msra.mxu0 0.0
      %10605 = vmatprep.subr.mxu0 0.0
      %10606 = vmatpush1.msra.mxu0 0.0
      %10607 = vmatprep.subr.mxu0 0.0
      %10608 = vmatpush1.msra.mxu0 0.0
      %10609 = vmatprep.subr.mxu0 0.0
      %10610 = vmatpush1.msra.mxu0 0.0
      %10611 = vmatprep.subr.mxu0 0.0
      %10612 = vmatpush1.msra.mxu0 0.0
      %10613 = vmatprep.subr.mxu0 0.0
      %10614 = vmatpush1.msra.mxu0 0.0
      %10615 = vmatprep.subr.mxu0 0.0
      %10616 = vmatpush1.msra.mxu0 0.0
      %10617 = vmatprep.subr.mxu0 0.0
      %10618 = vmatpush1.msra.mxu0 0.0
      %10619 = vmatprep.subr.mxu0 0.0
      %10620 = vmatpush1.msra.mxu0 0.0
      %10621 = vmatprep.subr.mxu0 0.0
      %10622 = vmatpush1.msra.mxu0 0.0
      %10623 = vmatprep.subr.mxu0 0.0
      %10624 = vmatpush1.msra.mxu0 0.0
      %10625 = vmatprep.subr.mxu0 0.0
      %10626 = vmatpush1.msra.mxu0 0.0
      %10627 = vmatprep.subr.mxu0 0.0
      %10628 = vmatpush1.msra.mxu0 0.0
      %10629 = vmatprep.subr.mxu0 0.0
      %10630 = vmatpush1.msra.mxu0 0.0
      %10631 = vmatprep.subr.mxu0 0.0
      %10632 = vmatpush1.msra.mxu0 0.0
      %10633 = vmatprep.subr.mxu0 0.0
      %10634 = vmatpush1.msra.mxu0 0.0
      %10635 = vmatprep.subr.mxu0 0.0
      %10636 = vmatpush1.msra.mxu0 0.0
      %10637 = vmatprep.subr.mxu0 0.0
      %10638 = vmatpush1.msra.mxu0 0.0
      %10639 = vmatprep.subr.mxu0 0.0
      %10640 = vmatpush1.msra.mxu0 0.0
      %10641 = vmatprep.subr.mxu0 0.0
      %10642 = vmatpush1.msra.mxu0 0.0
      %10643 = vmatprep.subr.mxu0 0.0
      %10644 = vmatpush1.msra.mxu0 0.0
      %10645 = vmatprep.mubr.f32.mxu0 0.0
      %10646 = vmatmul.mubr.f32.gmra.mrb[0].mxu0 %v10579
      %v10647 = vpop.f32.mrb[0].mxu0
      %v10648 = vadd.f32 %v10576, %v10647
      %v10649 = vpop.f32.mrb[0].mxu0
      %10650 = vdwg.mxu0
      %v10651 = vmax.f32 %v10648, 0.0
      %v10652 = vld [vmem:[%s23] sm:$0xff]
      %v10653 = vld [vmem:[%s23 + $0x8] sm:$0xff]
      %v10654 = vld [vmem:[%s24] sm:$0x1]
      %v10656 = vlaneseq
      %v10657 = vshrl.u32 %v10656, 7
      %v10658 = vsub.s32 0, %v10657
      %v10659 = vrot.slane %v10654, %v10658
      %vm10661 = vcmask 130048
      %v10663 = vsel %vm10661, %v10651, 0
      %10665 = vmatprep.subr.mxu0 0.0
      %10666 = vmatpush1.msra.mxu0 %v10652
      %10667 = vmatprep.subr.mxu0 0.0
      %10668 = vmatpush1.msra.mxu0 %v10653
      %10669 = vmatprep.subr.mxu0 0.0
      %10670 = vmatpush1.msra.mxu0 0.0
      %10671 = vmatprep.subr.mxu0 0.0
      %10672 = vmatpush1.msra.mxu0 0.0
      %10673 = vmatprep.subr.mxu0 0.0
      %10674 = vmatpush1.msra.mxu0 0.0
      %10675 = vmatprep.subr.mxu0 0.0
      %10676 = vmatpush1.msra.mxu0 0.0
      %10677 = vmatprep.subr.mxu0 0.0
      %10678 = vmatpush1.msra.mxu0 0.0
      %10679 = vmatprep.subr.mxu0 0.0
      %10680 = vmatpush1.msra.mxu0 0.0
      %10681 = vmatprep.subr.mxu0 0.0
      %10682 = vmatpush1.msra.mxu0 0.0
      %10683 = vmatprep.subr.mxu0 0.0
      %10684 = vmatpush1.msra.mxu0 0.0
      %10685 = vmatprep.subr.mxu0 0.0
      %10686 = vmatpush1.msra.mxu0 0.0
      %10687 = vmatprep.subr.mxu0 0.0
      %10688 = vmatpush1.msra.mxu0 0.0
      %10689 = vmatprep.subr.mxu0 0.0
      %10690 = vmatpush1.msra.mxu0 0.0
      %10691 = vmatprep.subr.mxu0 0.0
      %10692 = vmatpush1.msra.mxu0 0.0
      %10693 = vmatprep.subr.mxu0 0.0
      %10694 = vmatpush1.msra.mxu0 0.0
      %10695 = vmatprep.subr.mxu0 0.0
      %10696 = vmatpush1.msra.mxu0 0.0
      %10697 = vmatprep.subr.mxu0 0.0
      %10698 = vmatpush1.msra.mxu0 0.0
      %10699 = vmatprep.subr.mxu0 0.0
      %10700 = vmatpush1.msra.mxu0 0.0
      %10701 = vmatprep.subr.mxu0 0.0
      %10702 = vmatpush1.msra.mxu0 0.0
      %10703 = vmatprep.subr.mxu0 0.0
      %10704 = vmatpush1.msra.mxu0 0.0
      %10705 = vmatprep.subr.mxu0 0.0
      %10706 = vmatpush1.msra.mxu0 0.0
      %10707 = vmatprep.subr.mxu0 0.0
      %10708 = vmatpush1.msra.mxu0 0.0
      %10709 = vmatprep.subr.mxu0 0.0
      %10710 = vmatpush1.msra.mxu0 0.0
      %10711 = vmatprep.subr.mxu0 0.0
      %10712 = vmatpush1.msra.mxu0 0.0
      %10713 = vmatprep.subr.mxu0 0.0
      %10714 = vmatpush1.msra.mxu0 0.0
      %10715 = vmatprep.subr.mxu0 0.0
      %10716 = vmatpush1.msra.mxu0 0.0
      %10717 = vmatprep.subr.mxu0 0.0
      %10718 = vmatpush1.msra.mxu0 0.0
      %10719 = vmatprep.subr.mxu0 0.0
      %10720 = vmatpush1.msra.mxu0 0.0
      %10721 = vmatprep.subr.mxu0 0.0
      %10722 = vmatpush1.msra.mxu0 0.0
      %10723 = vmatprep.subr.mxu0 0.0
      %10724 = vmatpush1.msra.mxu0 0.0
      %10725 = vmatprep.subr.mxu0 0.0
      %10726 = vmatpush1.msra.mxu0 0.0
      %10727 = vmatprep.subr.mxu0 0.0
      %10728 = vmatpush1.msra.mxu0 0.0
      %10729 = vmatprep.mubr.f32.mxu0 0.0
      %10730 = vmatmul.mubr.f32.gmra.mrb[0].mxu0 %v10663
      %v10731 = vpop.f32.mrb[0].mxu0
      %v10732 = vadd.f32 %v10659, %v10731
      %v10733 = vpop.f32.mrb[0].mxu0
      %10734 = vdwg.mxu0
      %v10735 = vmax.f32 %v10732, 0.0
      %v10736 = vld [vmem:[%s25] sm:$0xff]
      %v10737 = vld [vmem:[#allocation6] sm:$0x1]
      %v10739 = vlaneseq
      %v10740 = vshrl.u32 %v10739, 7
      %v10741 = vsub.s32 0, %v10740
      %v10742 = vrot.slane %v10737, %v10741
      %v10745 = vsel %vm4048, %v10735, 0
      %10747 = vmatprep.subr.mxu0 0.0
      %10748 = vmatpush1.msra.mxu0 %v10736
      %10749 = vmatprep.subr.mxu0 0.0
      %10750 = vmatpush1.msra.mxu0 0.0
      %10751 = vmatprep.subr.mxu0 0.0
      %10752 = vmatpush1.msra.mxu0 0.0
      %10753 = vmatprep.subr.mxu0 0.0
      %10754 = vmatpush1.msra.mxu0 0.0
      %10755 = vmatprep.subr.mxu0 0.0
      %10756 = vmatpush1.msra.mxu0 0.0
      %10757 = vmatprep.subr.mxu0 0.0
      %10758 = vmatpush1.msra.mxu0 0.0
      %10759 = vmatprep.subr.mxu0 0.0
      %10760 = vmatpush1.msra.mxu0 0.0
      %10761 = vmatprep.subr.mxu0 0.0
      %10762 = vmatpush1.msra.mxu0 0.0
      %10763 = vmatprep.subr.mxu0 0.0
      %10764 = vmatpush1.msra.mxu0 0.0
      %10765 = vmatprep.subr.mxu0 0.0
      %10766 = vmatpush1.msra.mxu0 0.0
      %10767 = vmatprep.subr.mxu0 0.0
      %10768 = vmatpush1.msra.mxu0 0.0
      %10769 = vmatprep.subr.mxu0 0.0
      %10770 = vmatpush1.msra.mxu0 0.0
      %10771 = vmatprep.subr.mxu0 0.0
      %10772 = vmatpush1.msra.mxu0 0.0
      %10773 = vmatprep.subr.mxu0 0.0
      %10774 = vmatpush1.msra.mxu0 0.0
      %10775 = vmatprep.subr.mxu0 0.0
      %10776 = vmatpush1.msra.mxu0 0.0
      %10777 = vmatprep.subr.mxu0 0.0
      %10778 = vmatpush1.msra.mxu0 0.0
      %10779 = vmatprep.subr.mxu0 0.0
      %10780 = vmatpush1.msra.mxu0 0.0
      %10781 = vmatprep.subr.mxu0 0.0
      %10782 = vmatpush1.msra.mxu0 0.0
      %10783 = vmatprep.subr.mxu0 0.0
      %10784 = vmatpush1.msra.mxu0 0.0
      %10785 = vmatprep.subr.mxu0 0.0
      %10786 = vmatpush1.msra.mxu0 0.0
      %10787 = vmatprep.subr.mxu0 0.0
      %10788 = vmatpush1.msra.mxu0 0.0
      %10789 = vmatprep.subr.mxu0 0.0
      %10790 = vmatpush1.msra.mxu0 0.0
      %10791 = vmatprep.subr.mxu0 0.0
      %10792 = vmatpush1.msra.mxu0 0.0
      %10793 = vmatprep.subr.mxu0 0.0
      %10794 = vmatpush1.msra.mxu0 0.0
      %10795 = vmatprep.subr.mxu0 0.0
      %10796 = vmatpush1.msra.mxu0 0.0
      %10797 = vmatprep.subr.mxu0 0.0
      %10798 = vmatpush1.msra.mxu0 0.0
      %10799 = vmatprep.subr.mxu0 0.0
      %10800 = vmatpush1.msra.mxu0 0.0
      %10801 = vmatprep.subr.mxu0 0.0
      %10802 = vmatpush1.msra.mxu0 0.0
      %10803 = vmatprep.subr.mxu0 0.0
      %10804 = vmatpush1.msra.mxu0 0.0
      %10805 = vmatprep.subr.mxu0 0.0
      %10806 = vmatpush1.msra.mxu0 0.0
      %10807 = vmatprep.subr.mxu0 0.0
      %10808 = vmatpush1.msra.mxu0 0.0
      %10809 = vmatprep.subr.mxu0 0.0
      %10810 = vmatpush1.msra.mxu0 0.0
      %10811 = vmatprep.mubr.f32.mxu0 0.0
      %10812 = vmatmul.mubr.f32.gmra.mrb[0].mxu0 %v10745
      %v10813 = vpop.f32.mrb[0].mxu0
      %v10814 = vadd.f32 %v10742, %v10813
      %v10815 = vpop.f32.mrb[0].mxu0
      %10816 = vdwg.mxu0
      %10818 = vset.pattern.permute.xlu0 0
      %10819 = vperm.xlu0 %10818, %v10814
      %v10820 = vpop.permute.xlu0 %10819
      %10822 = vst [vmem:[%s898] sm:$0x3] %v10820
      %p10823 = scmp.lt.s32.totalorder %s40, 1
      %s10824 = scalar_select %p10823, %s40, 1
      %s10825 = smul.addr %s10824, 2
      %s10826 = scalar_lea.vmem %s27, %s10825
      // Predicated region
      $region129: #{learn_loss_active_forward.1} parent=127 // pred_check
        %p10827 = pneg %p650
      $region130: #{learn_loss_active_forward.1} parent=127 // pred_check_branch
        %10829 = sbr.rel (%p10827) target = $region132
      $region131: #{learn_loss_active_forward.1} parent=127 // pred_region
        _
      $region132: #{learn_loss_active_forward.1} parent=127 // pred_fallthru
        _
    $region128: #{learn_loss_active_forward.1} parent=5 // pred_fallthru
      _
    %p10830 = scmp.le.s32.totalorder 2, %s35
    // Predicated region
    $region133: #{learn_loss_active_forward.1} parent=5 // pred_check
      %p10831 = pneg %p10830
    $region134: #{learn_loss_active_forward.1} parent=5 // pred_check_branch
      %10833 = sbr.rel (%p10831) target = $region136
    $region135: #{learn_loss_active_forward.1} parent=5 // pred_region
      %s10834 = ssub.s32 %s35, 2
      // Predicated region
      $region137: #{learn_loss_active_forward.1} parent=135 // pred_check
        %p10835 = pneg %p656
      $region138: #{learn_loss_active_forward.1} parent=135 // pred_check_branch
        %10837 = sbr.rel (%p10835) target = $region140
      $region139: #{learn_loss_active_forward.1} parent=135 // pred_region
        %p10838 = scmp.lt.s32.totalorder %s41, 1
        %s10839 = scalar_select %p10838, %s41, 1
        %s10840 = smul.addr %s10839, 2
        %s10841 = scalar_lea.vmem %s27, %s10840
      $region140: #{learn_loss_active_forward.1} parent=135 // pred_fallthru
        _
    $region136: #{learn_loss_active_forward.1} parent=5 // pred_fallthru
      _
  $region6: #{learn_loss_active_forward.1} parent=0 // loop_footer
    %s39 = sadd.s32 1, %s35
  $region7: #{learn_loss_active_forward.1} parent=0 // loop_footer_branch
    %34 = sbr.rel target = $region3
  $region8: #{learn_loss_active_forward.1} parent=0 // loop_exit
    _

</llo_original>
